<compile_context>
chip_gen: v5e
topology: v5e:2x2
jax: 0.10.0
libtpu: 0.0.40
codegen_flags: <defaults>
</compile_context>

<pallas_src>
import jax
import jax.numpy as jnp
from jax.experimental import pallas as pl
from jax.experimental.pallas import tpu as pltpu

HIDDEN = 1024
OUT_PAD = 128  # fc3 output dim padded to a full lane tile


def da_ins_head_kernel(x_ref, w1_ref, b1_ref, w2_ref, b2_ref, w3_ref, b3_ref, o_ref):
    # fc1 (bf16 operands, f32 accumulation) + bias + relu (f32)
    h1 = jnp.dot(x_ref[...], w1_ref[...], preferred_element_type=jnp.float32)
    h1 = jnp.maximum(h1 + b1_ref[...], 0.0)
    # dropout(p=0.5) -> identity in eval mode

    # fc2 + bias + relu
    h2 = jnp.dot(h1.astype(w2_ref.dtype), w2_ref[...],
                 preferred_element_type=jnp.float32)
    h2 = jnp.maximum(h2 + b2_ref[...], 0.0)
    # dropout(p=0.5) -> identity in eval mode

    # fc3: output padded to 128 lanes (only column 0 is the real logit).
    out = jnp.dot(h2.astype(w3_ref.dtype), w3_ref[...],
                  preferred_element_type=jnp.float32)
    o_ref[...] = (out + b3_ref[0]).astype(o_ref.dtype)


def da_ins_head(x, w1, b1, w2, b2, w3, b3, *, tm=256):
    """x: (N, C) float32.  Weights in (in_features, out_features) layout, f32.

    Returns (N, 1) float32 logits.
    """
    n, c = x.shape
    h = w1.shape[1]
    assert h == HIDDEN and w2.shape == (HIDDEN, HIDDEN) and w3.shape == (HIDDEN, 1)

    # Pad feature dim to a multiple of 128 (full MXU K-tiles / lanes) and the
    # batch dim to the row tile.  Zero padding leaves the math unchanged.
    c_pad = max(128, ((c + 127) // 128) * 128)
    n_pad = ((n + tm - 1) // tm) * tm
    grid = (n_pad // tm,)

    # bf16 operands for the MXU; biases stay f32 (added post-accumulation).
    x_p = jnp.zeros((n_pad, c_pad), jnp.bfloat16).at[:n, :c].set(x.astype(jnp.bfloat16))
    w1_p = jnp.zeros((c_pad, HIDDEN), jnp.bfloat16).at[:c, :].set(w1.astype(jnp.bfloat16))
    w2_b = w2.astype(jnp.bfloat16)
    w3_p = jnp.zeros((HIDDEN, OUT_PAD), jnp.bfloat16).at[:, :1].set(w3.astype(jnp.bfloat16))
    b1_r = b1.reshape(1, HIDDEN).astype(jnp.float32)
    b2_r = b2.reshape(1, HIDDEN).astype(jnp.float32)
    b3_r = b3.reshape(1).astype(jnp.float32)  # scalar -> SMEM

    # Resident (constant index_map) blocks: single-buffered.
    resident = lambda shape: pl.BlockSpec(shape, lambda i: (0, 0),
                                          pipeline_mode=pl.Buffered(1))

    out_pad = pl.pallas_call(
        da_ins_head_kernel,
        out_shape=jax.ShapeDtypeStruct((n_pad, OUT_PAD), jnp.float32),
        grid_spec=pltpu.PrefetchScalarGridSpec(
            num_scalar_prefetch=0,
            grid=grid,
            in_specs=[
                pl.BlockSpec((tm, c_pad), lambda i: (i, 0)),      # x row tile
                resident((c_pad, HIDDEN)),                        # W1 (bf16)
                resident((1, HIDDEN)),                            # b1 (f32)
                resident((HIDDEN, HIDDEN)),                       # W2 (bf16)
                resident((1, HIDDEN)),                            # b2 (f32)
                resident((HIDDEN, OUT_PAD)),                      # W3 padded (bf16)
                pl.BlockSpec(memory_space=pltpu.MemorySpace.SMEM),  # b3 scalar
            ],
            out_specs=pl.BlockSpec((tm, OUT_PAD), lambda i: (i, 0)),
        ),
        compiler_params=pltpu.CompilerParams(
            dimension_semantics=("parallel",),
            vmem_limit_bytes=32 * 1024 * 1024,
        ),
    )(x_p, w1_p, b1_r, w2_b, b2_r, w3_p, b3_r)

    # Real logit is column 0; drop the batch padding.
    return out_pad[:n, 0:1]


def init_params(key, in_channels):
    """Deterministic init matching the PyTorch module's __init__:
    fc1/fc2 weights ~ N(0, 0.01^2), fc3 weights ~ N(0, 0.05^2), biases 0.
    Weights stored transposed: (in_features, out_features), float32."""
    k1, k2, k3 = jax.random.split(key, 3)
    w1 = 0.01 * jax.random.normal(k1, (in_channels, HIDDEN), jnp.float32)
    b1 = jnp.zeros((HIDDEN,), jnp.float32)
    w2 = 0.01 * jax.random.normal(k2, (HIDDEN, HIDDEN), jnp.float32)
    b2 = jnp.zeros((HIDDEN,), jnp.float32)
    w3 = 0.05 * jax.random.normal(k3, (HIDDEN, 1), jnp.float32)
    b3 = jnp.zeros((1,), jnp.float32)
    return w1, b1, w2, b2, w3, b3


def reference(x, w1, b1, w2, b2, w3, b3):
    h1 = jnp.maximum(x @ w1 + b1[None, :], 0.0)
    h2 = jnp.maximum(h1 @ w2 + b2[None, :], 0.0)
    return h2 @ w3 + b3[None, :]


if __name__ == "__main__":
    key = jax.random.PRNGKey(0)
    kx, kp = jax.random.split(key)

    # Small-but-representative shapes: 512 ROIs, 64 input channels.
    # N=512 with tm=256 keeps the grid length at 2 (both v7x TCs get work).
    N, IN_CHANNELS = 512, 64
    x = jax.random.normal(kx, (N, IN_CHANNELS), jnp.float32)
    params = init_params(kp, IN_CHANNELS)

    out = jax.block_until_ready(da_ins_head(x, *params, tm=256))

    ref = reference(x, *params)
    assert out.shape == (N, 1)
    # bf16 matmul operands (f32 accumulation) -> loosened tolerance vs f32 ref.
    assert jnp.allclose(out, ref, atol=1e-2, rtol=1e-2), (
        f"mismatch vs JAX reference, max abs err {jnp.max(jnp.abs(out - ref))}")

    print("KERNEL_OK")
</pallas_src>

<mosaic_0001>
module attributes {stable_mosaic.version = 11 : i64} {
  func.func @da_ins_head_kernel(%arg0: i32, %arg1: memref<256x128xbf16, #tpu.memory_space<vmem>>, %arg2: memref<128x1024xbf16, #tpu.memory_space<vmem>>, %arg3: memref<1x1024xf32, #tpu.memory_space<vmem>>, %arg4: memref<1024x1024xbf16, #tpu.memory_space<vmem>>, %arg5: memref<1x1024xf32, #tpu.memory_space<vmem>>, %arg6: memref<1024x128xbf16, #tpu.memory_space<vmem>>, %arg7: memref<1xf32, #tpu.memory_space<smem>>, %arg8: memref<256x128xf32, #tpu.memory_space<vmem>>) attributes {dimension_semantics = [#tpu.dimension_semantics<parallel>], iteration_bounds = array<i64: 2>, scalar_prefetch = 0 : i64, scratch_operands = 0 : i64, tpu.core_type = #tpu.core_type<tc>, window_params = [{transform_indices = @transform_0, window_bounds = array<i64: 256, 128>}, {pipeline_mode = #tpu.pipeline_mode<synchronous>, transform_indices = @transform_1, window_bounds = array<i64: 128, 1024>}, {pipeline_mode = #tpu.pipeline_mode<synchronous>, transform_indices = @transform_2, window_bounds = array<i64: 1, 1024>}, {pipeline_mode = #tpu.pipeline_mode<synchronous>, transform_indices = @transform_3, window_bounds = array<i64: 1024, 1024>}, {pipeline_mode = #tpu.pipeline_mode<synchronous>, transform_indices = @transform_4, window_bounds = array<i64: 1, 1024>}, {pipeline_mode = #tpu.pipeline_mode<synchronous>, transform_indices = @transform_5, window_bounds = array<i64: 1024, 128>}, {transform_indices = @transform_6, window_bounds = array<i64: 1>}, {transform_indices = @transform_7, window_bounds = array<i64: 256, 128>}]} {
    %c0 = arith.constant 0 : index
    %c0_0 = arith.constant 0 : index
    %0 = vector.load %arg1[%c0, %c0_0] : memref<256x128xbf16, #tpu.memory_space<vmem>>, vector<256x128xbf16>
    %c0_1 = arith.constant 0 : index
    %c0_2 = arith.constant 0 : index
    %1 = vector.load %arg2[%c0_1, %c0_2] : memref<128x1024xbf16, #tpu.memory_space<vmem>>, vector<128x1024xbf16>
    %cst = arith.constant dense<0.000000e+00> : vector<256x1024xf32>
    %2 = tpu.matmul %0, %1, %cst {dimension_numbers = #tpu.dot_dimension_numbers<[1], [0], [0], [1], [0, 0, 1, 1], [], []>} : vector<256x128xbf16>, vector<128x1024xbf16>, vector<256x1024xf32> -> vector<256x1024xf32>
    %c0_3 = arith.constant 0 : index
    %c0_4 = arith.constant 0 : index
    %3 = vector.load %arg3[%c0_3, %c0_4] : memref<1x1024xf32, #tpu.memory_space<vmem>>, vector<1x1024xf32>
    %4 = vector.broadcast %3 : vector<1x1024xf32> to vector<256x1024xf32>
    %5 = arith.addf %2, %4 : vector<256x1024xf32>
    %cst_5 = arith.constant 0.000000e+00 : f32
    %6 = vector.broadcast %cst_5 : f32 to vector<256x1024xf32>
    %7 = arith.maximumf %5, %6 : vector<256x1024xf32>
    %8 = arith.truncf %7 : vector<256x1024xf32> to vector<256x1024xbf16>
    %c0_6 = arith.constant 0 : index
    %c0_7 = arith.constant 0 : index
    %9 = vector.load %arg4[%c0_6, %c0_7] : memref<1024x1024xbf16, #tpu.memory_space<vmem>>, vector<1024x1024xbf16>
    %cst_8 = arith.constant dense<0.000000e+00> : vector<256x1024xf32>
    %10 = tpu.matmul %8, %9, %cst_8 {dimension_numbers = #tpu.dot_dimension_numbers<[1], [0], [0], [1], [0, 0, 1, 1], [], []>} : vector<256x1024xbf16>, vector<1024x1024xbf16>, vector<256x1024xf32> -> vector<256x1024xf32>
    %c0_9 = arith.constant 0 : index
    %c0_10 = arith.constant 0 : index
    %11 = vector.load %arg5[%c0_9, %c0_10] : memref<1x1024xf32, #tpu.memory_space<vmem>>, vector<1x1024xf32>
    %12 = vector.broadcast %11 : vector<1x1024xf32> to vector<256x1024xf32>
    %13 = arith.addf %10, %12 : vector<256x1024xf32>
    %cst_11 = arith.constant 0.000000e+00 : f32
    %14 = vector.broadcast %cst_11 : f32 to vector<256x1024xf32>
    %15 = arith.maximumf %13, %14 : vector<256x1024xf32>
    %16 = arith.truncf %15 : vector<256x1024xf32> to vector<256x1024xbf16>
    %c0_12 = arith.constant 0 : index
    %c0_13 = arith.constant 0 : index
    %17 = vector.load %arg6[%c0_12, %c0_13] : memref<1024x128xbf16, #tpu.memory_space<vmem>>, vector<1024x128xbf16>
    %cst_14 = arith.constant dense<0.000000e+00> : vector<256x128xf32>
    %18 = tpu.matmul %16, %17, %cst_14 {dimension_numbers = #tpu.dot_dimension_numbers<[1], [0], [0], [1], [0, 0, 1, 1], [], []>} : vector<256x1024xbf16>, vector<1024x128xbf16>, vector<256x128xf32> -> vector<256x128xf32>
    %c0_15 = arith.constant 0 : index
    %19 = memref.load %arg7[%c0_15] : memref<1xf32, #tpu.memory_space<smem>>
    %20 = vector.broadcast %19 : f32 to vector<256x128xf32>
    %21 = arith.addf %18, %20 : vector<256x128xf32>
    %c0_16 = arith.constant 0 : index
    %c0_17 = arith.constant 0 : index
    %22 = vector.load %arg8[%c0_16, %c0_17] : memref<256x128xf32, #tpu.memory_space<vmem>>, vector<256x128xf32>
    tpu.vector_store %arg8[%c0_16, %c0_17], %21 {strides = array<i32>} : memref<256x128xf32, #tpu.memory_space<vmem>>, vector<256x128xf32>,
    return
  }
  func.func @transform_0(%arg0: i32) -> (i32, i32) {
    %c0_i32 = arith.constant 0 : i32
    %c0_i32_0 = arith.constant 0 : i32
    return %arg0, %c0_i32 : i32, i32
  }
  func.func @transform_1(%arg0: i32) -> (i32, i32) {
    %c0_i32 = arith.constant 0 : i32
    %c0_i32_0 = arith.constant 0 : i32
    %c0_i32_1 = arith.constant 0 : i32
    return %c0_i32, %c0_i32_0 : i32, i32
  }
  func.func @transform_2(%arg0: i32) -> (i32, i32) {
    %c0_i32 = arith.constant 0 : i32
    %c0_i32_0 = arith.constant 0 : i32
    %c0_i32_1 = arith.constant 0 : i32
    return %c0_i32, %c0_i32_0 : i32, i32
  }
  func.func @transform_3(%arg0: i32) -> (i32, i32) {
    %c0_i32 = arith.constant 0 : i32
    %c0_i32_0 = arith.constant 0 : i32
    %c0_i32_1 = arith.constant 0 : i32
    return %c0_i32, %c0_i32_0 : i32, i32
  }
  func.func @transform_4(%arg0: i32) -> (i32, i32) {
    %c0_i32 = arith.constant 0 : i32
    %c0_i32_0 = arith.constant 0 : i32
    %c0_i32_1 = arith.constant 0 : i32
    return %c0_i32, %c0_i32_0 : i32, i32
  }
  func.func @transform_5(%arg0: i32) -> (i32, i32) {
    %c0_i32 = arith.constant 0 : i32
    %c0_i32_0 = arith.constant 0 : i32
    %c0_i32_1 = arith.constant 0 : i32
    return %c0_i32, %c0_i32_0 : i32, i32
  }
  func.func @transform_6(%arg0: i32) -> i32 {
    %c0_i32 = arith.constant 0 : i32
    %c0_i32_0 = arith.constant 0 : i32
    return %c0_i32 : i32
  }
  func.func @transform_7(%arg0: i32) -> (i32, i32) {
    %c0_i32 = arith.constant 0 : i32
    %c0_i32_0 = arith.constant 0 : i32
    return %arg0, %c0_i32 : i32, i32
  }
}

</mosaic_0001>

<llo_original>
// kernel: tpu_custom_call.1
$region0: #{tpu_custom_call.1}
  #allocation0 [shape = 'u32[]', space=smem, size = 0x4, offset = 0x4, fixed_abs, tag = 'smem constant byte address 0x4 - core index']
  #allocation1 [shape = 'u32[72,128]{1,0:T(1,128)}', space=vmem, size = 0x9000, scoped, tag = 'internal scratch']
  #allocation2 [shape = 'f32[1]{0:T(128)S(6)}', space=smem, size = 0x200, scoped, tag = 'scoped memory for tpu_custom_call.1']
  %s0 = inlined_call_operand.hbm [shape: bf16[512,128], index: 0, kind: input, shape index: {}]
  %s1 = inlined_call_operand.hbm [shape: bf16[128,1024], index: 1, kind: input, shape index: {}]
  %s2 = inlined_call_operand.hbm [shape: f32[1,1024], index: 2, kind: input, shape index: {}]
  %s3 = inlined_call_operand.hbm [shape: bf16[1024,1024], index: 3, kind: input, shape index: {}]
  %s4 = inlined_call_operand.hbm [shape: f32[1,1024], index: 4, kind: input, shape index: {}]
  %s5 = inlined_call_operand.hbm [shape: bf16[1024,128], index: 5, kind: input, shape index: {}]
  %s6 = inlined_call_operand.<no memory space> [shape: f32[1], index: 6, kind: input, shape index: {}]
  %s7 = inlined_call_operand.hbm [shape: f32[512,128], index: 7, kind: output, shape index: {}]
  %s8 = sld [smem:[#allocation0]]
  $region85: #{tpu_custom_call.1} parent=0
    _
  %s10 = ssub.s32 1, %s8
  %s11 = scalar_select 0, %s10, %s8
  %12 = sst [smem:[#allocation2]] %s6
  $region1: #{tpu_custom_call.1} parent=0
    #allocation3 [shape = 'u8[131072]{0}', space=vmem, size = 0x20000, scoped, tag = 'input window, operand 0']
    #allocation4 [shape = 's32[2]{0}', space=sflag, size = 0x8, scoped, tag = 'scoped memory for tpu_custom_call.1']
    #allocation5 [shape = 's32[2]{0}', space=sflag, size = 0x8, scoped, tag = 'scoped memory for tpu_custom_call.1']
    #allocation6 [shape = 'u8[262144]{0}', space=vmem, size = 0x40000, scoped, tag = 'input window, operand 1, single buffered']
    #allocation7 [shape = 's32[1]{0}', space=sflag, size = 0x4, scoped, tag = 'scoped memory for tpu_custom_call.1']
    #allocation8 [shape = 'u8[4096]{0}', space=vmem, size = 0x1000, scoped, tag = 'input window, operand 2, single buffered']
    #allocation9 [shape = 'u8[2097152]{0}', space=vmem, size = 0x200000, scoped, tag = 'input window, operand 3, single buffered']
    #allocation10 [shape = 's32[1]{0}', space=sflag, size = 0x4, scoped, tag = 'scoped memory for tpu_custom_call.1']
    #allocation11 [shape = 'u8[4096]{0}', space=vmem, size = 0x1000, scoped, tag = 'input window, operand 4, single buffered']
    #allocation12 [shape = 'u8[262144]{0}', space=vmem, size = 0x40000, scoped, tag = 'input window, operand 5, single buffered']
    #allocation13 [shape = 's32[1]{0}', space=sflag, size = 0x4, scoped, tag = 'scoped memory for tpu_custom_call.1']
    #allocation14 [shape = 'u8[262144]{0}', space=vmem, size = 0x40000, scoped, tag = 'output window, operand 0']
    %13 = vsyncpa [#allocation4], 0
    %s14 = scalar_lea.sflag [#allocation4], 1
    %15 = vsyncpa %s14, 0
    %16 = vsyncpa [#allocation7], 0
    %17 = vsyncpa [#allocation10], 0
    %18 = vsyncpa [#allocation13], 0
    %19 = vsyncpa [#allocation5], 0
    %s20 = scalar_lea.sflag [#allocation5], 1
    %21 = vsyncpa %s20, 0
    loop: start=0, step=1, limit=4
    $region2: #{tpu_custom_call.1} parent=1 // loop_pre_header
      _
    $region3: #{tpu_custom_call.1} parent=1 // loop_header
      %s23 = sphi 0, %s27
      %p24 = scmp.ge.s32.totalorder %s23, 4
      %s33 = sphi 0, %s35
      %s36 = sphi 0, %s33
      %s37 = sphi 0, %s36
      %s53 = sphi 0, %s37
      %s57 = sphi 0, %s57
      %s59 = sphi 0, %s57
      %s60 = sphi 0, %s59
      %s74 = sphi 0, %s60
      %s78 = sphi 0, %s78
      %s80 = sphi 0, %s78
      %s81 = sphi 0, %s80
      %s95 = sphi 0, %s81
      %s99 = sphi 0, %s99
      %s101 = sphi 0, %s99
      %s102 = sphi 0, %s101
      %s116 = sphi 0, %s102
      %s120 = sphi 0, %s120
      %s122 = sphi 0, %s120
      %s123 = sphi 0, %s122
      %s137 = sphi 0, %s123
      %s141 = sphi 0, %s141
      %s143 = sphi 0, %s141
      %s144 = sphi 0, %s143
      %s158 = sphi 0, %s144
      %s162 = sphi 0, %s162
      %s164 = sphi 0, %s162
      %s165 = sphi 0, %s164
      %s179 = sphi 0, %s165
      %s185 = sphi 0, %s187
      %s188 = sphi 0, %s185
      %s189 = sphi 0, %s188
      %s205 = sphi 0, %s189
    $region4: #{tpu_custom_call.1} parent=1 // loop_header_branch
      %26 = sbr.rel (%p24) target = $region8
    $region5: #{tpu_custom_call.1} parent=1 // loop_body
      %s28 = ssub.s32 %s23, 1
      %s29 = ssub.s32 %s23, 2
      %s30 = sadd.s32 %s23, 1
      %s31 = ssub.s32 %s23, %s30
      %p32 = scmp.eq.s32.totalorder %s31, 0
      %s34 = sadd.s32 %s33, 1
      %s35 = scalar_select %p32, %s33, %s34
      %p38 = pneg %p32
      %p39 = scmp.eq.s32.totalorder %s23, 1
      %p40 = por %p38, %p39
      %p41 = scmp.ne.s32.totalorder %s33, %s36
      %p42 = scmp.eq.s32.totalorder %s23, 0
      %p43 = por %p41, %p42
      %p44 = scmp.ne.s32.totalorder %s33, %s36
      %p45 = scmp.eq.s32.totalorder %s28, 1
      %p46 = por %p44, %p45
      %p47 = scmp.ne.s32.totalorder %s36, %s37
      %p48 = scmp.eq.s32.totalorder %s28, 0
      %p49 = por %p47, %p48
      %p50 = scmp.ne.s32.totalorder %s36, %s37
      %p51 = scmp.eq.s32.totalorder %s29, 1
      %p52 = por %p50, %p51
      %p54 = scmp.ne.s32.totalorder %s37, %s53
      %p55 = scmp.eq.s32.totalorder %s29, 0
      %p56 = por %p54, %p55
      %s58 = sadd.s32 %s57, 1
      %p61 = scmp.eq.s32.totalorder %s23, 1
      %p62 = scmp.ne.s32.totalorder %s57, %s59
      %p63 = scmp.eq.s32.totalorder %s23, 0
      %p64 = por %p62, %p63
      %p65 = scmp.ne.s32.totalorder %s57, %s59
      %p66 = scmp.eq.s32.totalorder %s28, 1
      %p67 = por %p65, %p66
      %p68 = scmp.ne.s32.totalorder %s59, %s60
      %p69 = scmp.eq.s32.totalorder %s28, 0
      %p70 = por %p68, %p69
      %p71 = scmp.ne.s32.totalorder %s59, %s60
      %p72 = scmp.eq.s32.totalorder %s29, 1
      %p73 = por %p71, %p72
      %p75 = scmp.ne.s32.totalorder %s60, %s74
      %p76 = scmp.eq.s32.totalorder %s29, 0
      %p77 = por %p75, %p76
      %s79 = sadd.s32 %s78, 1
      %p82 = scmp.eq.s32.totalorder %s23, 1
      %p83 = scmp.ne.s32.totalorder %s78, %s80
      %p84 = scmp.eq.s32.totalorder %s23, 0
      %p85 = por %p83, %p84
      %p86 = scmp.ne.s32.totalorder %s78, %s80
      %p87 = scmp.eq.s32.totalorder %s28, 1
      %p88 = por %p86, %p87
      %p89 = scmp.ne.s32.totalorder %s80, %s81
      %p90 = scmp.eq.s32.totalorder %s28, 0
      %p91 = por %p89, %p90
      %p92 = scmp.ne.s32.totalorder %s80, %s81
      %p93 = scmp.eq.s32.totalorder %s29, 1
      %p94 = por %p92, %p93
      %p96 = scmp.ne.s32.totalorder %s81, %s95
      %p97 = scmp.eq.s32.totalorder %s29, 0
      %p98 = por %p96, %p97
      %s100 = sadd.s32 %s99, 1
      %p103 = scmp.eq.s32.totalorder %s23, 1
      %p104 = scmp.ne.s32.totalorder %s99, %s101
      %p105 = scmp.eq.s32.totalorder %s23, 0
      %p106 = por %p104, %p105
      %p107 = scmp.ne.s32.totalorder %s99, %s101
      %p108 = scmp.eq.s32.totalorder %s28, 1
      %p109 = por %p107, %p108
      %p110 = scmp.ne.s32.totalorder %s101, %s102
      %p111 = scmp.eq.s32.totalorder %s28, 0
      %p112 = por %p110, %p111
      %p113 = scmp.ne.s32.totalorder %s101, %s102
      %p114 = scmp.eq.s32.totalorder %s29, 1
      %p115 = por %p113, %p114
      %p117 = scmp.ne.s32.totalorder %s102, %s116
      %p118 = scmp.eq.s32.totalorder %s29, 0
      %p119 = por %p117, %p118
      %s121 = sadd.s32 %s120, 1
      %p124 = scmp.eq.s32.totalorder %s23, 1
      %p125 = scmp.ne.s32.totalorder %s120, %s122
      %p126 = scmp.eq.s32.totalorder %s23, 0
      %p127 = por %p125, %p126
      %p128 = scmp.ne.s32.totalorder %s120, %s122
      %p129 = scmp.eq.s32.totalorder %s28, 1
      %p130 = por %p128, %p129
      %p131 = scmp.ne.s32.totalorder %s122, %s123
      %p132 = scmp.eq.s32.totalorder %s28, 0
      %p133 = por %p131, %p132
      %p134 = scmp.ne.s32.totalorder %s122, %s123
      %p135 = scmp.eq.s32.totalorder %s29, 1
      %p136 = por %p134, %p135
      %p138 = scmp.ne.s32.totalorder %s123, %s137
      %p139 = scmp.eq.s32.totalorder %s29, 0
      %p140 = por %p138, %p139
      %s142 = sadd.s32 %s141, 1
      %p145 = scmp.eq.s32.totalorder %s23, 1
      %p146 = scmp.ne.s32.totalorder %s141, %s143
      %p147 = scmp.eq.s32.totalorder %s23, 0
      %p148 = por %p146, %p147
      %p149 = scmp.ne.s32.totalorder %s141, %s143
      %p150 = scmp.eq.s32.totalorder %s28, 1
      %p151 = por %p149, %p150
      %p152 = scmp.ne.s32.totalorder %s143, %s144
      %p153 = scmp.eq.s32.totalorder %s28, 0
      %p154 = por %p152, %p153
      %p155 = scmp.ne.s32.totalorder %s143, %s144
      %p156 = scmp.eq.s32.totalorder %s29, 1
      %p157 = por %p155, %p156
      %p159 = scmp.ne.s32.totalorder %s144, %s158
      %p160 = scmp.eq.s32.totalorder %s29, 0
      %p161 = por %p159, %p160
      %s163 = sadd.s32 %s162, 1
      %p166 = scmp.eq.s32.totalorder %s23, 1
      %p167 = scmp.ne.s32.totalorder %s162, %s164
      %p168 = scmp.eq.s32.totalorder %s23, 0
      %p169 = por %p167, %p168
      %p170 = scmp.ne.s32.totalorder %s162, %s164
      %p171 = scmp.eq.s32.totalorder %s28, 1
      %p172 = por %p170, %p171
      %p173 = scmp.ne.s32.totalorder %s164, %s165
      %p174 = scmp.eq.s32.totalorder %s28, 0
      %p175 = por %p173, %p174
      %p176 = scmp.ne.s32.totalorder %s164, %s165
      %p177 = scmp.eq.s32.totalorder %s29, 1
      %p178 = por %p176, %p177
      %p180 = scmp.ne.s32.totalorder %s165, %s179
      %p181 = scmp.eq.s32.totalorder %s29, 0
      %p182 = por %p180, %p181
      %s183 = ssub.s32 %s23, %s30
      %p184 = scmp.eq.s32.totalorder %s183, 0
      %s186 = sadd.s32 %s185, 1
      %s187 = scalar_select %p184, %s185, %s186
      %p190 = pneg %p184
      %p191 = scmp.eq.s32.totalorder %s23, 1
      %p192 = por %p190, %p191
      %p193 = scmp.ne.s32.totalorder %s185, %s188
      %p194 = scmp.eq.s32.totalorder %s23, 0
      %p195 = por %p193, %p194
      %p196 = scmp.ne.s32.totalorder %s185, %s188
      %p197 = scmp.eq.s32.totalorder %s28, 1
      %p198 = por %p196, %p197
      %p199 = scmp.ne.s32.totalorder %s188, %s189
      %p200 = scmp.eq.s32.totalorder %s28, 0
      %p201 = por %p199, %p200
      %p202 = scmp.ne.s32.totalorder %s188, %s189
      %p203 = scmp.eq.s32.totalorder %s29, 1
      %p204 = por %p202, %p203
      %p206 = scmp.ne.s32.totalorder %s189, %s205
      %p207 = scmp.eq.s32.totalorder %s29, 0
      %p208 = por %p206, %p207
      %p209 = scmp.le.s32.totalorder 1, %s23
      %p210 = scmp.lt.s32.totalorder %s23, 3
      %p211 = pnand %p209, %p210
      %p212 = pneg %p211
      // Predicated region
      $region9: #{tpu_custom_call.1} parent=5 // pred_check
        _
      $region10: #{tpu_custom_call.1} parent=5 // pred_check_branch
        %214 = sbr.rel (%p211) target = $region12
      $region11: #{tpu_custom_call.1} parent=5 // pred_region
        %s215 = ssub.s32 %s23, 1
        // Predicated region
        $region13: #{tpu_custom_call.1} parent=11 // pred_check
          %p216 = pneg %p70
        $region14: #{tpu_custom_call.1} parent=11 // pred_check_branch
          %218 = sbr.rel (%p216) target = $region16
        $region15: #{tpu_custom_call.1} parent=11 // pred_region
          %220 = vsyncadd [#allocation7], 0
          %s221 = sshll.u32 %s1, 4
          %s222 = int_to_ptr.hbm [resolvable:$true] %s221
          %s223 = sshll.u32 [#allocation6], 4
          %s224 = int_to_ptr.vmem [resolvable:$true] %s223
          %229 = dma.hbm_to_vmem [thread:$0]  %s222, 8192, %s224, [#allocation7], 512, 512, 32
        $region16: #{tpu_custom_call.1} parent=11 // pred_fallthru
          _
        // Predicated region
        $region17: #{tpu_custom_call.1} parent=11 // pred_check
          %p230 = pneg %p91
        $region18: #{tpu_custom_call.1} parent=11 // pred_check_branch
          %232 = sbr.rel (%p230) target = $region20
        $region19: #{tpu_custom_call.1} parent=11 // pred_region
          %234 = vsyncadd [#allocation7], 0
          %s236 = sshll.u32 %s2, 4
          %s237 = int_to_ptr.hbm [resolvable:$true] %s236
          %s238 = sshll.u32 [#allocation8], 4
          %s239 = int_to_ptr.vmem [resolvable:$true] %s238
          %241 = dma.hbm_to_vmem [thread:$0]  %s237, 128, %s239, [#allocation7]
        $region20: #{tpu_custom_call.1} parent=11 // pred_fallthru
          _
        // Predicated region
        $region21: #{tpu_custom_call.1} parent=11 // pred_check
          %p242 = pneg %p112
        $region22: #{tpu_custom_call.1} parent=11 // pred_check_branch
          %244 = sbr.rel (%p242) target = $region24
        $region23: #{tpu_custom_call.1} parent=11 // pred_region
          %246 = vsyncadd [#allocation10], 0
          %s247 = sshll.u32 %s3, 4
          %s248 = int_to_ptr.hbm [resolvable:$true] %s247
          %s249 = sshll.u32 [#allocation9], 4
          %s250 = int_to_ptr.vmem [resolvable:$true] %s249
          %255 = dma.hbm_to_vmem [thread:$0]  %s248, 65536, %s250, [#allocation10], 512, 512, 32
        $region24: #{tpu_custom_call.1} parent=11 // pred_fallthru
          _
        // Predicated region
        $region25: #{tpu_custom_call.1} parent=11 // pred_check
          %p256 = pneg %p133
        $region26: #{tpu_custom_call.1} parent=11 // pred_check_branch
          %258 = sbr.rel (%p256) target = $region28
        $region27: #{tpu_custom_call.1} parent=11 // pred_region
          %260 = vsyncadd [#allocation10], 0
          %s262 = sshll.u32 %s4, 4
          %s263 = int_to_ptr.hbm [resolvable:$true] %s262
          %s264 = sshll.u32 [#allocation11], 4
          %s265 = int_to_ptr.vmem [resolvable:$true] %s264
          %267 = dma.hbm_to_vmem [thread:$0]  %s263, 128, %s265, [#allocation10]
        $region28: #{tpu_custom_call.1} parent=11 // pred_fallthru
          _
        // Predicated region
        $region29: #{tpu_custom_call.1} parent=11 // pred_check
          %p268 = pneg %p154
        $region30: #{tpu_custom_call.1} parent=11 // pred_check_branch
          %270 = sbr.rel (%p268) target = $region32
        $region31: #{tpu_custom_call.1} parent=11 // pred_region
          %272 = vsyncadd [#allocation13], 0
          %s273 = sshll.u32 %s5, 4
          %s274 = int_to_ptr.hbm [resolvable:$true] %s273
          %s275 = sshll.u32 [#allocation12], 4
          %s276 = int_to_ptr.vmem [resolvable:$true] %s275
          %281 = dma.hbm_to_vmem [thread:$0]  %s274, 8192, %s276, [#allocation13], 64, 64, 4
        $region32: #{tpu_custom_call.1} parent=11 // pred_fallthru
          _
        // Predicated region
        $region33: #{tpu_custom_call.1} parent=11 // pred_check
          %p282 = pneg %p175
        $region34: #{tpu_custom_call.1} parent=11 // pred_check_branch
          %284 = sbr.rel (%p282) target = $region36
        $region35: #{tpu_custom_call.1} parent=11 // pred_region
          _
        $region36: #{tpu_custom_call.1} parent=11 // pred_fallthru
          _
      $region12: #{tpu_custom_call.1} parent=5 // pred_fallthru
        _
      %p285 = scmp.lt.s32.totalorder %s23, 2
      // Predicated region
      $region37: #{tpu_custom_call.1} parent=5 // pred_check
        %p286 = pneg %p285
      $region38: #{tpu_custom_call.1} parent=5 // pred_check_branch
        %288 = sbr.rel (%p286) target = $region40
      $region39: #{tpu_custom_call.1} parent=5 // pred_region
        // Predicated region
        $region41: #{tpu_custom_call.1} parent=39 // pred_check
          %p289 = pneg %p43
        $region42: #{tpu_custom_call.1} parent=39 // pred_check_branch
          %291 = sbr.rel (%p289) target = $region44
        $region43: #{tpu_custom_call.1} parent=39 // pred_region
          %s292 = sand.u32 %s33, 1
          %s293 = scalar_lea.sflag [#allocation4], %s292
          %s294 = sand.u32 %s33, 1
          %s295 = smul.addr %s294, 128
          %s296 = scalar_lea.vmem [#allocation3], %s295
          %s297 = smul.u32 32, %s23
          %299 = vsyncadd %s293, 0
          %s300 = smul.addr %s297, 4
          %s301 = scalar_lea.hbm %s0, %s300
          %s302 = sshll.u32 %s301, 4
          %s303 = int_to_ptr.hbm [resolvable:$true] %s302
          %s304 = sshll.u32 %s296, 4
          %s305 = int_to_ptr.vmem [resolvable:$true] %s304
          %310 = dma.hbm_to_vmem [thread:$0]  %s303, 2048, %s305, %s293, 64, 64, 4
        $region44: #{tpu_custom_call.1} parent=39 // pred_fallthru
          _
      $region40: #{tpu_custom_call.1} parent=5 // pred_fallthru
        _
      %p311 = scmp.le.s32.totalorder 1, %s23
      %p312 = scmp.lt.s32.totalorder %s23, 3
      %p313 = pnand %p311, %p312
      %p314 = pneg %p313
      // Predicated region
      $region45: #{tpu_custom_call.1} parent=5 // pred_check
        _
      $region46: #{tpu_custom_call.1} parent=5 // pred_check_branch
        %316 = sbr.rel (%p313) target = $region48
      $region47: #{tpu_custom_call.1} parent=5 // pred_region
        %s317 = ssub.s32 %s23, 1
        %s318 = sand.u32 %s36, 1
        %s319 = scalar_lea.sflag [#allocation4], %s318
        %s320 = sand.u32 %s36, 1
        %s321 = smul.addr %s320, 128
        %s322 = scalar_lea.vmem [#allocation3], %s321
        // Predicated region
        $region49: #{tpu_custom_call.1} parent=47 // pred_check
          %p323 = pneg %p49
        $region50: #{tpu_custom_call.1} parent=47 // pred_check_branch
          %325 = sbr.rel (%p323) target = $region52
        $region51: #{tpu_custom_call.1} parent=47 // pred_region
          %327 = dma.done %s319, 2048
        $region52: #{tpu_custom_call.1} parent=47 // pred_fallthru
          _
        // Predicated region
        $region53: #{tpu_custom_call.1} parent=47 // pred_check
          %p328 = pneg %p70
        $region54: #{tpu_custom_call.1} parent=47 // pred_check_branch
          %330 = sbr.rel (%p328) target = $region56
        $region55: #{tpu_custom_call.1} parent=47 // pred_region
          %332 = dma.done [#allocation7], 8192
        $region56: #{tpu_custom_call.1} parent=47 // pred_fallthru
          _
        // Predicated region
        $region57: #{tpu_custom_call.1} parent=47 // pred_check
          %p333 = pneg %p91
        $region58: #{tpu_custom_call.1} parent=47 // pred_check_branch
          %335 = sbr.rel (%p333) target = $region60
        $region59: #{tpu_custom_call.1} parent=47 // pred_region
          %337 = dma.done [#allocation7], 128
        $region60: #{tpu_custom_call.1} parent=47 // pred_fallthru
          _
        // Predicated region
        $region61: #{tpu_custom_call.1} parent=47 // pred_check
          %p338 = pneg %p112
        $region62: #{tpu_custom_call.1} parent=47 // pred_check_branch
          %340 = sbr.rel (%p338) target = $region64
        $region63: #{tpu_custom_call.1} parent=47 // pred_region
          %342 = dma.done [#allocation10], 65536
        $region64: #{tpu_custom_call.1} parent=47 // pred_fallthru
          _
        // Predicated region
        $region65: #{tpu_custom_call.1} parent=47 // pred_check
          %p343 = pneg %p133
        $region66: #{tpu_custom_call.1} parent=47 // pred_check_branch
          %345 = sbr.rel (%p343) target = $region68
        $region67: #{tpu_custom_call.1} parent=47 // pred_region
          %347 = dma.done [#allocation10], 128
        $region68: #{tpu_custom_call.1} parent=47 // pred_fallthru
          _
        // Predicated region
        $region69: #{tpu_custom_call.1} parent=47 // pred_check
          %p348 = pneg %p154
        $region70: #{tpu_custom_call.1} parent=47 // pred_check_branch
          %350 = sbr.rel (%p348) target = $region72
        $region71: #{tpu_custom_call.1} parent=47 // pred_region
          %352 = dma.done [#allocation13], 8192
        $region72: #{tpu_custom_call.1} parent=47 // pred_fallthru
          _
        %s353 = sand.u32 %s36, 1
        %s354 = scalar_lea.sflag [#allocation4], %s353
        %s355 = sand.u32 %s36, 1
        %s356 = smul.addr %s355, 128
        %s357 = scalar_lea.vmem [#allocation3], %s356
        %p358 = pneg %p49
        %p359 = pneg %p46
        %p360 = pneg %p70
        %p361 = pneg %p67
        %p362 = pneg %p91
        %p363 = pneg %p88
        %p364 = pneg %p112
        %p365 = pneg %p109
        %p366 = pneg %p133
        %p367 = pneg %p130
        %p368 = pneg %p154
        %p369 = pneg %p151
        %p370 = pneg %p175
        %p371 = pneg %p172
        %p372 = pneg %p201
        %p373 = pneg %p198
        %s374 = sand.u32 %s188, 1
        %s375 = scalar_lea.sflag [#allocation5], %s374
        %s376 = sand.u32 %s188, 1
        %s377 = smul.addr %s376, 256
        %s378 = scalar_lea.vmem [#allocation14], %s377
        %s379 = smul.u32 32, %s28
        %s380 = smul.u32 32, %s28
        %v381 = vld [vmem:[%s322] sm:$0xf]
        %v382 = vld [vmem:[%s322 + $0x4] sm:$0xf]
        %v383 = vld [vmem:[%s322 + $0x8] sm:$0xf]
        %v384 = vld [vmem:[%s322 + $0xc] sm:$0xf]
        %v385 = vld [vmem:[%s322 + $0x10] sm:$0xf]
        %v386 = vld [vmem:[%s322 + $0x14] sm:$0xf]
        %v387 = vld [vmem:[%s322 + $0x18] sm:$0xf]
        %v388 = vld [vmem:[%s322 + $0x1c] sm:$0xf]
        %v389 = vld [vmem:[%s322 + $0x20] sm:$0xf]
        %v390 = vld [vmem:[%s322 + $0x24] sm:$0xf]
        %v391 = vld [vmem:[%s322 + $0x28] sm:$0xf]
        %v392 = vld [vmem:[%s322 + $0x2c] sm:$0xf]
        %v393 = vld [vmem:[%s322 + $0x30] sm:$0xf]
        %v394 = vld [vmem:[%s322 + $0x34] sm:$0xf]
        %v395 = vld [vmem:[%s322 + $0x38] sm:$0xf]
        %v396 = vld [vmem:[%s322 + $0x3c] sm:$0xf]
        %v397 = vld [vmem:[%s322 + $0x40] sm:$0xf]
        %v398 = vld [vmem:[%s322 + $0x44] sm:$0xf]
        %v399 = vld [vmem:[%s322 + $0x48] sm:$0xf]
        %v400 = vld [vmem:[%s322 + $0x4c] sm:$0xf]
        %v401 = vld [vmem:[%s322 + $0x50] sm:$0xf]
        %v402 = vld [vmem:[%s322 + $0x54] sm:$0xf]
        %v403 = vld [vmem:[%s322 + $0x58] sm:$0xf]
        %v404 = vld [vmem:[%s322 + $0x5c] sm:$0xf]
        %v405 = vld [vmem:[%s322 + $0x60] sm:$0xf]
        %v406 = vld [vmem:[%s322 + $0x64] sm:$0xf]
        %v407 = vld [vmem:[%s322 + $0x68] sm:$0xf]
        %v408 = vld [vmem:[%s322 + $0x6c] sm:$0xf]
        %v409 = vld [vmem:[%s322 + $0x70] sm:$0xf]
        %v410 = vld [vmem:[%s322 + $0x74] sm:$0xf]
        %v411 = vld [vmem:[%s322 + $0x78] sm:$0xf]
        %v412 = vld [vmem:[%s322 + $0x7c] sm:$0xf]
        %v413 = vld [vmem:[#allocation6] sm:$0xff]
        %v414 = vld [vmem:[#allocation6 + $0x8] sm:$0xff]
        %v415 = vld [vmem:[#allocation6 + $0x10] sm:$0xff]
        %v416 = vld [vmem:[#allocation6 + $0x18] sm:$0xff]
        %v417 = vld [vmem:[#allocation6 + $0x20] sm:$0xff]
        %v418 = vld [vmem:[#allocation6 + $0x28] sm:$0xff]
        %v419 = vld [vmem:[#allocation6 + $0x30] sm:$0xff]
        %v420 = vld [vmem:[#allocation6 + $0x38] sm:$0xff]
        %v421 = vld [vmem:[#allocation6 + $0x40] sm:$0xff]
        %v422 = vld [vmem:[#allocation6 + $0x48] sm:$0xff]
        %v423 = vld [vmem:[#allocation6 + $0x50] sm:$0xff]
        %v424 = vld [vmem:[#allocation6 + $0x58] sm:$0xff]
        %v425 = vld [vmem:[#allocation6 + $0x60] sm:$0xff]
        %v426 = vld [vmem:[#allocation6 + $0x68] sm:$0xff]
        %v427 = vld [vmem:[#allocation6 + $0x70] sm:$0xff]
        %v428 = vld [vmem:[#allocation6 + $0x78] sm:$0xff]
        %v429 = vld [vmem:[#allocation6 + $0x80] sm:$0xff]
        %v430 = vld [vmem:[#allocation6 + $0x88] sm:$0xff]
        %v431 = vld [vmem:[#allocation6 + $0x90] sm:$0xff]
        %v432 = vld [vmem:[#allocation6 + $0x98] sm:$0xff]
        %v433 = vld [vmem:[#allocation6 + $0xa0] sm:$0xff]
        %v434 = vld [vmem:[#allocation6 + $0xa8] sm:$0xff]
        %v435 = vld [vmem:[#allocation6 + $0xb0] sm:$0xff]
        %v436 = vld [vmem:[#allocation6 + $0xb8] sm:$0xff]
        %v437 = vld [vmem:[#allocation6 + $0xc0] sm:$0xff]
        %v438 = vld [vmem:[#allocation6 + $0xc8] sm:$0xff]
        %v439 = vld [vmem:[#allocation6 + $0xd0] sm:$0xff]
        %v440 = vld [vmem:[#allocation6 + $0xd8] sm:$0xff]
        %v441 = vld [vmem:[#allocation6 + $0xe0] sm:$0xff]
        %v442 = vld [vmem:[#allocation6 + $0xe8] sm:$0xff]
        %v443 = vld [vmem:[#allocation6 + $0xf0] sm:$0xff]
        %v444 = vld [vmem:[#allocation6 + $0xf8] sm:$0xff]
        %v445 = vld [vmem:[#allocation6 + $0x100] sm:$0xff]
        %v446 = vld [vmem:[#allocation6 + $0x108] sm:$0xff]
        %v447 = vld [vmem:[#allocation6 + $0x110] sm:$0xff]
        %v448 = vld [vmem:[#allocation6 + $0x118] sm:$0xff]
        %v449 = vld [vmem:[#allocation6 + $0x120] sm:$0xff]
        %v450 = vld [vmem:[#allocation6 + $0x128] sm:$0xff]
        %v451 = vld [vmem:[#allocation6 + $0x130] sm:$0xff]
        %v452 = vld [vmem:[#allocation6 + $0x138] sm:$0xff]
        %v453 = vld [vmem:[#allocation6 + $0x140] sm:$0xff]
        %v454 = vld [vmem:[#allocation6 + $0x148] sm:$0xff]
        %v455 = vld [vmem:[#allocation6 + $0x150] sm:$0xff]
        %v456 = vld [vmem:[#allocation6 + $0x158] sm:$0xff]
        %v457 = vld [vmem:[#allocation6 + $0x160] sm:$0xff]
        %v458 = vld [vmem:[#allocation6 + $0x168] sm:$0xff]
        %v459 = vld [vmem:[#allocation6 + $0x170] sm:$0xff]
        %v460 = vld [vmem:[#allocation6 + $0x178] sm:$0xff]
        %v461 = vld [vmem:[#allocation6 + $0x180] sm:$0xff]
        %v462 = vld [vmem:[#allocation6 + $0x188] sm:$0xff]
        %v463 = vld [vmem:[#allocation6 + $0x190] sm:$0xff]
        %v464 = vld [vmem:[#allocation6 + $0x198] sm:$0xff]
        %v465 = vld [vmem:[#allocation6 + $0x1a0] sm:$0xff]
        %v466 = vld [vmem:[#allocation6 + $0x1a8] sm:$0xff]
        %v467 = vld [vmem:[#allocation6 + $0x1b0] sm:$0xff]
        %v468 = vld [vmem:[#allocation6 + $0x1b8] sm:$0xff]
        %v469 = vld [vmem:[#allocation6 + $0x1c0] sm:$0xff]
        %v470 = vld [vmem:[#allocation6 + $0x1c8] sm:$0xff]
        %v471 = vld [vmem:[#allocation6 + $0x1d0] sm:$0xff]
        %v472 = vld [vmem:[#allocation6 + $0x1d8] sm:$0xff]
        %v473 = vld [vmem:[#allocation6 + $0x1e0] sm:$0xff]
        %v474 = vld [vmem:[#allocation6 + $0x1e8] sm:$0xff]
        %v475 = vld [vmem:[#allocation6 + $0x1f0] sm:$0xff]
        %v476 = vld [vmem:[#allocation6 + $0x1f8] sm:$0xff]
        %v477 = vld [vmem:[#allocation8] sm:$0xff]
        %v479 = vperm.slane %v477, 0
        %v480 = vperm.slane %v477, 1
        %v481 = vperm.slane %v477, 2
        %v482 = vperm.slane %v477, 3
        %v483 = vperm.slane %v477, 4
        %v484 = vperm.slane %v477, 5
        %v485 = vperm.slane %v477, 6
        %v486 = vperm.slane %v477, 7
        %v527 = vunpack.c.l.b16 %v381
        %v528 = vunpack.c.l.b16 %v382
        %v529 = vunpack.c.l.b16 %v383
        %v530 = vunpack.c.l.b16 %v384
        %v531 = vunpack.c.l.b16 %v385
        %v532 = vunpack.c.l.b16 %v386
        %v533 = vunpack.c.l.b16 %v387
        %v534 = vunpack.c.l.b16 %v388
        %v535 = vunpack.c.l.b16 %v389
        %v536 = vunpack.c.l.b16 %v390
        %v537 = vunpack.c.l.b16 %v391
        %v538 = vunpack.c.l.b16 %v392
        %v539 = vunpack.c.l.b16 %v393
        %v540 = vunpack.c.l.b16 %v394
        %v541 = vunpack.c.l.b16 %v395
        %v542 = vunpack.c.l.b16 %v396
        %v543 = vunpack.c.l.b16 %v397
        %v544 = vunpack.c.l.b16 %v398
        %v545 = vunpack.c.l.b16 %v399
        %v546 = vunpack.c.l.b16 %v400
        %v547 = vunpack.c.l.b16 %v401
        %v548 = vunpack.c.l.b16 %v402
        %v549 = vunpack.c.l.b16 %v403
        %v550 = vunpack.c.l.b16 %v404
        %v551 = vunpack.c.l.b16 %v405
        %v552 = vunpack.c.l.b16 %v406
        %v553 = vunpack.c.l.b16 %v407
        %v554 = vunpack.c.l.b16 %v408
        %v555 = vunpack.c.l.b16 %v409
        %v556 = vunpack.c.l.b16 %v410
        %v557 = vunpack.c.l.b16 %v411
        %v558 = vunpack.c.l.b16 %v412
        %v559 = vpack.c.b16 %v528, %v527
        %v560 = vpack.c.b16 %v530, %v529
        %v561 = vpack.c.b16 %v532, %v531
        %v562 = vpack.c.b16 %v534, %v533
        %v563 = vpack.c.b16 %v536, %v535
        %v564 = vpack.c.b16 %v538, %v537
        %v565 = vpack.c.b16 %v540, %v539
        %v566 = vpack.c.b16 %v542, %v541
        %v567 = vpack.c.b16 %v544, %v543
        %v568 = vpack.c.b16 %v546, %v545
        %v569 = vpack.c.b16 %v548, %v547
        %v570 = vpack.c.b16 %v550, %v549
        %v571 = vpack.c.b16 %v552, %v551
        %v572 = vpack.c.b16 %v554, %v553
        %v573 = vpack.c.b16 %v556, %v555
        %v574 = vpack.c.b16 %v558, %v557
        %v655 = vunpack.c.l.b16 %v413
        %v656 = vunpack.c.h.b16 %v413
        %v657 = vunpack.c.l.b16 %v414
        %v658 = vunpack.c.h.b16 %v414
        %v659 = vunpack.c.l.b16 %v415
        %v660 = vunpack.c.h.b16 %v415
        %v661 = vunpack.c.l.b16 %v416
        %v662 = vunpack.c.h.b16 %v416
        %v663 = vunpack.c.l.b16 %v417
        %v664 = vunpack.c.h.b16 %v417
        %v665 = vunpack.c.l.b16 %v418
        %v666 = vunpack.c.h.b16 %v418
        %v667 = vunpack.c.l.b16 %v419
        %v668 = vunpack.c.h.b16 %v419
        %v669 = vunpack.c.l.b16 %v420
        %v670 = vunpack.c.h.b16 %v420
        %v671 = vunpack.c.l.b16 %v421
        %v672 = vunpack.c.h.b16 %v421
        %v673 = vunpack.c.l.b16 %v422
        %v674 = vunpack.c.h.b16 %v422
        %v675 = vunpack.c.l.b16 %v423
        %v676 = vunpack.c.h.b16 %v423
        %v677 = vunpack.c.l.b16 %v424
        %v678 = vunpack.c.h.b16 %v424
        %v679 = vunpack.c.l.b16 %v425
        %v680 = vunpack.c.h.b16 %v425
        %v681 = vunpack.c.l.b16 %v426
        %v682 = vunpack.c.h.b16 %v426
        %v683 = vunpack.c.l.b16 %v427
        %v684 = vunpack.c.h.b16 %v427
        %v685 = vunpack.c.l.b16 %v428
        %v686 = vunpack.c.h.b16 %v428
        %v687 = vunpack.c.l.b16 %v429
        %v688 = vunpack.c.h.b16 %v429
        %v689 = vunpack.c.l.b16 %v430
        %v690 = vunpack.c.h.b16 %v430
        %v691 = vunpack.c.l.b16 %v431
        %v692 = vunpack.c.h.b16 %v431
        %v693 = vunpack.c.l.b16 %v432
        %v694 = vunpack.c.h.b16 %v432
        %v695 = vunpack.c.l.b16 %v433
        %v696 = vunpack.c.h.b16 %v433
        %v697 = vunpack.c.l.b16 %v434
        %v698 = vunpack.c.h.b16 %v434
        %v699 = vunpack.c.l.b16 %v435
        %v700 = vunpack.c.h.b16 %v435
        %v701 = vunpack.c.l.b16 %v436
        %v702 = vunpack.c.h.b16 %v436
        %v703 = vunpack.c.l.b16 %v437
        %v704 = vunpack.c.h.b16 %v437
        %v705 = vunpack.c.l.b16 %v438
        %v706 = vunpack.c.h.b16 %v438
        %v707 = vunpack.c.l.b16 %v439
        %v708 = vunpack.c.h.b16 %v439
        %v709 = vunpack.c.l.b16 %v440
        %v710 = vunpack.c.h.b16 %v440
        %v711 = vunpack.c.l.b16 %v441
        %v712 = vunpack.c.h.b16 %v441
        %v713 = vunpack.c.l.b16 %v442
        %v714 = vunpack.c.h.b16 %v442
        %v715 = vunpack.c.l.b16 %v443
        %v716 = vunpack.c.h.b16 %v443
        %v717 = vunpack.c.l.b16 %v444
        %v718 = vunpack.c.h.b16 %v444
        %v719 = vunpack.c.l.b16 %v445
        %v720 = vunpack.c.h.b16 %v445
        %v721 = vunpack.c.l.b16 %v446
        %v722 = vunpack.c.h.b16 %v446
        %v723 = vunpack.c.l.b16 %v447
        %v724 = vunpack.c.h.b16 %v447
        %v725 = vunpack.c.l.b16 %v448
        %v726 = vunpack.c.h.b16 %v448
        %v727 = vunpack.c.l.b16 %v449
        %v728 = vunpack.c.h.b16 %v449
        %v729 = vunpack.c.l.b16 %v450
        %v730 = vunpack.c.h.b16 %v450
        %v731 = vunpack.c.l.b16 %v451
        %v732 = vunpack.c.h.b16 %v451
        %v733 = vunpack.c.l.b16 %v452
        %v734 = vunpack.c.h.b16 %v452
        %v735 = vunpack.c.l.b16 %v453
        %v736 = vunpack.c.h.b16 %v453
        %v737 = vunpack.c.l.b16 %v454
        %v738 = vunpack.c.h.b16 %v454
        %v739 = vunpack.c.l.b16 %v455
        %v740 = vunpack.c.h.b16 %v455
        %v741 = vunpack.c.l.b16 %v456
        %v742 = vunpack.c.h.b16 %v456
        %v743 = vunpack.c.l.b16 %v457
        %v744 = vunpack.c.h.b16 %v457
        %v745 = vunpack.c.l.b16 %v458
        %v746 = vunpack.c.h.b16 %v458
        %v747 = vunpack.c.l.b16 %v459
        %v748 = vunpack.c.h.b16 %v459
        %v749 = vunpack.c.l.b16 %v460
        %v750 = vunpack.c.h.b16 %v460
        %v751 = vunpack.c.l.b16 %v461
        %v752 = vunpack.c.h.b16 %v461
        %v753 = vunpack.c.l.b16 %v462
        %v754 = vunpack.c.h.b16 %v462
        %v755 = vunpack.c.l.b16 %v463
        %v756 = vunpack.c.h.b16 %v463
        %v757 = vunpack.c.l.b16 %v464
        %v758 = vunpack.c.h.b16 %v464
        %v759 = vunpack.c.l.b16 %v465
        %v760 = vunpack.c.h.b16 %v465
        %v761 = vunpack.c.l.b16 %v466
        %v762 = vunpack.c.h.b16 %v466
        %v763 = vunpack.c.l.b16 %v467
        %v764 = vunpack.c.h.b16 %v467
        %v765 = vunpack.c.l.b16 %v468
        %v766 = vunpack.c.h.b16 %v468
        %v767 = vunpack.c.l.b16 %v469
        %v768 = vunpack.c.h.b16 %v469
        %v769 = vunpack.c.l.b16 %v470
        %v770 = vunpack.c.h.b16 %v470
        %v771 = vunpack.c.l.b16 %v471
        %v772 = vunpack.c.h.b16 %v471
        %v773 = vunpack.c.l.b16 %v472
        %v774 = vunpack.c.h.b16 %v472
        %v775 = vunpack.c.l.b16 %v473
        %v776 = vunpack.c.h.b16 %v473
        %v777 = vunpack.c.l.b16 %v474
        %v778 = vunpack.c.h.b16 %v474
        %v779 = vunpack.c.l.b16 %v475
        %v780 = vunpack.c.h.b16 %v475
        %v781 = vunpack.c.l.b16 %v476
        %v782 = vunpack.c.h.b16 %v476
        %v783 = vpack.c.b16 %v663, %v655
        %v784 = vpack.c.b16 %v664, %v656
        %v785 = vpack.c.b16 %v665, %v657
        %v786 = vpack.c.b16 %v666, %v658
        %v787 = vpack.c.b16 %v667, %v659
        %v788 = vpack.c.b16 %v668, %v660
        %v789 = vpack.c.b16 %v669, %v661
        %v790 = vpack.c.b16 %v670, %v662
        %v791 = vpack.c.b16 %v679, %v671
        %v792 = vpack.c.b16 %v680, %v672
        %v793 = vpack.c.b16 %v681, %v673
        %v794 = vpack.c.b16 %v682, %v674
        %v795 = vpack.c.b16 %v683, %v675
        %v796 = vpack.c.b16 %v684, %v676
        %v797 = vpack.c.b16 %v685, %v677
        %v798 = vpack.c.b16 %v686, %v678
        %v799 = vpack.c.b16 %v695, %v687
        %v800 = vpack.c.b16 %v696, %v688
        %v801 = vpack.c.b16 %v697, %v689
        %v802 = vpack.c.b16 %v698, %v690
        %v803 = vpack.c.b16 %v699, %v691
        %v804 = vpack.c.b16 %v700, %v692
        %v805 = vpack.c.b16 %v701, %v693
        %v806 = vpack.c.b16 %v702, %v694
        %v807 = vpack.c.b16 %v711, %v703
        %v808 = vpack.c.b16 %v712, %v704
        %v809 = vpack.c.b16 %v713, %v705
        %v810 = vpack.c.b16 %v714, %v706
        %v811 = vpack.c.b16 %v715, %v707
        %v812 = vpack.c.b16 %v716, %v708
        %v813 = vpack.c.b16 %v717, %v709
        %v814 = vpack.c.b16 %v718, %v710
        %v815 = vpack.c.b16 %v727, %v719
        %v816 = vpack.c.b16 %v728, %v720
        %v817 = vpack.c.b16 %v729, %v721
        %v818 = vpack.c.b16 %v730, %v722
        %v819 = vpack.c.b16 %v731, %v723
        %v820 = vpack.c.b16 %v732, %v724
        %v821 = vpack.c.b16 %v733, %v725
        %v822 = vpack.c.b16 %v734, %v726
        %v823 = vpack.c.b16 %v743, %v735
        %v824 = vpack.c.b16 %v744, %v736
        %v825 = vpack.c.b16 %v745, %v737
        %v826 = vpack.c.b16 %v746, %v738
        %v827 = vpack.c.b16 %v747, %v739
        %v828 = vpack.c.b16 %v748, %v740
        %v829 = vpack.c.b16 %v749, %v741
        %v830 = vpack.c.b16 %v750, %v742
        %v831 = vpack.c.b16 %v759, %v751
        %v832 = vpack.c.b16 %v760, %v752
        %v833 = vpack.c.b16 %v761, %v753
        %v834 = vpack.c.b16 %v762, %v754
        %v835 = vpack.c.b16 %v763, %v755
        %v836 = vpack.c.b16 %v764, %v756
        %v837 = vpack.c.b16 %v765, %v757
        %v838 = vpack.c.b16 %v766, %v758
        %v839 = vpack.c.b16 %v775, %v767
        %v840 = vpack.c.b16 %v776, %v768
        %v841 = vpack.c.b16 %v777, %v769
        %v842 = vpack.c.b16 %v778, %v770
        %v843 = vpack.c.b16 %v779, %v771
        %v844 = vpack.c.b16 %v780, %v772
        %v845 = vpack.c.b16 %v781, %v773
        %v846 = vpack.c.b16 %v782, %v774
        %911 = vmatpush.bf16.msra.mxu0 %v839
        %912 = vmatpush.bf16.msra.mxu0 %v831
        %913 = vmatpush.bf16.msra.mxu0 %v823
        %914 = vmatpush.bf16.msra.mxu0 %v815
        %915 = vmatpush.bf16.msra.mxu0 %v807
        %916 = vmatpush.bf16.msra.mxu0 %v799
        %917 = vmatpush.bf16.msra.mxu0 %v791
        %918 = vmatpush.bf16.msra.mxu0 %v783
        %919 = vmatmul.bf16.gmra.mxu0 %v559
        %v920 = vpop.f32.mrf.mxu0
        %v921 = vadd.f32 %v479, %v920
        %v922 = vpop.f32.mrf.mxu0
        %v923 = vadd.f32 %v479, %v922
        %924 = vmatmul.bf16.gmra.mxu0 %v560
        %v925 = vpop.f32.mrf.mxu0
        %v926 = vadd.f32 %v479, %v925
        %v927 = vpop.f32.mrf.mxu0
        %v928 = vadd.f32 %v479, %v927
        %929 = vmatmul.bf16.gmra.mxu0 %v561
        %v930 = vpop.f32.mrf.mxu0
        %v931 = vadd.f32 %v479, %v930
        %v932 = vpop.f32.mrf.mxu0
        %v933 = vadd.f32 %v479, %v932
        %934 = vmatmul.bf16.gmra.mxu0 %v562
        %v935 = vpop.f32.mrf.mxu0
        %v936 = vadd.f32 %v479, %v935
        %v937 = vpop.f32.mrf.mxu0
        %v938 = vadd.f32 %v479, %v937
        %939 = vmatmul.bf16.gmra.mxu0 %v563
        %v940 = vpop.f32.mrf.mxu0
        %v941 = vadd.f32 %v479, %v940
        %v942 = vpop.f32.mrf.mxu0
        %v943 = vadd.f32 %v479, %v942
        %944 = vmatmul.bf16.gmra.mxu0 %v564
        %v945 = vpop.f32.mrf.mxu0
        %v946 = vadd.f32 %v479, %v945
        %v947 = vpop.f32.mrf.mxu0
        %v948 = vadd.f32 %v479, %v947
        %949 = vmatmul.bf16.gmra.mxu0 %v565
        %v950 = vpop.f32.mrf.mxu0
        %v951 = vadd.f32 %v479, %v950
        %v952 = vpop.f32.mrf.mxu0
        %v953 = vadd.f32 %v479, %v952
        %954 = vmatmul.bf16.gmra.mxu0 %v566
        %v955 = vpop.f32.mrf.mxu0
        %v956 = vadd.f32 %v479, %v955
        %v957 = vpop.f32.mrf.mxu0
        %v958 = vadd.f32 %v479, %v957
        %959 = vmatmul.bf16.gmra.mxu0 %v567
        %v960 = vpop.f32.mrf.mxu0
        %v961 = vadd.f32 %v479, %v960
        %v962 = vpop.f32.mrf.mxu0
        %v963 = vadd.f32 %v479, %v962
        %964 = vmatmul.bf16.gmra.mxu0 %v568
        %v965 = vpop.f32.mrf.mxu0
        %v966 = vadd.f32 %v479, %v965
        %v967 = vpop.f32.mrf.mxu0
        %v968 = vadd.f32 %v479, %v967
        %969 = vmatmul.bf16.gmra.mxu0 %v569
        %v970 = vpop.f32.mrf.mxu0
        %v971 = vadd.f32 %v479, %v970
        %v972 = vpop.f32.mrf.mxu0
        %v973 = vadd.f32 %v479, %v972
        %974 = vmatmul.bf16.gmra.mxu0 %v570
        %v975 = vpop.f32.mrf.mxu0
        %v976 = vadd.f32 %v479, %v975
        %v977 = vpop.f32.mrf.mxu0
        %v978 = vadd.f32 %v479, %v977
        %979 = vmatmul.bf16.gmra.mxu0 %v571
        %v980 = vpop.f32.mrf.mxu0
        %v981 = vadd.f32 %v479, %v980
        %v982 = vpop.f32.mrf.mxu0
        %v983 = vadd.f32 %v479, %v982
        %984 = vmatmul.bf16.gmra.mxu0 %v572
        %v985 = vpop.f32.mrf.mxu0
        %v986 = vadd.f32 %v479, %v985
        %v987 = vpop.f32.mrf.mxu0
        %v988 = vadd.f32 %v479, %v987
        %989 = vmatmul.bf16.gmra.mxu0 %v573
        %v990 = vpop.f32.mrf.mxu0
        %v991 = vadd.f32 %v479, %v990
        %v992 = vpop.f32.mrf.mxu0
        %v993 = vadd.f32 %v479, %v992
        %994 = vmatmul.bf16.gmra.mxu0 %v574
        %v995 = vpop.f32.mrf.mxu0
        %v996 = vadd.f32 %v479, %v995
        %v997 = vpop.f32.mrf.mxu0
        %v998 = vadd.f32 %v479, %v997
        %999 = vdwg.mxu0
        %1000 = vmatpush.bf16.msra.mxu0 %v840
        %1001 = vmatpush.bf16.msra.mxu0 %v832
        %1002 = vmatpush.bf16.msra.mxu0 %v824
        %1003 = vmatpush.bf16.msra.mxu0 %v816
        %1004 = vmatpush.bf16.msra.mxu0 %v808
        %1005 = vmatpush.bf16.msra.mxu0 %v800
        %1006 = vmatpush.bf16.msra.mxu0 %v792
        %1007 = vmatpush.bf16.msra.mxu0 %v784
        %1008 = vmatmul.bf16.gmra.mxu0 %v559
        %v1009 = vpop.f32.mrf.mxu0
        %v1010 = vadd.f32 %v480, %v1009
        %v1011 = vpop.f32.mrf.mxu0
        %v1012 = vadd.f32 %v480, %v1011
        %1013 = vmatmul.bf16.gmra.mxu0 %v560
        %v1014 = vpop.f32.mrf.mxu0
        %v1015 = vadd.f32 %v480, %v1014
        %v1016 = vpop.f32.mrf.mxu0
        %v1017 = vadd.f32 %v480, %v1016
        %1018 = vmatmul.bf16.gmra.mxu0 %v561
        %v1019 = vpop.f32.mrf.mxu0
        %v1020 = vadd.f32 %v480, %v1019
        %v1021 = vpop.f32.mrf.mxu0
        %v1022 = vadd.f32 %v480, %v1021
        %1023 = vmatmul.bf16.gmra.mxu0 %v562
        %v1024 = vpop.f32.mrf.mxu0
        %v1025 = vadd.f32 %v480, %v1024
        %v1026 = vpop.f32.mrf.mxu0
        %v1027 = vadd.f32 %v480, %v1026
        %1028 = vmatmul.bf16.gmra.mxu0 %v563
        %v1029 = vpop.f32.mrf.mxu0
        %v1030 = vadd.f32 %v480, %v1029
        %v1031 = vpop.f32.mrf.mxu0
        %v1032 = vadd.f32 %v480, %v1031
        %1033 = vmatmul.bf16.gmra.mxu0 %v564
        %v1034 = vpop.f32.mrf.mxu0
        %v1035 = vadd.f32 %v480, %v1034
        %v1036 = vpop.f32.mrf.mxu0
        %v1037 = vadd.f32 %v480, %v1036
        %1038 = vmatmul.bf16.gmra.mxu0 %v565
        %v1039 = vpop.f32.mrf.mxu0
        %v1040 = vadd.f32 %v480, %v1039
        %v1041 = vpop.f32.mrf.mxu0
        %v1042 = vadd.f32 %v480, %v1041
        %1043 = vmatmul.bf16.gmra.mxu0 %v566
        %v1044 = vpop.f32.mrf.mxu0
        %v1045 = vadd.f32 %v480, %v1044
        %v1046 = vpop.f32.mrf.mxu0
        %v1047 = vadd.f32 %v480, %v1046
        %1048 = vmatmul.bf16.gmra.mxu0 %v567
        %v1049 = vpop.f32.mrf.mxu0
        %v1050 = vadd.f32 %v480, %v1049
        %v1051 = vpop.f32.mrf.mxu0
        %v1052 = vadd.f32 %v480, %v1051
        %1053 = vmatmul.bf16.gmra.mxu0 %v568
        %v1054 = vpop.f32.mrf.mxu0
        %v1055 = vadd.f32 %v480, %v1054
        %v1056 = vpop.f32.mrf.mxu0
        %v1057 = vadd.f32 %v480, %v1056
        %1058 = vmatmul.bf16.gmra.mxu0 %v569
        %v1059 = vpop.f32.mrf.mxu0
        %v1060 = vadd.f32 %v480, %v1059
        %v1061 = vpop.f32.mrf.mxu0
        %v1062 = vadd.f32 %v480, %v1061
        %1063 = vmatmul.bf16.gmra.mxu0 %v570
        %v1064 = vpop.f32.mrf.mxu0
        %v1065 = vadd.f32 %v480, %v1064
        %v1066 = vpop.f32.mrf.mxu0
        %v1067 = vadd.f32 %v480, %v1066
        %1068 = vmatmul.bf16.gmra.mxu0 %v571
        %v1069 = vpop.f32.mrf.mxu0
        %v1070 = vadd.f32 %v480, %v1069
        %v1071 = vpop.f32.mrf.mxu0
        %v1072 = vadd.f32 %v480, %v1071
        %1073 = vmatmul.bf16.gmra.mxu0 %v572
        %v1074 = vpop.f32.mrf.mxu0
        %v1075 = vadd.f32 %v480, %v1074
        %v1076 = vpop.f32.mrf.mxu0
        %v1077 = vadd.f32 %v480, %v1076
        %1078 = vmatmul.bf16.gmra.mxu0 %v573
        %v1079 = vpop.f32.mrf.mxu0
        %v1080 = vadd.f32 %v480, %v1079
        %v1081 = vpop.f32.mrf.mxu0
        %v1082 = vadd.f32 %v480, %v1081
        %1083 = vmatmul.bf16.gmra.mxu0 %v574
        %v1084 = vpop.f32.mrf.mxu0
        %v1085 = vadd.f32 %v480, %v1084
        %v1086 = vpop.f32.mrf.mxu0
        %v1087 = vadd.f32 %v480, %v1086
        %1088 = vdwg.mxu0
        %1089 = vmatpush.bf16.msra.mxu0 %v841
        %1090 = vmatpush.bf16.msra.mxu0 %v833
        %1091 = vmatpush.bf16.msra.mxu0 %v825
        %1092 = vmatpush.bf16.msra.mxu0 %v817
        %1093 = vmatpush.bf16.msra.mxu0 %v809
        %1094 = vmatpush.bf16.msra.mxu0 %v801
        %1095 = vmatpush.bf16.msra.mxu0 %v793
        %1096 = vmatpush.bf16.msra.mxu0 %v785
        %1097 = vmatmul.bf16.gmra.mxu0 %v559
        %v1098 = vpop.f32.mrf.mxu0
        %v1099 = vadd.f32 %v481, %v1098
        %v1100 = vpop.f32.mrf.mxu0
        %v1101 = vadd.f32 %v481, %v1100
        %1102 = vmatmul.bf16.gmra.mxu0 %v560
        %v1103 = vpop.f32.mrf.mxu0
        %v1104 = vadd.f32 %v481, %v1103
        %v1105 = vpop.f32.mrf.mxu0
        %v1106 = vadd.f32 %v481, %v1105
        %1107 = vmatmul.bf16.gmra.mxu0 %v561
        %v1108 = vpop.f32.mrf.mxu0
        %v1109 = vadd.f32 %v481, %v1108
        %v1110 = vpop.f32.mrf.mxu0
        %v1111 = vadd.f32 %v481, %v1110
        %1112 = vmatmul.bf16.gmra.mxu0 %v562
        %v1113 = vpop.f32.mrf.mxu0
        %v1114 = vadd.f32 %v481, %v1113
        %v1115 = vpop.f32.mrf.mxu0
        %v1116 = vadd.f32 %v481, %v1115
        %1117 = vmatmul.bf16.gmra.mxu0 %v563
        %v1118 = vpop.f32.mrf.mxu0
        %v1119 = vadd.f32 %v481, %v1118
        %v1120 = vpop.f32.mrf.mxu0
        %v1121 = vadd.f32 %v481, %v1120
        %1122 = vmatmul.bf16.gmra.mxu0 %v564
        %v1123 = vpop.f32.mrf.mxu0
        %v1124 = vadd.f32 %v481, %v1123
        %v1125 = vpop.f32.mrf.mxu0
        %v1126 = vadd.f32 %v481, %v1125
        %1127 = vmatmul.bf16.gmra.mxu0 %v565
        %v1128 = vpop.f32.mrf.mxu0
        %v1129 = vadd.f32 %v481, %v1128
        %v1130 = vpop.f32.mrf.mxu0
        %v1131 = vadd.f32 %v481, %v1130
        %1132 = vmatmul.bf16.gmra.mxu0 %v566
        %v1133 = vpop.f32.mrf.mxu0
        %v1134 = vadd.f32 %v481, %v1133
        %v1135 = vpop.f32.mrf.mxu0
        %v1136 = vadd.f32 %v481, %v1135
        %1137 = vmatmul.bf16.gmra.mxu0 %v567
        %v1138 = vpop.f32.mrf.mxu0
        %v1139 = vadd.f32 %v481, %v1138
        %v1140 = vpop.f32.mrf.mxu0
        %v1141 = vadd.f32 %v481, %v1140
        %1142 = vmatmul.bf16.gmra.mxu0 %v568
        %v1143 = vpop.f32.mrf.mxu0
        %v1144 = vadd.f32 %v481, %v1143
        %v1145 = vpop.f32.mrf.mxu0
        %v1146 = vadd.f32 %v481, %v1145
        %1147 = vmatmul.bf16.gmra.mxu0 %v569
        %v1148 = vpop.f32.mrf.mxu0
        %v1149 = vadd.f32 %v481, %v1148
        %v1150 = vpop.f32.mrf.mxu0
        %v1151 = vadd.f32 %v481, %v1150
        %1152 = vmatmul.bf16.gmra.mxu0 %v570
        %v1153 = vpop.f32.mrf.mxu0
        %v1154 = vadd.f32 %v481, %v1153
        %v1155 = vpop.f32.mrf.mxu0
        %v1156 = vadd.f32 %v481, %v1155
        %1157 = vmatmul.bf16.gmra.mxu0 %v571
        %v1158 = vpop.f32.mrf.mxu0
        %v1159 = vadd.f32 %v481, %v1158
        %v1160 = vpop.f32.mrf.mxu0
        %v1161 = vadd.f32 %v481, %v1160
        %1162 = vmatmul.bf16.gmra.mxu0 %v572
        %v1163 = vpop.f32.mrf.mxu0
        %v1164 = vadd.f32 %v481, %v1163
        %v1165 = vpop.f32.mrf.mxu0
        %v1166 = vadd.f32 %v481, %v1165
        %1167 = vmatmul.bf16.gmra.mxu0 %v573
        %v1168 = vpop.f32.mrf.mxu0
        %v1169 = vadd.f32 %v481, %v1168
        %v1170 = vpop.f32.mrf.mxu0
        %v1171 = vadd.f32 %v481, %v1170
        %1172 = vmatmul.bf16.gmra.mxu0 %v574
        %v1173 = vpop.f32.mrf.mxu0
        %v1174 = vadd.f32 %v481, %v1173
        %v1175 = vpop.f32.mrf.mxu0
        %v1176 = vadd.f32 %v481, %v1175
        %1177 = vdwg.mxu0
        %1178 = vmatpush.bf16.msra.mxu0 %v842
        %1179 = vmatpush.bf16.msra.mxu0 %v834
        %1180 = vmatpush.bf16.msra.mxu0 %v826
        %1181 = vmatpush.bf16.msra.mxu0 %v818
        %1182 = vmatpush.bf16.msra.mxu0 %v810
        %1183 = vmatpush.bf16.msra.mxu0 %v802
        %1184 = vmatpush.bf16.msra.mxu0 %v794
        %1185 = vmatpush.bf16.msra.mxu0 %v786
        %1186 = vmatmul.bf16.gmra.mxu0 %v559
        %v1187 = vpop.f32.mrf.mxu0
        %v1188 = vadd.f32 %v482, %v1187
        %v1189 = vpop.f32.mrf.mxu0
        %v1190 = vadd.f32 %v482, %v1189
        %1191 = vmatmul.bf16.gmra.mxu0 %v560
        %v1192 = vpop.f32.mrf.mxu0
        %v1193 = vadd.f32 %v482, %v1192
        %v1194 = vpop.f32.mrf.mxu0
        %v1195 = vadd.f32 %v482, %v1194
        %1196 = vmatmul.bf16.gmra.mxu0 %v561
        %v1197 = vpop.f32.mrf.mxu0
        %v1198 = vadd.f32 %v482, %v1197
        %v1199 = vpop.f32.mrf.mxu0
        %v1200 = vadd.f32 %v482, %v1199
        %1201 = vmatmul.bf16.gmra.mxu0 %v562
        %v1202 = vpop.f32.mrf.mxu0
        %v1203 = vadd.f32 %v482, %v1202
        %v1204 = vpop.f32.mrf.mxu0
        %v1205 = vadd.f32 %v482, %v1204
        %1206 = vmatmul.bf16.gmra.mxu0 %v563
        %v1207 = vpop.f32.mrf.mxu0
        %v1208 = vadd.f32 %v482, %v1207
        %v1209 = vpop.f32.mrf.mxu0
        %v1210 = vadd.f32 %v482, %v1209
        %1211 = vmatmul.bf16.gmra.mxu0 %v564
        %v1212 = vpop.f32.mrf.mxu0
        %v1213 = vadd.f32 %v482, %v1212
        %v1214 = vpop.f32.mrf.mxu0
        %v1215 = vadd.f32 %v482, %v1214
        %1216 = vmatmul.bf16.gmra.mxu0 %v565
        %v1217 = vpop.f32.mrf.mxu0
        %v1218 = vadd.f32 %v482, %v1217
        %v1219 = vpop.f32.mrf.mxu0
        %v1220 = vadd.f32 %v482, %v1219
        %1221 = vmatmul.bf16.gmra.mxu0 %v566
        %v1222 = vpop.f32.mrf.mxu0
        %v1223 = vadd.f32 %v482, %v1222
        %v1224 = vpop.f32.mrf.mxu0
        %v1225 = vadd.f32 %v482, %v1224
        %1226 = vmatmul.bf16.gmra.mxu0 %v567
        %v1227 = vpop.f32.mrf.mxu0
        %v1228 = vadd.f32 %v482, %v1227
        %v1229 = vpop.f32.mrf.mxu0
        %v1230 = vadd.f32 %v482, %v1229
        %1231 = vmatmul.bf16.gmra.mxu0 %v568
        %v1232 = vpop.f32.mrf.mxu0
        %v1233 = vadd.f32 %v482, %v1232
        %v1234 = vpop.f32.mrf.mxu0
        %v1235 = vadd.f32 %v482, %v1234
        %1236 = vmatmul.bf16.gmra.mxu0 %v569
        %v1237 = vpop.f32.mrf.mxu0
        %v1238 = vadd.f32 %v482, %v1237
        %v1239 = vpop.f32.mrf.mxu0
        %v1240 = vadd.f32 %v482, %v1239
        %1241 = vmatmul.bf16.gmra.mxu0 %v570
        %v1242 = vpop.f32.mrf.mxu0
        %v1243 = vadd.f32 %v482, %v1242
        %v1244 = vpop.f32.mrf.mxu0
        %v1245 = vadd.f32 %v482, %v1244
        %1246 = vmatmul.bf16.gmra.mxu0 %v571
        %v1247 = vpop.f32.mrf.mxu0
        %v1248 = vadd.f32 %v482, %v1247
        %v1249 = vpop.f32.mrf.mxu0
        %v1250 = vadd.f32 %v482, %v1249
        %1251 = vmatmul.bf16.gmra.mxu0 %v572
        %v1252 = vpop.f32.mrf.mxu0
        %v1253 = vadd.f32 %v482, %v1252
        %v1254 = vpop.f32.mrf.mxu0
        %v1255 = vadd.f32 %v482, %v1254
        %1256 = vmatmul.bf16.gmra.mxu0 %v573
        %v1257 = vpop.f32.mrf.mxu0
        %v1258 = vadd.f32 %v482, %v1257
        %v1259 = vpop.f32.mrf.mxu0
        %v1260 = vadd.f32 %v482, %v1259
        %1261 = vmatmul.bf16.gmra.mxu0 %v574
        %v1262 = vpop.f32.mrf.mxu0
        %v1263 = vadd.f32 %v482, %v1262
        %v1264 = vpop.f32.mrf.mxu0
        %v1265 = vadd.f32 %v482, %v1264
        %1266 = vdwg.mxu0
        %1267 = vmatpush.bf16.msra.mxu0 %v843
        %1268 = vmatpush.bf16.msra.mxu0 %v835
        %1269 = vmatpush.bf16.msra.mxu0 %v827
        %1270 = vmatpush.bf16.msra.mxu0 %v819
        %1271 = vmatpush.bf16.msra.mxu0 %v811
        %1272 = vmatpush.bf16.msra.mxu0 %v803
        %1273 = vmatpush.bf16.msra.mxu0 %v795
        %1274 = vmatpush.bf16.msra.mxu0 %v787
        %1275 = vmatmul.bf16.gmra.mxu0 %v559
        %v1276 = vpop.f32.mrf.mxu0
        %v1277 = vadd.f32 %v483, %v1276
        %v1278 = vpop.f32.mrf.mxu0
        %v1279 = vadd.f32 %v483, %v1278
        %1280 = vmatmul.bf16.gmra.mxu0 %v560
        %v1281 = vpop.f32.mrf.mxu0
        %v1282 = vadd.f32 %v483, %v1281
        %v1283 = vpop.f32.mrf.mxu0
        %v1284 = vadd.f32 %v483, %v1283
        %1285 = vmatmul.bf16.gmra.mxu0 %v561
        %v1286 = vpop.f32.mrf.mxu0
        %v1287 = vadd.f32 %v483, %v1286
        %v1288 = vpop.f32.mrf.mxu0
        %v1289 = vadd.f32 %v483, %v1288
        %1290 = vmatmul.bf16.gmra.mxu0 %v562
        %v1291 = vpop.f32.mrf.mxu0
        %v1292 = vadd.f32 %v483, %v1291
        %v1293 = vpop.f32.mrf.mxu0
        %v1294 = vadd.f32 %v483, %v1293
        %1295 = vmatmul.bf16.gmra.mxu0 %v563
        %v1296 = vpop.f32.mrf.mxu0
        %v1297 = vadd.f32 %v483, %v1296
        %v1298 = vpop.f32.mrf.mxu0
        %v1299 = vadd.f32 %v483, %v1298
        %1300 = vmatmul.bf16.gmra.mxu0 %v564
        %v1301 = vpop.f32.mrf.mxu0
        %v1302 = vadd.f32 %v483, %v1301
        %v1303 = vpop.f32.mrf.mxu0
        %v1304 = vadd.f32 %v483, %v1303
        %1305 = vmatmul.bf16.gmra.mxu0 %v565
        %v1306 = vpop.f32.mrf.mxu0
        %v1307 = vadd.f32 %v483, %v1306
        %v1308 = vpop.f32.mrf.mxu0
        %v1309 = vadd.f32 %v483, %v1308
        %1310 = vmatmul.bf16.gmra.mxu0 %v566
        %v1311 = vpop.f32.mrf.mxu0
        %v1312 = vadd.f32 %v483, %v1311
        %v1313 = vpop.f32.mrf.mxu0
        %v1314 = vadd.f32 %v483, %v1313
        %1315 = vmatmul.bf16.gmra.mxu0 %v567
        %v1316 = vpop.f32.mrf.mxu0
        %v1317 = vadd.f32 %v483, %v1316
        %v1318 = vpop.f32.mrf.mxu0
        %v1319 = vadd.f32 %v483, %v1318
        %1320 = vmatmul.bf16.gmra.mxu0 %v568
        %v1321 = vpop.f32.mrf.mxu0
        %v1322 = vadd.f32 %v483, %v1321
        %v1323 = vpop.f32.mrf.mxu0
        %v1324 = vadd.f32 %v483, %v1323
        %1325 = vmatmul.bf16.gmra.mxu0 %v569
        %v1326 = vpop.f32.mrf.mxu0
        %v1327 = vadd.f32 %v483, %v1326
        %v1328 = vpop.f32.mrf.mxu0
        %v1329 = vadd.f32 %v483, %v1328
        %1330 = vmatmul.bf16.gmra.mxu0 %v570
        %v1331 = vpop.f32.mrf.mxu0
        %v1332 = vadd.f32 %v483, %v1331
        %v1333 = vpop.f32.mrf.mxu0
        %v1334 = vadd.f32 %v483, %v1333
        %1335 = vmatmul.bf16.gmra.mxu0 %v571
        %v1336 = vpop.f32.mrf.mxu0
        %v1337 = vadd.f32 %v483, %v1336
        %v1338 = vpop.f32.mrf.mxu0
        %v1339 = vadd.f32 %v483, %v1338
        %1340 = vmatmul.bf16.gmra.mxu0 %v572
        %v1341 = vpop.f32.mrf.mxu0
        %v1342 = vadd.f32 %v483, %v1341
        %v1343 = vpop.f32.mrf.mxu0
        %v1344 = vadd.f32 %v483, %v1343
        %1345 = vmatmul.bf16.gmra.mxu0 %v573
        %v1346 = vpop.f32.mrf.mxu0
        %v1347 = vadd.f32 %v483, %v1346
        %v1348 = vpop.f32.mrf.mxu0
        %v1349 = vadd.f32 %v483, %v1348
        %1350 = vmatmul.bf16.gmra.mxu0 %v574
        %v1351 = vpop.f32.mrf.mxu0
        %v1352 = vadd.f32 %v483, %v1351
        %v1353 = vpop.f32.mrf.mxu0
        %v1354 = vadd.f32 %v483, %v1353
        %1355 = vdwg.mxu0
        %1356 = vmatpush.bf16.msra.mxu0 %v844
        %1357 = vmatpush.bf16.msra.mxu0 %v836
        %1358 = vmatpush.bf16.msra.mxu0 %v828
        %1359 = vmatpush.bf16.msra.mxu0 %v820
        %1360 = vmatpush.bf16.msra.mxu0 %v812
        %1361 = vmatpush.bf16.msra.mxu0 %v804
        %1362 = vmatpush.bf16.msra.mxu0 %v796
        %1363 = vmatpush.bf16.msra.mxu0 %v788
        %1364 = vmatmul.bf16.gmra.mxu0 %v559
        %v1365 = vpop.f32.mrf.mxu0
        %v1366 = vadd.f32 %v484, %v1365
        %v1367 = vpop.f32.mrf.mxu0
        %v1368 = vadd.f32 %v484, %v1367
        %1369 = vmatmul.bf16.gmra.mxu0 %v560
        %v1370 = vpop.f32.mrf.mxu0
        %v1371 = vadd.f32 %v484, %v1370
        %v1372 = vpop.f32.mrf.mxu0
        %v1373 = vadd.f32 %v484, %v1372
        %1374 = vmatmul.bf16.gmra.mxu0 %v561
        %v1375 = vpop.f32.mrf.mxu0
        %v1376 = vadd.f32 %v484, %v1375
        %v1377 = vpop.f32.mrf.mxu0
        %v1378 = vadd.f32 %v484, %v1377
        %1379 = vmatmul.bf16.gmra.mxu0 %v562
        %v1380 = vpop.f32.mrf.mxu0
        %v1381 = vadd.f32 %v484, %v1380
        %v1382 = vpop.f32.mrf.mxu0
        %v1383 = vadd.f32 %v484, %v1382
        %1384 = vmatmul.bf16.gmra.mxu0 %v563
        %v1385 = vpop.f32.mrf.mxu0
        %v1386 = vadd.f32 %v484, %v1385
        %v1387 = vpop.f32.mrf.mxu0
        %v1388 = vadd.f32 %v484, %v1387
        %1389 = vmatmul.bf16.gmra.mxu0 %v564
        %v1390 = vpop.f32.mrf.mxu0
        %v1391 = vadd.f32 %v484, %v1390
        %v1392 = vpop.f32.mrf.mxu0
        %v1393 = vadd.f32 %v484, %v1392
        %1394 = vmatmul.bf16.gmra.mxu0 %v565
        %v1395 = vpop.f32.mrf.mxu0
        %v1396 = vadd.f32 %v484, %v1395
        %v1397 = vpop.f32.mrf.mxu0
        %v1398 = vadd.f32 %v484, %v1397
        %1399 = vmatmul.bf16.gmra.mxu0 %v566
        %v1400 = vpop.f32.mrf.mxu0
        %v1401 = vadd.f32 %v484, %v1400
        %v1402 = vpop.f32.mrf.mxu0
        %v1403 = vadd.f32 %v484, %v1402
        %1404 = vmatmul.bf16.gmra.mxu0 %v567
        %v1405 = vpop.f32.mrf.mxu0
        %v1406 = vadd.f32 %v484, %v1405
        %v1407 = vpop.f32.mrf.mxu0
        %v1408 = vadd.f32 %v484, %v1407
        %1409 = vmatmul.bf16.gmra.mxu0 %v568
        %v1410 = vpop.f32.mrf.mxu0
        %v1411 = vadd.f32 %v484, %v1410
        %v1412 = vpop.f32.mrf.mxu0
        %v1413 = vadd.f32 %v484, %v1412
        %1414 = vmatmul.bf16.gmra.mxu0 %v569
        %v1415 = vpop.f32.mrf.mxu0
        %v1416 = vadd.f32 %v484, %v1415
        %v1417 = vpop.f32.mrf.mxu0
        %v1418 = vadd.f32 %v484, %v1417
        %1419 = vmatmul.bf16.gmra.mxu0 %v570
        %v1420 = vpop.f32.mrf.mxu0
        %v1421 = vadd.f32 %v484, %v1420
        %v1422 = vpop.f32.mrf.mxu0
        %v1423 = vadd.f32 %v484, %v1422
        %1424 = vmatmul.bf16.gmra.mxu0 %v571
        %v1425 = vpop.f32.mrf.mxu0
        %v1426 = vadd.f32 %v484, %v1425
        %v1427 = vpop.f32.mrf.mxu0
        %v1428 = vadd.f32 %v484, %v1427
        %1429 = vmatmul.bf16.gmra.mxu0 %v572
        %v1430 = vpop.f32.mrf.mxu0
        %v1431 = vadd.f32 %v484, %v1430
        %v1432 = vpop.f32.mrf.mxu0
        %v1433 = vadd.f32 %v484, %v1432
        %1434 = vmatmul.bf16.gmra.mxu0 %v573
        %v1435 = vpop.f32.mrf.mxu0
        %v1436 = vadd.f32 %v484, %v1435
        %v1437 = vpop.f32.mrf.mxu0
        %v1438 = vadd.f32 %v484, %v1437
        %1439 = vmatmul.bf16.gmra.mxu0 %v574
        %v1440 = vpop.f32.mrf.mxu0
        %v1441 = vadd.f32 %v484, %v1440
        %v1442 = vpop.f32.mrf.mxu0
        %v1443 = vadd.f32 %v484, %v1442
        %1444 = vdwg.mxu0
        %1445 = vmatpush.bf16.msra.mxu0 %v845
        %1446 = vmatpush.bf16.msra.mxu0 %v837
        %1447 = vmatpush.bf16.msra.mxu0 %v829
        %1448 = vmatpush.bf16.msra.mxu0 %v821
        %1449 = vmatpush.bf16.msra.mxu0 %v813
        %1450 = vmatpush.bf16.msra.mxu0 %v805
        %1451 = vmatpush.bf16.msra.mxu0 %v797
        %1452 = vmatpush.bf16.msra.mxu0 %v789
        %1453 = vmatmul.bf16.gmra.mxu0 %v559
        %v1454 = vpop.f32.mrf.mxu0
        %v1455 = vadd.f32 %v485, %v1454
        %v1456 = vpop.f32.mrf.mxu0
        %v1457 = vadd.f32 %v485, %v1456
        %1458 = vmatmul.bf16.gmra.mxu0 %v560
        %v1459 = vpop.f32.mrf.mxu0
        %v1460 = vadd.f32 %v485, %v1459
        %v1461 = vpop.f32.mrf.mxu0
        %v1462 = vadd.f32 %v485, %v1461
        %1463 = vmatmul.bf16.gmra.mxu0 %v561
        %v1464 = vpop.f32.mrf.mxu0
        %v1465 = vadd.f32 %v485, %v1464
        %v1466 = vpop.f32.mrf.mxu0
        %v1467 = vadd.f32 %v485, %v1466
        %1468 = vmatmul.bf16.gmra.mxu0 %v562
        %v1469 = vpop.f32.mrf.mxu0
        %v1470 = vadd.f32 %v485, %v1469
        %v1471 = vpop.f32.mrf.mxu0
        %v1472 = vadd.f32 %v485, %v1471
        %1473 = vmatmul.bf16.gmra.mxu0 %v563
        %v1474 = vpop.f32.mrf.mxu0
        %v1475 = vadd.f32 %v485, %v1474
        %v1476 = vpop.f32.mrf.mxu0
        %v1477 = vadd.f32 %v485, %v1476
        %1478 = vmatmul.bf16.gmra.mxu0 %v564
        %v1479 = vpop.f32.mrf.mxu0
        %v1480 = vadd.f32 %v485, %v1479
        %v1481 = vpop.f32.mrf.mxu0
        %v1482 = vadd.f32 %v485, %v1481
        %1483 = vmatmul.bf16.gmra.mxu0 %v565
        %v1484 = vpop.f32.mrf.mxu0
        %v1485 = vadd.f32 %v485, %v1484
        %v1486 = vpop.f32.mrf.mxu0
        %v1487 = vadd.f32 %v485, %v1486
        %1488 = vmatmul.bf16.gmra.mxu0 %v566
        %v1489 = vpop.f32.mrf.mxu0
        %v1490 = vadd.f32 %v485, %v1489
        %v1491 = vpop.f32.mrf.mxu0
        %v1492 = vadd.f32 %v485, %v1491
        %1493 = vmatmul.bf16.gmra.mxu0 %v567
        %v1494 = vpop.f32.mrf.mxu0
        %v1495 = vadd.f32 %v485, %v1494
        %v1496 = vpop.f32.mrf.mxu0
        %v1497 = vadd.f32 %v485, %v1496
        %1498 = vmatmul.bf16.gmra.mxu0 %v568
        %v1499 = vpop.f32.mrf.mxu0
        %v1500 = vadd.f32 %v485, %v1499
        %v1501 = vpop.f32.mrf.mxu0
        %v1502 = vadd.f32 %v485, %v1501
        %1503 = vmatmul.bf16.gmra.mxu0 %v569
        %v1504 = vpop.f32.mrf.mxu0
        %v1505 = vadd.f32 %v485, %v1504
        %v1506 = vpop.f32.mrf.mxu0
        %v1507 = vadd.f32 %v485, %v1506
        %1508 = vmatmul.bf16.gmra.mxu0 %v570
        %v1509 = vpop.f32.mrf.mxu0
        %v1510 = vadd.f32 %v485, %v1509
        %v1511 = vpop.f32.mrf.mxu0
        %v1512 = vadd.f32 %v485, %v1511
        %1513 = vmatmul.bf16.gmra.mxu0 %v571
        %v1514 = vpop.f32.mrf.mxu0
        %v1515 = vadd.f32 %v485, %v1514
        %v1516 = vpop.f32.mrf.mxu0
        %v1517 = vadd.f32 %v485, %v1516
        %1518 = vmatmul.bf16.gmra.mxu0 %v572
        %v1519 = vpop.f32.mrf.mxu0
        %v1520 = vadd.f32 %v485, %v1519
        %v1521 = vpop.f32.mrf.mxu0
        %v1522 = vadd.f32 %v485, %v1521
        %1523 = vmatmul.bf16.gmra.mxu0 %v573
        %v1524 = vpop.f32.mrf.mxu0
        %v1525 = vadd.f32 %v485, %v1524
        %v1526 = vpop.f32.mrf.mxu0
        %v1527 = vadd.f32 %v485, %v1526
        %1528 = vmatmul.bf16.gmra.mxu0 %v574
        %v1529 = vpop.f32.mrf.mxu0
        %v1530 = vadd.f32 %v485, %v1529
        %v1531 = vpop.f32.mrf.mxu0
        %v1532 = vadd.f32 %v485, %v1531
        %1533 = vdwg.mxu0
        %1534 = vmatpush.bf16.msra.mxu0 %v846
        %1535 = vmatpush.bf16.msra.mxu0 %v838
        %1536 = vmatpush.bf16.msra.mxu0 %v830
        %1537 = vmatpush.bf16.msra.mxu0 %v822
        %1538 = vmatpush.bf16.msra.mxu0 %v814
        %1539 = vmatpush.bf16.msra.mxu0 %v806
        %1540 = vmatpush.bf16.msra.mxu0 %v798
        %1541 = vmatpush.bf16.msra.mxu0 %v790
        %1542 = vmatmul.bf16.gmra.mxu0 %v559
        %v1543 = vpop.f32.mrf.mxu0
        %v1544 = vadd.f32 %v486, %v1543
        %v1545 = vpop.f32.mrf.mxu0
        %v1546 = vadd.f32 %v486, %v1545
        %1547 = vmatmul.bf16.gmra.mxu0 %v560
        %v1548 = vpop.f32.mrf.mxu0
        %v1549 = vadd.f32 %v486, %v1548
        %v1550 = vpop.f32.mrf.mxu0
        %v1551 = vadd.f32 %v486, %v1550
        %1552 = vmatmul.bf16.gmra.mxu0 %v561
        %v1553 = vpop.f32.mrf.mxu0
        %v1554 = vadd.f32 %v486, %v1553
        %v1555 = vpop.f32.mrf.mxu0
        %v1556 = vadd.f32 %v486, %v1555
        %1557 = vmatmul.bf16.gmra.mxu0 %v562
        %v1558 = vpop.f32.mrf.mxu0
        %v1559 = vadd.f32 %v486, %v1558
        %v1560 = vpop.f32.mrf.mxu0
        %v1561 = vadd.f32 %v486, %v1560
        %1562 = vmatmul.bf16.gmra.mxu0 %v563
        %v1563 = vpop.f32.mrf.mxu0
        %v1564 = vadd.f32 %v486, %v1563
        %v1565 = vpop.f32.mrf.mxu0
        %v1566 = vadd.f32 %v486, %v1565
        %1567 = vmatmul.bf16.gmra.mxu0 %v564
        %v1568 = vpop.f32.mrf.mxu0
        %v1569 = vadd.f32 %v486, %v1568
        %v1570 = vpop.f32.mrf.mxu0
        %v1571 = vadd.f32 %v486, %v1570
        %1572 = vmatmul.bf16.gmra.mxu0 %v565
        %v1573 = vpop.f32.mrf.mxu0
        %v1574 = vadd.f32 %v486, %v1573
        %v1575 = vpop.f32.mrf.mxu0
        %v1576 = vadd.f32 %v486, %v1575
        %1577 = vmatmul.bf16.gmra.mxu0 %v566
        %v1578 = vpop.f32.mrf.mxu0
        %v1579 = vadd.f32 %v486, %v1578
        %v1580 = vpop.f32.mrf.mxu0
        %v1581 = vadd.f32 %v486, %v1580
        %1582 = vmatmul.bf16.gmra.mxu0 %v567
        %v1583 = vpop.f32.mrf.mxu0
        %v1584 = vadd.f32 %v486, %v1583
        %v1585 = vpop.f32.mrf.mxu0
        %v1586 = vadd.f32 %v486, %v1585
        %1587 = vmatmul.bf16.gmra.mxu0 %v568
        %v1588 = vpop.f32.mrf.mxu0
        %v1589 = vadd.f32 %v486, %v1588
        %v1590 = vpop.f32.mrf.mxu0
        %v1591 = vadd.f32 %v486, %v1590
        %1592 = vmatmul.bf16.gmra.mxu0 %v569
        %v1593 = vpop.f32.mrf.mxu0
        %v1594 = vadd.f32 %v486, %v1593
        %v1595 = vpop.f32.mrf.mxu0
        %v1596 = vadd.f32 %v486, %v1595
        %1597 = vmatmul.bf16.gmra.mxu0 %v570
        %v1598 = vpop.f32.mrf.mxu0
        %v1599 = vadd.f32 %v486, %v1598
        %v1600 = vpop.f32.mrf.mxu0
        %v1601 = vadd.f32 %v486, %v1600
        %1602 = vmatmul.bf16.gmra.mxu0 %v571
        %v1603 = vpop.f32.mrf.mxu0
        %v1604 = vadd.f32 %v486, %v1603
        %v1605 = vpop.f32.mrf.mxu0
        %v1606 = vadd.f32 %v486, %v1605
        %1607 = vmatmul.bf16.gmra.mxu0 %v572
        %v1608 = vpop.f32.mrf.mxu0
        %v1609 = vadd.f32 %v486, %v1608
        %v1610 = vpop.f32.mrf.mxu0
        %v1611 = vadd.f32 %v486, %v1610
        %1612 = vmatmul.bf16.gmra.mxu0 %v573
        %v1613 = vpop.f32.mrf.mxu0
        %v1614 = vadd.f32 %v486, %v1613
        %v1615 = vpop.f32.mrf.mxu0
        %v1616 = vadd.f32 %v486, %v1615
        %1617 = vmatmul.bf16.gmra.mxu0 %v574
        %v1618 = vpop.f32.mrf.mxu0
        %v1619 = vadd.f32 %v486, %v1618
        %v1620 = vpop.f32.mrf.mxu0
        %v1621 = vadd.f32 %v486, %v1620
        %1622 = vdwg.mxu0
        %v1623 = vmax.f32 %v921, 0.0
        %v1624 = vmax.f32 %v1010, 0.0
        %v1625 = vmax.f32 %v1099, 0.0
        %v1626 = vmax.f32 %v1188, 0.0
        %v1627 = vmax.f32 %v1277, 0.0
        %v1628 = vmax.f32 %v1366, 0.0
        %v1629 = vmax.f32 %v1455, 0.0
        %v1630 = vmax.f32 %v1544, 0.0
        %v1631 = vmax.f32 %v923, 0.0
        %v1632 = vmax.f32 %v1012, 0.0
        %v1633 = vmax.f32 %v1101, 0.0
        %v1634 = vmax.f32 %v1190, 0.0
        %v1635 = vmax.f32 %v1279, 0.0
        %v1636 = vmax.f32 %v1368, 0.0
        %v1637 = vmax.f32 %v1457, 0.0
        %v1638 = vmax.f32 %v1546, 0.0
        %v1639 = vmax.f32 %v926, 0.0
        %v1640 = vmax.f32 %v1015, 0.0
        %v1641 = vmax.f32 %v1104, 0.0
        %v1642 = vmax.f32 %v1193, 0.0
        %v1643 = vmax.f32 %v1282, 0.0
        %v1644 = vmax.f32 %v1371, 0.0
        %v1645 = vmax.f32 %v1460, 0.0
        %v1646 = vmax.f32 %v1549, 0.0
        %v1647 = vmax.f32 %v928, 0.0
        %v1648 = vmax.f32 %v1017, 0.0
        %v1649 = vmax.f32 %v1106, 0.0
        %v1650 = vmax.f32 %v1195, 0.0
        %v1651 = vmax.f32 %v1284, 0.0
        %v1652 = vmax.f32 %v1373, 0.0
        %v1653 = vmax.f32 %v1462, 0.0
        %v1654 = vmax.f32 %v1551, 0.0
        %v1655 = vmax.f32 %v931, 0.0
        %v1656 = vmax.f32 %v1020, 0.0
        %v1657 = vmax.f32 %v1109, 0.0
        %v1658 = vmax.f32 %v1198, 0.0
        %v1659 = vmax.f32 %v1287, 0.0
        %v1660 = vmax.f32 %v1376, 0.0
        %v1661 = vmax.f32 %v1465, 0.0
        %v1662 = vmax.f32 %v1554, 0.0
        %v1663 = vmax.f32 %v933, 0.0
        %v1664 = vmax.f32 %v1022, 0.0
        %v1665 = vmax.f32 %v1111, 0.0
        %v1666 = vmax.f32 %v1200, 0.0
        %v1667 = vmax.f32 %v1289, 0.0
        %v1668 = vmax.f32 %v1378, 0.0
        %v1669 = vmax.f32 %v1467, 0.0
        %v1670 = vmax.f32 %v1556, 0.0
        %v1671 = vmax.f32 %v936, 0.0
        %v1672 = vmax.f32 %v1025, 0.0
        %v1673 = vmax.f32 %v1114, 0.0
        %v1674 = vmax.f32 %v1203, 0.0
        %v1675 = vmax.f32 %v1292, 0.0
        %v1676 = vmax.f32 %v1381, 0.0
        %v1677 = vmax.f32 %v1470, 0.0
        %v1678 = vmax.f32 %v1559, 0.0
        %v1679 = vmax.f32 %v938, 0.0
        %v1680 = vmax.f32 %v1027, 0.0
        %v1681 = vmax.f32 %v1116, 0.0
        %v1682 = vmax.f32 %v1205, 0.0
        %v1683 = vmax.f32 %v1294, 0.0
        %v1684 = vmax.f32 %v1383, 0.0
        %v1685 = vmax.f32 %v1472, 0.0
        %v1686 = vmax.f32 %v1561, 0.0
        %v1687 = vmax.f32 %v941, 0.0
        %v1688 = vmax.f32 %v1030, 0.0
        %v1689 = vmax.f32 %v1119, 0.0
        %v1690 = vmax.f32 %v1208, 0.0
        %v1691 = vmax.f32 %v1297, 0.0
        %v1692 = vmax.f32 %v1386, 0.0
        %v1693 = vmax.f32 %v1475, 0.0
        %v1694 = vmax.f32 %v1564, 0.0
        %v1695 = vmax.f32 %v943, 0.0
        %v1696 = vmax.f32 %v1032, 0.0
        %v1697 = vmax.f32 %v1121, 0.0
        %v1698 = vmax.f32 %v1210, 0.0
        %v1699 = vmax.f32 %v1299, 0.0
        %v1700 = vmax.f32 %v1388, 0.0
        %v1701 = vmax.f32 %v1477, 0.0
        %v1702 = vmax.f32 %v1566, 0.0
        %v1703 = vmax.f32 %v946, 0.0
        %v1704 = vmax.f32 %v1035, 0.0
        %v1705 = vmax.f32 %v1124, 0.0
        %v1706 = vmax.f32 %v1213, 0.0
        %v1707 = vmax.f32 %v1302, 0.0
        %v1708 = vmax.f32 %v1391, 0.0
        %v1709 = vmax.f32 %v1480, 0.0
        %v1710 = vmax.f32 %v1569, 0.0
        %v1711 = vmax.f32 %v948, 0.0
        %v1712 = vmax.f32 %v1037, 0.0
        %v1713 = vmax.f32 %v1126, 0.0
        %v1714 = vmax.f32 %v1215, 0.0
        %v1715 = vmax.f32 %v1304, 0.0
        %v1716 = vmax.f32 %v1393, 0.0
        %v1717 = vmax.f32 %v1482, 0.0
        %v1718 = vmax.f32 %v1571, 0.0
        %v1719 = vmax.f32 %v951, 0.0
        %v1720 = vmax.f32 %v1040, 0.0
        %v1721 = vmax.f32 %v1129, 0.0
        %v1722 = vmax.f32 %v1218, 0.0
        %v1723 = vmax.f32 %v1307, 0.0
        %v1724 = vmax.f32 %v1396, 0.0
        %v1725 = vmax.f32 %v1485, 0.0
        %v1726 = vmax.f32 %v1574, 0.0
        %v1727 = vmax.f32 %v953, 0.0
        %v1728 = vmax.f32 %v1042, 0.0
        %v1729 = vmax.f32 %v1131, 0.0
        %v1730 = vmax.f32 %v1220, 0.0
        %v1731 = vmax.f32 %v1309, 0.0
        %v1732 = vmax.f32 %v1398, 0.0
        %v1733 = vmax.f32 %v1487, 0.0
        %v1734 = vmax.f32 %v1576, 0.0
        %v1735 = vmax.f32 %v956, 0.0
        %v1736 = vmax.f32 %v1045, 0.0
        %v1737 = vmax.f32 %v1134, 0.0
        %v1738 = vmax.f32 %v1223, 0.0
        %v1739 = vmax.f32 %v1312, 0.0
        %v1740 = vmax.f32 %v1401, 0.0
        %v1741 = vmax.f32 %v1490, 0.0
        %v1742 = vmax.f32 %v1579, 0.0
        %v1743 = vmax.f32 %v958, 0.0
        %v1744 = vmax.f32 %v1047, 0.0
        %v1745 = vmax.f32 %v1136, 0.0
        %v1746 = vmax.f32 %v1225, 0.0
        %v1747 = vmax.f32 %v1314, 0.0
        %v1748 = vmax.f32 %v1403, 0.0
        %v1749 = vmax.f32 %v1492, 0.0
        %v1750 = vmax.f32 %v1581, 0.0
        %v1751 = vmax.f32 %v961, 0.0
        %v1752 = vmax.f32 %v1050, 0.0
        %v1753 = vmax.f32 %v1139, 0.0
        %v1754 = vmax.f32 %v1228, 0.0
        %v1755 = vmax.f32 %v1317, 0.0
        %v1756 = vmax.f32 %v1406, 0.0
        %v1757 = vmax.f32 %v1495, 0.0
        %v1758 = vmax.f32 %v1584, 0.0
        %v1759 = vmax.f32 %v963, 0.0
        %v1760 = vmax.f32 %v1052, 0.0
        %v1761 = vmax.f32 %v1141, 0.0
        %v1762 = vmax.f32 %v1230, 0.0
        %v1763 = vmax.f32 %v1319, 0.0
        %v1764 = vmax.f32 %v1408, 0.0
        %v1765 = vmax.f32 %v1497, 0.0
        %v1766 = vmax.f32 %v1586, 0.0
        %v1767 = vmax.f32 %v966, 0.0
        %v1768 = vmax.f32 %v1055, 0.0
        %v1769 = vmax.f32 %v1144, 0.0
        %v1770 = vmax.f32 %v1233, 0.0
        %v1771 = vmax.f32 %v1322, 0.0
        %v1772 = vmax.f32 %v1411, 0.0
        %v1773 = vmax.f32 %v1500, 0.0
        %v1774 = vmax.f32 %v1589, 0.0
        %v1775 = vmax.f32 %v968, 0.0
        %v1776 = vmax.f32 %v1057, 0.0
        %v1777 = vmax.f32 %v1146, 0.0
        %v1778 = vmax.f32 %v1235, 0.0
        %v1779 = vmax.f32 %v1324, 0.0
        %v1780 = vmax.f32 %v1413, 0.0
        %v1781 = vmax.f32 %v1502, 0.0
        %v1782 = vmax.f32 %v1591, 0.0
        %v1783 = vmax.f32 %v971, 0.0
        %v1784 = vmax.f32 %v1060, 0.0
        %v1785 = vmax.f32 %v1149, 0.0
        %v1786 = vmax.f32 %v1238, 0.0
        %v1787 = vmax.f32 %v1327, 0.0
        %v1788 = vmax.f32 %v1416, 0.0
        %v1789 = vmax.f32 %v1505, 0.0
        %v1790 = vmax.f32 %v1594, 0.0
        %v1791 = vmax.f32 %v973, 0.0
        %v1792 = vmax.f32 %v1062, 0.0
        %v1793 = vmax.f32 %v1151, 0.0
        %v1794 = vmax.f32 %v1240, 0.0
        %v1795 = vmax.f32 %v1329, 0.0
        %v1796 = vmax.f32 %v1418, 0.0
        %v1797 = vmax.f32 %v1507, 0.0
        %v1798 = vmax.f32 %v1596, 0.0
        %v1799 = vmax.f32 %v976, 0.0
        %v1800 = vmax.f32 %v1065, 0.0
        %v1801 = vmax.f32 %v1154, 0.0
        %v1802 = vmax.f32 %v1243, 0.0
        %v1803 = vmax.f32 %v1332, 0.0
        %v1804 = vmax.f32 %v1421, 0.0
        %v1805 = vmax.f32 %v1510, 0.0
        %v1806 = vmax.f32 %v1599, 0.0
        %v1807 = vmax.f32 %v978, 0.0
        %v1808 = vmax.f32 %v1067, 0.0
        %v1809 = vmax.f32 %v1156, 0.0
        %v1810 = vmax.f32 %v1245, 0.0
        %v1811 = vmax.f32 %v1334, 0.0
        %v1812 = vmax.f32 %v1423, 0.0
        %v1813 = vmax.f32 %v1512, 0.0
        %v1814 = vmax.f32 %v1601, 0.0
        %v1815 = vmax.f32 %v981, 0.0
        %v1816 = vmax.f32 %v1070, 0.0
        %v1817 = vmax.f32 %v1159, 0.0
        %v1818 = vmax.f32 %v1248, 0.0
        %v1819 = vmax.f32 %v1337, 0.0
        %v1820 = vmax.f32 %v1426, 0.0
        %v1821 = vmax.f32 %v1515, 0.0
        %v1822 = vmax.f32 %v1604, 0.0
        %v1823 = vmax.f32 %v983, 0.0
        %v1824 = vmax.f32 %v1072, 0.0
        %v1825 = vmax.f32 %v1161, 0.0
        %v1826 = vmax.f32 %v1250, 0.0
        %v1827 = vmax.f32 %v1339, 0.0
        %v1828 = vmax.f32 %v1428, 0.0
        %v1829 = vmax.f32 %v1517, 0.0
        %v1830 = vmax.f32 %v1606, 0.0
        %v1831 = vmax.f32 %v986, 0.0
        %v1832 = vmax.f32 %v1075, 0.0
        %v1833 = vmax.f32 %v1164, 0.0
        %v1834 = vmax.f32 %v1253, 0.0
        %v1835 = vmax.f32 %v1342, 0.0
        %v1836 = vmax.f32 %v1431, 0.0
        %v1837 = vmax.f32 %v1520, 0.0
        %v1838 = vmax.f32 %v1609, 0.0
        %v1839 = vmax.f32 %v988, 0.0
        %v1840 = vmax.f32 %v1077, 0.0
        %v1841 = vmax.f32 %v1166, 0.0
        %v1842 = vmax.f32 %v1255, 0.0
        %v1843 = vmax.f32 %v1344, 0.0
        %v1844 = vmax.f32 %v1433, 0.0
        %v1845 = vmax.f32 %v1522, 0.0
        %v1846 = vmax.f32 %v1611, 0.0
        %v1847 = vmax.f32 %v991, 0.0
        %v1848 = vmax.f32 %v1080, 0.0
        %v1849 = vmax.f32 %v1169, 0.0
        %v1850 = vmax.f32 %v1258, 0.0
        %v1851 = vmax.f32 %v1347, 0.0
        %v1852 = vmax.f32 %v1436, 0.0
        %v1853 = vmax.f32 %v1525, 0.0
        %v1854 = vmax.f32 %v1614, 0.0
        %v1855 = vmax.f32 %v993, 0.0
        %v1856 = vmax.f32 %v1082, 0.0
        %v1857 = vmax.f32 %v1171, 0.0
        %v1858 = vmax.f32 %v1260, 0.0
        %v1859 = vmax.f32 %v1349, 0.0
        %v1860 = vmax.f32 %v1438, 0.0
        %v1861 = vmax.f32 %v1527, 0.0
        %v1862 = vmax.f32 %v1616, 0.0
        %v1863 = vmax.f32 %v996, 0.0
        %v1864 = vmax.f32 %v1085, 0.0
        %v1865 = vmax.f32 %v1174, 0.0
        %v1866 = vmax.f32 %v1263, 0.0
        %v1867 = vmax.f32 %v1352, 0.0
        %v1868 = vmax.f32 %v1441, 0.0
        %v1869 = vmax.f32 %v1530, 0.0
        %v1870 = vmax.f32 %v1619, 0.0
        %v1871 = vmax.f32 %v998, 0.0
        %v1872 = vmax.f32 %v1087, 0.0
        %v1873 = vmax.f32 %v1176, 0.0
        %v1874 = vmax.f32 %v1265, 0.0
        %v1875 = vmax.f32 %v1354, 0.0
        %v1876 = vmax.f32 %v1443, 0.0
        %v1877 = vmax.f32 %v1532, 0.0
        %v1878 = vmax.f32 %v1621, 0.0
        %v1879 = vpack.c.bf16 %v1631, %v1623
        %v1880 = vpack.c.bf16 %v1632, %v1624
        %v1881 = vpack.c.bf16 %v1633, %v1625
        %v1882 = vpack.c.bf16 %v1634, %v1626
        %v1883 = vpack.c.bf16 %v1635, %v1627
        %v1884 = vpack.c.bf16 %v1636, %v1628
        %v1885 = vpack.c.bf16 %v1637, %v1629
        %v1886 = vpack.c.bf16 %v1638, %v1630
        %v1887 = vpack.c.bf16 %v1647, %v1639
        %v1888 = vpack.c.bf16 %v1648, %v1640
        %v1889 = vpack.c.bf16 %v1649, %v1641
        %v1890 = vpack.c.bf16 %v1650, %v1642
        %v1891 = vpack.c.bf16 %v1651, %v1643
        %v1892 = vpack.c.bf16 %v1652, %v1644
        %v1893 = vpack.c.bf16 %v1653, %v1645
        %v1894 = vpack.c.bf16 %v1654, %v1646
        %v1895 = vpack.c.bf16 %v1663, %v1655
        %v1896 = vpack.c.bf16 %v1664, %v1656
        %v1897 = vpack.c.bf16 %v1665, %v1657
        %v1898 = vpack.c.bf16 %v1666, %v1658
        %v1899 = vpack.c.bf16 %v1667, %v1659
        %v1900 = vpack.c.bf16 %v1668, %v1660
        %v1901 = vpack.c.bf16 %v1669, %v1661
        %v1902 = vpack.c.bf16 %v1670, %v1662
        %v1903 = vpack.c.bf16 %v1679, %v1671
        %v1904 = vpack.c.bf16 %v1680, %v1672
        %v1905 = vpack.c.bf16 %v1681, %v1673
        %v1906 = vpack.c.bf16 %v1682, %v1674
        %v1907 = vpack.c.bf16 %v1683, %v1675
        %v1908 = vpack.c.bf16 %v1684, %v1676
        %v1909 = vpack.c.bf16 %v1685, %v1677
        %v1910 = vpack.c.bf16 %v1686, %v1678
        %v1911 = vpack.c.bf16 %v1695, %v1687
        %v1912 = vpack.c.bf16 %v1696, %v1688
        %v1913 = vpack.c.bf16 %v1697, %v1689
        %v1914 = vpack.c.bf16 %v1698, %v1690
        %v1915 = vpack.c.bf16 %v1699, %v1691
        %v1916 = vpack.c.bf16 %v1700, %v1692
        %v1917 = vpack.c.bf16 %v1701, %v1693
        %v1918 = vpack.c.bf16 %v1702, %v1694
        %v1919 = vpack.c.bf16 %v1711, %v1703
        %v1920 = vpack.c.bf16 %v1712, %v1704
        %v1921 = vpack.c.bf16 %v1713, %v1705
        %v1922 = vpack.c.bf16 %v1714, %v1706
        %v1923 = vpack.c.bf16 %v1715, %v1707
        %v1924 = vpack.c.bf16 %v1716, %v1708
        %v1925 = vpack.c.bf16 %v1717, %v1709
        %v1926 = vpack.c.bf16 %v1718, %v1710
        %v1927 = vpack.c.bf16 %v1727, %v1719
        %v1928 = vpack.c.bf16 %v1728, %v1720
        %v1929 = vpack.c.bf16 %v1729, %v1721
        %v1930 = vpack.c.bf16 %v1730, %v1722
        %v1931 = vpack.c.bf16 %v1731, %v1723
        %v1932 = vpack.c.bf16 %v1732, %v1724
        %v1933 = vpack.c.bf16 %v1733, %v1725
        %v1934 = vpack.c.bf16 %v1734, %v1726
        %v1935 = vpack.c.bf16 %v1743, %v1735
        %v1936 = vpack.c.bf16 %v1744, %v1736
        %v1937 = vpack.c.bf16 %v1745, %v1737
        %v1938 = vpack.c.bf16 %v1746, %v1738
        %v1939 = vpack.c.bf16 %v1747, %v1739
        %v1940 = vpack.c.bf16 %v1748, %v1740
        %v1941 = vpack.c.bf16 %v1749, %v1741
        %v1942 = vpack.c.bf16 %v1750, %v1742
        %v1943 = vpack.c.bf16 %v1759, %v1751
        %v1944 = vpack.c.bf16 %v1760, %v1752
        %v1945 = vpack.c.bf16 %v1761, %v1753
        %v1946 = vpack.c.bf16 %v1762, %v1754
        %v1947 = vpack.c.bf16 %v1763, %v1755
        %v1948 = vpack.c.bf16 %v1764, %v1756
        %v1949 = vpack.c.bf16 %v1765, %v1757
        %v1950 = vpack.c.bf16 %v1766, %v1758
        %v1951 = vpack.c.bf16 %v1775, %v1767
        %v1952 = vpack.c.bf16 %v1776, %v1768
        %v1953 = vpack.c.bf16 %v1777, %v1769
        %v1954 = vpack.c.bf16 %v1778, %v1770
        %v1955 = vpack.c.bf16 %v1779, %v1771
        %v1956 = vpack.c.bf16 %v1780, %v1772
        %v1957 = vpack.c.bf16 %v1781, %v1773
        %v1958 = vpack.c.bf16 %v1782, %v1774
        %v1959 = vpack.c.bf16 %v1791, %v1783
        %v1960 = vpack.c.bf16 %v1792, %v1784
        %v1961 = vpack.c.bf16 %v1793, %v1785
        %v1962 = vpack.c.bf16 %v1794, %v1786
        %v1963 = vpack.c.bf16 %v1795, %v1787
        %v1964 = vpack.c.bf16 %v1796, %v1788
        %v1965 = vpack.c.bf16 %v1797, %v1789
        %v1966 = vpack.c.bf16 %v1798, %v1790
        %v1967 = vpack.c.bf16 %v1807, %v1799
        %v1968 = vpack.c.bf16 %v1808, %v1800
        %v1969 = vpack.c.bf16 %v1809, %v1801
        %v1970 = vpack.c.bf16 %v1810, %v1802
        %v1971 = vpack.c.bf16 %v1811, %v1803
        %v1972 = vpack.c.bf16 %v1812, %v1804
        %v1973 = vpack.c.bf16 %v1813, %v1805
        %v1974 = vpack.c.bf16 %v1814, %v1806
        %v1975 = vpack.c.bf16 %v1823, %v1815
        %v1976 = vpack.c.bf16 %v1824, %v1816
        %v1977 = vpack.c.bf16 %v1825, %v1817
        %v1978 = vpack.c.bf16 %v1826, %v1818
        %v1979 = vpack.c.bf16 %v1827, %v1819
        %v1980 = vpack.c.bf16 %v1828, %v1820
        %v1981 = vpack.c.bf16 %v1829, %v1821
        %v1982 = vpack.c.bf16 %v1830, %v1822
        %v1983 = vpack.c.bf16 %v1839, %v1831
        %v1984 = vpack.c.bf16 %v1840, %v1832
        %v1985 = vpack.c.bf16 %v1841, %v1833
        %v1986 = vpack.c.bf16 %v1842, %v1834
        %v1987 = vpack.c.bf16 %v1843, %v1835
        %v1988 = vpack.c.bf16 %v1844, %v1836
        %v1989 = vpack.c.bf16 %v1845, %v1837
        %v1990 = vpack.c.bf16 %v1846, %v1838
        %v1991 = vpack.c.bf16 %v1855, %v1847
        %v1992 = vpack.c.bf16 %v1856, %v1848
        %v1993 = vpack.c.bf16 %v1857, %v1849
        %v1994 = vpack.c.bf16 %v1858, %v1850
        %v1995 = vpack.c.bf16 %v1859, %v1851
        %v1996 = vpack.c.bf16 %v1860, %v1852
        %v1997 = vpack.c.bf16 %v1861, %v1853
        %v1998 = vpack.c.bf16 %v1862, %v1854
        %v1999 = vpack.c.bf16 %v1871, %v1863
        %v2000 = vpack.c.bf16 %v1872, %v1864
        %v2001 = vpack.c.bf16 %v1873, %v1865
        %v2002 = vpack.c.bf16 %v1874, %v1866
        %v2003 = vpack.c.bf16 %v1875, %v1867
        %v2004 = vpack.c.bf16 %v1876, %v1868
        %v2005 = vpack.c.bf16 %v1877, %v1869
        %v2006 = vpack.c.bf16 %v1878, %v1870
        %v2007 = vld [vmem:[#allocation9] sm:$0xff]
        %v2008 = vld [vmem:[#allocation9 + $0x8] sm:$0xff]
        %v2009 = vld [vmem:[#allocation9 + $0x10] sm:$0xff]
        %v2010 = vld [vmem:[#allocation9 + $0x18] sm:$0xff]
        %v2011 = vld [vmem:[#allocation9 + $0x20] sm:$0xff]
        %v2012 = vld [vmem:[#allocation9 + $0x28] sm:$0xff]
        %v2013 = vld [vmem:[#allocation9 + $0x30] sm:$0xff]
        %v2014 = vld [vmem:[#allocation9 + $0x38] sm:$0xff]
        %v2015 = vld [vmem:[#allocation9 + $0x40] sm:$0xff]
        %v2016 = vld [vmem:[#allocation9 + $0x48] sm:$0xff]
        %v2017 = vld [vmem:[#allocation9 + $0x50] sm:$0xff]
        %v2018 = vld [vmem:[#allocation9 + $0x58] sm:$0xff]
        %v2019 = vld [vmem:[#allocation9 + $0x60] sm:$0xff]
        %v2020 = vld [vmem:[#allocation9 + $0x68] sm:$0xff]
        %v2021 = vld [vmem:[#allocation9 + $0x70] sm:$0xff]
        %v2022 = vld [vmem:[#allocation9 + $0x78] sm:$0xff]
        %v2023 = vld [vmem:[#allocation9 + $0x80] sm:$0xff]
        %v2024 = vld [vmem:[#allocation9 + $0x88] sm:$0xff]
        %v2025 = vld [vmem:[#allocation9 + $0x90] sm:$0xff]
        %v2026 = vld [vmem:[#allocation9 + $0x98] sm:$0xff]
        %v2027 = vld [vmem:[#allocation9 + $0xa0] sm:$0xff]
        %v2028 = vld [vmem:[#allocation9 + $0xa8] sm:$0xff]
        %v2029 = vld [vmem:[#allocation9 + $0xb0] sm:$0xff]
        %v2030 = vld [vmem:[#allocation9 + $0xb8] sm:$0xff]
        %v2031 = vld [vmem:[#allocation9 + $0xc0] sm:$0xff]
        %v2032 = vld [vmem:[#allocation9 + $0xc8] sm:$0xff]
        %v2033 = vld [vmem:[#allocation9 + $0xd0] sm:$0xff]
        %v2034 = vld [vmem:[#allocation9 + $0xd8] sm:$0xff]
        %v2035 = vld [vmem:[#allocation9 + $0xe0] sm:$0xff]
        %v2036 = vld [vmem:[#allocation9 + $0xe8] sm:$0xff]
        %v2037 = vld [vmem:[#allocation9 + $0xf0] sm:$0xff]
        %v2038 = vld [vmem:[#allocation9 + $0xf8] sm:$0xff]
        %v2039 = vld [vmem:[#allocation9 + $0x100] sm:$0xff]
        %v2040 = vld [vmem:[#allocation9 + $0x108] sm:$0xff]
        %v2041 = vld [vmem:[#allocation9 + $0x110] sm:$0xff]
        %v2042 = vld [vmem:[#allocation9 + $0x118] sm:$0xff]
        %v2043 = vld [vmem:[#allocation9 + $0x120] sm:$0xff]
        %v2044 = vld [vmem:[#allocation9 + $0x128] sm:$0xff]
        %v2045 = vld [vmem:[#allocation9 + $0x130] sm:$0xff]
        %v2046 = vld [vmem:[#allocation9 + $0x138] sm:$0xff]
        %v2047 = vld [vmem:[#allocation9 + $0x140] sm:$0xff]
        %v2048 = vld [vmem:[#allocation9 + $0x148] sm:$0xff]
        %v2049 = vld [vmem:[#allocation9 + $0x150] sm:$0xff]
        %v2050 = vld [vmem:[#allocation9 + $0x158] sm:$0xff]
        %v2051 = vld [vmem:[#allocation9 + $0x160] sm:$0xff]
        %v2052 = vld [vmem:[#allocation9 + $0x168] sm:$0xff]
        %v2053 = vld [vmem:[#allocation9 + $0x170] sm:$0xff]
        %v2054 = vld [vmem:[#allocation9 + $0x178] sm:$0xff]
        %v2055 = vld [vmem:[#allocation9 + $0x180] sm:$0xff]
        %v2056 = vld [vmem:[#allocation9 + $0x188] sm:$0xff]
        %v2057 = vld [vmem:[#allocation9 + $0x190] sm:$0xff]
        %v2058 = vld [vmem:[#allocation9 + $0x198] sm:$0xff]
        %v2059 = vld [vmem:[#allocation9 + $0x1a0] sm:$0xff]
        %v2060 = vld [vmem:[#allocation9 + $0x1a8] sm:$0xff]
        %v2061 = vld [vmem:[#allocation9 + $0x1b0] sm:$0xff]
        %v2062 = vld [vmem:[#allocation9 + $0x1b8] sm:$0xff]
        %v2063 = vld [vmem:[#allocation9 + $0x1c0] sm:$0xff]
        %v2064 = vld [vmem:[#allocation9 + $0x1c8] sm:$0xff]
        %v2065 = vld [vmem:[#allocation9 + $0x1d0] sm:$0xff]
        %v2066 = vld [vmem:[#allocation9 + $0x1d8] sm:$0xff]
        %v2067 = vld [vmem:[#allocation9 + $0x1e0] sm:$0xff]
        %v2068 = vld [vmem:[#allocation9 + $0x1e8] sm:$0xff]
        %v2069 = vld [vmem:[#allocation9 + $0x1f0] sm:$0xff]
        %v2070 = vld [vmem:[#allocation9 + $0x1f8] sm:$0xff]
        %v2071 = vld [vmem:[#allocation9 + $0x200] sm:$0xff]
        %v2072 = vld [vmem:[#allocation9 + $0x208] sm:$0xff]
        %v2073 = vld [vmem:[#allocation9 + $0x210] sm:$0xff]
        %v2074 = vld [vmem:[#allocation9 + $0x218] sm:$0xff]
        %v2075 = vld [vmem:[#allocation9 + $0x220] sm:$0xff]
        %v2076 = vld [vmem:[#allocation9 + $0x228] sm:$0xff]
        %v2077 = vld [vmem:[#allocation9 + $0x230] sm:$0xff]
        %v2078 = vld [vmem:[#allocation9 + $0x238] sm:$0xff]
        %v2079 = vld [vmem:[#allocation9 + $0x240] sm:$0xff]
        %v2080 = vld [vmem:[#allocation9 + $0x248] sm:$0xff]
        %v2081 = vld [vmem:[#allocation9 + $0x250] sm:$0xff]
        %v2082 = vld [vmem:[#allocation9 + $0x258] sm:$0xff]
        %v2083 = vld [vmem:[#allocation9 + $0x260] sm:$0xff]
        %v2084 = vld [vmem:[#allocation9 + $0x268] sm:$0xff]
        %v2085 = vld [vmem:[#allocation9 + $0x270] sm:$0xff]
        %v2086 = vld [vmem:[#allocation9 + $0x278] sm:$0xff]
        %v2087 = vld [vmem:[#allocation9 + $0x280] sm:$0xff]
        %v2088 = vld [vmem:[#allocation9 + $0x288] sm:$0xff]
        %v2089 = vld [vmem:[#allocation9 + $0x290] sm:$0xff]
        %v2090 = vld [vmem:[#allocation9 + $0x298] sm:$0xff]
        %v2091 = vld [vmem:[#allocation9 + $0x2a0] sm:$0xff]
        %v2092 = vld [vmem:[#allocation9 + $0x2a8] sm:$0xff]
        %v2093 = vld [vmem:[#allocation9 + $0x2b0] sm:$0xff]
        %v2094 = vld [vmem:[#allocation9 + $0x2b8] sm:$0xff]
        %v2095 = vld [vmem:[#allocation9 + $0x2c0] sm:$0xff]
        %v2096 = vld [vmem:[#allocation9 + $0x2c8] sm:$0xff]
        %v2097 = vld [vmem:[#allocation9 + $0x2d0] sm:$0xff]
        %v2098 = vld [vmem:[#allocation9 + $0x2d8] sm:$0xff]
        %v2099 = vld [vmem:[#allocation9 + $0x2e0] sm:$0xff]
        %v2100 = vld [vmem:[#allocation9 + $0x2e8] sm:$0xff]
        %v2101 = vld [vmem:[#allocation9 + $0x2f0] sm:$0xff]
        %v2102 = vld [vmem:[#allocation9 + $0x2f8] sm:$0xff]
        %v2103 = vld [vmem:[#allocation9 + $0x300] sm:$0xff]
        %v2104 = vld [vmem:[#allocation9 + $0x308] sm:$0xff]
        %v2105 = vld [vmem:[#allocation9 + $0x310] sm:$0xff]
        %v2106 = vld [vmem:[#allocation9 + $0x318] sm:$0xff]
        %v2107 = vld [vmem:[#allocation9 + $0x320] sm:$0xff]
        %v2108 = vld [vmem:[#allocation9 + $0x328] sm:$0xff]
        %v2109 = vld [vmem:[#allocation9 + $0x330] sm:$0xff]
        %v2110 = vld [vmem:[#allocation9 + $0x338] sm:$0xff]
        %v2111 = vld [vmem:[#allocation9 + $0x340] sm:$0xff]
        %v2112 = vld [vmem:[#allocation9 + $0x348] sm:$0xff]
        %v2113 = vld [vmem:[#allocation9 + $0x350] sm:$0xff]
        %v2114 = vld [vmem:[#allocation9 + $0x358] sm:$0xff]
        %v2115 = vld [vmem:[#allocation9 + $0x360] sm:$0xff]
        %v2116 = vld [vmem:[#allocation9 + $0x368] sm:$0xff]
        %v2117 = vld [vmem:[#allocation9 + $0x370] sm:$0xff]
        %v2118 = vld [vmem:[#allocation9 + $0x378] sm:$0xff]
        %v2119 = vld [vmem:[#allocation9 + $0x380] sm:$0xff]
        %v2120 = vld [vmem:[#allocation9 + $0x388] sm:$0xff]
        %v2121 = vld [vmem:[#allocation9 + $0x390] sm:$0xff]
        %v2122 = vld [vmem:[#allocation9 + $0x398] sm:$0xff]
        %v2123 = vld [vmem:[#allocation9 + $0x3a0] sm:$0xff]
        %v2124 = vld [vmem:[#allocation9 + $0x3a8] sm:$0xff]
        %v2125 = vld [vmem:[#allocation9 + $0x3b0] sm:$0xff]
        %v2126 = vld [vmem:[#allocation9 + $0x3b8] sm:$0xff]
        %v2127 = vld [vmem:[#allocation9 + $0x3c0] sm:$0xff]
        %v2128 = vld [vmem:[#allocation9 + $0x3c8] sm:$0xff]
        %v2129 = vld [vmem:[#allocation9 + $0x3d0] sm:$0xff]
        %v2130 = vld [vmem:[#allocation9 + $0x3d8] sm:$0xff]
        %v2131 = vld [vmem:[#allocation9 + $0x3e0] sm:$0xff]
        %v2132 = vld [vmem:[#allocation9 + $0x3e8] sm:$0xff]
        %v2133 = vld [vmem:[#allocation9 + $0x3f0] sm:$0xff]
        %v2134 = vld [vmem:[#allocation9 + $0x3f8] sm:$0xff]
        %v2135 = vld [vmem:[#allocation9 + $0x400] sm:$0xff]
        %v2136 = vld [vmem:[#allocation9 + $0x408] sm:$0xff]
        %v2137 = vld [vmem:[#allocation9 + $0x410] sm:$0xff]
        %v2138 = vld [vmem:[#allocation9 + $0x418] sm:$0xff]
        %v2139 = vld [vmem:[#allocation9 + $0x420] sm:$0xff]
        %v2140 = vld [vmem:[#allocation9 + $0x428] sm:$0xff]
        %v2141 = vld [vmem:[#allocation9 + $0x430] sm:$0xff]
        %v2142 = vld [vmem:[#allocation9 + $0x438] sm:$0xff]
        %v2143 = vld [vmem:[#allocation9 + $0x440] sm:$0xff]
        %v2144 = vld [vmem:[#allocation9 + $0x448] sm:$0xff]
        %v2145 = vld [vmem:[#allocation9 + $0x450] sm:$0xff]
        %v2146 = vld [vmem:[#allocation9 + $0x458] sm:$0xff]
        %v2147 = vld [vmem:[#allocation9 + $0x460] sm:$0xff]
        %v2148 = vld [vmem:[#allocation9 + $0x468] sm:$0xff]
        %v2149 = vld [vmem:[#allocation9 + $0x470] sm:$0xff]
        %v2150 = vld [vmem:[#allocation9 + $0x478] sm:$0xff]
        %v2151 = vld [vmem:[#allocation9 + $0x480] sm:$0xff]
        %v2152 = vld [vmem:[#allocation9 + $0x488] sm:$0xff]
        %v2153 = vld [vmem:[#allocation9 + $0x490] sm:$0xff]
        %v2154 = vld [vmem:[#allocation9 + $0x498] sm:$0xff]
        %v2155 = vld [vmem:[#allocation9 + $0x4a0] sm:$0xff]
        %v2156 = vld [vmem:[#allocation9 + $0x4a8] sm:$0xff]
        %v2157 = vld [vmem:[#allocation9 + $0x4b0] sm:$0xff]
        %v2158 = vld [vmem:[#allocation9 + $0x4b8] sm:$0xff]
        %v2159 = vld [vmem:[#allocation9 + $0x4c0] sm:$0xff]
        %v2160 = vld [vmem:[#allocation9 + $0x4c8] sm:$0xff]
        %v2161 = vld [vmem:[#allocation9 + $0x4d0] sm:$0xff]
        %v2162 = vld [vmem:[#allocation9 + $0x4d8] sm:$0xff]
        %v2163 = vld [vmem:[#allocation9 + $0x4e0] sm:$0xff]
        %v2164 = vld [vmem:[#allocation9 + $0x4e8] sm:$0xff]
        %v2165 = vld [vmem:[#allocation9 + $0x4f0] sm:$0xff]
        %v2166 = vld [vmem:[#allocation9 + $0x4f8] sm:$0xff]
        %v2167 = vld [vmem:[#allocation9 + $0x500] sm:$0xff]
        %v2168 = vld [vmem:[#allocation9 + $0x508] sm:$0xff]
        %v2169 = vld [vmem:[#allocation9 + $0x510] sm:$0xff]
        %v2170 = vld [vmem:[#allocation9 + $0x518] sm:$0xff]
        %v2171 = vld [vmem:[#allocation9 + $0x520] sm:$0xff]
        %v2172 = vld [vmem:[#allocation9 + $0x528] sm:$0xff]
        %v2173 = vld [vmem:[#allocation9 + $0x530] sm:$0xff]
        %v2174 = vld [vmem:[#allocation9 + $0x538] sm:$0xff]
        %v2175 = vld [vmem:[#allocation9 + $0x540] sm:$0xff]
        %v2176 = vld [vmem:[#allocation9 + $0x548] sm:$0xff]
        %v2177 = vld [vmem:[#allocation9 + $0x550] sm:$0xff]
        %v2178 = vld [vmem:[#allocation9 + $0x558] sm:$0xff]
        %v2179 = vld [vmem:[#allocation9 + $0x560] sm:$0xff]
        %v2180 = vld [vmem:[#allocation9 + $0x568] sm:$0xff]
        %v2181 = vld [vmem:[#allocation9 + $0x570] sm:$0xff]
        %v2182 = vld [vmem:[#allocation9 + $0x578] sm:$0xff]
        %v2183 = vld [vmem:[#allocation9 + $0x580] sm:$0xff]
        %v2184 = vld [vmem:[#allocation9 + $0x588] sm:$0xff]
        %v2185 = vld [vmem:[#allocation9 + $0x590] sm:$0xff]
        %v2186 = vld [vmem:[#allocation9 + $0x598] sm:$0xff]
        %v2187 = vld [vmem:[#allocation9 + $0x5a0] sm:$0xff]
        %v2188 = vld [vmem:[#allocation9 + $0x5a8] sm:$0xff]
        %v2189 = vld [vmem:[#allocation9 + $0x5b0] sm:$0xff]
        %v2190 = vld [vmem:[#allocation9 + $0x5b8] sm:$0xff]
        %v2191 = vld [vmem:[#allocation9 + $0x5c0] sm:$0xff]
        %v2192 = vld [vmem:[#allocation9 + $0x5c8] sm:$0xff]
        %v2193 = vld [vmem:[#allocation9 + $0x5d0] sm:$0xff]
        %v2194 = vld [vmem:[#allocation9 + $0x5d8] sm:$0xff]
        %v2195 = vld [vmem:[#allocation9 + $0x5e0] sm:$0xff]
        %v2196 = vld [vmem:[#allocation9 + $0x5e8] sm:$0xff]
        %v2197 = vld [vmem:[#allocation9 + $0x5f0] sm:$0xff]
        %v2198 = vld [vmem:[#allocation9 + $0x5f8] sm:$0xff]
        %v2199 = vld [vmem:[#allocation9 + $0x600] sm:$0xff]
        %v2200 = vld [vmem:[#allocation9 + $0x608] sm:$0xff]
        %v2201 = vld [vmem:[#allocation9 + $0x610] sm:$0xff]
        %v2202 = vld [vmem:[#allocation9 + $0x618] sm:$0xff]
        %v2203 = vld [vmem:[#allocation9 + $0x620] sm:$0xff]
        %v2204 = vld [vmem:[#allocation9 + $0x628] sm:$0xff]
        %v2205 = vld [vmem:[#allocation9 + $0x630] sm:$0xff]
        %v2206 = vld [vmem:[#allocation9 + $0x638] sm:$0xff]
        %v2207 = vld [vmem:[#allocation9 + $0x640] sm:$0xff]
        %v2208 = vld [vmem:[#allocation9 + $0x648] sm:$0xff]
        %v2209 = vld [vmem:[#allocation9 + $0x650] sm:$0xff]
        %v2210 = vld [vmem:[#allocation9 + $0x658] sm:$0xff]
        %v2211 = vld [vmem:[#allocation9 + $0x660] sm:$0xff]
        %v2212 = vld [vmem:[#allocation9 + $0x668] sm:$0xff]
        %v2213 = vld [vmem:[#allocation9 + $0x670] sm:$0xff]
        %v2214 = vld [vmem:[#allocation9 + $0x678] sm:$0xff]
        %v2215 = vld [vmem:[#allocation9 + $0x680] sm:$0xff]
        %v2216 = vld [vmem:[#allocation9 + $0x688] sm:$0xff]
        %v2217 = vld [vmem:[#allocation9 + $0x690] sm:$0xff]
        %v2218 = vld [vmem:[#allocation9 + $0x698] sm:$0xff]
        %v2219 = vld [vmem:[#allocation9 + $0x6a0] sm:$0xff]
        %v2220 = vld [vmem:[#allocation9 + $0x6a8] sm:$0xff]
        %v2221 = vld [vmem:[#allocation9 + $0x6b0] sm:$0xff]
        %v2222 = vld [vmem:[#allocation9 + $0x6b8] sm:$0xff]
        %v2223 = vld [vmem:[#allocation9 + $0x6c0] sm:$0xff]
        %v2224 = vld [vmem:[#allocation9 + $0x6c8] sm:$0xff]
        %v2225 = vld [vmem:[#allocation9 + $0x6d0] sm:$0xff]
        %v2226 = vld [vmem:[#allocation9 + $0x6d8] sm:$0xff]
        %v2227 = vld [vmem:[#allocation9 + $0x6e0] sm:$0xff]
        %v2228 = vld [vmem:[#allocation9 + $0x6e8] sm:$0xff]
        %v2229 = vld [vmem:[#allocation9 + $0x6f0] sm:$0xff]
        %v2230 = vld [vmem:[#allocation9 + $0x6f8] sm:$0xff]
        %v2231 = vld [vmem:[#allocation9 + $0x700] sm:$0xff]
        %v2232 = vld [vmem:[#allocation9 + $0x708] sm:$0xff]
        %v2233 = vld [vmem:[#allocation9 + $0x710] sm:$0xff]
        %v2234 = vld [vmem:[#allocation9 + $0x718] sm:$0xff]
        %v2235 = vld [vmem:[#allocation9 + $0x720] sm:$0xff]
        %v2236 = vld [vmem:[#allocation9 + $0x728] sm:$0xff]
        %v2237 = vld [vmem:[#allocation9 + $0x730] sm:$0xff]
        %v2238 = vld [vmem:[#allocation9 + $0x738] sm:$0xff]
        %v2239 = vld [vmem:[#allocation9 + $0x740] sm:$0xff]
        %v2240 = vld [vmem:[#allocation9 + $0x748] sm:$0xff]
        %v2241 = vld [vmem:[#allocation9 + $0x750] sm:$0xff]
        %v2242 = vld [vmem:[#allocation9 + $0x758] sm:$0xff]
        %v2243 = vld [vmem:[#allocation9 + $0x760] sm:$0xff]
        %v2244 = vld [vmem:[#allocation9 + $0x768] sm:$0xff]
        %v2245 = vld [vmem:[#allocation9 + $0x770] sm:$0xff]
        %v2246 = vld [vmem:[#allocation9 + $0x778] sm:$0xff]
        %v2247 = vld [vmem:[#allocation9 + $0x780] sm:$0xff]
        %v2248 = vld [vmem:[#allocation9 + $0x788] sm:$0xff]
        %v2249 = vld [vmem:[#allocation9 + $0x790] sm:$0xff]
        %v2250 = vld [vmem:[#allocation9 + $0x798] sm:$0xff]
        %v2251 = vld [vmem:[#allocation9 + $0x7a0] sm:$0xff]
        %v2252 = vld [vmem:[#allocation9 + $0x7a8] sm:$0xff]
        %v2253 = vld [vmem:[#allocation9 + $0x7b0] sm:$0xff]
        %v2254 = vld [vmem:[#allocation9 + $0x7b8] sm:$0xff]
        %v2255 = vld [vmem:[#allocation9 + $0x7c0] sm:$0xff]
        %v2256 = vld [vmem:[#allocation9 + $0x7c8] sm:$0xff]
        %v2257 = vld [vmem:[#allocation9 + $0x7d0] sm:$0xff]
        %v2258 = vld [vmem:[#allocation9 + $0x7d8] sm:$0xff]
        %v2259 = vld [vmem:[#allocation9 + $0x7e0] sm:$0xff]
        %v2260 = vld [vmem:[#allocation9 + $0x7e8] sm:$0xff]
        %v2261 = vld [vmem:[#allocation9 + $0x7f0] sm:$0xff]
        %v2262 = vld [vmem:[#allocation9 + $0x7f8] sm:$0xff]
        %v2263 = vld [vmem:[#allocation9 + $0x800] sm:$0xff]
        %v2264 = vld [vmem:[#allocation9 + $0x808] sm:$0xff]
        %v2265 = vld [vmem:[#allocation9 + $0x810] sm:$0xff]
        %v2266 = vld [vmem:[#allocation9 + $0x818] sm:$0xff]
        %v2267 = vld [vmem:[#allocation9 + $0x820] sm:$0xff]
        %v2268 = vld [vmem:[#allocation9 + $0x828] sm:$0xff]
        %v2269 = vld [vmem:[#allocation9 + $0x830] sm:$0xff]
        %v2270 = vld [vmem:[#allocation9 + $0x838] sm:$0xff]
        %v2271 = vld [vmem:[#allocation9 + $0x840] sm:$0xff]
        %v2272 = vld [vmem:[#allocation9 + $0x848] sm:$0xff]
        %v2273 = vld [vmem:[#allocation9 + $0x850] sm:$0xff]
        %v2274 = vld [vmem:[#allocation9 + $0x858] sm:$0xff]
        %v2275 = vld [vmem:[#allocation9 + $0x860] sm:$0xff]
        %v2276 = vld [vmem:[#allocation9 + $0x868] sm:$0xff]
        %v2277 = vld [vmem:[#allocation9 + $0x870] sm:$0xff]
        %v2278 = vld [vmem:[#allocation9 + $0x878] sm:$0xff]
        %v2279 = vld [vmem:[#allocation9 + $0x880] sm:$0xff]
        %v2280 = vld [vmem:[#allocation9 + $0x888] sm:$0xff]
        %v2281 = vld [vmem:[#allocation9 + $0x890] sm:$0xff]
        %v2282 = vld [vmem:[#allocation9 + $0x898] sm:$0xff]
        %v2283 = vld [vmem:[#allocation9 + $0x8a0] sm:$0xff]
        %v2284 = vld [vmem:[#allocation9 + $0x8a8] sm:$0xff]
        %v2285 = vld [vmem:[#allocation9 + $0x8b0] sm:$0xff]
        %v2286 = vld [vmem:[#allocation9 + $0x8b8] sm:$0xff]
        %v2287 = vld [vmem:[#allocation9 + $0x8c0] sm:$0xff]
        %v2288 = vld [vmem:[#allocation9 + $0x8c8] sm:$0xff]
        %v2289 = vld [vmem:[#allocation9 + $0x8d0] sm:$0xff]
        %v2290 = vld [vmem:[#allocation9 + $0x8d8] sm:$0xff]
        %v2291 = vld [vmem:[#allocation9 + $0x8e0] sm:$0xff]
        %v2292 = vld [vmem:[#allocation9 + $0x8e8] sm:$0xff]
        %v2293 = vld [vmem:[#allocation9 + $0x8f0] sm:$0xff]
        %v2294 = vld [vmem:[#allocation9 + $0x8f8] sm:$0xff]
        %v2295 = vld [vmem:[#allocation9 + $0x900] sm:$0xff]
        %v2296 = vld [vmem:[#allocation9 + $0x908] sm:$0xff]
        %v2297 = vld [vmem:[#allocation9 + $0x910] sm:$0xff]
        %v2298 = vld [vmem:[#allocation9 + $0x918] sm:$0xff]
        %v2299 = vld [vmem:[#allocation9 + $0x920] sm:$0xff]
        %v2300 = vld [vmem:[#allocation9 + $0x928] sm:$0xff]
        %v2301 = vld [vmem:[#allocation9 + $0x930] sm:$0xff]
        %v2302 = vld [vmem:[#allocation9 + $0x938] sm:$0xff]
        %v2303 = vld [vmem:[#allocation9 + $0x940] sm:$0xff]
        %v2304 = vld [vmem:[#allocation9 + $0x948] sm:$0xff]
        %v2305 = vld [vmem:[#allocation9 + $0x950] sm:$0xff]
        %v2306 = vld [vmem:[#allocation9 + $0x958] sm:$0xff]
        %v2307 = vld [vmem:[#allocation9 + $0x960] sm:$0xff]
        %v2308 = vld [vmem:[#allocation9 + $0x968] sm:$0xff]
        %v2309 = vld [vmem:[#allocation9 + $0x970] sm:$0xff]
        %v2310 = vld [vmem:[#allocation9 + $0x978] sm:$0xff]
        %v2311 = vld [vmem:[#allocation9 + $0x980] sm:$0xff]
        %v2312 = vld [vmem:[#allocation9 + $0x988] sm:$0xff]
        %v2313 = vld [vmem:[#allocation9 + $0x990] sm:$0xff]
        %v2314 = vld [vmem:[#allocation9 + $0x998] sm:$0xff]
        %v2315 = vld [vmem:[#allocation9 + $0x9a0] sm:$0xff]
        %v2316 = vld [vmem:[#allocation9 + $0x9a8] sm:$0xff]
        %v2317 = vld [vmem:[#allocation9 + $0x9b0] sm:$0xff]
        %v2318 = vld [vmem:[#allocation9 + $0x9b8] sm:$0xff]
        %v2319 = vld [vmem:[#allocation9 + $0x9c0] sm:$0xff]
        %v2320 = vld [vmem:[#allocation9 + $0x9c8] sm:$0xff]
        %v2321 = vld [vmem:[#allocation9 + $0x9d0] sm:$0xff]
        %v2322 = vld [vmem:[#allocation9 + $0x9d8] sm:$0xff]
        %v2323 = vld [vmem:[#allocation9 + $0x9e0] sm:$0xff]
        %v2324 = vld [vmem:[#allocation9 + $0x9e8] sm:$0xff]
        %v2325 = vld [vmem:[#allocation9 + $0x9f0] sm:$0xff]
        %v2326 = vld [vmem:[#allocation9 + $0x9f8] sm:$0xff]
        %v2327 = vld [vmem:[#allocation9 + $0xa00] sm:$0xff]
        %v2328 = vld [vmem:[#allocation9 + $0xa08] sm:$0xff]
        %v2329 = vld [vmem:[#allocation9 + $0xa10] sm:$0xff]
        %v2330 = vld [vmem:[#allocation9 + $0xa18] sm:$0xff]
        %v2331 = vld [vmem:[#allocation9 + $0xa20] sm:$0xff]
        %v2332 = vld [vmem:[#allocation9 + $0xa28] sm:$0xff]
        %v2333 = vld [vmem:[#allocation9 + $0xa30] sm:$0xff]
        %v2334 = vld [vmem:[#allocation9 + $0xa38] sm:$0xff]
        %v2335 = vld [vmem:[#allocation9 + $0xa40] sm:$0xff]
        %v2336 = vld [vmem:[#allocation9 + $0xa48] sm:$0xff]
        %v2337 = vld [vmem:[#allocation9 + $0xa50] sm:$0xff]
        %v2338 = vld [vmem:[#allocation9 + $0xa58] sm:$0xff]
        %v2339 = vld [vmem:[#allocation9 + $0xa60] sm:$0xff]
        %v2340 = vld [vmem:[#allocation9 + $0xa68] sm:$0xff]
        %v2341 = vld [vmem:[#allocation9 + $0xa70] sm:$0xff]
        %v2342 = vld [vmem:[#allocation9 + $0xa78] sm:$0xff]
        %v2343 = vld [vmem:[#allocation9 + $0xa80] sm:$0xff]
        %v2344 = vld [vmem:[#allocation9 + $0xa88] sm:$0xff]
        %v2345 = vld [vmem:[#allocation9 + $0xa90] sm:$0xff]
        %v2346 = vld [vmem:[#allocation9 + $0xa98] sm:$0xff]
        %v2347 = vld [vmem:[#allocation9 + $0xaa0] sm:$0xff]
        %v2348 = vld [vmem:[#allocation9 + $0xaa8] sm:$0xff]
        %v2349 = vld [vmem:[#allocation9 + $0xab0] sm:$0xff]
        %v2350 = vld [vmem:[#allocation9 + $0xab8] sm:$0xff]
        %v2351 = vld [vmem:[#allocation9 + $0xac0] sm:$0xff]
        %v2352 = vld [vmem:[#allocation9 + $0xac8] sm:$0xff]
        %v2353 = vld [vmem:[#allocation9 + $0xad0] sm:$0xff]
        %v2354 = vld [vmem:[#allocation9 + $0xad8] sm:$0xff]
        %v2355 = vld [vmem:[#allocation9 + $0xae0] sm:$0xff]
        %v2356 = vld [vmem:[#allocation9 + $0xae8] sm:$0xff]
        %v2357 = vld [vmem:[#allocation9 + $0xaf0] sm:$0xff]
        %v2358 = vld [vmem:[#allocation9 + $0xaf8] sm:$0xff]
        %v2359 = vld [vmem:[#allocation9 + $0xb00] sm:$0xff]
        %v2360 = vld [vmem:[#allocation9 + $0xb08] sm:$0xff]
        %v2361 = vld [vmem:[#allocation9 + $0xb10] sm:$0xff]
        %v2362 = vld [vmem:[#allocation9 + $0xb18] sm:$0xff]
        %v2363 = vld [vmem:[#allocation9 + $0xb20] sm:$0xff]
        %v2364 = vld [vmem:[#allocation9 + $0xb28] sm:$0xff]
        %v2365 = vld [vmem:[#allocation9 + $0xb30] sm:$0xff]
        %v2366 = vld [vmem:[#allocation9 + $0xb38] sm:$0xff]
        %v2367 = vld [vmem:[#allocation9 + $0xb40] sm:$0xff]
        %v2368 = vld [vmem:[#allocation9 + $0xb48] sm:$0xff]
        %v2369 = vld [vmem:[#allocation9 + $0xb50] sm:$0xff]
        %v2370 = vld [vmem:[#allocation9 + $0xb58] sm:$0xff]
        %v2371 = vld [vmem:[#allocation9 + $0xb60] sm:$0xff]
        %v2372 = vld [vmem:[#allocation9 + $0xb68] sm:$0xff]
        %v2373 = vld [vmem:[#allocation9 + $0xb70] sm:$0xff]
        %v2374 = vld [vmem:[#allocation9 + $0xb78] sm:$0xff]
        %v2375 = vld [vmem:[#allocation9 + $0xb80] sm:$0xff]
        %v2376 = vld [vmem:[#allocation9 + $0xb88] sm:$0xff]
        %v2377 = vld [vmem:[#allocation9 + $0xb90] sm:$0xff]
        %v2378 = vld [vmem:[#allocation9 + $0xb98] sm:$0xff]
        %v2379 = vld [vmem:[#allocation9 + $0xba0] sm:$0xff]
        %v2380 = vld [vmem:[#allocation9 + $0xba8] sm:$0xff]
        %v2381 = vld [vmem:[#allocation9 + $0xbb0] sm:$0xff]
        %v2382 = vld [vmem:[#allocation9 + $0xbb8] sm:$0xff]
        %v2383 = vld [vmem:[#allocation9 + $0xbc0] sm:$0xff]
        %v2384 = vld [vmem:[#allocation9 + $0xbc8] sm:$0xff]
        %v2385 = vld [vmem:[#allocation9 + $0xbd0] sm:$0xff]
        %v2386 = vld [vmem:[#allocation9 + $0xbd8] sm:$0xff]
        %v2387 = vld [vmem:[#allocation9 + $0xbe0] sm:$0xff]
        %v2388 = vld [vmem:[#allocation9 + $0xbe8] sm:$0xff]
        %v2389 = vld [vmem:[#allocation9 + $0xbf0] sm:$0xff]
        %v2390 = vld [vmem:[#allocation9 + $0xbf8] sm:$0xff]
        %v2391 = vld [vmem:[#allocation9 + $0xc00] sm:$0xff]
        %v2392 = vld [vmem:[#allocation9 + $0xc08] sm:$0xff]
        %v2393 = vld [vmem:[#allocation9 + $0xc10] sm:$0xff]
        %v2394 = vld [vmem:[#allocation9 + $0xc18] sm:$0xff]
        %v2395 = vld [vmem:[#allocation9 + $0xc20] sm:$0xff]
        %v2396 = vld [vmem:[#allocation9 + $0xc28] sm:$0xff]
        %v2397 = vld [vmem:[#allocation9 + $0xc30] sm:$0xff]
        %v2398 = vld [vmem:[#allocation9 + $0xc38] sm:$0xff]
        %v2399 = vld [vmem:[#allocation9 + $0xc40] sm:$0xff]
        %v2400 = vld [vmem:[#allocation9 + $0xc48] sm:$0xff]
        %v2401 = vld [vmem:[#allocation9 + $0xc50] sm:$0xff]
        %v2402 = vld [vmem:[#allocation9 + $0xc58] sm:$0xff]
        %v2403 = vld [vmem:[#allocation9 + $0xc60] sm:$0xff]
        %v2404 = vld [vmem:[#allocation9 + $0xc68] sm:$0xff]
        %v2405 = vld [vmem:[#allocation9 + $0xc70] sm:$0xff]
        %v2406 = vld [vmem:[#allocation9 + $0xc78] sm:$0xff]
        %v2407 = vld [vmem:[#allocation9 + $0xc80] sm:$0xff]
        %v2408 = vld [vmem:[#allocation9 + $0xc88] sm:$0xff]
        %v2409 = vld [vmem:[#allocation9 + $0xc90] sm:$0xff]
        %v2410 = vld [vmem:[#allocation9 + $0xc98] sm:$0xff]
        %v2411 = vld [vmem:[#allocation9 + $0xca0] sm:$0xff]
        %v2412 = vld [vmem:[#allocation9 + $0xca8] sm:$0xff]
        %v2413 = vld [vmem:[#allocation9 + $0xcb0] sm:$0xff]
        %v2414 = vld [vmem:[#allocation9 + $0xcb8] sm:$0xff]
        %v2415 = vld [vmem:[#allocation9 + $0xcc0] sm:$0xff]
        %v2416 = vld [vmem:[#allocation9 + $0xcc8] sm:$0xff]
        %v2417 = vld [vmem:[#allocation9 + $0xcd0] sm:$0xff]
        %v2418 = vld [vmem:[#allocation9 + $0xcd8] sm:$0xff]
        %v2419 = vld [vmem:[#allocation9 + $0xce0] sm:$0xff]
        %v2420 = vld [vmem:[#allocation9 + $0xce8] sm:$0xff]
        %v2421 = vld [vmem:[#allocation9 + $0xcf0] sm:$0xff]
        %v2422 = vld [vmem:[#allocation9 + $0xcf8] sm:$0xff]
        %v2423 = vld [vmem:[#allocation9 + $0xd00] sm:$0xff]
        %v2424 = vld [vmem:[#allocation9 + $0xd08] sm:$0xff]
        %v2425 = vld [vmem:[#allocation9 + $0xd10] sm:$0xff]
        %v2426 = vld [vmem:[#allocation9 + $0xd18] sm:$0xff]
        %v2427 = vld [vmem:[#allocation9 + $0xd20] sm:$0xff]
        %v2428 = vld [vmem:[#allocation9 + $0xd28] sm:$0xff]
        %v2429 = vld [vmem:[#allocation9 + $0xd30] sm:$0xff]
        %v2430 = vld [vmem:[#allocation9 + $0xd38] sm:$0xff]
        %v2431 = vld [vmem:[#allocation9 + $0xd40] sm:$0xff]
        %v2432 = vld [vmem:[#allocation9 + $0xd48] sm:$0xff]
        %v2433 = vld [vmem:[#allocation9 + $0xd50] sm:$0xff]
        %v2434 = vld [vmem:[#allocation9 + $0xd58] sm:$0xff]
        %v2435 = vld [vmem:[#allocation9 + $0xd60] sm:$0xff]
        %v2436 = vld [vmem:[#allocation9 + $0xd68] sm:$0xff]
        %v2437 = vld [vmem:[#allocation9 + $0xd70] sm:$0xff]
        %v2438 = vld [vmem:[#allocation9 + $0xd78] sm:$0xff]
        %v2439 = vld [vmem:[#allocation9 + $0xd80] sm:$0xff]
        %v2440 = vld [vmem:[#allocation9 + $0xd88] sm:$0xff]
        %v2441 = vld [vmem:[#allocation9 + $0xd90] sm:$0xff]
        %v2442 = vld [vmem:[#allocation9 + $0xd98] sm:$0xff]
        %v2443 = vld [vmem:[#allocation9 + $0xda0] sm:$0xff]
        %v2444 = vld [vmem:[#allocation9 + $0xda8] sm:$0xff]
        %v2445 = vld [vmem:[#allocation9 + $0xdb0] sm:$0xff]
        %v2446 = vld [vmem:[#allocation9 + $0xdb8] sm:$0xff]
        %v2447 = vld [vmem:[#allocation9 + $0xdc0] sm:$0xff]
        %v2448 = vld [vmem:[#allocation9 + $0xdc8] sm:$0xff]
        %v2449 = vld [vmem:[#allocation9 + $0xdd0] sm:$0xff]
        %v2450 = vld [vmem:[#allocation9 + $0xdd8] sm:$0xff]
        %v2451 = vld [vmem:[#allocation9 + $0xde0] sm:$0xff]
        %v2452 = vld [vmem:[#allocation9 + $0xde8] sm:$0xff]
        %v2453 = vld [vmem:[#allocation9 + $0xdf0] sm:$0xff]
        %v2454 = vld [vmem:[#allocation9 + $0xdf8] sm:$0xff]
        %v2455 = vld [vmem:[#allocation9 + $0xe00] sm:$0xff]
        %v2456 = vld [vmem:[#allocation9 + $0xe08] sm:$0xff]
        %v2457 = vld [vmem:[#allocation9 + $0xe10] sm:$0xff]
        %v2458 = vld [vmem:[#allocation9 + $0xe18] sm:$0xff]
        %v2459 = vld [vmem:[#allocation9 + $0xe20] sm:$0xff]
        %v2460 = vld [vmem:[#allocation9 + $0xe28] sm:$0xff]
        %v2461 = vld [vmem:[#allocation9 + $0xe30] sm:$0xff]
        %v2462 = vld [vmem:[#allocation9 + $0xe38] sm:$0xff]
        %v2463 = vld [vmem:[#allocation9 + $0xe40] sm:$0xff]
        %v2464 = vld [vmem:[#allocation9 + $0xe48] sm:$0xff]
        %v2465 = vld [vmem:[#allocation9 + $0xe50] sm:$0xff]
        %v2466 = vld [vmem:[#allocation9 + $0xe58] sm:$0xff]
        %v2467 = vld [vmem:[#allocation9 + $0xe60] sm:$0xff]
        %v2468 = vld [vmem:[#allocation9 + $0xe68] sm:$0xff]
        %v2469 = vld [vmem:[#allocation9 + $0xe70] sm:$0xff]
        %v2470 = vld [vmem:[#allocation9 + $0xe78] sm:$0xff]
        %v2471 = vld [vmem:[#allocation9 + $0xe80] sm:$0xff]
        %v2472 = vld [vmem:[#allocation9 + $0xe88] sm:$0xff]
        %v2473 = vld [vmem:[#allocation9 + $0xe90] sm:$0xff]
        %v2474 = vld [vmem:[#allocation9 + $0xe98] sm:$0xff]
        %v2475 = vld [vmem:[#allocation9 + $0xea0] sm:$0xff]
        %v2476 = vld [vmem:[#allocation9 + $0xea8] sm:$0xff]
        %v2477 = vld [vmem:[#allocation9 + $0xeb0] sm:$0xff]
        %v2478 = vld [vmem:[#allocation9 + $0xeb8] sm:$0xff]
        %v2479 = vld [vmem:[#allocation9 + $0xec0] sm:$0xff]
        %v2480 = vld [vmem:[#allocation9 + $0xec8] sm:$0xff]
        %v2481 = vld [vmem:[#allocation9 + $0xed0] sm:$0xff]
        %v2482 = vld [vmem:[#allocation9 + $0xed8] sm:$0xff]
        %v2483 = vld [vmem:[#allocation9 + $0xee0] sm:$0xff]
        %v2484 = vld [vmem:[#allocation9 + $0xee8] sm:$0xff]
        %v2485 = vld [vmem:[#allocation9 + $0xef0] sm:$0xff]
        %v2486 = vld [vmem:[#allocation9 + $0xef8] sm:$0xff]
        %v2487 = vld [vmem:[#allocation9 + $0xf00] sm:$0xff]
        %v2488 = vld [vmem:[#allocation9 + $0xf08] sm:$0xff]
        %v2489 = vld [vmem:[#allocation9 + $0xf10] sm:$0xff]
        %v2490 = vld [vmem:[#allocation9 + $0xf18] sm:$0xff]
        %v2491 = vld [vmem:[#allocation9 + $0xf20] sm:$0xff]
        %v2492 = vld [vmem:[#allocation9 + $0xf28] sm:$0xff]
        %v2493 = vld [vmem:[#allocation9 + $0xf30] sm:$0xff]
        %v2494 = vld [vmem:[#allocation9 + $0xf38] sm:$0xff]
        %v2495 = vld [vmem:[#allocation9 + $0xf40] sm:$0xff]
        %v2496 = vld [vmem:[#allocation9 + $0xf48] sm:$0xff]
        %v2497 = vld [vmem:[#allocation9 + $0xf50] sm:$0xff]
        %v2498 = vld [vmem:[#allocation9 + $0xf58] sm:$0xff]
        %v2499 = vld [vmem:[#allocation9 + $0xf60] sm:$0xff]
        %v2500 = vld [vmem:[#allocation9 + $0xf68] sm:$0xff]
        %v2501 = vld [vmem:[#allocation9 + $0xf70] sm:$0xff]
        %v2502 = vld [vmem:[#allocation9 + $0xf78] sm:$0xff]
        %v2503 = vld [vmem:[#allocation9 + $0xf80] sm:$0xff]
        %v2504 = vld [vmem:[#allocation9 + $0xf88] sm:$0xff]
        %v2505 = vld [vmem:[#allocation9 + $0xf90] sm:$0xff]
        %v2506 = vld [vmem:[#allocation9 + $0xf98] sm:$0xff]
        %v2507 = vld [vmem:[#allocation9 + $0xfa0] sm:$0xff]
        %v2508 = vld [vmem:[#allocation9 + $0xfa8] sm:$0xff]
        %v2509 = vld [vmem:[#allocation9 + $0xfb0] sm:$0xff]
        %v2510 = vld [vmem:[#allocation9 + $0xfb8] sm:$0xff]
        %v2511 = vld [vmem:[#allocation9 + $0xfc0] sm:$0xff]
        %v2512 = vld [vmem:[#allocation9 + $0xfc8] sm:$0xff]
        %v2513 = vld [vmem:[#allocation9 + $0xfd0] sm:$0xff]
        %v2514 = vld [vmem:[#allocation9 + $0xfd8] sm:$0xff]
        %v2515 = vld [vmem:[#allocation9 + $0xfe0] sm:$0xff]
        %v2516 = vld [vmem:[#allocation9 + $0xfe8] sm:$0xff]
        %v2517 = vld [vmem:[#allocation9 + $0xff0] sm:$0xff]
        %v2518 = vld [vmem:[#allocation9 + $0xff8] sm:$0xff]
        %v2519 = vld [vmem:[#allocation11] sm:$0xff]
        %v2521 = vperm.slane %v2519, 0
        %v2522 = vperm.slane %v2519, 1
        %v2523 = vperm.slane %v2519, 2
        %v2524 = vperm.slane %v2519, 3
        %v2525 = vperm.slane %v2519, 4
        %v2526 = vperm.slane %v2519, 5
        %v2527 = vperm.slane %v2519, 6
        %v2528 = vperm.slane %v2519, 7
        %v3049 = vunpack.c.l.b16 %v2007
        %v3050 = vunpack.c.h.b16 %v2007
        %v3051 = vunpack.c.l.b16 %v2008
        %v3052 = vunpack.c.h.b16 %v2008
        %v3053 = vunpack.c.l.b16 %v2009
        %v3054 = vunpack.c.h.b16 %v2009
        %v3055 = vunpack.c.l.b16 %v2010
        %v3056 = vunpack.c.h.b16 %v2010
        %v3057 = vunpack.c.l.b16 %v2011
        %v3058 = vunpack.c.h.b16 %v2011
        %v3059 = vunpack.c.l.b16 %v2012
        %v3060 = vunpack.c.h.b16 %v2012
        %v3061 = vunpack.c.l.b16 %v2013
        %v3062 = vunpack.c.h.b16 %v2013
        %v3063 = vunpack.c.l.b16 %v2014
        %v3064 = vunpack.c.h.b16 %v2014
        %v3065 = vunpack.c.l.b16 %v2015
        %v3066 = vunpack.c.h.b16 %v2015
        %v3067 = vunpack.c.l.b16 %v2016
        %v3068 = vunpack.c.h.b16 %v2016
        %v3069 = vunpack.c.l.b16 %v2017
        %v3070 = vunpack.c.h.b16 %v2017
        %v3071 = vunpack.c.l.b16 %v2018
        %v3072 = vunpack.c.h.b16 %v2018
        %v3073 = vunpack.c.l.b16 %v2019
        %v3074 = vunpack.c.h.b16 %v2019
        %v3075 = vunpack.c.l.b16 %v2020
        %v3076 = vunpack.c.h.b16 %v2020
        %v3077 = vunpack.c.l.b16 %v2021
        %v3078 = vunpack.c.h.b16 %v2021
        %v3079 = vunpack.c.l.b16 %v2022
        %v3080 = vunpack.c.h.b16 %v2022
        %v3081 = vunpack.c.l.b16 %v2023
        %v3082 = vunpack.c.h.b16 %v2023
        %v3083 = vunpack.c.l.b16 %v2024
        %v3084 = vunpack.c.h.b16 %v2024
        %v3085 = vunpack.c.l.b16 %v2025
        %v3086 = vunpack.c.h.b16 %v2025
        %v3087 = vunpack.c.l.b16 %v2026
        %v3088 = vunpack.c.h.b16 %v2026
        %v3089 = vunpack.c.l.b16 %v2027
        %v3090 = vunpack.c.h.b16 %v2027
        %v3091 = vunpack.c.l.b16 %v2028
        %v3092 = vunpack.c.h.b16 %v2028
        %v3093 = vunpack.c.l.b16 %v2029
        %v3094 = vunpack.c.h.b16 %v2029
        %v3095 = vunpack.c.l.b16 %v2030
        %v3096 = vunpack.c.h.b16 %v2030
        %v3097 = vunpack.c.l.b16 %v2031
        %v3098 = vunpack.c.h.b16 %v2031
        %v3099 = vunpack.c.l.b16 %v2032
        %v3100 = vunpack.c.h.b16 %v2032
        %v3101 = vunpack.c.l.b16 %v2033
        %v3102 = vunpack.c.h.b16 %v2033
        %v3103 = vunpack.c.l.b16 %v2034
        %v3104 = vunpack.c.h.b16 %v2034
        %v3105 = vunpack.c.l.b16 %v2035
        %v3106 = vunpack.c.h.b16 %v2035
        %v3107 = vunpack.c.l.b16 %v2036
        %v3108 = vunpack.c.h.b16 %v2036
        %v3109 = vunpack.c.l.b16 %v2037
        %v3110 = vunpack.c.h.b16 %v2037
        %v3111 = vunpack.c.l.b16 %v2038
        %v3112 = vunpack.c.h.b16 %v2038
        %v3113 = vunpack.c.l.b16 %v2039
        %v3114 = vunpack.c.h.b16 %v2039
        %v3115 = vunpack.c.l.b16 %v2040
        %v3116 = vunpack.c.h.b16 %v2040
        %v3117 = vunpack.c.l.b16 %v2041
        %v3118 = vunpack.c.h.b16 %v2041
        %v3119 = vunpack.c.l.b16 %v2042
        %v3120 = vunpack.c.h.b16 %v2042
        %v3121 = vunpack.c.l.b16 %v2043
        %v3122 = vunpack.c.h.b16 %v2043
        %v3123 = vunpack.c.l.b16 %v2044
        %v3124 = vunpack.c.h.b16 %v2044
        %v3125 = vunpack.c.l.b16 %v2045
        %v3126 = vunpack.c.h.b16 %v2045
        %v3127 = vunpack.c.l.b16 %v2046
        %v3128 = vunpack.c.h.b16 %v2046
        %v3129 = vunpack.c.l.b16 %v2047
        %v3130 = vunpack.c.h.b16 %v2047
        %v3131 = vunpack.c.l.b16 %v2048
        %v3132 = vunpack.c.h.b16 %v2048
        %v3133 = vunpack.c.l.b16 %v2049
        %v3134 = vunpack.c.h.b16 %v2049
        %v3135 = vunpack.c.l.b16 %v2050
        %v3136 = vunpack.c.h.b16 %v2050
        %v3137 = vunpack.c.l.b16 %v2051
        %v3138 = vunpack.c.h.b16 %v2051
        %v3139 = vunpack.c.l.b16 %v2052
        %v3140 = vunpack.c.h.b16 %v2052
        %v3141 = vunpack.c.l.b16 %v2053
        %v3142 = vunpack.c.h.b16 %v2053
        %v3143 = vunpack.c.l.b16 %v2054
        %v3144 = vunpack.c.h.b16 %v2054
        %v3145 = vunpack.c.l.b16 %v2055
        %v3146 = vunpack.c.h.b16 %v2055
        %v3147 = vunpack.c.l.b16 %v2056
        %v3148 = vunpack.c.h.b16 %v2056
        %v3149 = vunpack.c.l.b16 %v2057
        %v3150 = vunpack.c.h.b16 %v2057
        %v3151 = vunpack.c.l.b16 %v2058
        %v3152 = vunpack.c.h.b16 %v2058
        %v3153 = vunpack.c.l.b16 %v2059
        %v3154 = vunpack.c.h.b16 %v2059
        %v3155 = vunpack.c.l.b16 %v2060
        %v3156 = vunpack.c.h.b16 %v2060
        %v3157 = vunpack.c.l.b16 %v2061
        %v3158 = vunpack.c.h.b16 %v2061
        %v3159 = vunpack.c.l.b16 %v2062
        %v3160 = vunpack.c.h.b16 %v2062
        %v3161 = vunpack.c.l.b16 %v2063
        %v3162 = vunpack.c.h.b16 %v2063
        %v3163 = vunpack.c.l.b16 %v2064
        %v3164 = vunpack.c.h.b16 %v2064
        %v3165 = vunpack.c.l.b16 %v2065
        %v3166 = vunpack.c.h.b16 %v2065
        %v3167 = vunpack.c.l.b16 %v2066
        %v3168 = vunpack.c.h.b16 %v2066
        %v3169 = vunpack.c.l.b16 %v2067
        %v3170 = vunpack.c.h.b16 %v2067
        %v3171 = vunpack.c.l.b16 %v2068
        %v3172 = vunpack.c.h.b16 %v2068
        %v3173 = vunpack.c.l.b16 %v2069
        %v3174 = vunpack.c.h.b16 %v2069
        %v3175 = vunpack.c.l.b16 %v2070
        %v3176 = vunpack.c.h.b16 %v2070
        %v3177 = vunpack.c.l.b16 %v2071
        %v3178 = vunpack.c.h.b16 %v2071
        %v3179 = vunpack.c.l.b16 %v2072
        %v3180 = vunpack.c.h.b16 %v2072
        %v3181 = vunpack.c.l.b16 %v2073
        %v3182 = vunpack.c.h.b16 %v2073
        %v3183 = vunpack.c.l.b16 %v2074
        %v3184 = vunpack.c.h.b16 %v2074
        %v3185 = vunpack.c.l.b16 %v2075
        %v3186 = vunpack.c.h.b16 %v2075
        %v3187 = vunpack.c.l.b16 %v2076
        %v3188 = vunpack.c.h.b16 %v2076
        %v3189 = vunpack.c.l.b16 %v2077
        %v3190 = vunpack.c.h.b16 %v2077
        %v3191 = vunpack.c.l.b16 %v2078
        %v3192 = vunpack.c.h.b16 %v2078
        %v3193 = vunpack.c.l.b16 %v2079
        %v3194 = vunpack.c.h.b16 %v2079
        %v3195 = vunpack.c.l.b16 %v2080
        %v3196 = vunpack.c.h.b16 %v2080
        %v3197 = vunpack.c.l.b16 %v2081
        %v3198 = vunpack.c.h.b16 %v2081
        %v3199 = vunpack.c.l.b16 %v2082
        %v3200 = vunpack.c.h.b16 %v2082
        %v3201 = vunpack.c.l.b16 %v2083
        %v3202 = vunpack.c.h.b16 %v2083
        %v3203 = vunpack.c.l.b16 %v2084
        %v3204 = vunpack.c.h.b16 %v2084
        %v3205 = vunpack.c.l.b16 %v2085
        %v3206 = vunpack.c.h.b16 %v2085
        %v3207 = vunpack.c.l.b16 %v2086
        %v3208 = vunpack.c.h.b16 %v2086
        %v3209 = vunpack.c.l.b16 %v2087
        %v3210 = vunpack.c.h.b16 %v2087
        %v3211 = vunpack.c.l.b16 %v2088
        %v3212 = vunpack.c.h.b16 %v2088
        %v3213 = vunpack.c.l.b16 %v2089
        %v3214 = vunpack.c.h.b16 %v2089
        %v3215 = vunpack.c.l.b16 %v2090
        %v3216 = vunpack.c.h.b16 %v2090
        %v3217 = vunpack.c.l.b16 %v2091
        %v3218 = vunpack.c.h.b16 %v2091
        %v3219 = vunpack.c.l.b16 %v2092
        %v3220 = vunpack.c.h.b16 %v2092
        %v3221 = vunpack.c.l.b16 %v2093
        %v3222 = vunpack.c.h.b16 %v2093
        %v3223 = vunpack.c.l.b16 %v2094
        %v3224 = vunpack.c.h.b16 %v2094
        %v3225 = vunpack.c.l.b16 %v2095
        %v3226 = vunpack.c.h.b16 %v2095
        %v3227 = vunpack.c.l.b16 %v2096
        %v3228 = vunpack.c.h.b16 %v2096
        %v3229 = vunpack.c.l.b16 %v2097
        %v3230 = vunpack.c.h.b16 %v2097
        %v3231 = vunpack.c.l.b16 %v2098
        %v3232 = vunpack.c.h.b16 %v2098
        %v3233 = vunpack.c.l.b16 %v2099
        %v3234 = vunpack.c.h.b16 %v2099
        %v3235 = vunpack.c.l.b16 %v2100
        %v3236 = vunpack.c.h.b16 %v2100
        %v3237 = vunpack.c.l.b16 %v2101
        %v3238 = vunpack.c.h.b16 %v2101
        %v3239 = vunpack.c.l.b16 %v2102
        %v3240 = vunpack.c.h.b16 %v2102
        %v3241 = vunpack.c.l.b16 %v2103
        %v3242 = vunpack.c.h.b16 %v2103
        %v3243 = vunpack.c.l.b16 %v2104
        %v3244 = vunpack.c.h.b16 %v2104
        %v3245 = vunpack.c.l.b16 %v2105
        %v3246 = vunpack.c.h.b16 %v2105
        %v3247 = vunpack.c.l.b16 %v2106
        %v3248 = vunpack.c.h.b16 %v2106
        %v3249 = vunpack.c.l.b16 %v2107
        %v3250 = vunpack.c.h.b16 %v2107
        %v3251 = vunpack.c.l.b16 %v2108
        %v3252 = vunpack.c.h.b16 %v2108
        %v3253 = vunpack.c.l.b16 %v2109
        %v3254 = vunpack.c.h.b16 %v2109
        %v3255 = vunpack.c.l.b16 %v2110
        %v3256 = vunpack.c.h.b16 %v2110
        %v3257 = vunpack.c.l.b16 %v2111
        %v3258 = vunpack.c.h.b16 %v2111
        %v3259 = vunpack.c.l.b16 %v2112
        %v3260 = vunpack.c.h.b16 %v2112
        %v3261 = vunpack.c.l.b16 %v2113
        %v3262 = vunpack.c.h.b16 %v2113
        %v3263 = vunpack.c.l.b16 %v2114
        %v3264 = vunpack.c.h.b16 %v2114
        %v3265 = vunpack.c.l.b16 %v2115
        %v3266 = vunpack.c.h.b16 %v2115
        %v3267 = vunpack.c.l.b16 %v2116
        %v3268 = vunpack.c.h.b16 %v2116
        %v3269 = vunpack.c.l.b16 %v2117
        %v3270 = vunpack.c.h.b16 %v2117
        %v3271 = vunpack.c.l.b16 %v2118
        %v3272 = vunpack.c.h.b16 %v2118
        %v3273 = vunpack.c.l.b16 %v2119
        %v3274 = vunpack.c.h.b16 %v2119
        %v3275 = vunpack.c.l.b16 %v2120
        %v3276 = vunpack.c.h.b16 %v2120
        %v3277 = vunpack.c.l.b16 %v2121
        %v3278 = vunpack.c.h.b16 %v2121
        %v3279 = vunpack.c.l.b16 %v2122
        %v3280 = vunpack.c.h.b16 %v2122
        %v3281 = vunpack.c.l.b16 %v2123
        %v3282 = vunpack.c.h.b16 %v2123
        %v3283 = vunpack.c.l.b16 %v2124
        %v3284 = vunpack.c.h.b16 %v2124
        %v3285 = vunpack.c.l.b16 %v2125
        %v3286 = vunpack.c.h.b16 %v2125
        %v3287 = vunpack.c.l.b16 %v2126
        %v3288 = vunpack.c.h.b16 %v2126
        %v3289 = vunpack.c.l.b16 %v2127
        %v3290 = vunpack.c.h.b16 %v2127
        %v3291 = vunpack.c.l.b16 %v2128
        %v3292 = vunpack.c.h.b16 %v2128
        %v3293 = vunpack.c.l.b16 %v2129
        %v3294 = vunpack.c.h.b16 %v2129
        %v3295 = vunpack.c.l.b16 %v2130
        %v3296 = vunpack.c.h.b16 %v2130
        %v3297 = vunpack.c.l.b16 %v2131
        %v3298 = vunpack.c.h.b16 %v2131
        %v3299 = vunpack.c.l.b16 %v2132
        %v3300 = vunpack.c.h.b16 %v2132
        %v3301 = vunpack.c.l.b16 %v2133
        %v3302 = vunpack.c.h.b16 %v2133
        %v3303 = vunpack.c.l.b16 %v2134
        %v3304 = vunpack.c.h.b16 %v2134
        %v3305 = vunpack.c.l.b16 %v2135
        %v3306 = vunpack.c.h.b16 %v2135
        %v3307 = vunpack.c.l.b16 %v2136
        %v3308 = vunpack.c.h.b16 %v2136
        %v3309 = vunpack.c.l.b16 %v2137
        %v3310 = vunpack.c.h.b16 %v2137
        %v3311 = vunpack.c.l.b16 %v2138
        %v3312 = vunpack.c.h.b16 %v2138
        %v3313 = vunpack.c.l.b16 %v2139
        %v3314 = vunpack.c.h.b16 %v2139
        %v3315 = vunpack.c.l.b16 %v2140
        %v3316 = vunpack.c.h.b16 %v2140
        %v3317 = vunpack.c.l.b16 %v2141
        %v3318 = vunpack.c.h.b16 %v2141
        %v3319 = vunpack.c.l.b16 %v2142
        %v3320 = vunpack.c.h.b16 %v2142
        %v3321 = vunpack.c.l.b16 %v2143
        %v3322 = vunpack.c.h.b16 %v2143
        %v3323 = vunpack.c.l.b16 %v2144
        %v3324 = vunpack.c.h.b16 %v2144
        %v3325 = vunpack.c.l.b16 %v2145
        %v3326 = vunpack.c.h.b16 %v2145
        %v3327 = vunpack.c.l.b16 %v2146
        %v3328 = vunpack.c.h.b16 %v2146
        %v3329 = vunpack.c.l.b16 %v2147
        %v3330 = vunpack.c.h.b16 %v2147
        %v3331 = vunpack.c.l.b16 %v2148
        %v3332 = vunpack.c.h.b16 %v2148
        %v3333 = vunpack.c.l.b16 %v2149
        %v3334 = vunpack.c.h.b16 %v2149
        %v3335 = vunpack.c.l.b16 %v2150
        %v3336 = vunpack.c.h.b16 %v2150
        %v3337 = vunpack.c.l.b16 %v2151
        %v3338 = vunpack.c.h.b16 %v2151
        %v3339 = vunpack.c.l.b16 %v2152
        %v3340 = vunpack.c.h.b16 %v2152
        %v3341 = vunpack.c.l.b16 %v2153
        %v3342 = vunpack.c.h.b16 %v2153
        %v3343 = vunpack.c.l.b16 %v2154
        %v3344 = vunpack.c.h.b16 %v2154
        %v3345 = vunpack.c.l.b16 %v2155
        %v3346 = vunpack.c.h.b16 %v2155
        %v3347 = vunpack.c.l.b16 %v2156
        %v3348 = vunpack.c.h.b16 %v2156
        %v3349 = vunpack.c.l.b16 %v2157
        %v3350 = vunpack.c.h.b16 %v2157
        %v3351 = vunpack.c.l.b16 %v2158
        %v3352 = vunpack.c.h.b16 %v2158
        %v3353 = vunpack.c.l.b16 %v2159
        %v3354 = vunpack.c.h.b16 %v2159
        %v3355 = vunpack.c.l.b16 %v2160
        %v3356 = vunpack.c.h.b16 %v2160
        %v3357 = vunpack.c.l.b16 %v2161
        %v3358 = vunpack.c.h.b16 %v2161
        %v3359 = vunpack.c.l.b16 %v2162
        %v3360 = vunpack.c.h.b16 %v2162
        %v3361 = vunpack.c.l.b16 %v2163
        %v3362 = vunpack.c.h.b16 %v2163
        %v3363 = vunpack.c.l.b16 %v2164
        %v3364 = vunpack.c.h.b16 %v2164
        %v3365 = vunpack.c.l.b16 %v2165
        %v3366 = vunpack.c.h.b16 %v2165
        %v3367 = vunpack.c.l.b16 %v2166
        %v3368 = vunpack.c.h.b16 %v2166
        %v3369 = vunpack.c.l.b16 %v2167
        %v3370 = vunpack.c.h.b16 %v2167
        %v3371 = vunpack.c.l.b16 %v2168
        %v3372 = vunpack.c.h.b16 %v2168
        %v3373 = vunpack.c.l.b16 %v2169
        %v3374 = vunpack.c.h.b16 %v2169
        %v3375 = vunpack.c.l.b16 %v2170
        %v3376 = vunpack.c.h.b16 %v2170
        %v3377 = vunpack.c.l.b16 %v2171
        %v3378 = vunpack.c.h.b16 %v2171
        %v3379 = vunpack.c.l.b16 %v2172
        %v3380 = vunpack.c.h.b16 %v2172
        %v3381 = vunpack.c.l.b16 %v2173
        %v3382 = vunpack.c.h.b16 %v2173
        %v3383 = vunpack.c.l.b16 %v2174
        %v3384 = vunpack.c.h.b16 %v2174
        %v3385 = vunpack.c.l.b16 %v2175
        %v3386 = vunpack.c.h.b16 %v2175
        %v3387 = vunpack.c.l.b16 %v2176
        %v3388 = vunpack.c.h.b16 %v2176
        %v3389 = vunpack.c.l.b16 %v2177
        %v3390 = vunpack.c.h.b16 %v2177
        %v3391 = vunpack.c.l.b16 %v2178
        %v3392 = vunpack.c.h.b16 %v2178
        %v3393 = vunpack.c.l.b16 %v2179
        %v3394 = vunpack.c.h.b16 %v2179
        %v3395 = vunpack.c.l.b16 %v2180
        %v3396 = vunpack.c.h.b16 %v2180
        %v3397 = vunpack.c.l.b16 %v2181
        %v3398 = vunpack.c.h.b16 %v2181
        %v3399 = vunpack.c.l.b16 %v2182
        %v3400 = vunpack.c.h.b16 %v2182
        %v3401 = vunpack.c.l.b16 %v2183
        %v3402 = vunpack.c.h.b16 %v2183
        %v3403 = vunpack.c.l.b16 %v2184
        %v3404 = vunpack.c.h.b16 %v2184
        %v3405 = vunpack.c.l.b16 %v2185
        %v3406 = vunpack.c.h.b16 %v2185
        %v3407 = vunpack.c.l.b16 %v2186
        %v3408 = vunpack.c.h.b16 %v2186
        %v3409 = vunpack.c.l.b16 %v2187
        %v3410 = vunpack.c.h.b16 %v2187
        %v3411 = vunpack.c.l.b16 %v2188
        %v3412 = vunpack.c.h.b16 %v2188
        %v3413 = vunpack.c.l.b16 %v2189
        %v3414 = vunpack.c.h.b16 %v2189
        %v3415 = vunpack.c.l.b16 %v2190
        %v3416 = vunpack.c.h.b16 %v2190
        %v3417 = vunpack.c.l.b16 %v2191
        %v3418 = vunpack.c.h.b16 %v2191
        %v3419 = vunpack.c.l.b16 %v2192
        %v3420 = vunpack.c.h.b16 %v2192
        %v3421 = vunpack.c.l.b16 %v2193
        %v3422 = vunpack.c.h.b16 %v2193
        %v3423 = vunpack.c.l.b16 %v2194
        %v3424 = vunpack.c.h.b16 %v2194
        %v3425 = vunpack.c.l.b16 %v2195
        %v3426 = vunpack.c.h.b16 %v2195
        %v3427 = vunpack.c.l.b16 %v2196
        %v3428 = vunpack.c.h.b16 %v2196
        %v3429 = vunpack.c.l.b16 %v2197
        %v3430 = vunpack.c.h.b16 %v2197
        %v3431 = vunpack.c.l.b16 %v2198
        %v3432 = vunpack.c.h.b16 %v2198
        %v3433 = vunpack.c.l.b16 %v2199
        %v3434 = vunpack.c.h.b16 %v2199
        %v3435 = vunpack.c.l.b16 %v2200
        %v3436 = vunpack.c.h.b16 %v2200
        %v3437 = vunpack.c.l.b16 %v2201
        %v3438 = vunpack.c.h.b16 %v2201
        %v3439 = vunpack.c.l.b16 %v2202
        %v3440 = vunpack.c.h.b16 %v2202
        %v3441 = vunpack.c.l.b16 %v2203
        %v3442 = vunpack.c.h.b16 %v2203
        %v3443 = vunpack.c.l.b16 %v2204
        %v3444 = vunpack.c.h.b16 %v2204
        %v3445 = vunpack.c.l.b16 %v2205
        %v3446 = vunpack.c.h.b16 %v2205
        %v3447 = vunpack.c.l.b16 %v2206
        %v3448 = vunpack.c.h.b16 %v2206
        %v3449 = vunpack.c.l.b16 %v2207
        %v3450 = vunpack.c.h.b16 %v2207
        %v3451 = vunpack.c.l.b16 %v2208
        %v3452 = vunpack.c.h.b16 %v2208
        %v3453 = vunpack.c.l.b16 %v2209
        %v3454 = vunpack.c.h.b16 %v2209
        %v3455 = vunpack.c.l.b16 %v2210
        %v3456 = vunpack.c.h.b16 %v2210
        %v3457 = vunpack.c.l.b16 %v2211
        %v3458 = vunpack.c.h.b16 %v2211
        %v3459 = vunpack.c.l.b16 %v2212
        %v3460 = vunpack.c.h.b16 %v2212
        %v3461 = vunpack.c.l.b16 %v2213
        %v3462 = vunpack.c.h.b16 %v2213
        %v3463 = vunpack.c.l.b16 %v2214
        %v3464 = vunpack.c.h.b16 %v2214
        %v3465 = vunpack.c.l.b16 %v2215
        %v3466 = vunpack.c.h.b16 %v2215
        %v3467 = vunpack.c.l.b16 %v2216
        %v3468 = vunpack.c.h.b16 %v2216
        %v3469 = vunpack.c.l.b16 %v2217
        %v3470 = vunpack.c.h.b16 %v2217
        %v3471 = vunpack.c.l.b16 %v2218
        %v3472 = vunpack.c.h.b16 %v2218
        %v3473 = vunpack.c.l.b16 %v2219
        %v3474 = vunpack.c.h.b16 %v2219
        %v3475 = vunpack.c.l.b16 %v2220
        %v3476 = vunpack.c.h.b16 %v2220
        %v3477 = vunpack.c.l.b16 %v2221
        %v3478 = vunpack.c.h.b16 %v2221
        %v3479 = vunpack.c.l.b16 %v2222
        %v3480 = vunpack.c.h.b16 %v2222
        %v3481 = vunpack.c.l.b16 %v2223
        %v3482 = vunpack.c.h.b16 %v2223
        %v3483 = vunpack.c.l.b16 %v2224
        %v3484 = vunpack.c.h.b16 %v2224
        %v3485 = vunpack.c.l.b16 %v2225
        %v3486 = vunpack.c.h.b16 %v2225
        %v3487 = vunpack.c.l.b16 %v2226
        %v3488 = vunpack.c.h.b16 %v2226
        %v3489 = vunpack.c.l.b16 %v2227
        %v3490 = vunpack.c.h.b16 %v2227
        %v3491 = vunpack.c.l.b16 %v2228
        %v3492 = vunpack.c.h.b16 %v2228
        %v3493 = vunpack.c.l.b16 %v2229
        %v3494 = vunpack.c.h.b16 %v2229
        %v3495 = vunpack.c.l.b16 %v2230
        %v3496 = vunpack.c.h.b16 %v2230
        %v3497 = vunpack.c.l.b16 %v2231
        %v3498 = vunpack.c.h.b16 %v2231
        %v3499 = vunpack.c.l.b16 %v2232
        %v3500 = vunpack.c.h.b16 %v2232
        %v3501 = vunpack.c.l.b16 %v2233
        %v3502 = vunpack.c.h.b16 %v2233
        %v3503 = vunpack.c.l.b16 %v2234
        %v3504 = vunpack.c.h.b16 %v2234
        %v3505 = vunpack.c.l.b16 %v2235
        %v3506 = vunpack.c.h.b16 %v2235
        %v3507 = vunpack.c.l.b16 %v2236
        %v3508 = vunpack.c.h.b16 %v2236
        %v3509 = vunpack.c.l.b16 %v2237
        %v3510 = vunpack.c.h.b16 %v2237
        %v3511 = vunpack.c.l.b16 %v2238
        %v3512 = vunpack.c.h.b16 %v2238
        %v3513 = vunpack.c.l.b16 %v2239
        %v3514 = vunpack.c.h.b16 %v2239
        %v3515 = vunpack.c.l.b16 %v2240
        %v3516 = vunpack.c.h.b16 %v2240
        %v3517 = vunpack.c.l.b16 %v2241
        %v3518 = vunpack.c.h.b16 %v2241
        %v3519 = vunpack.c.l.b16 %v2242
        %v3520 = vunpack.c.h.b16 %v2242
        %v3521 = vunpack.c.l.b16 %v2243
        %v3522 = vunpack.c.h.b16 %v2243
        %v3523 = vunpack.c.l.b16 %v2244
        %v3524 = vunpack.c.h.b16 %v2244
        %v3525 = vunpack.c.l.b16 %v2245
        %v3526 = vunpack.c.h.b16 %v2245
        %v3527 = vunpack.c.l.b16 %v2246
        %v3528 = vunpack.c.h.b16 %v2246
        %v3529 = vunpack.c.l.b16 %v2247
        %v3530 = vunpack.c.h.b16 %v2247
        %v3531 = vunpack.c.l.b16 %v2248
        %v3532 = vunpack.c.h.b16 %v2248
        %v3533 = vunpack.c.l.b16 %v2249
        %v3534 = vunpack.c.h.b16 %v2249
        %v3535 = vunpack.c.l.b16 %v2250
        %v3536 = vunpack.c.h.b16 %v2250
        %v3537 = vunpack.c.l.b16 %v2251
        %v3538 = vunpack.c.h.b16 %v2251
        %v3539 = vunpack.c.l.b16 %v2252
        %v3540 = vunpack.c.h.b16 %v2252
        %v3541 = vunpack.c.l.b16 %v2253
        %v3542 = vunpack.c.h.b16 %v2253
        %v3543 = vunpack.c.l.b16 %v2254
        %v3544 = vunpack.c.h.b16 %v2254
        %v3545 = vunpack.c.l.b16 %v2255
        %v3546 = vunpack.c.h.b16 %v2255
        %v3547 = vunpack.c.l.b16 %v2256
        %v3548 = vunpack.c.h.b16 %v2256
        %v3549 = vunpack.c.l.b16 %v2257
        %v3550 = vunpack.c.h.b16 %v2257
        %v3551 = vunpack.c.l.b16 %v2258
        %v3552 = vunpack.c.h.b16 %v2258
        %v3553 = vunpack.c.l.b16 %v2259
        %v3554 = vunpack.c.h.b16 %v2259
        %v3555 = vunpack.c.l.b16 %v2260
        %v3556 = vunpack.c.h.b16 %v2260
        %v3557 = vunpack.c.l.b16 %v2261
        %v3558 = vunpack.c.h.b16 %v2261
        %v3559 = vunpack.c.l.b16 %v2262
        %v3560 = vunpack.c.h.b16 %v2262
        %v3561 = vunpack.c.l.b16 %v2263
        %v3562 = vunpack.c.h.b16 %v2263
        %v3563 = vunpack.c.l.b16 %v2264
        %v3564 = vunpack.c.h.b16 %v2264
        %v3565 = vunpack.c.l.b16 %v2265
        %v3566 = vunpack.c.h.b16 %v2265
        %v3567 = vunpack.c.l.b16 %v2266
        %v3568 = vunpack.c.h.b16 %v2266
        %v3569 = vunpack.c.l.b16 %v2267
        %v3570 = vunpack.c.h.b16 %v2267
        %v3571 = vunpack.c.l.b16 %v2268
        %v3572 = vunpack.c.h.b16 %v2268
        %v3573 = vunpack.c.l.b16 %v2269
        %v3574 = vunpack.c.h.b16 %v2269
        %v3575 = vunpack.c.l.b16 %v2270
        %v3576 = vunpack.c.h.b16 %v2270
        %v3577 = vunpack.c.l.b16 %v2271
        %v3578 = vunpack.c.h.b16 %v2271
        %v3579 = vunpack.c.l.b16 %v2272
        %v3580 = vunpack.c.h.b16 %v2272
        %v3581 = vunpack.c.l.b16 %v2273
        %v3582 = vunpack.c.h.b16 %v2273
        %v3583 = vunpack.c.l.b16 %v2274
        %v3584 = vunpack.c.h.b16 %v2274
        %v3585 = vunpack.c.l.b16 %v2275
        %v3586 = vunpack.c.h.b16 %v2275
        %v3587 = vunpack.c.l.b16 %v2276
        %v3588 = vunpack.c.h.b16 %v2276
        %v3589 = vunpack.c.l.b16 %v2277
        %v3590 = vunpack.c.h.b16 %v2277
        %v3591 = vunpack.c.l.b16 %v2278
        %v3592 = vunpack.c.h.b16 %v2278
        %v3593 = vunpack.c.l.b16 %v2279
        %v3594 = vunpack.c.h.b16 %v2279
        %v3595 = vunpack.c.l.b16 %v2280
        %v3596 = vunpack.c.h.b16 %v2280
        %v3597 = vunpack.c.l.b16 %v2281
        %v3598 = vunpack.c.h.b16 %v2281
        %v3599 = vunpack.c.l.b16 %v2282
        %v3600 = vunpack.c.h.b16 %v2282
        %v3601 = vunpack.c.l.b16 %v2283
        %v3602 = vunpack.c.h.b16 %v2283
        %v3603 = vunpack.c.l.b16 %v2284
        %v3604 = vunpack.c.h.b16 %v2284
        %v3605 = vunpack.c.l.b16 %v2285
        %v3606 = vunpack.c.h.b16 %v2285
        %v3607 = vunpack.c.l.b16 %v2286
        %v3608 = vunpack.c.h.b16 %v2286
        %v3609 = vunpack.c.l.b16 %v2287
        %v3610 = vunpack.c.h.b16 %v2287
        %v3611 = vunpack.c.l.b16 %v2288
        %v3612 = vunpack.c.h.b16 %v2288
        %v3613 = vunpack.c.l.b16 %v2289
        %v3614 = vunpack.c.h.b16 %v2289
        %v3615 = vunpack.c.l.b16 %v2290
        %v3616 = vunpack.c.h.b16 %v2290
        %v3617 = vunpack.c.l.b16 %v2291
        %v3618 = vunpack.c.h.b16 %v2291
        %v3619 = vunpack.c.l.b16 %v2292
        %v3620 = vunpack.c.h.b16 %v2292
        %v3621 = vunpack.c.l.b16 %v2293
        %v3622 = vunpack.c.h.b16 %v2293
        %v3623 = vunpack.c.l.b16 %v2294
        %v3624 = vunpack.c.h.b16 %v2294
        %v3625 = vunpack.c.l.b16 %v2295
        %v3626 = vunpack.c.h.b16 %v2295
        %v3627 = vunpack.c.l.b16 %v2296
        %v3628 = vunpack.c.h.b16 %v2296
        %v3629 = vunpack.c.l.b16 %v2297
        %v3630 = vunpack.c.h.b16 %v2297
        %v3631 = vunpack.c.l.b16 %v2298
        %v3632 = vunpack.c.h.b16 %v2298
        %v3633 = vunpack.c.l.b16 %v2299
        %v3634 = vunpack.c.h.b16 %v2299
        %v3635 = vunpack.c.l.b16 %v2300
        %v3636 = vunpack.c.h.b16 %v2300
        %v3637 = vunpack.c.l.b16 %v2301
        %v3638 = vunpack.c.h.b16 %v2301
        %v3639 = vunpack.c.l.b16 %v2302
        %v3640 = vunpack.c.h.b16 %v2302
        %v3641 = vunpack.c.l.b16 %v2303
        %v3642 = vunpack.c.h.b16 %v2303
        %v3643 = vunpack.c.l.b16 %v2304
        %v3644 = vunpack.c.h.b16 %v2304
        %v3645 = vunpack.c.l.b16 %v2305
        %v3646 = vunpack.c.h.b16 %v2305
        %v3647 = vunpack.c.l.b16 %v2306
        %v3648 = vunpack.c.h.b16 %v2306
        %v3649 = vunpack.c.l.b16 %v2307
        %v3650 = vunpack.c.h.b16 %v2307
        %v3651 = vunpack.c.l.b16 %v2308
        %v3652 = vunpack.c.h.b16 %v2308
        %v3653 = vunpack.c.l.b16 %v2309
        %v3654 = vunpack.c.h.b16 %v2309
        %v3655 = vunpack.c.l.b16 %v2310
        %v3656 = vunpack.c.h.b16 %v2310
        %v3657 = vunpack.c.l.b16 %v2311
        %v3658 = vunpack.c.h.b16 %v2311
        %v3659 = vunpack.c.l.b16 %v2312
        %v3660 = vunpack.c.h.b16 %v2312
        %v3661 = vunpack.c.l.b16 %v2313
        %v3662 = vunpack.c.h.b16 %v2313
        %v3663 = vunpack.c.l.b16 %v2314
        %v3664 = vunpack.c.h.b16 %v2314
        %v3665 = vunpack.c.l.b16 %v2315
        %v3666 = vunpack.c.h.b16 %v2315
        %v3667 = vunpack.c.l.b16 %v2316
        %v3668 = vunpack.c.h.b16 %v2316
        %v3669 = vunpack.c.l.b16 %v2317
        %v3670 = vunpack.c.h.b16 %v2317
        %v3671 = vunpack.c.l.b16 %v2318
        %v3672 = vunpack.c.h.b16 %v2318
        %v3673 = vunpack.c.l.b16 %v2319
        %v3674 = vunpack.c.h.b16 %v2319
        %v3675 = vunpack.c.l.b16 %v2320
        %v3676 = vunpack.c.h.b16 %v2320
        %v3677 = vunpack.c.l.b16 %v2321
        %v3678 = vunpack.c.h.b16 %v2321
        %v3679 = vunpack.c.l.b16 %v2322
        %v3680 = vunpack.c.h.b16 %v2322
        %v3681 = vunpack.c.l.b16 %v2323
        %v3682 = vunpack.c.h.b16 %v2323
        %v3683 = vunpack.c.l.b16 %v2324
        %v3684 = vunpack.c.h.b16 %v2324
        %v3685 = vunpack.c.l.b16 %v2325
        %v3686 = vunpack.c.h.b16 %v2325
        %v3687 = vunpack.c.l.b16 %v2326
        %v3688 = vunpack.c.h.b16 %v2326
        %v3689 = vunpack.c.l.b16 %v2327
        %v3690 = vunpack.c.h.b16 %v2327
        %v3691 = vunpack.c.l.b16 %v2328
        %v3692 = vunpack.c.h.b16 %v2328
        %v3693 = vunpack.c.l.b16 %v2329
        %v3694 = vunpack.c.h.b16 %v2329
        %v3695 = vunpack.c.l.b16 %v2330
        %v3696 = vunpack.c.h.b16 %v2330
        %v3697 = vunpack.c.l.b16 %v2331
        %v3698 = vunpack.c.h.b16 %v2331
        %v3699 = vunpack.c.l.b16 %v2332
        %v3700 = vunpack.c.h.b16 %v2332
        %v3701 = vunpack.c.l.b16 %v2333
        %v3702 = vunpack.c.h.b16 %v2333
        %v3703 = vunpack.c.l.b16 %v2334
        %v3704 = vunpack.c.h.b16 %v2334
        %v3705 = vunpack.c.l.b16 %v2335
        %v3706 = vunpack.c.h.b16 %v2335
        %v3707 = vunpack.c.l.b16 %v2336
        %v3708 = vunpack.c.h.b16 %v2336
        %v3709 = vunpack.c.l.b16 %v2337
        %v3710 = vunpack.c.h.b16 %v2337
        %v3711 = vunpack.c.l.b16 %v2338
        %v3712 = vunpack.c.h.b16 %v2338
        %v3713 = vunpack.c.l.b16 %v2339
        %v3714 = vunpack.c.h.b16 %v2339
        %v3715 = vunpack.c.l.b16 %v2340
        %v3716 = vunpack.c.h.b16 %v2340
        %v3717 = vunpack.c.l.b16 %v2341
        %v3718 = vunpack.c.h.b16 %v2341
        %v3719 = vunpack.c.l.b16 %v2342
        %v3720 = vunpack.c.h.b16 %v2342
        %v3721 = vunpack.c.l.b16 %v2343
        %v3722 = vunpack.c.h.b16 %v2343
        %v3723 = vunpack.c.l.b16 %v2344
        %v3724 = vunpack.c.h.b16 %v2344
        %v3725 = vunpack.c.l.b16 %v2345
        %v3726 = vunpack.c.h.b16 %v2345
        %v3727 = vunpack.c.l.b16 %v2346
        %v3728 = vunpack.c.h.b16 %v2346
        %v3729 = vunpack.c.l.b16 %v2347
        %v3730 = vunpack.c.h.b16 %v2347
        %v3731 = vunpack.c.l.b16 %v2348
        %v3732 = vunpack.c.h.b16 %v2348
        %v3733 = vunpack.c.l.b16 %v2349
        %v3734 = vunpack.c.h.b16 %v2349
        %v3735 = vunpack.c.l.b16 %v2350
        %v3736 = vunpack.c.h.b16 %v2350
        %v3737 = vunpack.c.l.b16 %v2351
        %v3738 = vunpack.c.h.b16 %v2351
        %v3739 = vunpack.c.l.b16 %v2352
        %v3740 = vunpack.c.h.b16 %v2352
        %v3741 = vunpack.c.l.b16 %v2353
        %v3742 = vunpack.c.h.b16 %v2353
        %v3743 = vunpack.c.l.b16 %v2354
        %v3744 = vunpack.c.h.b16 %v2354
        %v3745 = vunpack.c.l.b16 %v2355
        %v3746 = vunpack.c.h.b16 %v2355
        %v3747 = vunpack.c.l.b16 %v2356
        %v3748 = vunpack.c.h.b16 %v2356
        %v3749 = vunpack.c.l.b16 %v2357
        %v3750 = vunpack.c.h.b16 %v2357
        %v3751 = vunpack.c.l.b16 %v2358
        %v3752 = vunpack.c.h.b16 %v2358
        %v3753 = vunpack.c.l.b16 %v2359
        %v3754 = vunpack.c.h.b16 %v2359
        %v3755 = vunpack.c.l.b16 %v2360
        %v3756 = vunpack.c.h.b16 %v2360
        %v3757 = vunpack.c.l.b16 %v2361
        %v3758 = vunpack.c.h.b16 %v2361
        %v3759 = vunpack.c.l.b16 %v2362
        %v3760 = vunpack.c.h.b16 %v2362
        %v3761 = vunpack.c.l.b16 %v2363
        %v3762 = vunpack.c.h.b16 %v2363
        %v3763 = vunpack.c.l.b16 %v2364
        %v3764 = vunpack.c.h.b16 %v2364
        %v3765 = vunpack.c.l.b16 %v2365
        %v3766 = vunpack.c.h.b16 %v2365
        %v3767 = vunpack.c.l.b16 %v2366
        %v3768 = vunpack.c.h.b16 %v2366
        %v3769 = vunpack.c.l.b16 %v2367
        %v3770 = vunpack.c.h.b16 %v2367
        %v3771 = vunpack.c.l.b16 %v2368
        %v3772 = vunpack.c.h.b16 %v2368
        %v3773 = vunpack.c.l.b16 %v2369
        %v3774 = vunpack.c.h.b16 %v2369
        %v3775 = vunpack.c.l.b16 %v2370
        %v3776 = vunpack.c.h.b16 %v2370
        %v3777 = vunpack.c.l.b16 %v2371
        %v3778 = vunpack.c.h.b16 %v2371
        %v3779 = vunpack.c.l.b16 %v2372
        %v3780 = vunpack.c.h.b16 %v2372
        %v3781 = vunpack.c.l.b16 %v2373
        %v3782 = vunpack.c.h.b16 %v2373
        %v3783 = vunpack.c.l.b16 %v2374
        %v3784 = vunpack.c.h.b16 %v2374
        %v3785 = vunpack.c.l.b16 %v2375
        %v3786 = vunpack.c.h.b16 %v2375
        %v3787 = vunpack.c.l.b16 %v2376
        %v3788 = vunpack.c.h.b16 %v2376
        %v3789 = vunpack.c.l.b16 %v2377
        %v3790 = vunpack.c.h.b16 %v2377
        %v3791 = vunpack.c.l.b16 %v2378
        %v3792 = vunpack.c.h.b16 %v2378
        %v3793 = vunpack.c.l.b16 %v2379
        %v3794 = vunpack.c.h.b16 %v2379
        %v3795 = vunpack.c.l.b16 %v2380
        %v3796 = vunpack.c.h.b16 %v2380
        %v3797 = vunpack.c.l.b16 %v2381
        %v3798 = vunpack.c.h.b16 %v2381
        %v3799 = vunpack.c.l.b16 %v2382
        %v3800 = vunpack.c.h.b16 %v2382
        %v3801 = vunpack.c.l.b16 %v2383
        %v3802 = vunpack.c.h.b16 %v2383
        %v3803 = vunpack.c.l.b16 %v2384
        %v3804 = vunpack.c.h.b16 %v2384
        %v3805 = vunpack.c.l.b16 %v2385
        %v3806 = vunpack.c.h.b16 %v2385
        %v3807 = vunpack.c.l.b16 %v2386
        %v3808 = vunpack.c.h.b16 %v2386
        %v3809 = vunpack.c.l.b16 %v2387
        %v3810 = vunpack.c.h.b16 %v2387
        %v3811 = vunpack.c.l.b16 %v2388
        %v3812 = vunpack.c.h.b16 %v2388
        %v3813 = vunpack.c.l.b16 %v2389
        %v3814 = vunpack.c.h.b16 %v2389
        %v3815 = vunpack.c.l.b16 %v2390
        %v3816 = vunpack.c.h.b16 %v2390
        %v3817 = vunpack.c.l.b16 %v2391
        %v3818 = vunpack.c.h.b16 %v2391
        %v3819 = vunpack.c.l.b16 %v2392
        %v3820 = vunpack.c.h.b16 %v2392
        %v3821 = vunpack.c.l.b16 %v2393
        %v3822 = vunpack.c.h.b16 %v2393
        %v3823 = vunpack.c.l.b16 %v2394
        %v3824 = vunpack.c.h.b16 %v2394
        %v3825 = vunpack.c.l.b16 %v2395
        %v3826 = vunpack.c.h.b16 %v2395
        %v3827 = vunpack.c.l.b16 %v2396
        %v3828 = vunpack.c.h.b16 %v2396
        %v3829 = vunpack.c.l.b16 %v2397
        %v3830 = vunpack.c.h.b16 %v2397
        %v3831 = vunpack.c.l.b16 %v2398
        %v3832 = vunpack.c.h.b16 %v2398
        %v3833 = vunpack.c.l.b16 %v2399
        %v3834 = vunpack.c.h.b16 %v2399
        %v3835 = vunpack.c.l.b16 %v2400
        %v3836 = vunpack.c.h.b16 %v2400
        %v3837 = vunpack.c.l.b16 %v2401
        %v3838 = vunpack.c.h.b16 %v2401
        %v3839 = vunpack.c.l.b16 %v2402
        %v3840 = vunpack.c.h.b16 %v2402
        %v3841 = vunpack.c.l.b16 %v2403
        %v3842 = vunpack.c.h.b16 %v2403
        %v3843 = vunpack.c.l.b16 %v2404
        %v3844 = vunpack.c.h.b16 %v2404
        %v3845 = vunpack.c.l.b16 %v2405
        %v3846 = vunpack.c.h.b16 %v2405
        %v3847 = vunpack.c.l.b16 %v2406
        %v3848 = vunpack.c.h.b16 %v2406
        %v3849 = vunpack.c.l.b16 %v2407
        %v3850 = vunpack.c.h.b16 %v2407
        %v3851 = vunpack.c.l.b16 %v2408
        %v3852 = vunpack.c.h.b16 %v2408
        %v3853 = vunpack.c.l.b16 %v2409
        %v3854 = vunpack.c.h.b16 %v2409
        %v3855 = vunpack.c.l.b16 %v2410
        %v3856 = vunpack.c.h.b16 %v2410
        %v3857 = vunpack.c.l.b16 %v2411
        %v3858 = vunpack.c.h.b16 %v2411
        %v3859 = vunpack.c.l.b16 %v2412
        %v3860 = vunpack.c.h.b16 %v2412
        %v3861 = vunpack.c.l.b16 %v2413
        %v3862 = vunpack.c.h.b16 %v2413
        %v3863 = vunpack.c.l.b16 %v2414
        %v3864 = vunpack.c.h.b16 %v2414
        %v3865 = vunpack.c.l.b16 %v2415
        %v3866 = vunpack.c.h.b16 %v2415
        %v3867 = vunpack.c.l.b16 %v2416
        %v3868 = vunpack.c.h.b16 %v2416
        %v3869 = vunpack.c.l.b16 %v2417
        %v3870 = vunpack.c.h.b16 %v2417
        %v3871 = vunpack.c.l.b16 %v2418
        %v3872 = vunpack.c.h.b16 %v2418
        %v3873 = vunpack.c.l.b16 %v2419
        %v3874 = vunpack.c.h.b16 %v2419
        %v3875 = vunpack.c.l.b16 %v2420
        %v3876 = vunpack.c.h.b16 %v2420
        %v3877 = vunpack.c.l.b16 %v2421
        %v3878 = vunpack.c.h.b16 %v2421
        %v3879 = vunpack.c.l.b16 %v2422
        %v3880 = vunpack.c.h.b16 %v2422
        %v3881 = vunpack.c.l.b16 %v2423
        %v3882 = vunpack.c.h.b16 %v2423
        %v3883 = vunpack.c.l.b16 %v2424
        %v3884 = vunpack.c.h.b16 %v2424
        %v3885 = vunpack.c.l.b16 %v2425
        %v3886 = vunpack.c.h.b16 %v2425
        %v3887 = vunpack.c.l.b16 %v2426
        %v3888 = vunpack.c.h.b16 %v2426
        %v3889 = vunpack.c.l.b16 %v2427
        %v3890 = vunpack.c.h.b16 %v2427
        %v3891 = vunpack.c.l.b16 %v2428
        %v3892 = vunpack.c.h.b16 %v2428
        %v3893 = vunpack.c.l.b16 %v2429
        %v3894 = vunpack.c.h.b16 %v2429
        %v3895 = vunpack.c.l.b16 %v2430
        %v3896 = vunpack.c.h.b16 %v2430
        %v3897 = vunpack.c.l.b16 %v2431
        %v3898 = vunpack.c.h.b16 %v2431
        %v3899 = vunpack.c.l.b16 %v2432
        %v3900 = vunpack.c.h.b16 %v2432
        %v3901 = vunpack.c.l.b16 %v2433
        %v3902 = vunpack.c.h.b16 %v2433
        %v3903 = vunpack.c.l.b16 %v2434
        %v3904 = vunpack.c.h.b16 %v2434
        %v3905 = vunpack.c.l.b16 %v2435
        %v3906 = vunpack.c.h.b16 %v2435
        %v3907 = vunpack.c.l.b16 %v2436
        %v3908 = vunpack.c.h.b16 %v2436
        %v3909 = vunpack.c.l.b16 %v2437
        %v3910 = vunpack.c.h.b16 %v2437
        %v3911 = vunpack.c.l.b16 %v2438
        %v3912 = vunpack.c.h.b16 %v2438
        %v3913 = vunpack.c.l.b16 %v2439
        %v3914 = vunpack.c.h.b16 %v2439
        %v3915 = vunpack.c.l.b16 %v2440
        %v3916 = vunpack.c.h.b16 %v2440
        %v3917 = vunpack.c.l.b16 %v2441
        %v3918 = vunpack.c.h.b16 %v2441
        %v3919 = vunpack.c.l.b16 %v2442
        %v3920 = vunpack.c.h.b16 %v2442
        %v3921 = vunpack.c.l.b16 %v2443
        %v3922 = vunpack.c.h.b16 %v2443
        %v3923 = vunpack.c.l.b16 %v2444
        %v3924 = vunpack.c.h.b16 %v2444
        %v3925 = vunpack.c.l.b16 %v2445
        %v3926 = vunpack.c.h.b16 %v2445
        %v3927 = vunpack.c.l.b16 %v2446
        %v3928 = vunpack.c.h.b16 %v2446
        %v3929 = vunpack.c.l.b16 %v2447
        %v3930 = vunpack.c.h.b16 %v2447
        %v3931 = vunpack.c.l.b16 %v2448
        %v3932 = vunpack.c.h.b16 %v2448
        %v3933 = vunpack.c.l.b16 %v2449
        %v3934 = vunpack.c.h.b16 %v2449
        %v3935 = vunpack.c.l.b16 %v2450
        %v3936 = vunpack.c.h.b16 %v2450
        %v3937 = vunpack.c.l.b16 %v2451
        %v3938 = vunpack.c.h.b16 %v2451
        %v3939 = vunpack.c.l.b16 %v2452
        %v3940 = vunpack.c.h.b16 %v2452
        %v3941 = vunpack.c.l.b16 %v2453
        %v3942 = vunpack.c.h.b16 %v2453
        %v3943 = vunpack.c.l.b16 %v2454
        %v3944 = vunpack.c.h.b16 %v2454
        %v3945 = vunpack.c.l.b16 %v2455
        %v3946 = vunpack.c.h.b16 %v2455
        %v3947 = vunpack.c.l.b16 %v2456
        %v3948 = vunpack.c.h.b16 %v2456
        %v3949 = vunpack.c.l.b16 %v2457
        %v3950 = vunpack.c.h.b16 %v2457
        %v3951 = vunpack.c.l.b16 %v2458
        %v3952 = vunpack.c.h.b16 %v2458
        %v3953 = vunpack.c.l.b16 %v2459
        %v3954 = vunpack.c.h.b16 %v2459
        %v3955 = vunpack.c.l.b16 %v2460
        %v3956 = vunpack.c.h.b16 %v2460
        %v3957 = vunpack.c.l.b16 %v2461
        %v3958 = vunpack.c.h.b16 %v2461
        %v3959 = vunpack.c.l.b16 %v2462
        %v3960 = vunpack.c.h.b16 %v2462
        %v3961 = vunpack.c.l.b16 %v2463
        %v3962 = vunpack.c.h.b16 %v2463
        %v3963 = vunpack.c.l.b16 %v2464
        %v3964 = vunpack.c.h.b16 %v2464
        %v3965 = vunpack.c.l.b16 %v2465
        %v3966 = vunpack.c.h.b16 %v2465
        %v3967 = vunpack.c.l.b16 %v2466
        %v3968 = vunpack.c.h.b16 %v2466
        %v3969 = vunpack.c.l.b16 %v2467
        %v3970 = vunpack.c.h.b16 %v2467
        %v3971 = vunpack.c.l.b16 %v2468
        %v3972 = vunpack.c.h.b16 %v2468
        %v3973 = vunpack.c.l.b16 %v2469
        %v3974 = vunpack.c.h.b16 %v2469
        %v3975 = vunpack.c.l.b16 %v2470
        %v3976 = vunpack.c.h.b16 %v2470
        %v3977 = vunpack.c.l.b16 %v2471
        %v3978 = vunpack.c.h.b16 %v2471
        %v3979 = vunpack.c.l.b16 %v2472
        %v3980 = vunpack.c.h.b16 %v2472
        %v3981 = vunpack.c.l.b16 %v2473
        %v3982 = vunpack.c.h.b16 %v2473
        %v3983 = vunpack.c.l.b16 %v2474
        %v3984 = vunpack.c.h.b16 %v2474
        %v3985 = vunpack.c.l.b16 %v2475
        %v3986 = vunpack.c.h.b16 %v2475
        %v3987 = vunpack.c.l.b16 %v2476
        %v3988 = vunpack.c.h.b16 %v2476
        %v3989 = vunpack.c.l.b16 %v2477
        %v3990 = vunpack.c.h.b16 %v2477
        %v3991 = vunpack.c.l.b16 %v2478
        %v3992 = vunpack.c.h.b16 %v2478
        %v3993 = vunpack.c.l.b16 %v2479
        %v3994 = vunpack.c.h.b16 %v2479
        %v3995 = vunpack.c.l.b16 %v2480
        %v3996 = vunpack.c.h.b16 %v2480
        %v3997 = vunpack.c.l.b16 %v2481
        %v3998 = vunpack.c.h.b16 %v2481
        %v3999 = vunpack.c.l.b16 %v2482
        %v4000 = vunpack.c.h.b16 %v2482
        %v4001 = vunpack.c.l.b16 %v2483
        %v4002 = vunpack.c.h.b16 %v2483
        %v4003 = vunpack.c.l.b16 %v2484
        %v4004 = vunpack.c.h.b16 %v2484
        %v4005 = vunpack.c.l.b16 %v2485
        %v4006 = vunpack.c.h.b16 %v2485
        %v4007 = vunpack.c.l.b16 %v2486
        %v4008 = vunpack.c.h.b16 %v2486
        %v4009 = vunpack.c.l.b16 %v2487
        %v4010 = vunpack.c.h.b16 %v2487
        %v4011 = vunpack.c.l.b16 %v2488
        %v4012 = vunpack.c.h.b16 %v2488
        %v4013 = vunpack.c.l.b16 %v2489
        %v4014 = vunpack.c.h.b16 %v2489
        %v4015 = vunpack.c.l.b16 %v2490
        %v4016 = vunpack.c.h.b16 %v2490
        %v4017 = vunpack.c.l.b16 %v2491
        %v4018 = vunpack.c.h.b16 %v2491
        %v4019 = vunpack.c.l.b16 %v2492
        %v4020 = vunpack.c.h.b16 %v2492
        %v4021 = vunpack.c.l.b16 %v2493
        %v4022 = vunpack.c.h.b16 %v2493
        %v4023 = vunpack.c.l.b16 %v2494
        %v4024 = vunpack.c.h.b16 %v2494
        %v4025 = vunpack.c.l.b16 %v2495
        %v4026 = vunpack.c.h.b16 %v2495
        %v4027 = vunpack.c.l.b16 %v2496
        %v4028 = vunpack.c.h.b16 %v2496
        %v4029 = vunpack.c.l.b16 %v2497
        %v4030 = vunpack.c.h.b16 %v2497
        %v4031 = vunpack.c.l.b16 %v2498
        %v4032 = vunpack.c.h.b16 %v2498
        %v4033 = vunpack.c.l.b16 %v2499
        %v4034 = vunpack.c.h.b16 %v2499
        %v4035 = vunpack.c.l.b16 %v2500
        %v4036 = vunpack.c.h.b16 %v2500
        %v4037 = vunpack.c.l.b16 %v2501
        %v4038 = vunpack.c.h.b16 %v2501
        %v4039 = vunpack.c.l.b16 %v2502
        %v4040 = vunpack.c.h.b16 %v2502
        %v4041 = vunpack.c.l.b16 %v2503
        %v4042 = vunpack.c.h.b16 %v2503
        %v4043 = vunpack.c.l.b16 %v2504
        %v4044 = vunpack.c.h.b16 %v2504
        %v4045 = vunpack.c.l.b16 %v2505
        %v4046 = vunpack.c.h.b16 %v2505
        %v4047 = vunpack.c.l.b16 %v2506
        %v4048 = vunpack.c.h.b16 %v2506
        %v4049 = vunpack.c.l.b16 %v2507
        %v4050 = vunpack.c.h.b16 %v2507
        %v4051 = vunpack.c.l.b16 %v2508
        %v4052 = vunpack.c.h.b16 %v2508
        %v4053 = vunpack.c.l.b16 %v2509
        %v4054 = vunpack.c.h.b16 %v2509
        %v4055 = vunpack.c.l.b16 %v2510
        %v4056 = vunpack.c.h.b16 %v2510
        %v4057 = vunpack.c.l.b16 %v2511
        %v4058 = vunpack.c.h.b16 %v2511
        %v4059 = vunpack.c.l.b16 %v2512
        %v4060 = vunpack.c.h.b16 %v2512
        %v4061 = vunpack.c.l.b16 %v2513
        %v4062 = vunpack.c.h.b16 %v2513
        %v4063 = vunpack.c.l.b16 %v2514
        %v4064 = vunpack.c.h.b16 %v2514
        %v4065 = vunpack.c.l.b16 %v2515
        %v4066 = vunpack.c.h.b16 %v2515
        %v4067 = vunpack.c.l.b16 %v2516
        %v4068 = vunpack.c.h.b16 %v2516
        %v4069 = vunpack.c.l.b16 %v2517
        %v4070 = vunpack.c.h.b16 %v2517
        %v4071 = vunpack.c.l.b16 %v2518
        %v4072 = vunpack.c.h.b16 %v2518
        %v4073 = vpack.c.b16 %v3057, %v3049
        %v4074 = vpack.c.b16 %v3058, %v3050
        %v4075 = vpack.c.b16 %v3059, %v3051
        %v4076 = vpack.c.b16 %v3060, %v3052
        %v4077 = vpack.c.b16 %v3061, %v3053
        %v4078 = vpack.c.b16 %v3062, %v3054
        %v4079 = vpack.c.b16 %v3063, %v3055
        %v4080 = vpack.c.b16 %v3064, %v3056
        %v4081 = vpack.c.b16 %v3073, %v3065
        %v4082 = vpack.c.b16 %v3074, %v3066
        %v4083 = vpack.c.b16 %v3075, %v3067
        %v4084 = vpack.c.b16 %v3076, %v3068
        %v4085 = vpack.c.b16 %v3077, %v3069
        %v4086 = vpack.c.b16 %v3078, %v3070
        %v4087 = vpack.c.b16 %v3079, %v3071
        %v4088 = vpack.c.b16 %v3080, %v3072
        %v4089 = vpack.c.b16 %v3089, %v3081
        %v4090 = vpack.c.b16 %v3090, %v3082
        %v4091 = vpack.c.b16 %v3091, %v3083
        %v4092 = vpack.c.b16 %v3092, %v3084
        %v4093 = vpack.c.b16 %v3093, %v3085
        %v4094 = vpack.c.b16 %v3094, %v3086
        %v4095 = vpack.c.b16 %v3095, %v3087
        %v4096 = vpack.c.b16 %v3096, %v3088
        %v4097 = vpack.c.b16 %v3105, %v3097
        %v4098 = vpack.c.b16 %v3106, %v3098
        %v4099 = vpack.c.b16 %v3107, %v3099
        %v4100 = vpack.c.b16 %v3108, %v3100
        %v4101 = vpack.c.b16 %v3109, %v3101
        %v4102 = vpack.c.b16 %v3110, %v3102
        %v4103 = vpack.c.b16 %v3111, %v3103
        %v4104 = vpack.c.b16 %v3112, %v3104
        %v4105 = vpack.c.b16 %v3121, %v3113
        %v4106 = vpack.c.b16 %v3122, %v3114
        %v4107 = vpack.c.b16 %v3123, %v3115
        %v4108 = vpack.c.b16 %v3124, %v3116
        %v4109 = vpack.c.b16 %v3125, %v3117
        %v4110 = vpack.c.b16 %v3126, %v3118
        %v4111 = vpack.c.b16 %v3127, %v3119
        %v4112 = vpack.c.b16 %v3128, %v3120
        %v4113 = vpack.c.b16 %v3137, %v3129
        %v4114 = vpack.c.b16 %v3138, %v3130
        %v4115 = vpack.c.b16 %v3139, %v3131
        %v4116 = vpack.c.b16 %v3140, %v3132
        %v4117 = vpack.c.b16 %v3141, %v3133
        %v4118 = vpack.c.b16 %v3142, %v3134
        %v4119 = vpack.c.b16 %v3143, %v3135
        %v4120 = vpack.c.b16 %v3144, %v3136
        %v4121 = vpack.c.b16 %v3153, %v3145
        %v4122 = vpack.c.b16 %v3154, %v3146
        %v4123 = vpack.c.b16 %v3155, %v3147
        %v4124 = vpack.c.b16 %v3156, %v3148
        %v4125 = vpack.c.b16 %v3157, %v3149
        %v4126 = vpack.c.b16 %v3158, %v3150
        %v4127 = vpack.c.b16 %v3159, %v3151
        %v4128 = vpack.c.b16 %v3160, %v3152
        %v4129 = vpack.c.b16 %v3169, %v3161
        %v4130 = vpack.c.b16 %v3170, %v3162
        %v4131 = vpack.c.b16 %v3171, %v3163
        %v4132 = vpack.c.b16 %v3172, %v3164
        %v4133 = vpack.c.b16 %v3173, %v3165
        %v4134 = vpack.c.b16 %v3174, %v3166
        %v4135 = vpack.c.b16 %v3175, %v3167
        %v4136 = vpack.c.b16 %v3176, %v3168
        %v4137 = vpack.c.b16 %v3185, %v3177
        %v4138 = vpack.c.b16 %v3186, %v3178
        %v4139 = vpack.c.b16 %v3187, %v3179
        %v4140 = vpack.c.b16 %v3188, %v3180
        %v4141 = vpack.c.b16 %v3189, %v3181
        %v4142 = vpack.c.b16 %v3190, %v3182
        %v4143 = vpack.c.b16 %v3191, %v3183
        %v4144 = vpack.c.b16 %v3192, %v3184
        %v4145 = vpack.c.b16 %v3201, %v3193
        %v4146 = vpack.c.b16 %v3202, %v3194
        %v4147 = vpack.c.b16 %v3203, %v3195
        %v4148 = vpack.c.b16 %v3204, %v3196
        %v4149 = vpack.c.b16 %v3205, %v3197
        %v4150 = vpack.c.b16 %v3206, %v3198
        %v4151 = vpack.c.b16 %v3207, %v3199
        %v4152 = vpack.c.b16 %v3208, %v3200
        %v4153 = vpack.c.b16 %v3217, %v3209
        %v4154 = vpack.c.b16 %v3218, %v3210
        %v4155 = vpack.c.b16 %v3219, %v3211
        %v4156 = vpack.c.b16 %v3220, %v3212
        %v4157 = vpack.c.b16 %v3221, %v3213
        %v4158 = vpack.c.b16 %v3222, %v3214
        %v4159 = vpack.c.b16 %v3223, %v3215
        %v4160 = vpack.c.b16 %v3224, %v3216
        %v4161 = vpack.c.b16 %v3233, %v3225
        %v4162 = vpack.c.b16 %v3234, %v3226
        %v4163 = vpack.c.b16 %v3235, %v3227
        %v4164 = vpack.c.b16 %v3236, %v3228
        %v4165 = vpack.c.b16 %v3237, %v3229
        %v4166 = vpack.c.b16 %v3238, %v3230
        %v4167 = vpack.c.b16 %v3239, %v3231
        %v4168 = vpack.c.b16 %v3240, %v3232
        %v4169 = vpack.c.b16 %v3249, %v3241
        %v4170 = vpack.c.b16 %v3250, %v3242
        %v4171 = vpack.c.b16 %v3251, %v3243
        %v4172 = vpack.c.b16 %v3252, %v3244
        %v4173 = vpack.c.b16 %v3253, %v3245
        %v4174 = vpack.c.b16 %v3254, %v3246
        %v4175 = vpack.c.b16 %v3255, %v3247
        %v4176 = vpack.c.b16 %v3256, %v3248
        %v4177 = vpack.c.b16 %v3265, %v3257
        %v4178 = vpack.c.b16 %v3266, %v3258
        %v4179 = vpack.c.b16 %v3267, %v3259
        %v4180 = vpack.c.b16 %v3268, %v3260
        %v4181 = vpack.c.b16 %v3269, %v3261
        %v4182 = vpack.c.b16 %v3270, %v3262
        %v4183 = vpack.c.b16 %v3271, %v3263
        %v4184 = vpack.c.b16 %v3272, %v3264
        %v4185 = vpack.c.b16 %v3281, %v3273
        %v4186 = vpack.c.b16 %v3282, %v3274
        %v4187 = vpack.c.b16 %v3283, %v3275
        %v4188 = vpack.c.b16 %v3284, %v3276
        %v4189 = vpack.c.b16 %v3285, %v3277
        %v4190 = vpack.c.b16 %v3286, %v3278
        %v4191 = vpack.c.b16 %v3287, %v3279
        %v4192 = vpack.c.b16 %v3288, %v3280
        %v4193 = vpack.c.b16 %v3297, %v3289
        %v4194 = vpack.c.b16 %v3298, %v3290
        %v4195 = vpack.c.b16 %v3299, %v3291
        %v4196 = vpack.c.b16 %v3300, %v3292
        %v4197 = vpack.c.b16 %v3301, %v3293
        %v4198 = vpack.c.b16 %v3302, %v3294
        %v4199 = vpack.c.b16 %v3303, %v3295
        %v4200 = vpack.c.b16 %v3304, %v3296
        %v4201 = vpack.c.b16 %v3313, %v3305
        %v4202 = vpack.c.b16 %v3314, %v3306
        %v4203 = vpack.c.b16 %v3315, %v3307
        %v4204 = vpack.c.b16 %v3316, %v3308
        %v4205 = vpack.c.b16 %v3317, %v3309
        %v4206 = vpack.c.b16 %v3318, %v3310
        %v4207 = vpack.c.b16 %v3319, %v3311
        %v4208 = vpack.c.b16 %v3320, %v3312
        %v4209 = vpack.c.b16 %v3329, %v3321
        %v4210 = vpack.c.b16 %v3330, %v3322
        %v4211 = vpack.c.b16 %v3331, %v3323
        %v4212 = vpack.c.b16 %v3332, %v3324
        %v4213 = vpack.c.b16 %v3333, %v3325
        %v4214 = vpack.c.b16 %v3334, %v3326
        %v4215 = vpack.c.b16 %v3335, %v3327
        %v4216 = vpack.c.b16 %v3336, %v3328
        %v4217 = vpack.c.b16 %v3345, %v3337
        %v4218 = vpack.c.b16 %v3346, %v3338
        %v4219 = vpack.c.b16 %v3347, %v3339
        %v4220 = vpack.c.b16 %v3348, %v3340
        %v4221 = vpack.c.b16 %v3349, %v3341
        %v4222 = vpack.c.b16 %v3350, %v3342
        %v4223 = vpack.c.b16 %v3351, %v3343
        %v4224 = vpack.c.b16 %v3352, %v3344
        %v4225 = vpack.c.b16 %v3361, %v3353
        %v4226 = vpack.c.b16 %v3362, %v3354
        %v4227 = vpack.c.b16 %v3363, %v3355
        %v4228 = vpack.c.b16 %v3364, %v3356
        %v4229 = vpack.c.b16 %v3365, %v3357
        %v4230 = vpack.c.b16 %v3366, %v3358
        %v4231 = vpack.c.b16 %v3367, %v3359
        %v4232 = vpack.c.b16 %v3368, %v3360
        %v4233 = vpack.c.b16 %v3377, %v3369
        %v4234 = vpack.c.b16 %v3378, %v3370
        %v4235 = vpack.c.b16 %v3379, %v3371
        %v4236 = vpack.c.b16 %v3380, %v3372
        %v4237 = vpack.c.b16 %v3381, %v3373
        %v4238 = vpack.c.b16 %v3382, %v3374
        %v4239 = vpack.c.b16 %v3383, %v3375
        %v4240 = vpack.c.b16 %v3384, %v3376
        %v4241 = vpack.c.b16 %v3393, %v3385
        %v4242 = vpack.c.b16 %v3394, %v3386
        %v4243 = vpack.c.b16 %v3395, %v3387
        %v4244 = vpack.c.b16 %v3396, %v3388
        %v4245 = vpack.c.b16 %v3397, %v3389
        %v4246 = vpack.c.b16 %v3398, %v3390
        %v4247 = vpack.c.b16 %v3399, %v3391
        %v4248 = vpack.c.b16 %v3400, %v3392
        %v4249 = vpack.c.b16 %v3409, %v3401
        %v4250 = vpack.c.b16 %v3410, %v3402
        %v4251 = vpack.c.b16 %v3411, %v3403
        %v4252 = vpack.c.b16 %v3412, %v3404
        %v4253 = vpack.c.b16 %v3413, %v3405
        %v4254 = vpack.c.b16 %v3414, %v3406
        %v4255 = vpack.c.b16 %v3415, %v3407
        %v4256 = vpack.c.b16 %v3416, %v3408
        %v4257 = vpack.c.b16 %v3425, %v3417
        %v4258 = vpack.c.b16 %v3426, %v3418
        %v4259 = vpack.c.b16 %v3427, %v3419
        %v4260 = vpack.c.b16 %v3428, %v3420
        %v4261 = vpack.c.b16 %v3429, %v3421
        %v4262 = vpack.c.b16 %v3430, %v3422
        %v4263 = vpack.c.b16 %v3431, %v3423
        %v4264 = vpack.c.b16 %v3432, %v3424
        %v4265 = vpack.c.b16 %v3441, %v3433
        %v4266 = vpack.c.b16 %v3442, %v3434
        %v4267 = vpack.c.b16 %v3443, %v3435
        %v4268 = vpack.c.b16 %v3444, %v3436
        %v4269 = vpack.c.b16 %v3445, %v3437
        %v4270 = vpack.c.b16 %v3446, %v3438
        %v4271 = vpack.c.b16 %v3447, %v3439
        %v4272 = vpack.c.b16 %v3448, %v3440
        %v4273 = vpack.c.b16 %v3457, %v3449
        %v4274 = vpack.c.b16 %v3458, %v3450
        %v4275 = vpack.c.b16 %v3459, %v3451
        %v4276 = vpack.c.b16 %v3460, %v3452
        %v4277 = vpack.c.b16 %v3461, %v3453
        %v4278 = vpack.c.b16 %v3462, %v3454
        %v4279 = vpack.c.b16 %v3463, %v3455
        %v4280 = vpack.c.b16 %v3464, %v3456
        %v4281 = vpack.c.b16 %v3473, %v3465
        %v4282 = vpack.c.b16 %v3474, %v3466
        %v4283 = vpack.c.b16 %v3475, %v3467
        %v4284 = vpack.c.b16 %v3476, %v3468
        %v4285 = vpack.c.b16 %v3477, %v3469
        %v4286 = vpack.c.b16 %v3478, %v3470
        %v4287 = vpack.c.b16 %v3479, %v3471
        %v4288 = vpack.c.b16 %v3480, %v3472
        %v4289 = vpack.c.b16 %v3489, %v3481
        %v4290 = vpack.c.b16 %v3490, %v3482
        %v4291 = vpack.c.b16 %v3491, %v3483
        %v4292 = vpack.c.b16 %v3492, %v3484
        %v4293 = vpack.c.b16 %v3493, %v3485
        %v4294 = vpack.c.b16 %v3494, %v3486
        %v4295 = vpack.c.b16 %v3495, %v3487
        %v4296 = vpack.c.b16 %v3496, %v3488
        %v4297 = vpack.c.b16 %v3505, %v3497
        %v4298 = vpack.c.b16 %v3506, %v3498
        %v4299 = vpack.c.b16 %v3507, %v3499
        %v4300 = vpack.c.b16 %v3508, %v3500
        %v4301 = vpack.c.b16 %v3509, %v3501
        %v4302 = vpack.c.b16 %v3510, %v3502
        %v4303 = vpack.c.b16 %v3511, %v3503
        %v4304 = vpack.c.b16 %v3512, %v3504
        %v4305 = vpack.c.b16 %v3521, %v3513
        %v4306 = vpack.c.b16 %v3522, %v3514
        %v4307 = vpack.c.b16 %v3523, %v3515
        %v4308 = vpack.c.b16 %v3524, %v3516
        %v4309 = vpack.c.b16 %v3525, %v3517
        %v4310 = vpack.c.b16 %v3526, %v3518
        %v4311 = vpack.c.b16 %v3527, %v3519
        %v4312 = vpack.c.b16 %v3528, %v3520
        %v4313 = vpack.c.b16 %v3537, %v3529
        %v4314 = vpack.c.b16 %v3538, %v3530
        %v4315 = vpack.c.b16 %v3539, %v3531
        %v4316 = vpack.c.b16 %v3540, %v3532
        %v4317 = vpack.c.b16 %v3541, %v3533
        %v4318 = vpack.c.b16 %v3542, %v3534
        %v4319 = vpack.c.b16 %v3543, %v3535
        %v4320 = vpack.c.b16 %v3544, %v3536
        %v4321 = vpack.c.b16 %v3553, %v3545
        %v4322 = vpack.c.b16 %v3554, %v3546
        %v4323 = vpack.c.b16 %v3555, %v3547
        %v4324 = vpack.c.b16 %v3556, %v3548
        %v4325 = vpack.c.b16 %v3557, %v3549
        %v4326 = vpack.c.b16 %v3558, %v3550
        %v4327 = vpack.c.b16 %v3559, %v3551
        %v4328 = vpack.c.b16 %v3560, %v3552
        %v4329 = vpack.c.b16 %v3569, %v3561
        %v4330 = vpack.c.b16 %v3570, %v3562
        %v4331 = vpack.c.b16 %v3571, %v3563
        %v4332 = vpack.c.b16 %v3572, %v3564
        %v4333 = vpack.c.b16 %v3573, %v3565
        %v4334 = vpack.c.b16 %v3574, %v3566
        %v4335 = vpack.c.b16 %v3575, %v3567
        %v4336 = vpack.c.b16 %v3576, %v3568
        %v4337 = vpack.c.b16 %v3585, %v3577
        %v4338 = vpack.c.b16 %v3586, %v3578
        %v4339 = vpack.c.b16 %v3587, %v3579
        %v4340 = vpack.c.b16 %v3588, %v3580
        %v4341 = vpack.c.b16 %v3589, %v3581
        %v4342 = vpack.c.b16 %v3590, %v3582
        %v4343 = vpack.c.b16 %v3591, %v3583
        %v4344 = vpack.c.b16 %v3592, %v3584
        %v4345 = vpack.c.b16 %v3601, %v3593
        %v4346 = vpack.c.b16 %v3602, %v3594
        %v4347 = vpack.c.b16 %v3603, %v3595
        %v4348 = vpack.c.b16 %v3604, %v3596
        %v4349 = vpack.c.b16 %v3605, %v3597
        %v4350 = vpack.c.b16 %v3606, %v3598
        %v4351 = vpack.c.b16 %v3607, %v3599
        %v4352 = vpack.c.b16 %v3608, %v3600
        %v4353 = vpack.c.b16 %v3617, %v3609
        %v4354 = vpack.c.b16 %v3618, %v3610
        %v4355 = vpack.c.b16 %v3619, %v3611
        %v4356 = vpack.c.b16 %v3620, %v3612
        %v4357 = vpack.c.b16 %v3621, %v3613
        %v4358 = vpack.c.b16 %v3622, %v3614
        %v4359 = vpack.c.b16 %v3623, %v3615
        %v4360 = vpack.c.b16 %v3624, %v3616
        %v4361 = vpack.c.b16 %v3633, %v3625
        %v4362 = vpack.c.b16 %v3634, %v3626
        %v4363 = vpack.c.b16 %v3635, %v3627
        %v4364 = vpack.c.b16 %v3636, %v3628
        %v4365 = vpack.c.b16 %v3637, %v3629
        %v4366 = vpack.c.b16 %v3638, %v3630
        %v4367 = vpack.c.b16 %v3639, %v3631
        %v4368 = vpack.c.b16 %v3640, %v3632
        %v4369 = vpack.c.b16 %v3649, %v3641
        %v4370 = vpack.c.b16 %v3650, %v3642
        %v4371 = vpack.c.b16 %v3651, %v3643
        %v4372 = vpack.c.b16 %v3652, %v3644
        %v4373 = vpack.c.b16 %v3653, %v3645
        %v4374 = vpack.c.b16 %v3654, %v3646
        %v4375 = vpack.c.b16 %v3655, %v3647
        %v4376 = vpack.c.b16 %v3656, %v3648
        %v4377 = vpack.c.b16 %v3665, %v3657
        %v4378 = vpack.c.b16 %v3666, %v3658
        %v4379 = vpack.c.b16 %v3667, %v3659
        %v4380 = vpack.c.b16 %v3668, %v3660
        %v4381 = vpack.c.b16 %v3669, %v3661
        %v4382 = vpack.c.b16 %v3670, %v3662
        %v4383 = vpack.c.b16 %v3671, %v3663
        %v4384 = vpack.c.b16 %v3672, %v3664
        %v4385 = vpack.c.b16 %v3681, %v3673
        %v4386 = vpack.c.b16 %v3682, %v3674
        %v4387 = vpack.c.b16 %v3683, %v3675
        %v4388 = vpack.c.b16 %v3684, %v3676
        %v4389 = vpack.c.b16 %v3685, %v3677
        %v4390 = vpack.c.b16 %v3686, %v3678
        %v4391 = vpack.c.b16 %v3687, %v3679
        %v4392 = vpack.c.b16 %v3688, %v3680
        %v4393 = vpack.c.b16 %v3697, %v3689
        %v4394 = vpack.c.b16 %v3698, %v3690
        %v4395 = vpack.c.b16 %v3699, %v3691
        %v4396 = vpack.c.b16 %v3700, %v3692
        %v4397 = vpack.c.b16 %v3701, %v3693
        %v4398 = vpack.c.b16 %v3702, %v3694
        %v4399 = vpack.c.b16 %v3703, %v3695
        %v4400 = vpack.c.b16 %v3704, %v3696
        %v4401 = vpack.c.b16 %v3713, %v3705
        %v4402 = vpack.c.b16 %v3714, %v3706
        %v4403 = vpack.c.b16 %v3715, %v3707
        %v4404 = vpack.c.b16 %v3716, %v3708
        %v4405 = vpack.c.b16 %v3717, %v3709
        %v4406 = vpack.c.b16 %v3718, %v3710
        %v4407 = vpack.c.b16 %v3719, %v3711
        %v4408 = vpack.c.b16 %v3720, %v3712
        %v4409 = vpack.c.b16 %v3729, %v3721
        %v4410 = vpack.c.b16 %v3730, %v3722
        %v4411 = vpack.c.b16 %v3731, %v3723
        %v4412 = vpack.c.b16 %v3732, %v3724
        %v4413 = vpack.c.b16 %v3733, %v3725
        %v4414 = vpack.c.b16 %v3734, %v3726
        %v4415 = vpack.c.b16 %v3735, %v3727
        %v4416 = vpack.c.b16 %v3736, %v3728
        %v4417 = vpack.c.b16 %v3745, %v3737
        %v4418 = vpack.c.b16 %v3746, %v3738
        %v4419 = vpack.c.b16 %v3747, %v3739
        %v4420 = vpack.c.b16 %v3748, %v3740
        %v4421 = vpack.c.b16 %v3749, %v3741
        %v4422 = vpack.c.b16 %v3750, %v3742
        %v4423 = vpack.c.b16 %v3751, %v3743
        %v4424 = vpack.c.b16 %v3752, %v3744
        %v4425 = vpack.c.b16 %v3761, %v3753
        %v4426 = vpack.c.b16 %v3762, %v3754
        %v4427 = vpack.c.b16 %v3763, %v3755
        %v4428 = vpack.c.b16 %v3764, %v3756
        %v4429 = vpack.c.b16 %v3765, %v3757
        %v4430 = vpack.c.b16 %v3766, %v3758
        %v4431 = vpack.c.b16 %v3767, %v3759
        %v4432 = vpack.c.b16 %v3768, %v3760
        %v4433 = vpack.c.b16 %v3777, %v3769
        %v4434 = vpack.c.b16 %v3778, %v3770
        %v4435 = vpack.c.b16 %v3779, %v3771
        %v4436 = vpack.c.b16 %v3780, %v3772
        %v4437 = vpack.c.b16 %v3781, %v3773
        %v4438 = vpack.c.b16 %v3782, %v3774
        %v4439 = vpack.c.b16 %v3783, %v3775
        %v4440 = vpack.c.b16 %v3784, %v3776
        %v4441 = vpack.c.b16 %v3793, %v3785
        %v4442 = vpack.c.b16 %v3794, %v3786
        %v4443 = vpack.c.b16 %v3795, %v3787
        %v4444 = vpack.c.b16 %v3796, %v3788
        %v4445 = vpack.c.b16 %v3797, %v3789
        %v4446 = vpack.c.b16 %v3798, %v3790
        %v4447 = vpack.c.b16 %v3799, %v3791
        %v4448 = vpack.c.b16 %v3800, %v3792
        %v4449 = vpack.c.b16 %v3809, %v3801
        %v4450 = vpack.c.b16 %v3810, %v3802
        %v4451 = vpack.c.b16 %v3811, %v3803
        %v4452 = vpack.c.b16 %v3812, %v3804
        %v4453 = vpack.c.b16 %v3813, %v3805
        %v4454 = vpack.c.b16 %v3814, %v3806
        %v4455 = vpack.c.b16 %v3815, %v3807
        %v4456 = vpack.c.b16 %v3816, %v3808
        %v4457 = vpack.c.b16 %v3825, %v3817
        %v4458 = vpack.c.b16 %v3826, %v3818
        %v4459 = vpack.c.b16 %v3827, %v3819
        %v4460 = vpack.c.b16 %v3828, %v3820
        %v4461 = vpack.c.b16 %v3829, %v3821
        %v4462 = vpack.c.b16 %v3830, %v3822
        %v4463 = vpack.c.b16 %v3831, %v3823
        %v4464 = vpack.c.b16 %v3832, %v3824
        %v4465 = vpack.c.b16 %v3841, %v3833
        %v4466 = vpack.c.b16 %v3842, %v3834
        %v4467 = vpack.c.b16 %v3843, %v3835
        %v4468 = vpack.c.b16 %v3844, %v3836
        %v4469 = vpack.c.b16 %v3845, %v3837
        %v4470 = vpack.c.b16 %v3846, %v3838
        %v4471 = vpack.c.b16 %v3847, %v3839
        %v4472 = vpack.c.b16 %v3848, %v3840
        %v4473 = vpack.c.b16 %v3857, %v3849
        %v4474 = vpack.c.b16 %v3858, %v3850
        %v4475 = vpack.c.b16 %v3859, %v3851
        %v4476 = vpack.c.b16 %v3860, %v3852
        %v4477 = vpack.c.b16 %v3861, %v3853
        %v4478 = vpack.c.b16 %v3862, %v3854
        %v4479 = vpack.c.b16 %v3863, %v3855
        %v4480 = vpack.c.b16 %v3864, %v3856
        %v4481 = vpack.c.b16 %v3873, %v3865
        %v4482 = vpack.c.b16 %v3874, %v3866
        %v4483 = vpack.c.b16 %v3875, %v3867
        %v4484 = vpack.c.b16 %v3876, %v3868
        %v4485 = vpack.c.b16 %v3877, %v3869
        %v4486 = vpack.c.b16 %v3878, %v3870
        %v4487 = vpack.c.b16 %v3879, %v3871
        %v4488 = vpack.c.b16 %v3880, %v3872
        %v4489 = vpack.c.b16 %v3889, %v3881
        %v4490 = vpack.c.b16 %v3890, %v3882
        %v4491 = vpack.c.b16 %v3891, %v3883
        %v4492 = vpack.c.b16 %v3892, %v3884
        %v4493 = vpack.c.b16 %v3893, %v3885
        %v4494 = vpack.c.b16 %v3894, %v3886
        %v4495 = vpack.c.b16 %v3895, %v3887
        %v4496 = vpack.c.b16 %v3896, %v3888
        %v4497 = vpack.c.b16 %v3905, %v3897
        %v4498 = vpack.c.b16 %v3906, %v3898
        %v4499 = vpack.c.b16 %v3907, %v3899
        %v4500 = vpack.c.b16 %v3908, %v3900
        %v4501 = vpack.c.b16 %v3909, %v3901
        %v4502 = vpack.c.b16 %v3910, %v3902
        %v4503 = vpack.c.b16 %v3911, %v3903
        %v4504 = vpack.c.b16 %v3912, %v3904
        %v4505 = vpack.c.b16 %v3921, %v3913
        %v4506 = vpack.c.b16 %v3922, %v3914
        %v4507 = vpack.c.b16 %v3923, %v3915
        %v4508 = vpack.c.b16 %v3924, %v3916
        %v4509 = vpack.c.b16 %v3925, %v3917
        %v4510 = vpack.c.b16 %v3926, %v3918
        %v4511 = vpack.c.b16 %v3927, %v3919
        %v4512 = vpack.c.b16 %v3928, %v3920
        %v4513 = vpack.c.b16 %v3937, %v3929
        %v4514 = vpack.c.b16 %v3938, %v3930
        %v4515 = vpack.c.b16 %v3939, %v3931
        %v4516 = vpack.c.b16 %v3940, %v3932
        %v4517 = vpack.c.b16 %v3941, %v3933
        %v4518 = vpack.c.b16 %v3942, %v3934
        %v4519 = vpack.c.b16 %v3943, %v3935
        %v4520 = vpack.c.b16 %v3944, %v3936
        %v4521 = vpack.c.b16 %v3953, %v3945
        %v4522 = vpack.c.b16 %v3954, %v3946
        %v4523 = vpack.c.b16 %v3955, %v3947
        %v4524 = vpack.c.b16 %v3956, %v3948
        %v4525 = vpack.c.b16 %v3957, %v3949
        %v4526 = vpack.c.b16 %v3958, %v3950
        %v4527 = vpack.c.b16 %v3959, %v3951
        %v4528 = vpack.c.b16 %v3960, %v3952
        %v4529 = vpack.c.b16 %v3969, %v3961
        %v4530 = vpack.c.b16 %v3970, %v3962
        %v4531 = vpack.c.b16 %v3971, %v3963
        %v4532 = vpack.c.b16 %v3972, %v3964
        %v4533 = vpack.c.b16 %v3973, %v3965
        %v4534 = vpack.c.b16 %v3974, %v3966
        %v4535 = vpack.c.b16 %v3975, %v3967
        %v4536 = vpack.c.b16 %v3976, %v3968
        %v4537 = vpack.c.b16 %v3985, %v3977
        %v4538 = vpack.c.b16 %v3986, %v3978
        %v4539 = vpack.c.b16 %v3987, %v3979
        %v4540 = vpack.c.b16 %v3988, %v3980
        %v4541 = vpack.c.b16 %v3989, %v3981
        %v4542 = vpack.c.b16 %v3990, %v3982
        %v4543 = vpack.c.b16 %v3991, %v3983
        %v4544 = vpack.c.b16 %v3992, %v3984
        %v4545 = vpack.c.b16 %v4001, %v3993
        %v4546 = vpack.c.b16 %v4002, %v3994
        %v4547 = vpack.c.b16 %v4003, %v3995
        %v4548 = vpack.c.b16 %v4004, %v3996
        %v4549 = vpack.c.b16 %v4005, %v3997
        %v4550 = vpack.c.b16 %v4006, %v3998
        %v4551 = vpack.c.b16 %v4007, %v3999
        %v4552 = vpack.c.b16 %v4008, %v4000
        %v4553 = vpack.c.b16 %v4017, %v4009
        %v4554 = vpack.c.b16 %v4018, %v4010
        %v4555 = vpack.c.b16 %v4019, %v4011
        %v4556 = vpack.c.b16 %v4020, %v4012
        %v4557 = vpack.c.b16 %v4021, %v4013
        %v4558 = vpack.c.b16 %v4022, %v4014
        %v4559 = vpack.c.b16 %v4023, %v4015
        %v4560 = vpack.c.b16 %v4024, %v4016
        %v4561 = vpack.c.b16 %v4033, %v4025
        %v4562 = vpack.c.b16 %v4034, %v4026
        %v4563 = vpack.c.b16 %v4035, %v4027
        %v4564 = vpack.c.b16 %v4036, %v4028
        %v4565 = vpack.c.b16 %v4037, %v4029
        %v4566 = vpack.c.b16 %v4038, %v4030
        %v4567 = vpack.c.b16 %v4039, %v4031
        %v4568 = vpack.c.b16 %v4040, %v4032
        %v4569 = vpack.c.b16 %v4049, %v4041
        %v4570 = vpack.c.b16 %v4050, %v4042
        %v4571 = vpack.c.b16 %v4051, %v4043
        %v4572 = vpack.c.b16 %v4052, %v4044
        %v4573 = vpack.c.b16 %v4053, %v4045
        %v4574 = vpack.c.b16 %v4054, %v4046
        %v4575 = vpack.c.b16 %v4055, %v4047
        %v4576 = vpack.c.b16 %v4056, %v4048
        %v4577 = vpack.c.b16 %v4065, %v4057
        %v4578 = vpack.c.b16 %v4066, %v4058
        %v4579 = vpack.c.b16 %v4067, %v4059
        %v4580 = vpack.c.b16 %v4068, %v4060
        %v4581 = vpack.c.b16 %v4069, %v4061
        %v4582 = vpack.c.b16 %v4070, %v4062
        %v4583 = vpack.c.b16 %v4071, %v4063
        %v4584 = vpack.c.b16 %v4072, %v4064
        %5097 = vmatpush.bf16.msra.mxu0 %v4129
        %5098 = vmatpush.bf16.msra.mxu0 %v4121
        %5099 = vmatpush.bf16.msra.mxu0 %v4113
        %5100 = vmatpush.bf16.msra.mxu0 %v4105
        %5101 = vmatpush.bf16.msra.mxu0 %v4097
        %5102 = vmatpush.bf16.msra.mxu0 %v4089
        %5103 = vmatpush.bf16.msra.mxu0 %v4081
        %5104 = vmatpush.bf16.msra.mxu0 %v4073
        %5105 = vmatmul.bf16.gmra.mxu0 %v1879
        %v5106 = vpop.f32.mrf.mxu0
        %v5107 = vadd.f32 %v2521, %v5106
        %v5108 = vpop.f32.mrf.mxu0
        %v5109 = vadd.f32 %v2521, %v5108
        %5110 = vmatmul.bf16.gmra.mxu0 %v1887
        %v5111 = vpop.f32.mrf.mxu0
        %v5112 = vadd.f32 %v2521, %v5111
        %v5113 = vpop.f32.mrf.mxu0
        %v5114 = vadd.f32 %v2521, %v5113
        %5115 = vmatmul.bf16.gmra.mxu0 %v1895
        %v5116 = vpop.f32.mrf.mxu0
        %v5117 = vadd.f32 %v2521, %v5116
        %v5118 = vpop.f32.mrf.mxu0
        %v5119 = vadd.f32 %v2521, %v5118
        %5120 = vmatmul.bf16.gmra.mxu0 %v1903
        %v5121 = vpop.f32.mrf.mxu0
        %v5122 = vadd.f32 %v2521, %v5121
        %v5123 = vpop.f32.mrf.mxu0
        %v5124 = vadd.f32 %v2521, %v5123
        %5125 = vmatmul.bf16.gmra.mxu0 %v1911
        %v5126 = vpop.f32.mrf.mxu0
        %v5127 = vadd.f32 %v2521, %v5126
        %v5128 = vpop.f32.mrf.mxu0
        %v5129 = vadd.f32 %v2521, %v5128
        %5130 = vmatmul.bf16.gmra.mxu0 %v1919
        %v5131 = vpop.f32.mrf.mxu0
        %v5132 = vadd.f32 %v2521, %v5131
        %v5133 = vpop.f32.mrf.mxu0
        %v5134 = vadd.f32 %v2521, %v5133
        %5135 = vmatmul.bf16.gmra.mxu0 %v1927
        %v5136 = vpop.f32.mrf.mxu0
        %v5137 = vadd.f32 %v2521, %v5136
        %v5138 = vpop.f32.mrf.mxu0
        %v5139 = vadd.f32 %v2521, %v5138
        %5140 = vmatmul.bf16.gmra.mxu0 %v1935
        %v5141 = vpop.f32.mrf.mxu0
        %v5142 = vadd.f32 %v2521, %v5141
        %v5143 = vpop.f32.mrf.mxu0
        %v5144 = vadd.f32 %v2521, %v5143
        %5145 = vmatmul.bf16.gmra.mxu0 %v1943
        %v5146 = vpop.f32.mrf.mxu0
        %v5147 = vadd.f32 %v2521, %v5146
        %v5148 = vpop.f32.mrf.mxu0
        %v5149 = vadd.f32 %v2521, %v5148
        %5150 = vmatmul.bf16.gmra.mxu0 %v1951
        %v5151 = vpop.f32.mrf.mxu0
        %v5152 = vadd.f32 %v2521, %v5151
        %v5153 = vpop.f32.mrf.mxu0
        %v5154 = vadd.f32 %v2521, %v5153
        %5155 = vmatmul.bf16.gmra.mxu0 %v1959
        %v5156 = vpop.f32.mrf.mxu0
        %v5157 = vadd.f32 %v2521, %v5156
        %v5158 = vpop.f32.mrf.mxu0
        %v5159 = vadd.f32 %v2521, %v5158
        %5160 = vmatmul.bf16.gmra.mxu0 %v1967
        %v5161 = vpop.f32.mrf.mxu0
        %v5162 = vadd.f32 %v2521, %v5161
        %v5163 = vpop.f32.mrf.mxu0
        %v5164 = vadd.f32 %v2521, %v5163
        %5165 = vmatmul.bf16.gmra.mxu0 %v1975
        %v5166 = vpop.f32.mrf.mxu0
        %v5167 = vadd.f32 %v2521, %v5166
        %v5168 = vpop.f32.mrf.mxu0
        %v5169 = vadd.f32 %v2521, %v5168
        %5170 = vmatmul.bf16.gmra.mxu0 %v1983
        %v5171 = vpop.f32.mrf.mxu0
        %v5172 = vadd.f32 %v2521, %v5171
        %v5173 = vpop.f32.mrf.mxu0
        %v5174 = vadd.f32 %v2521, %v5173
        %5175 = vmatmul.bf16.gmra.mxu0 %v1991
        %v5176 = vpop.f32.mrf.mxu0
        %v5177 = vadd.f32 %v2521, %v5176
        %v5178 = vpop.f32.mrf.mxu0
        %v5179 = vadd.f32 %v2521, %v5178
        %5180 = vmatmul.bf16.gmra.mxu0 %v1999
        %v5181 = vpop.f32.mrf.mxu0
        %v5182 = vadd.f32 %v2521, %v5181
        %v5183 = vpop.f32.mrf.mxu0
        %v5184 = vadd.f32 %v2521, %v5183
        %5185 = vdwg.mxu0
        %5186 = vmatpush.bf16.msra.mxu0 %v4193
        %5187 = vmatpush.bf16.msra.mxu0 %v4185
        %5188 = vmatpush.bf16.msra.mxu0 %v4177
        %5189 = vmatpush.bf16.msra.mxu0 %v4169
        %5190 = vmatpush.bf16.msra.mxu0 %v4161
        %5191 = vmatpush.bf16.msra.mxu0 %v4153
        %5192 = vmatpush.bf16.msra.mxu0 %v4145
        %5193 = vmatpush.bf16.msra.mxu0 %v4137
        %5194 = vmatmul.bf16.gmra.mxu0 %v1880
        %v5195 = vpop.f32.mrf.mxu0
        %v5196 = vadd.f32 %v5107, %v5195
        %v5197 = vpop.f32.mrf.mxu0
        %v5198 = vadd.f32 %v5109, %v5197
        %5199 = vmatmul.bf16.gmra.mxu0 %v1888
        %v5200 = vpop.f32.mrf.mxu0
        %v5201 = vadd.f32 %v5112, %v5200
        %v5202 = vpop.f32.mrf.mxu0
        %v5203 = vadd.f32 %v5114, %v5202
        %5204 = vmatmul.bf16.gmra.mxu0 %v1896
        %v5205 = vpop.f32.mrf.mxu0
        %v5206 = vadd.f32 %v5117, %v5205
        %v5207 = vpop.f32.mrf.mxu0
        %v5208 = vadd.f32 %v5119, %v5207
        %5209 = vmatmul.bf16.gmra.mxu0 %v1904
        %v5210 = vpop.f32.mrf.mxu0
        %v5211 = vadd.f32 %v5122, %v5210
        %v5212 = vpop.f32.mrf.mxu0
        %v5213 = vadd.f32 %v5124, %v5212
        %5214 = vmatmul.bf16.gmra.mxu0 %v1912
        %v5215 = vpop.f32.mrf.mxu0
        %v5216 = vadd.f32 %v5127, %v5215
        %v5217 = vpop.f32.mrf.mxu0
        %v5218 = vadd.f32 %v5129, %v5217
        %5219 = vmatmul.bf16.gmra.mxu0 %v1920
        %v5220 = vpop.f32.mrf.mxu0
        %v5221 = vadd.f32 %v5132, %v5220
        %v5222 = vpop.f32.mrf.mxu0
        %v5223 = vadd.f32 %v5134, %v5222
        %5224 = vmatmul.bf16.gmra.mxu0 %v1928
        %v5225 = vpop.f32.mrf.mxu0
        %v5226 = vadd.f32 %v5137, %v5225
        %v5227 = vpop.f32.mrf.mxu0
        %v5228 = vadd.f32 %v5139, %v5227
        %5229 = vmatmul.bf16.gmra.mxu0 %v1936
        %v5230 = vpop.f32.mrf.mxu0
        %v5231 = vadd.f32 %v5142, %v5230
        %v5232 = vpop.f32.mrf.mxu0
        %v5233 = vadd.f32 %v5144, %v5232
        %5234 = vmatmul.bf16.gmra.mxu0 %v1944
        %v5235 = vpop.f32.mrf.mxu0
        %v5236 = vadd.f32 %v5147, %v5235
        %v5237 = vpop.f32.mrf.mxu0
        %v5238 = vadd.f32 %v5149, %v5237
        %5239 = vmatmul.bf16.gmra.mxu0 %v1952
        %v5240 = vpop.f32.mrf.mxu0
        %v5241 = vadd.f32 %v5152, %v5240
        %v5242 = vpop.f32.mrf.mxu0
        %v5243 = vadd.f32 %v5154, %v5242
        %5244 = vmatmul.bf16.gmra.mxu0 %v1960
        %v5245 = vpop.f32.mrf.mxu0
        %v5246 = vadd.f32 %v5157, %v5245
        %v5247 = vpop.f32.mrf.mxu0
        %v5248 = vadd.f32 %v5159, %v5247
        %5249 = vmatmul.bf16.gmra.mxu0 %v1968
        %v5250 = vpop.f32.mrf.mxu0
        %v5251 = vadd.f32 %v5162, %v5250
        %v5252 = vpop.f32.mrf.mxu0
        %v5253 = vadd.f32 %v5164, %v5252
        %5254 = vmatmul.bf16.gmra.mxu0 %v1976
        %v5255 = vpop.f32.mrf.mxu0
        %v5256 = vadd.f32 %v5167, %v5255
        %v5257 = vpop.f32.mrf.mxu0
        %v5258 = vadd.f32 %v5169, %v5257
        %5259 = vmatmul.bf16.gmra.mxu0 %v1984
        %v5260 = vpop.f32.mrf.mxu0
        %v5261 = vadd.f32 %v5172, %v5260
        %v5262 = vpop.f32.mrf.mxu0
        %v5263 = vadd.f32 %v5174, %v5262
        %5264 = vmatmul.bf16.gmra.mxu0 %v1992
        %v5265 = vpop.f32.mrf.mxu0
        %v5266 = vadd.f32 %v5177, %v5265
        %v5267 = vpop.f32.mrf.mxu0
        %v5268 = vadd.f32 %v5179, %v5267
        %5269 = vmatmul.bf16.gmra.mxu0 %v2000
        %v5270 = vpop.f32.mrf.mxu0
        %v5271 = vadd.f32 %v5182, %v5270
        %v5272 = vpop.f32.mrf.mxu0
        %v5273 = vadd.f32 %v5184, %v5272
        %5274 = vdwg.mxu0
        %5275 = vmatpush.bf16.msra.mxu0 %v4257
        %5276 = vmatpush.bf16.msra.mxu0 %v4249
        %5277 = vmatpush.bf16.msra.mxu0 %v4241
        %5278 = vmatpush.bf16.msra.mxu0 %v4233
        %5279 = vmatpush.bf16.msra.mxu0 %v4225
        %5280 = vmatpush.bf16.msra.mxu0 %v4217
        %5281 = vmatpush.bf16.msra.mxu0 %v4209
        %5282 = vmatpush.bf16.msra.mxu0 %v4201
        %5283 = vmatmul.bf16.gmra.mxu0 %v1881
        %v5284 = vpop.f32.mrf.mxu0
        %v5285 = vadd.f32 %v5196, %v5284
        %v5286 = vpop.f32.mrf.mxu0
        %v5287 = vadd.f32 %v5198, %v5286
        %5288 = vmatmul.bf16.gmra.mxu0 %v1889
        %v5289 = vpop.f32.mrf.mxu0
        %v5290 = vadd.f32 %v5201, %v5289
        %v5291 = vpop.f32.mrf.mxu0
        %v5292 = vadd.f32 %v5203, %v5291
        %5293 = vmatmul.bf16.gmra.mxu0 %v1897
        %v5294 = vpop.f32.mrf.mxu0
        %v5295 = vadd.f32 %v5206, %v5294
        %v5296 = vpop.f32.mrf.mxu0
        %v5297 = vadd.f32 %v5208, %v5296
        %5298 = vmatmul.bf16.gmra.mxu0 %v1905
        %v5299 = vpop.f32.mrf.mxu0
        %v5300 = vadd.f32 %v5211, %v5299
        %v5301 = vpop.f32.mrf.mxu0
        %v5302 = vadd.f32 %v5213, %v5301
        %5303 = vmatmul.bf16.gmra.mxu0 %v1913
        %v5304 = vpop.f32.mrf.mxu0
        %v5305 = vadd.f32 %v5216, %v5304
        %v5306 = vpop.f32.mrf.mxu0
        %v5307 = vadd.f32 %v5218, %v5306
        %5308 = vmatmul.bf16.gmra.mxu0 %v1921
        %v5309 = vpop.f32.mrf.mxu0
        %v5310 = vadd.f32 %v5221, %v5309
        %v5311 = vpop.f32.mrf.mxu0
        %v5312 = vadd.f32 %v5223, %v5311
        %5313 = vmatmul.bf16.gmra.mxu0 %v1929
        %v5314 = vpop.f32.mrf.mxu0
        %v5315 = vadd.f32 %v5226, %v5314
        %v5316 = vpop.f32.mrf.mxu0
        %v5317 = vadd.f32 %v5228, %v5316
        %5318 = vmatmul.bf16.gmra.mxu0 %v1937
        %v5319 = vpop.f32.mrf.mxu0
        %v5320 = vadd.f32 %v5231, %v5319
        %v5321 = vpop.f32.mrf.mxu0
        %v5322 = vadd.f32 %v5233, %v5321
        %5323 = vmatmul.bf16.gmra.mxu0 %v1945
        %v5324 = vpop.f32.mrf.mxu0
        %v5325 = vadd.f32 %v5236, %v5324
        %v5326 = vpop.f32.mrf.mxu0
        %v5327 = vadd.f32 %v5238, %v5326
        %5328 = vmatmul.bf16.gmra.mxu0 %v1953
        %v5329 = vpop.f32.mrf.mxu0
        %v5330 = vadd.f32 %v5241, %v5329
        %v5331 = vpop.f32.mrf.mxu0
        %v5332 = vadd.f32 %v5243, %v5331
        %5333 = vmatmul.bf16.gmra.mxu0 %v1961
        %v5334 = vpop.f32.mrf.mxu0
        %v5335 = vadd.f32 %v5246, %v5334
        %v5336 = vpop.f32.mrf.mxu0
        %v5337 = vadd.f32 %v5248, %v5336
        %5338 = vmatmul.bf16.gmra.mxu0 %v1969
        %v5339 = vpop.f32.mrf.mxu0
        %v5340 = vadd.f32 %v5251, %v5339
        %v5341 = vpop.f32.mrf.mxu0
        %v5342 = vadd.f32 %v5253, %v5341
        %5343 = vmatmul.bf16.gmra.mxu0 %v1977
        %v5344 = vpop.f32.mrf.mxu0
        %v5345 = vadd.f32 %v5256, %v5344
        %v5346 = vpop.f32.mrf.mxu0
        %v5347 = vadd.f32 %v5258, %v5346
        %5348 = vmatmul.bf16.gmra.mxu0 %v1985
        %v5349 = vpop.f32.mrf.mxu0
        %v5350 = vadd.f32 %v5261, %v5349
        %v5351 = vpop.f32.mrf.mxu0
        %v5352 = vadd.f32 %v5263, %v5351
        %5353 = vmatmul.bf16.gmra.mxu0 %v1993
        %v5354 = vpop.f32.mrf.mxu0
        %v5355 = vadd.f32 %v5266, %v5354
        %v5356 = vpop.f32.mrf.mxu0
        %v5357 = vadd.f32 %v5268, %v5356
        %5358 = vmatmul.bf16.gmra.mxu0 %v2001
        %v5359 = vpop.f32.mrf.mxu0
        %v5360 = vadd.f32 %v5271, %v5359
        %v5361 = vpop.f32.mrf.mxu0
        %v5362 = vadd.f32 %v5273, %v5361
        %5363 = vdwg.mxu0
        %5364 = vmatpush.bf16.msra.mxu0 %v4321
        %5365 = vmatpush.bf16.msra.mxu0 %v4313
        %5366 = vmatpush.bf16.msra.mxu0 %v4305
        %5367 = vmatpush.bf16.msra.mxu0 %v4297
        %5368 = vmatpush.bf16.msra.mxu0 %v4289
        %5369 = vmatpush.bf16.msra.mxu0 %v4281
        %5370 = vmatpush.bf16.msra.mxu0 %v4273
        %5371 = vmatpush.bf16.msra.mxu0 %v4265
        %5372 = vmatmul.bf16.gmra.mxu0 %v1882
        %v5373 = vpop.f32.mrf.mxu0
        %v5374 = vadd.f32 %v5285, %v5373
        %v5375 = vpop.f32.mrf.mxu0
        %v5376 = vadd.f32 %v5287, %v5375
        %5377 = vmatmul.bf16.gmra.mxu0 %v1890
        %v5378 = vpop.f32.mrf.mxu0
        %v5379 = vadd.f32 %v5290, %v5378
        %v5380 = vpop.f32.mrf.mxu0
        %v5381 = vadd.f32 %v5292, %v5380
        %5382 = vmatmul.bf16.gmra.mxu0 %v1898
        %v5383 = vpop.f32.mrf.mxu0
        %v5384 = vadd.f32 %v5295, %v5383
        %v5385 = vpop.f32.mrf.mxu0
        %v5386 = vadd.f32 %v5297, %v5385
        %5387 = vmatmul.bf16.gmra.mxu0 %v1906
        %v5388 = vpop.f32.mrf.mxu0
        %v5389 = vadd.f32 %v5300, %v5388
        %v5390 = vpop.f32.mrf.mxu0
        %v5391 = vadd.f32 %v5302, %v5390
        %5392 = vmatmul.bf16.gmra.mxu0 %v1914
        %v5393 = vpop.f32.mrf.mxu0
        %v5394 = vadd.f32 %v5305, %v5393
        %v5395 = vpop.f32.mrf.mxu0
        %v5396 = vadd.f32 %v5307, %v5395
        %5397 = vmatmul.bf16.gmra.mxu0 %v1922
        %v5398 = vpop.f32.mrf.mxu0
        %v5399 = vadd.f32 %v5310, %v5398
        %v5400 = vpop.f32.mrf.mxu0
        %v5401 = vadd.f32 %v5312, %v5400
        %5402 = vmatmul.bf16.gmra.mxu0 %v1930
        %v5403 = vpop.f32.mrf.mxu0
        %v5404 = vadd.f32 %v5315, %v5403
        %v5405 = vpop.f32.mrf.mxu0
        %v5406 = vadd.f32 %v5317, %v5405
        %5407 = vmatmul.bf16.gmra.mxu0 %v1938
        %v5408 = vpop.f32.mrf.mxu0
        %v5409 = vadd.f32 %v5320, %v5408
        %v5410 = vpop.f32.mrf.mxu0
        %v5411 = vadd.f32 %v5322, %v5410
        %5412 = vmatmul.bf16.gmra.mxu0 %v1946
        %v5413 = vpop.f32.mrf.mxu0
        %v5414 = vadd.f32 %v5325, %v5413
        %v5415 = vpop.f32.mrf.mxu0
        %v5416 = vadd.f32 %v5327, %v5415
        %5417 = vmatmul.bf16.gmra.mxu0 %v1954
        %v5418 = vpop.f32.mrf.mxu0
        %v5419 = vadd.f32 %v5330, %v5418
        %v5420 = vpop.f32.mrf.mxu0
        %v5421 = vadd.f32 %v5332, %v5420
        %5422 = vmatmul.bf16.gmra.mxu0 %v1962
        %v5423 = vpop.f32.mrf.mxu0
        %v5424 = vadd.f32 %v5335, %v5423
        %v5425 = vpop.f32.mrf.mxu0
        %v5426 = vadd.f32 %v5337, %v5425
        %5427 = vmatmul.bf16.gmra.mxu0 %v1970
        %v5428 = vpop.f32.mrf.mxu0
        %v5429 = vadd.f32 %v5340, %v5428
        %v5430 = vpop.f32.mrf.mxu0
        %v5431 = vadd.f32 %v5342, %v5430
        %5432 = vmatmul.bf16.gmra.mxu0 %v1978
        %v5433 = vpop.f32.mrf.mxu0
        %v5434 = vadd.f32 %v5345, %v5433
        %v5435 = vpop.f32.mrf.mxu0
        %v5436 = vadd.f32 %v5347, %v5435
        %5437 = vmatmul.bf16.gmra.mxu0 %v1986
        %v5438 = vpop.f32.mrf.mxu0
        %v5439 = vadd.f32 %v5350, %v5438
        %v5440 = vpop.f32.mrf.mxu0
        %v5441 = vadd.f32 %v5352, %v5440
        %5442 = vmatmul.bf16.gmra.mxu0 %v1994
        %v5443 = vpop.f32.mrf.mxu0
        %v5444 = vadd.f32 %v5355, %v5443
        %v5445 = vpop.f32.mrf.mxu0
        %v5446 = vadd.f32 %v5357, %v5445
        %5447 = vmatmul.bf16.gmra.mxu0 %v2002
        %v5448 = vpop.f32.mrf.mxu0
        %v5449 = vadd.f32 %v5360, %v5448
        %v5450 = vpop.f32.mrf.mxu0
        %v5451 = vadd.f32 %v5362, %v5450
        %5452 = vdwg.mxu0
        %5453 = vmatpush.bf16.msra.mxu0 %v4385
        %5454 = vmatpush.bf16.msra.mxu0 %v4377
        %5455 = vmatpush.bf16.msra.mxu0 %v4369
        %5456 = vmatpush.bf16.msra.mxu0 %v4361
        %5457 = vmatpush.bf16.msra.mxu0 %v4353
        %5458 = vmatpush.bf16.msra.mxu0 %v4345
        %5459 = vmatpush.bf16.msra.mxu0 %v4337
        %5460 = vmatpush.bf16.msra.mxu0 %v4329
        %5461 = vmatmul.bf16.gmra.mxu0 %v1883
        %v5462 = vpop.f32.mrf.mxu0
        %v5463 = vadd.f32 %v5374, %v5462
        %v5464 = vpop.f32.mrf.mxu0
        %v5465 = vadd.f32 %v5376, %v5464
        %5466 = vmatmul.bf16.gmra.mxu0 %v1891
        %v5467 = vpop.f32.mrf.mxu0
        %v5468 = vadd.f32 %v5379, %v5467
        %v5469 = vpop.f32.mrf.mxu0
        %v5470 = vadd.f32 %v5381, %v5469
        %5471 = vmatmul.bf16.gmra.mxu0 %v1899
        %v5472 = vpop.f32.mrf.mxu0
        %v5473 = vadd.f32 %v5384, %v5472
        %v5474 = vpop.f32.mrf.mxu0
        %v5475 = vadd.f32 %v5386, %v5474
        %5476 = vmatmul.bf16.gmra.mxu0 %v1907
        %v5477 = vpop.f32.mrf.mxu0
        %v5478 = vadd.f32 %v5389, %v5477
        %v5479 = vpop.f32.mrf.mxu0
        %v5480 = vadd.f32 %v5391, %v5479
        %5481 = vmatmul.bf16.gmra.mxu0 %v1915
        %v5482 = vpop.f32.mrf.mxu0
        %v5483 = vadd.f32 %v5394, %v5482
        %v5484 = vpop.f32.mrf.mxu0
        %v5485 = vadd.f32 %v5396, %v5484
        %5486 = vmatmul.bf16.gmra.mxu0 %v1923
        %v5487 = vpop.f32.mrf.mxu0
        %v5488 = vadd.f32 %v5399, %v5487
        %v5489 = vpop.f32.mrf.mxu0
        %v5490 = vadd.f32 %v5401, %v5489
        %5491 = vmatmul.bf16.gmra.mxu0 %v1931
        %v5492 = vpop.f32.mrf.mxu0
        %v5493 = vadd.f32 %v5404, %v5492
        %v5494 = vpop.f32.mrf.mxu0
        %v5495 = vadd.f32 %v5406, %v5494
        %5496 = vmatmul.bf16.gmra.mxu0 %v1939
        %v5497 = vpop.f32.mrf.mxu0
        %v5498 = vadd.f32 %v5409, %v5497
        %v5499 = vpop.f32.mrf.mxu0
        %v5500 = vadd.f32 %v5411, %v5499
        %5501 = vmatmul.bf16.gmra.mxu0 %v1947
        %v5502 = vpop.f32.mrf.mxu0
        %v5503 = vadd.f32 %v5414, %v5502
        %v5504 = vpop.f32.mrf.mxu0
        %v5505 = vadd.f32 %v5416, %v5504
        %5506 = vmatmul.bf16.gmra.mxu0 %v1955
        %v5507 = vpop.f32.mrf.mxu0
        %v5508 = vadd.f32 %v5419, %v5507
        %v5509 = vpop.f32.mrf.mxu0
        %v5510 = vadd.f32 %v5421, %v5509
        %5511 = vmatmul.bf16.gmra.mxu0 %v1963
        %v5512 = vpop.f32.mrf.mxu0
        %v5513 = vadd.f32 %v5424, %v5512
        %v5514 = vpop.f32.mrf.mxu0
        %v5515 = vadd.f32 %v5426, %v5514
        %5516 = vmatmul.bf16.gmra.mxu0 %v1971
        %v5517 = vpop.f32.mrf.mxu0
        %v5518 = vadd.f32 %v5429, %v5517
        %v5519 = vpop.f32.mrf.mxu0
        %v5520 = vadd.f32 %v5431, %v5519
        %5521 = vmatmul.bf16.gmra.mxu0 %v1979
        %v5522 = vpop.f32.mrf.mxu0
        %v5523 = vadd.f32 %v5434, %v5522
        %v5524 = vpop.f32.mrf.mxu0
        %v5525 = vadd.f32 %v5436, %v5524
        %5526 = vmatmul.bf16.gmra.mxu0 %v1987
        %v5527 = vpop.f32.mrf.mxu0
        %v5528 = vadd.f32 %v5439, %v5527
        %v5529 = vpop.f32.mrf.mxu0
        %v5530 = vadd.f32 %v5441, %v5529
        %5531 = vmatmul.bf16.gmra.mxu0 %v1995
        %v5532 = vpop.f32.mrf.mxu0
        %v5533 = vadd.f32 %v5444, %v5532
        %v5534 = vpop.f32.mrf.mxu0
        %v5535 = vadd.f32 %v5446, %v5534
        %5536 = vmatmul.bf16.gmra.mxu0 %v2003
        %v5537 = vpop.f32.mrf.mxu0
        %v5538 = vadd.f32 %v5449, %v5537
        %v5539 = vpop.f32.mrf.mxu0
        %v5540 = vadd.f32 %v5451, %v5539
        %5541 = vdwg.mxu0
        %5542 = vmatpush.bf16.msra.mxu0 %v4449
        %5543 = vmatpush.bf16.msra.mxu0 %v4441
        %5544 = vmatpush.bf16.msra.mxu0 %v4433
        %5545 = vmatpush.bf16.msra.mxu0 %v4425
        %5546 = vmatpush.bf16.msra.mxu0 %v4417
        %5547 = vmatpush.bf16.msra.mxu0 %v4409
        %5548 = vmatpush.bf16.msra.mxu0 %v4401
        %5549 = vmatpush.bf16.msra.mxu0 %v4393
        %5550 = vmatmul.bf16.gmra.mxu0 %v1884
        %v5551 = vpop.f32.mrf.mxu0
        %v5552 = vadd.f32 %v5463, %v5551
        %v5553 = vpop.f32.mrf.mxu0
        %v5554 = vadd.f32 %v5465, %v5553
        %5555 = vmatmul.bf16.gmra.mxu0 %v1892
        %v5556 = vpop.f32.mrf.mxu0
        %v5557 = vadd.f32 %v5468, %v5556
        %v5558 = vpop.f32.mrf.mxu0
        %v5559 = vadd.f32 %v5470, %v5558
        %5560 = vmatmul.bf16.gmra.mxu0 %v1900
        %v5561 = vpop.f32.mrf.mxu0
        %v5562 = vadd.f32 %v5473, %v5561
        %v5563 = vpop.f32.mrf.mxu0
        %v5564 = vadd.f32 %v5475, %v5563
        %5565 = vmatmul.bf16.gmra.mxu0 %v1908
        %v5566 = vpop.f32.mrf.mxu0
        %v5567 = vadd.f32 %v5478, %v5566
        %v5568 = vpop.f32.mrf.mxu0
        %v5569 = vadd.f32 %v5480, %v5568
        %5570 = vmatmul.bf16.gmra.mxu0 %v1916
        %v5571 = vpop.f32.mrf.mxu0
        %v5572 = vadd.f32 %v5483, %v5571
        %v5573 = vpop.f32.mrf.mxu0
        %v5574 = vadd.f32 %v5485, %v5573
        %5575 = vmatmul.bf16.gmra.mxu0 %v1924
        %v5576 = vpop.f32.mrf.mxu0
        %v5577 = vadd.f32 %v5488, %v5576
        %v5578 = vpop.f32.mrf.mxu0
        %v5579 = vadd.f32 %v5490, %v5578
        %5580 = vmatmul.bf16.gmra.mxu0 %v1932
        %v5581 = vpop.f32.mrf.mxu0
        %v5582 = vadd.f32 %v5493, %v5581
        %v5583 = vpop.f32.mrf.mxu0
        %v5584 = vadd.f32 %v5495, %v5583
        %5585 = vmatmul.bf16.gmra.mxu0 %v1940
        %v5586 = vpop.f32.mrf.mxu0
        %v5587 = vadd.f32 %v5498, %v5586
        %v5588 = vpop.f32.mrf.mxu0
        %v5589 = vadd.f32 %v5500, %v5588
        %5590 = vmatmul.bf16.gmra.mxu0 %v1948
        %v5591 = vpop.f32.mrf.mxu0
        %v5592 = vadd.f32 %v5503, %v5591
        %v5593 = vpop.f32.mrf.mxu0
        %v5594 = vadd.f32 %v5505, %v5593
        %5595 = vmatmul.bf16.gmra.mxu0 %v1956
        %v5596 = vpop.f32.mrf.mxu0
        %v5597 = vadd.f32 %v5508, %v5596
        %v5598 = vpop.f32.mrf.mxu0
        %v5599 = vadd.f32 %v5510, %v5598
        %5600 = vmatmul.bf16.gmra.mxu0 %v1964
        %v5601 = vpop.f32.mrf.mxu0
        %v5602 = vadd.f32 %v5513, %v5601
        %v5603 = vpop.f32.mrf.mxu0
        %v5604 = vadd.f32 %v5515, %v5603
        %5605 = vmatmul.bf16.gmra.mxu0 %v1972
        %v5606 = vpop.f32.mrf.mxu0
        %v5607 = vadd.f32 %v5518, %v5606
        %v5608 = vpop.f32.mrf.mxu0
        %v5609 = vadd.f32 %v5520, %v5608
        %5610 = vmatmul.bf16.gmra.mxu0 %v1980
        %v5611 = vpop.f32.mrf.mxu0
        %v5612 = vadd.f32 %v5523, %v5611
        %v5613 = vpop.f32.mrf.mxu0
        %v5614 = vadd.f32 %v5525, %v5613
        %5615 = vmatmul.bf16.gmra.mxu0 %v1988
        %v5616 = vpop.f32.mrf.mxu0
        %v5617 = vadd.f32 %v5528, %v5616
        %v5618 = vpop.f32.mrf.mxu0
        %v5619 = vadd.f32 %v5530, %v5618
        %5620 = vmatmul.bf16.gmra.mxu0 %v1996
        %v5621 = vpop.f32.mrf.mxu0
        %v5622 = vadd.f32 %v5533, %v5621
        %v5623 = vpop.f32.mrf.mxu0
        %v5624 = vadd.f32 %v5535, %v5623
        %5625 = vmatmul.bf16.gmra.mxu0 %v2004
        %v5626 = vpop.f32.mrf.mxu0
        %v5627 = vadd.f32 %v5538, %v5626
        %v5628 = vpop.f32.mrf.mxu0
        %v5629 = vadd.f32 %v5540, %v5628
        %5630 = vdwg.mxu0
        %5631 = vmatpush.bf16.msra.mxu0 %v4513
        %5632 = vmatpush.bf16.msra.mxu0 %v4505
        %5633 = vmatpush.bf16.msra.mxu0 %v4497
        %5634 = vmatpush.bf16.msra.mxu0 %v4489
        %5635 = vmatpush.bf16.msra.mxu0 %v4481
        %5636 = vmatpush.bf16.msra.mxu0 %v4473
        %5637 = vmatpush.bf16.msra.mxu0 %v4465
        %5638 = vmatpush.bf16.msra.mxu0 %v4457
        %5639 = vmatmul.bf16.gmra.mxu0 %v1885
        %v5640 = vpop.f32.mrf.mxu0
        %v5641 = vadd.f32 %v5552, %v5640
        %v5642 = vpop.f32.mrf.mxu0
        %v5643 = vadd.f32 %v5554, %v5642
        %5644 = vmatmul.bf16.gmra.mxu0 %v1893
        %v5645 = vpop.f32.mrf.mxu0
        %v5646 = vadd.f32 %v5557, %v5645
        %v5647 = vpop.f32.mrf.mxu0
        %v5648 = vadd.f32 %v5559, %v5647
        %5649 = vmatmul.bf16.gmra.mxu0 %v1901
        %v5650 = vpop.f32.mrf.mxu0
        %v5651 = vadd.f32 %v5562, %v5650
        %v5652 = vpop.f32.mrf.mxu0
        %v5653 = vadd.f32 %v5564, %v5652
        %5654 = vmatmul.bf16.gmra.mxu0 %v1909
        %v5655 = vpop.f32.mrf.mxu0
        %v5656 = vadd.f32 %v5567, %v5655
        %v5657 = vpop.f32.mrf.mxu0
        %v5658 = vadd.f32 %v5569, %v5657
        %5659 = vmatmul.bf16.gmra.mxu0 %v1917
        %v5660 = vpop.f32.mrf.mxu0
        %v5661 = vadd.f32 %v5572, %v5660
        %v5662 = vpop.f32.mrf.mxu0
        %v5663 = vadd.f32 %v5574, %v5662
        %5664 = vmatmul.bf16.gmra.mxu0 %v1925
        %v5665 = vpop.f32.mrf.mxu0
        %v5666 = vadd.f32 %v5577, %v5665
        %v5667 = vpop.f32.mrf.mxu0
        %v5668 = vadd.f32 %v5579, %v5667
        %5669 = vmatmul.bf16.gmra.mxu0 %v1933
        %v5670 = vpop.f32.mrf.mxu0
        %v5671 = vadd.f32 %v5582, %v5670
        %v5672 = vpop.f32.mrf.mxu0
        %v5673 = vadd.f32 %v5584, %v5672
        %5674 = vmatmul.bf16.gmra.mxu0 %v1941
        %v5675 = vpop.f32.mrf.mxu0
        %v5676 = vadd.f32 %v5587, %v5675
        %v5677 = vpop.f32.mrf.mxu0
        %v5678 = vadd.f32 %v5589, %v5677
        %5679 = vmatmul.bf16.gmra.mxu0 %v1949
        %v5680 = vpop.f32.mrf.mxu0
        %v5681 = vadd.f32 %v5592, %v5680
        %v5682 = vpop.f32.mrf.mxu0
        %v5683 = vadd.f32 %v5594, %v5682
        %5684 = vmatmul.bf16.gmra.mxu0 %v1957
        %v5685 = vpop.f32.mrf.mxu0
        %v5686 = vadd.f32 %v5597, %v5685
        %v5687 = vpop.f32.mrf.mxu0
        %v5688 = vadd.f32 %v5599, %v5687
        %5689 = vmatmul.bf16.gmra.mxu0 %v1965
        %v5690 = vpop.f32.mrf.mxu0
        %v5691 = vadd.f32 %v5602, %v5690
        %v5692 = vpop.f32.mrf.mxu0
        %v5693 = vadd.f32 %v5604, %v5692
        %5694 = vmatmul.bf16.gmra.mxu0 %v1973
        %v5695 = vpop.f32.mrf.mxu0
        %v5696 = vadd.f32 %v5607, %v5695
        %v5697 = vpop.f32.mrf.mxu0
        %v5698 = vadd.f32 %v5609, %v5697
        %5699 = vmatmul.bf16.gmra.mxu0 %v1981
        %v5700 = vpop.f32.mrf.mxu0
        %v5701 = vadd.f32 %v5612, %v5700
        %v5702 = vpop.f32.mrf.mxu0
        %v5703 = vadd.f32 %v5614, %v5702
        %5704 = vmatmul.bf16.gmra.mxu0 %v1989
        %v5705 = vpop.f32.mrf.mxu0
        %v5706 = vadd.f32 %v5617, %v5705
        %v5707 = vpop.f32.mrf.mxu0
        %v5708 = vadd.f32 %v5619, %v5707
        %5709 = vmatmul.bf16.gmra.mxu0 %v1997
        %v5710 = vpop.f32.mrf.mxu0
        %v5711 = vadd.f32 %v5622, %v5710
        %v5712 = vpop.f32.mrf.mxu0
        %v5713 = vadd.f32 %v5624, %v5712
        %5714 = vmatmul.bf16.gmra.mxu0 %v2005
        %v5715 = vpop.f32.mrf.mxu0
        %v5716 = vadd.f32 %v5627, %v5715
        %v5717 = vpop.f32.mrf.mxu0
        %v5718 = vadd.f32 %v5629, %v5717
        %5719 = vdwg.mxu0
        %5720 = vmatpush.bf16.msra.mxu0 %v4577
        %5721 = vmatpush.bf16.msra.mxu0 %v4569
        %5722 = vmatpush.bf16.msra.mxu0 %v4561
        %5723 = vmatpush.bf16.msra.mxu0 %v4553
        %5724 = vmatpush.bf16.msra.mxu0 %v4545
        %5725 = vmatpush.bf16.msra.mxu0 %v4537
        %5726 = vmatpush.bf16.msra.mxu0 %v4529
        %5727 = vmatpush.bf16.msra.mxu0 %v4521
        %5728 = vmatmul.bf16.gmra.mxu0 %v1886
        %v5729 = vpop.f32.mrf.mxu0
        %v5730 = vadd.f32 %v5641, %v5729
        %v5731 = vpop.f32.mrf.mxu0
        %v5732 = vadd.f32 %v5643, %v5731
        %5733 = vmatmul.bf16.gmra.mxu0 %v1894
        %v5734 = vpop.f32.mrf.mxu0
        %v5735 = vadd.f32 %v5646, %v5734
        %v5736 = vpop.f32.mrf.mxu0
        %v5737 = vadd.f32 %v5648, %v5736
        %5738 = vmatmul.bf16.gmra.mxu0 %v1902
        %v5739 = vpop.f32.mrf.mxu0
        %v5740 = vadd.f32 %v5651, %v5739
        %v5741 = vpop.f32.mrf.mxu0
        %v5742 = vadd.f32 %v5653, %v5741
        %5743 = vmatmul.bf16.gmra.mxu0 %v1910
        %v5744 = vpop.f32.mrf.mxu0
        %v5745 = vadd.f32 %v5656, %v5744
        %v5746 = vpop.f32.mrf.mxu0
        %v5747 = vadd.f32 %v5658, %v5746
        %5748 = vmatmul.bf16.gmra.mxu0 %v1918
        %v5749 = vpop.f32.mrf.mxu0
        %v5750 = vadd.f32 %v5661, %v5749
        %v5751 = vpop.f32.mrf.mxu0
        %v5752 = vadd.f32 %v5663, %v5751
        %5753 = vmatmul.bf16.gmra.mxu0 %v1926
        %v5754 = vpop.f32.mrf.mxu0
        %v5755 = vadd.f32 %v5666, %v5754
        %v5756 = vpop.f32.mrf.mxu0
        %v5757 = vadd.f32 %v5668, %v5756
        %5758 = vmatmul.bf16.gmra.mxu0 %v1934
        %v5759 = vpop.f32.mrf.mxu0
        %v5760 = vadd.f32 %v5671, %v5759
        %v5761 = vpop.f32.mrf.mxu0
        %v5762 = vadd.f32 %v5673, %v5761
        %5763 = vmatmul.bf16.gmra.mxu0 %v1942
        %v5764 = vpop.f32.mrf.mxu0
        %v5765 = vadd.f32 %v5676, %v5764
        %v5766 = vpop.f32.mrf.mxu0
        %v5767 = vadd.f32 %v5678, %v5766
        %5768 = vmatmul.bf16.gmra.mxu0 %v1950
        %v5769 = vpop.f32.mrf.mxu0
        %v5770 = vadd.f32 %v5681, %v5769
        %v5771 = vpop.f32.mrf.mxu0
        %v5772 = vadd.f32 %v5683, %v5771
        %5773 = vmatmul.bf16.gmra.mxu0 %v1958
        %v5774 = vpop.f32.mrf.mxu0
        %v5775 = vadd.f32 %v5686, %v5774
        %v5776 = vpop.f32.mrf.mxu0
        %v5777 = vadd.f32 %v5688, %v5776
        %5778 = vmatmul.bf16.gmra.mxu0 %v1966
        %v5779 = vpop.f32.mrf.mxu0
        %v5780 = vadd.f32 %v5691, %v5779
        %v5781 = vpop.f32.mrf.mxu0
        %v5782 = vadd.f32 %v5693, %v5781
        %5783 = vmatmul.bf16.gmra.mxu0 %v1974
        %v5784 = vpop.f32.mrf.mxu0
        %v5785 = vadd.f32 %v5696, %v5784
        %v5786 = vpop.f32.mrf.mxu0
        %v5787 = vadd.f32 %v5698, %v5786
        %5788 = vmatmul.bf16.gmra.mxu0 %v1982
        %v5789 = vpop.f32.mrf.mxu0
        %v5790 = vadd.f32 %v5701, %v5789
        %v5791 = vpop.f32.mrf.mxu0
        %v5792 = vadd.f32 %v5703, %v5791
        %5793 = vmatmul.bf16.gmra.mxu0 %v1990
        %v5794 = vpop.f32.mrf.mxu0
        %v5795 = vadd.f32 %v5706, %v5794
        %v5796 = vpop.f32.mrf.mxu0
        %v5797 = vadd.f32 %v5708, %v5796
        %5798 = vmatmul.bf16.gmra.mxu0 %v1998
        %v5799 = vpop.f32.mrf.mxu0
        %v5800 = vadd.f32 %v5711, %v5799
        %v5801 = vpop.f32.mrf.mxu0
        %v5802 = vadd.f32 %v5713, %v5801
        %5803 = vmatmul.bf16.gmra.mxu0 %v2006
        %v5804 = vpop.f32.mrf.mxu0
        %v5805 = vadd.f32 %v5716, %v5804
        %v5806 = vpop.f32.mrf.mxu0
        %v5807 = vadd.f32 %v5718, %v5806
        %5808 = vdwg.mxu0
        %5809 = vmatpush.bf16.msra.mxu0 %v4130
        %5810 = vmatpush.bf16.msra.mxu0 %v4122
        %5811 = vmatpush.bf16.msra.mxu0 %v4114
        %5812 = vmatpush.bf16.msra.mxu0 %v4106
        %5813 = vmatpush.bf16.msra.mxu0 %v4098
        %5814 = vmatpush.bf16.msra.mxu0 %v4090
        %5815 = vmatpush.bf16.msra.mxu0 %v4082
        %5816 = vmatpush.bf16.msra.mxu0 %v4074
        %5817 = vmatmul.bf16.gmra.mxu0 %v1879
        %v5818 = vpop.f32.mrf.mxu0
        %v5819 = vadd.f32 %v2522, %v5818
        %v5820 = vpop.f32.mrf.mxu0
        %v5821 = vadd.f32 %v2522, %v5820
        %5822 = vmatmul.bf16.gmra.mxu0 %v1887
        %v5823 = vpop.f32.mrf.mxu0
        %v5824 = vadd.f32 %v2522, %v5823
        %v5825 = vpop.f32.mrf.mxu0
        %v5826 = vadd.f32 %v2522, %v5825
        %5827 = vmatmul.bf16.gmra.mxu0 %v1895
        %v5828 = vpop.f32.mrf.mxu0
        %v5829 = vadd.f32 %v2522, %v5828
        %v5830 = vpop.f32.mrf.mxu0
        %v5831 = vadd.f32 %v2522, %v5830
        %5832 = vmatmul.bf16.gmra.mxu0 %v1903
        %v5833 = vpop.f32.mrf.mxu0
        %v5834 = vadd.f32 %v2522, %v5833
        %v5835 = vpop.f32.mrf.mxu0
        %v5836 = vadd.f32 %v2522, %v5835
        %5837 = vmatmul.bf16.gmra.mxu0 %v1911
        %v5838 = vpop.f32.mrf.mxu0
        %v5839 = vadd.f32 %v2522, %v5838
        %v5840 = vpop.f32.mrf.mxu0
        %v5841 = vadd.f32 %v2522, %v5840
        %5842 = vmatmul.bf16.gmra.mxu0 %v1919
        %v5843 = vpop.f32.mrf.mxu0
        %v5844 = vadd.f32 %v2522, %v5843
        %v5845 = vpop.f32.mrf.mxu0
        %v5846 = vadd.f32 %v2522, %v5845
        %5847 = vmatmul.bf16.gmra.mxu0 %v1927
        %v5848 = vpop.f32.mrf.mxu0
        %v5849 = vadd.f32 %v2522, %v5848
        %v5850 = vpop.f32.mrf.mxu0
        %v5851 = vadd.f32 %v2522, %v5850
        %5852 = vmatmul.bf16.gmra.mxu0 %v1935
        %v5853 = vpop.f32.mrf.mxu0
        %v5854 = vadd.f32 %v2522, %v5853
        %v5855 = vpop.f32.mrf.mxu0
        %v5856 = vadd.f32 %v2522, %v5855
        %5857 = vmatmul.bf16.gmra.mxu0 %v1943
        %v5858 = vpop.f32.mrf.mxu0
        %v5859 = vadd.f32 %v2522, %v5858
        %v5860 = vpop.f32.mrf.mxu0
        %v5861 = vadd.f32 %v2522, %v5860
        %5862 = vmatmul.bf16.gmra.mxu0 %v1951
        %v5863 = vpop.f32.mrf.mxu0
        %v5864 = vadd.f32 %v2522, %v5863
        %v5865 = vpop.f32.mrf.mxu0
        %v5866 = vadd.f32 %v2522, %v5865
        %5867 = vmatmul.bf16.gmra.mxu0 %v1959
        %v5868 = vpop.f32.mrf.mxu0
        %v5869 = vadd.f32 %v2522, %v5868
        %v5870 = vpop.f32.mrf.mxu0
        %v5871 = vadd.f32 %v2522, %v5870
        %5872 = vmatmul.bf16.gmra.mxu0 %v1967
        %v5873 = vpop.f32.mrf.mxu0
        %v5874 = vadd.f32 %v2522, %v5873
        %v5875 = vpop.f32.mrf.mxu0
        %v5876 = vadd.f32 %v2522, %v5875
        %5877 = vmatmul.bf16.gmra.mxu0 %v1975
        %v5878 = vpop.f32.mrf.mxu0
        %v5879 = vadd.f32 %v2522, %v5878
        %v5880 = vpop.f32.mrf.mxu0
        %v5881 = vadd.f32 %v2522, %v5880
        %5882 = vmatmul.bf16.gmra.mxu0 %v1983
        %v5883 = vpop.f32.mrf.mxu0
        %v5884 = vadd.f32 %v2522, %v5883
        %v5885 = vpop.f32.mrf.mxu0
        %v5886 = vadd.f32 %v2522, %v5885
        %5887 = vmatmul.bf16.gmra.mxu0 %v1991
        %v5888 = vpop.f32.mrf.mxu0
        %v5889 = vadd.f32 %v2522, %v5888
        %v5890 = vpop.f32.mrf.mxu0
        %v5891 = vadd.f32 %v2522, %v5890
        %5892 = vmatmul.bf16.gmra.mxu0 %v1999
        %v5893 = vpop.f32.mrf.mxu0
        %v5894 = vadd.f32 %v2522, %v5893
        %v5895 = vpop.f32.mrf.mxu0
        %v5896 = vadd.f32 %v2522, %v5895
        %5897 = vdwg.mxu0
        %5898 = vmatpush.bf16.msra.mxu0 %v4194
        %5899 = vmatpush.bf16.msra.mxu0 %v4186
        %5900 = vmatpush.bf16.msra.mxu0 %v4178
        %5901 = vmatpush.bf16.msra.mxu0 %v4170
        %5902 = vmatpush.bf16.msra.mxu0 %v4162
        %5903 = vmatpush.bf16.msra.mxu0 %v4154
        %5904 = vmatpush.bf16.msra.mxu0 %v4146
        %5905 = vmatpush.bf16.msra.mxu0 %v4138
        %5906 = vmatmul.bf16.gmra.mxu0 %v1880
        %v5907 = vpop.f32.mrf.mxu0
        %v5908 = vadd.f32 %v5819, %v5907
        %v5909 = vpop.f32.mrf.mxu0
        %v5910 = vadd.f32 %v5821, %v5909
        %5911 = vmatmul.bf16.gmra.mxu0 %v1888
        %v5912 = vpop.f32.mrf.mxu0
        %v5913 = vadd.f32 %v5824, %v5912
        %v5914 = vpop.f32.mrf.mxu0
        %v5915 = vadd.f32 %v5826, %v5914
        %5916 = vmatmul.bf16.gmra.mxu0 %v1896
        %v5917 = vpop.f32.mrf.mxu0
        %v5918 = vadd.f32 %v5829, %v5917
        %v5919 = vpop.f32.mrf.mxu0
        %v5920 = vadd.f32 %v5831, %v5919
        %5921 = vmatmul.bf16.gmra.mxu0 %v1904
        %v5922 = vpop.f32.mrf.mxu0
        %v5923 = vadd.f32 %v5834, %v5922
        %v5924 = vpop.f32.mrf.mxu0
        %v5925 = vadd.f32 %v5836, %v5924
        %5926 = vmatmul.bf16.gmra.mxu0 %v1912
        %v5927 = vpop.f32.mrf.mxu0
        %v5928 = vadd.f32 %v5839, %v5927
        %v5929 = vpop.f32.mrf.mxu0
        %v5930 = vadd.f32 %v5841, %v5929
        %5931 = vmatmul.bf16.gmra.mxu0 %v1920
        %v5932 = vpop.f32.mrf.mxu0
        %v5933 = vadd.f32 %v5844, %v5932
        %v5934 = vpop.f32.mrf.mxu0
        %v5935 = vadd.f32 %v5846, %v5934
        %5936 = vmatmul.bf16.gmra.mxu0 %v1928
        %v5937 = vpop.f32.mrf.mxu0
        %v5938 = vadd.f32 %v5849, %v5937
        %v5939 = vpop.f32.mrf.mxu0
        %v5940 = vadd.f32 %v5851, %v5939
        %5941 = vmatmul.bf16.gmra.mxu0 %v1936
        %v5942 = vpop.f32.mrf.mxu0
        %v5943 = vadd.f32 %v5854, %v5942
        %v5944 = vpop.f32.mrf.mxu0
        %v5945 = vadd.f32 %v5856, %v5944
        %5946 = vmatmul.bf16.gmra.mxu0 %v1944
        %v5947 = vpop.f32.mrf.mxu0
        %v5948 = vadd.f32 %v5859, %v5947
        %v5949 = vpop.f32.mrf.mxu0
        %v5950 = vadd.f32 %v5861, %v5949
        %5951 = vmatmul.bf16.gmra.mxu0 %v1952
        %v5952 = vpop.f32.mrf.mxu0
        %v5953 = vadd.f32 %v5864, %v5952
        %v5954 = vpop.f32.mrf.mxu0
        %v5955 = vadd.f32 %v5866, %v5954
        %5956 = vmatmul.bf16.gmra.mxu0 %v1960
        %v5957 = vpop.f32.mrf.mxu0
        %v5958 = vadd.f32 %v5869, %v5957
        %v5959 = vpop.f32.mrf.mxu0
        %v5960 = vadd.f32 %v5871, %v5959
        %5961 = vmatmul.bf16.gmra.mxu0 %v1968
        %v5962 = vpop.f32.mrf.mxu0
        %v5963 = vadd.f32 %v5874, %v5962
        %v5964 = vpop.f32.mrf.mxu0
        %v5965 = vadd.f32 %v5876, %v5964
        %5966 = vmatmul.bf16.gmra.mxu0 %v1976
        %v5967 = vpop.f32.mrf.mxu0
        %v5968 = vadd.f32 %v5879, %v5967
        %v5969 = vpop.f32.mrf.mxu0
        %v5970 = vadd.f32 %v5881, %v5969
        %5971 = vmatmul.bf16.gmra.mxu0 %v1984
        %v5972 = vpop.f32.mrf.mxu0
        %v5973 = vadd.f32 %v5884, %v5972
        %v5974 = vpop.f32.mrf.mxu0
        %v5975 = vadd.f32 %v5886, %v5974
        %5976 = vmatmul.bf16.gmra.mxu0 %v1992
        %v5977 = vpop.f32.mrf.mxu0
        %v5978 = vadd.f32 %v5889, %v5977
        %v5979 = vpop.f32.mrf.mxu0
        %v5980 = vadd.f32 %v5891, %v5979
        %5981 = vmatmul.bf16.gmra.mxu0 %v2000
        %v5982 = vpop.f32.mrf.mxu0
        %v5983 = vadd.f32 %v5894, %v5982
        %v5984 = vpop.f32.mrf.mxu0
        %v5985 = vadd.f32 %v5896, %v5984
        %5986 = vdwg.mxu0
        %5987 = vmatpush.bf16.msra.mxu0 %v4258
        %5988 = vmatpush.bf16.msra.mxu0 %v4250
        %5989 = vmatpush.bf16.msra.mxu0 %v4242
        %5990 = vmatpush.bf16.msra.mxu0 %v4234
        %5991 = vmatpush.bf16.msra.mxu0 %v4226
        %5992 = vmatpush.bf16.msra.mxu0 %v4218
        %5993 = vmatpush.bf16.msra.mxu0 %v4210
        %5994 = vmatpush.bf16.msra.mxu0 %v4202
        %5995 = vmatmul.bf16.gmra.mxu0 %v1881
        %v5996 = vpop.f32.mrf.mxu0
        %v5997 = vadd.f32 %v5908, %v5996
        %v5998 = vpop.f32.mrf.mxu0
        %v5999 = vadd.f32 %v5910, %v5998
        %6000 = vmatmul.bf16.gmra.mxu0 %v1889
        %v6001 = vpop.f32.mrf.mxu0
        %v6002 = vadd.f32 %v5913, %v6001
        %v6003 = vpop.f32.mrf.mxu0
        %v6004 = vadd.f32 %v5915, %v6003
        %6005 = vmatmul.bf16.gmra.mxu0 %v1897
        %v6006 = vpop.f32.mrf.mxu0
        %v6007 = vadd.f32 %v5918, %v6006
        %v6008 = vpop.f32.mrf.mxu0
        %v6009 = vadd.f32 %v5920, %v6008
        %6010 = vmatmul.bf16.gmra.mxu0 %v1905
        %v6011 = vpop.f32.mrf.mxu0
        %v6012 = vadd.f32 %v5923, %v6011
        %v6013 = vpop.f32.mrf.mxu0
        %v6014 = vadd.f32 %v5925, %v6013
        %6015 = vmatmul.bf16.gmra.mxu0 %v1913
        %v6016 = vpop.f32.mrf.mxu0
        %v6017 = vadd.f32 %v5928, %v6016
        %v6018 = vpop.f32.mrf.mxu0
        %v6019 = vadd.f32 %v5930, %v6018
        %6020 = vmatmul.bf16.gmra.mxu0 %v1921
        %v6021 = vpop.f32.mrf.mxu0
        %v6022 = vadd.f32 %v5933, %v6021
        %v6023 = vpop.f32.mrf.mxu0
        %v6024 = vadd.f32 %v5935, %v6023
        %6025 = vmatmul.bf16.gmra.mxu0 %v1929
        %v6026 = vpop.f32.mrf.mxu0
        %v6027 = vadd.f32 %v5938, %v6026
        %v6028 = vpop.f32.mrf.mxu0
        %v6029 = vadd.f32 %v5940, %v6028
        %6030 = vmatmul.bf16.gmra.mxu0 %v1937
        %v6031 = vpop.f32.mrf.mxu0
        %v6032 = vadd.f32 %v5943, %v6031
        %v6033 = vpop.f32.mrf.mxu0
        %v6034 = vadd.f32 %v5945, %v6033
        %6035 = vmatmul.bf16.gmra.mxu0 %v1945
        %v6036 = vpop.f32.mrf.mxu0
        %v6037 = vadd.f32 %v5948, %v6036
        %v6038 = vpop.f32.mrf.mxu0
        %v6039 = vadd.f32 %v5950, %v6038
        %6040 = vmatmul.bf16.gmra.mxu0 %v1953
        %v6041 = vpop.f32.mrf.mxu0
        %v6042 = vadd.f32 %v5953, %v6041
        %v6043 = vpop.f32.mrf.mxu0
        %v6044 = vadd.f32 %v5955, %v6043
        %6045 = vmatmul.bf16.gmra.mxu0 %v1961
        %v6046 = vpop.f32.mrf.mxu0
        %v6047 = vadd.f32 %v5958, %v6046
        %v6048 = vpop.f32.mrf.mxu0
        %v6049 = vadd.f32 %v5960, %v6048
        %6050 = vmatmul.bf16.gmra.mxu0 %v1969
        %v6051 = vpop.f32.mrf.mxu0
        %v6052 = vadd.f32 %v5963, %v6051
        %v6053 = vpop.f32.mrf.mxu0
        %v6054 = vadd.f32 %v5965, %v6053
        %6055 = vmatmul.bf16.gmra.mxu0 %v1977
        %v6056 = vpop.f32.mrf.mxu0
        %v6057 = vadd.f32 %v5968, %v6056
        %v6058 = vpop.f32.mrf.mxu0
        %v6059 = vadd.f32 %v5970, %v6058
        %6060 = vmatmul.bf16.gmra.mxu0 %v1985
        %v6061 = vpop.f32.mrf.mxu0
        %v6062 = vadd.f32 %v5973, %v6061
        %v6063 = vpop.f32.mrf.mxu0
        %v6064 = vadd.f32 %v5975, %v6063
        %6065 = vmatmul.bf16.gmra.mxu0 %v1993
        %v6066 = vpop.f32.mrf.mxu0
        %v6067 = vadd.f32 %v5978, %v6066
        %v6068 = vpop.f32.mrf.mxu0
        %v6069 = vadd.f32 %v5980, %v6068
        %6070 = vmatmul.bf16.gmra.mxu0 %v2001
        %v6071 = vpop.f32.mrf.mxu0
        %v6072 = vadd.f32 %v5983, %v6071
        %v6073 = vpop.f32.mrf.mxu0
        %v6074 = vadd.f32 %v5985, %v6073
        %6075 = vdwg.mxu0
        %6076 = vmatpush.bf16.msra.mxu0 %v4322
        %6077 = vmatpush.bf16.msra.mxu0 %v4314
        %6078 = vmatpush.bf16.msra.mxu0 %v4306
        %6079 = vmatpush.bf16.msra.mxu0 %v4298
        %6080 = vmatpush.bf16.msra.mxu0 %v4290
        %6081 = vmatpush.bf16.msra.mxu0 %v4282
        %6082 = vmatpush.bf16.msra.mxu0 %v4274
        %6083 = vmatpush.bf16.msra.mxu0 %v4266
        %6084 = vmatmul.bf16.gmra.mxu0 %v1882
        %v6085 = vpop.f32.mrf.mxu0
        %v6086 = vadd.f32 %v5997, %v6085
        %v6087 = vpop.f32.mrf.mxu0
        %v6088 = vadd.f32 %v5999, %v6087
        %6089 = vmatmul.bf16.gmra.mxu0 %v1890
        %v6090 = vpop.f32.mrf.mxu0
        %v6091 = vadd.f32 %v6002, %v6090
        %v6092 = vpop.f32.mrf.mxu0
        %v6093 = vadd.f32 %v6004, %v6092
        %6094 = vmatmul.bf16.gmra.mxu0 %v1898
        %v6095 = vpop.f32.mrf.mxu0
        %v6096 = vadd.f32 %v6007, %v6095
        %v6097 = vpop.f32.mrf.mxu0
        %v6098 = vadd.f32 %v6009, %v6097
        %6099 = vmatmul.bf16.gmra.mxu0 %v1906
        %v6100 = vpop.f32.mrf.mxu0
        %v6101 = vadd.f32 %v6012, %v6100
        %v6102 = vpop.f32.mrf.mxu0
        %v6103 = vadd.f32 %v6014, %v6102
        %6104 = vmatmul.bf16.gmra.mxu0 %v1914
        %v6105 = vpop.f32.mrf.mxu0
        %v6106 = vadd.f32 %v6017, %v6105
        %v6107 = vpop.f32.mrf.mxu0
        %v6108 = vadd.f32 %v6019, %v6107
        %6109 = vmatmul.bf16.gmra.mxu0 %v1922
        %v6110 = vpop.f32.mrf.mxu0
        %v6111 = vadd.f32 %v6022, %v6110
        %v6112 = vpop.f32.mrf.mxu0
        %v6113 = vadd.f32 %v6024, %v6112
        %6114 = vmatmul.bf16.gmra.mxu0 %v1930
        %v6115 = vpop.f32.mrf.mxu0
        %v6116 = vadd.f32 %v6027, %v6115
        %v6117 = vpop.f32.mrf.mxu0
        %v6118 = vadd.f32 %v6029, %v6117
        %6119 = vmatmul.bf16.gmra.mxu0 %v1938
        %v6120 = vpop.f32.mrf.mxu0
        %v6121 = vadd.f32 %v6032, %v6120
        %v6122 = vpop.f32.mrf.mxu0
        %v6123 = vadd.f32 %v6034, %v6122
        %6124 = vmatmul.bf16.gmra.mxu0 %v1946
        %v6125 = vpop.f32.mrf.mxu0
        %v6126 = vadd.f32 %v6037, %v6125
        %v6127 = vpop.f32.mrf.mxu0
        %v6128 = vadd.f32 %v6039, %v6127
        %6129 = vmatmul.bf16.gmra.mxu0 %v1954
        %v6130 = vpop.f32.mrf.mxu0
        %v6131 = vadd.f32 %v6042, %v6130
        %v6132 = vpop.f32.mrf.mxu0
        %v6133 = vadd.f32 %v6044, %v6132
        %6134 = vmatmul.bf16.gmra.mxu0 %v1962
        %v6135 = vpop.f32.mrf.mxu0
        %v6136 = vadd.f32 %v6047, %v6135
        %v6137 = vpop.f32.mrf.mxu0
        %v6138 = vadd.f32 %v6049, %v6137
        %6139 = vmatmul.bf16.gmra.mxu0 %v1970
        %v6140 = vpop.f32.mrf.mxu0
        %v6141 = vadd.f32 %v6052, %v6140
        %v6142 = vpop.f32.mrf.mxu0
        %v6143 = vadd.f32 %v6054, %v6142
        %6144 = vmatmul.bf16.gmra.mxu0 %v1978
        %v6145 = vpop.f32.mrf.mxu0
        %v6146 = vadd.f32 %v6057, %v6145
        %v6147 = vpop.f32.mrf.mxu0
        %v6148 = vadd.f32 %v6059, %v6147
        %6149 = vmatmul.bf16.gmra.mxu0 %v1986
        %v6150 = vpop.f32.mrf.mxu0
        %v6151 = vadd.f32 %v6062, %v6150
        %v6152 = vpop.f32.mrf.mxu0
        %v6153 = vadd.f32 %v6064, %v6152
        %6154 = vmatmul.bf16.gmra.mxu0 %v1994
        %v6155 = vpop.f32.mrf.mxu0
        %v6156 = vadd.f32 %v6067, %v6155
        %v6157 = vpop.f32.mrf.mxu0
        %v6158 = vadd.f32 %v6069, %v6157
        %6159 = vmatmul.bf16.gmra.mxu0 %v2002
        %v6160 = vpop.f32.mrf.mxu0
        %v6161 = vadd.f32 %v6072, %v6160
        %v6162 = vpop.f32.mrf.mxu0
        %v6163 = vadd.f32 %v6074, %v6162
        %6164 = vdwg.mxu0
        %6165 = vmatpush.bf16.msra.mxu0 %v4386
        %6166 = vmatpush.bf16.msra.mxu0 %v4378
        %6167 = vmatpush.bf16.msra.mxu0 %v4370
        %6168 = vmatpush.bf16.msra.mxu0 %v4362
        %6169 = vmatpush.bf16.msra.mxu0 %v4354
        %6170 = vmatpush.bf16.msra.mxu0 %v4346
        %6171 = vmatpush.bf16.msra.mxu0 %v4338
        %6172 = vmatpush.bf16.msra.mxu0 %v4330
        %6173 = vmatmul.bf16.gmra.mxu0 %v1883
        %v6174 = vpop.f32.mrf.mxu0
        %v6175 = vadd.f32 %v6086, %v6174
        %v6176 = vpop.f32.mrf.mxu0
        %v6177 = vadd.f32 %v6088, %v6176
        %6178 = vmatmul.bf16.gmra.mxu0 %v1891
        %v6179 = vpop.f32.mrf.mxu0
        %v6180 = vadd.f32 %v6091, %v6179
        %v6181 = vpop.f32.mrf.mxu0
        %v6182 = vadd.f32 %v6093, %v6181
        %6183 = vmatmul.bf16.gmra.mxu0 %v1899
        %v6184 = vpop.f32.mrf.mxu0
        %v6185 = vadd.f32 %v6096, %v6184
        %v6186 = vpop.f32.mrf.mxu0
        %v6187 = vadd.f32 %v6098, %v6186
        %6188 = vmatmul.bf16.gmra.mxu0 %v1907
        %v6189 = vpop.f32.mrf.mxu0
        %v6190 = vadd.f32 %v6101, %v6189
        %v6191 = vpop.f32.mrf.mxu0
        %v6192 = vadd.f32 %v6103, %v6191
        %6193 = vmatmul.bf16.gmra.mxu0 %v1915
        %v6194 = vpop.f32.mrf.mxu0
        %v6195 = vadd.f32 %v6106, %v6194
        %v6196 = vpop.f32.mrf.mxu0
        %v6197 = vadd.f32 %v6108, %v6196
        %6198 = vmatmul.bf16.gmra.mxu0 %v1923
        %v6199 = vpop.f32.mrf.mxu0
        %v6200 = vadd.f32 %v6111, %v6199
        %v6201 = vpop.f32.mrf.mxu0
        %v6202 = vadd.f32 %v6113, %v6201
        %6203 = vmatmul.bf16.gmra.mxu0 %v1931
        %v6204 = vpop.f32.mrf.mxu0
        %v6205 = vadd.f32 %v6116, %v6204
        %v6206 = vpop.f32.mrf.mxu0
        %v6207 = vadd.f32 %v6118, %v6206
        %6208 = vmatmul.bf16.gmra.mxu0 %v1939
        %v6209 = vpop.f32.mrf.mxu0
        %v6210 = vadd.f32 %v6121, %v6209
        %v6211 = vpop.f32.mrf.mxu0
        %v6212 = vadd.f32 %v6123, %v6211
        %6213 = vmatmul.bf16.gmra.mxu0 %v1947
        %v6214 = vpop.f32.mrf.mxu0
        %v6215 = vadd.f32 %v6126, %v6214
        %v6216 = vpop.f32.mrf.mxu0
        %v6217 = vadd.f32 %v6128, %v6216
        %6218 = vmatmul.bf16.gmra.mxu0 %v1955
        %v6219 = vpop.f32.mrf.mxu0
        %v6220 = vadd.f32 %v6131, %v6219
        %v6221 = vpop.f32.mrf.mxu0
        %v6222 = vadd.f32 %v6133, %v6221
        %6223 = vmatmul.bf16.gmra.mxu0 %v1963
        %v6224 = vpop.f32.mrf.mxu0
        %v6225 = vadd.f32 %v6136, %v6224
        %v6226 = vpop.f32.mrf.mxu0
        %v6227 = vadd.f32 %v6138, %v6226
        %6228 = vmatmul.bf16.gmra.mxu0 %v1971
        %v6229 = vpop.f32.mrf.mxu0
        %v6230 = vadd.f32 %v6141, %v6229
        %v6231 = vpop.f32.mrf.mxu0
        %v6232 = vadd.f32 %v6143, %v6231
        %6233 = vmatmul.bf16.gmra.mxu0 %v1979
        %v6234 = vpop.f32.mrf.mxu0
        %v6235 = vadd.f32 %v6146, %v6234
        %v6236 = vpop.f32.mrf.mxu0
        %v6237 = vadd.f32 %v6148, %v6236
        %6238 = vmatmul.bf16.gmra.mxu0 %v1987
        %v6239 = vpop.f32.mrf.mxu0
        %v6240 = vadd.f32 %v6151, %v6239
        %v6241 = vpop.f32.mrf.mxu0
        %v6242 = vadd.f32 %v6153, %v6241
        %6243 = vmatmul.bf16.gmra.mxu0 %v1995
        %v6244 = vpop.f32.mrf.mxu0
        %v6245 = vadd.f32 %v6156, %v6244
        %v6246 = vpop.f32.mrf.mxu0
        %v6247 = vadd.f32 %v6158, %v6246
        %6248 = vmatmul.bf16.gmra.mxu0 %v2003
        %v6249 = vpop.f32.mrf.mxu0
        %v6250 = vadd.f32 %v6161, %v6249
        %v6251 = vpop.f32.mrf.mxu0
        %v6252 = vadd.f32 %v6163, %v6251
        %6253 = vdwg.mxu0
        %6254 = vmatpush.bf16.msra.mxu0 %v4450
        %6255 = vmatpush.bf16.msra.mxu0 %v4442
        %6256 = vmatpush.bf16.msra.mxu0 %v4434
        %6257 = vmatpush.bf16.msra.mxu0 %v4426
        %6258 = vmatpush.bf16.msra.mxu0 %v4418
        %6259 = vmatpush.bf16.msra.mxu0 %v4410
        %6260 = vmatpush.bf16.msra.mxu0 %v4402
        %6261 = vmatpush.bf16.msra.mxu0 %v4394
        %6262 = vmatmul.bf16.gmra.mxu0 %v1884
        %v6263 = vpop.f32.mrf.mxu0
        %v6264 = vadd.f32 %v6175, %v6263
        %v6265 = vpop.f32.mrf.mxu0
        %v6266 = vadd.f32 %v6177, %v6265
        %6267 = vmatmul.bf16.gmra.mxu0 %v1892
        %v6268 = vpop.f32.mrf.mxu0
        %v6269 = vadd.f32 %v6180, %v6268
        %v6270 = vpop.f32.mrf.mxu0
        %v6271 = vadd.f32 %v6182, %v6270
        %6272 = vmatmul.bf16.gmra.mxu0 %v1900
        %v6273 = vpop.f32.mrf.mxu0
        %v6274 = vadd.f32 %v6185, %v6273
        %v6275 = vpop.f32.mrf.mxu0
        %v6276 = vadd.f32 %v6187, %v6275
        %6277 = vmatmul.bf16.gmra.mxu0 %v1908
        %v6278 = vpop.f32.mrf.mxu0
        %v6279 = vadd.f32 %v6190, %v6278
        %v6280 = vpop.f32.mrf.mxu0
        %v6281 = vadd.f32 %v6192, %v6280
        %6282 = vmatmul.bf16.gmra.mxu0 %v1916
        %v6283 = vpop.f32.mrf.mxu0
        %v6284 = vadd.f32 %v6195, %v6283
        %v6285 = vpop.f32.mrf.mxu0
        %v6286 = vadd.f32 %v6197, %v6285
        %6287 = vmatmul.bf16.gmra.mxu0 %v1924
        %v6288 = vpop.f32.mrf.mxu0
        %v6289 = vadd.f32 %v6200, %v6288
        %v6290 = vpop.f32.mrf.mxu0
        %v6291 = vadd.f32 %v6202, %v6290
        %6292 = vmatmul.bf16.gmra.mxu0 %v1932
        %v6293 = vpop.f32.mrf.mxu0
        %v6294 = vadd.f32 %v6205, %v6293
        %v6295 = vpop.f32.mrf.mxu0
        %v6296 = vadd.f32 %v6207, %v6295
        %6297 = vmatmul.bf16.gmra.mxu0 %v1940
        %v6298 = vpop.f32.mrf.mxu0
        %v6299 = vadd.f32 %v6210, %v6298
        %v6300 = vpop.f32.mrf.mxu0
        %v6301 = vadd.f32 %v6212, %v6300
        %6302 = vmatmul.bf16.gmra.mxu0 %v1948
        %v6303 = vpop.f32.mrf.mxu0
        %v6304 = vadd.f32 %v6215, %v6303
        %v6305 = vpop.f32.mrf.mxu0
        %v6306 = vadd.f32 %v6217, %v6305
        %6307 = vmatmul.bf16.gmra.mxu0 %v1956
        %v6308 = vpop.f32.mrf.mxu0
        %v6309 = vadd.f32 %v6220, %v6308
        %v6310 = vpop.f32.mrf.mxu0
        %v6311 = vadd.f32 %v6222, %v6310
        %6312 = vmatmul.bf16.gmra.mxu0 %v1964
        %v6313 = vpop.f32.mrf.mxu0
        %v6314 = vadd.f32 %v6225, %v6313
        %v6315 = vpop.f32.mrf.mxu0
        %v6316 = vadd.f32 %v6227, %v6315
        %6317 = vmatmul.bf16.gmra.mxu0 %v1972
        %v6318 = vpop.f32.mrf.mxu0
        %v6319 = vadd.f32 %v6230, %v6318
        %v6320 = vpop.f32.mrf.mxu0
        %v6321 = vadd.f32 %v6232, %v6320
        %6322 = vmatmul.bf16.gmra.mxu0 %v1980
        %v6323 = vpop.f32.mrf.mxu0
        %v6324 = vadd.f32 %v6235, %v6323
        %v6325 = vpop.f32.mrf.mxu0
        %v6326 = vadd.f32 %v6237, %v6325
        %6327 = vmatmul.bf16.gmra.mxu0 %v1988
        %v6328 = vpop.f32.mrf.mxu0
        %v6329 = vadd.f32 %v6240, %v6328
        %v6330 = vpop.f32.mrf.mxu0
        %v6331 = vadd.f32 %v6242, %v6330
        %6332 = vmatmul.bf16.gmra.mxu0 %v1996
        %v6333 = vpop.f32.mrf.mxu0
        %v6334 = vadd.f32 %v6245, %v6333
        %v6335 = vpop.f32.mrf.mxu0
        %v6336 = vadd.f32 %v6247, %v6335
        %6337 = vmatmul.bf16.gmra.mxu0 %v2004
        %v6338 = vpop.f32.mrf.mxu0
        %v6339 = vadd.f32 %v6250, %v6338
        %v6340 = vpop.f32.mrf.mxu0
        %v6341 = vadd.f32 %v6252, %v6340
        %6342 = vdwg.mxu0
        %6343 = vmatpush.bf16.msra.mxu0 %v4514
        %6344 = vmatpush.bf16.msra.mxu0 %v4506
        %6345 = vmatpush.bf16.msra.mxu0 %v4498
        %6346 = vmatpush.bf16.msra.mxu0 %v4490
        %6347 = vmatpush.bf16.msra.mxu0 %v4482
        %6348 = vmatpush.bf16.msra.mxu0 %v4474
        %6349 = vmatpush.bf16.msra.mxu0 %v4466
        %6350 = vmatpush.bf16.msra.mxu0 %v4458
        %6351 = vmatmul.bf16.gmra.mxu0 %v1885
        %v6352 = vpop.f32.mrf.mxu0
        %v6353 = vadd.f32 %v6264, %v6352
        %v6354 = vpop.f32.mrf.mxu0
        %v6355 = vadd.f32 %v6266, %v6354
        %6356 = vmatmul.bf16.gmra.mxu0 %v1893
        %v6357 = vpop.f32.mrf.mxu0
        %v6358 = vadd.f32 %v6269, %v6357
        %v6359 = vpop.f32.mrf.mxu0
        %v6360 = vadd.f32 %v6271, %v6359
        %6361 = vmatmul.bf16.gmra.mxu0 %v1901
        %v6362 = vpop.f32.mrf.mxu0
        %v6363 = vadd.f32 %v6274, %v6362
        %v6364 = vpop.f32.mrf.mxu0
        %v6365 = vadd.f32 %v6276, %v6364
        %6366 = vmatmul.bf16.gmra.mxu0 %v1909
        %v6367 = vpop.f32.mrf.mxu0
        %v6368 = vadd.f32 %v6279, %v6367
        %v6369 = vpop.f32.mrf.mxu0
        %v6370 = vadd.f32 %v6281, %v6369
        %6371 = vmatmul.bf16.gmra.mxu0 %v1917
        %v6372 = vpop.f32.mrf.mxu0
        %v6373 = vadd.f32 %v6284, %v6372
        %v6374 = vpop.f32.mrf.mxu0
        %v6375 = vadd.f32 %v6286, %v6374
        %6376 = vmatmul.bf16.gmra.mxu0 %v1925
        %v6377 = vpop.f32.mrf.mxu0
        %v6378 = vadd.f32 %v6289, %v6377
        %v6379 = vpop.f32.mrf.mxu0
        %v6380 = vadd.f32 %v6291, %v6379
        %6381 = vmatmul.bf16.gmra.mxu0 %v1933
        %v6382 = vpop.f32.mrf.mxu0
        %v6383 = vadd.f32 %v6294, %v6382
        %v6384 = vpop.f32.mrf.mxu0
        %v6385 = vadd.f32 %v6296, %v6384
        %6386 = vmatmul.bf16.gmra.mxu0 %v1941
        %v6387 = vpop.f32.mrf.mxu0
        %v6388 = vadd.f32 %v6299, %v6387
        %v6389 = vpop.f32.mrf.mxu0
        %v6390 = vadd.f32 %v6301, %v6389
        %6391 = vmatmul.bf16.gmra.mxu0 %v1949
        %v6392 = vpop.f32.mrf.mxu0
        %v6393 = vadd.f32 %v6304, %v6392
        %v6394 = vpop.f32.mrf.mxu0
        %v6395 = vadd.f32 %v6306, %v6394
        %6396 = vmatmul.bf16.gmra.mxu0 %v1957
        %v6397 = vpop.f32.mrf.mxu0
        %v6398 = vadd.f32 %v6309, %v6397
        %v6399 = vpop.f32.mrf.mxu0
        %v6400 = vadd.f32 %v6311, %v6399
        %6401 = vmatmul.bf16.gmra.mxu0 %v1965
        %v6402 = vpop.f32.mrf.mxu0
        %v6403 = vadd.f32 %v6314, %v6402
        %v6404 = vpop.f32.mrf.mxu0
        %v6405 = vadd.f32 %v6316, %v6404
        %6406 = vmatmul.bf16.gmra.mxu0 %v1973
        %v6407 = vpop.f32.mrf.mxu0
        %v6408 = vadd.f32 %v6319, %v6407
        %v6409 = vpop.f32.mrf.mxu0
        %v6410 = vadd.f32 %v6321, %v6409
        %6411 = vmatmul.bf16.gmra.mxu0 %v1981
        %v6412 = vpop.f32.mrf.mxu0
        %v6413 = vadd.f32 %v6324, %v6412
        %v6414 = vpop.f32.mrf.mxu0
        %v6415 = vadd.f32 %v6326, %v6414
        %6416 = vmatmul.bf16.gmra.mxu0 %v1989
        %v6417 = vpop.f32.mrf.mxu0
        %v6418 = vadd.f32 %v6329, %v6417
        %v6419 = vpop.f32.mrf.mxu0
        %v6420 = vadd.f32 %v6331, %v6419
        %6421 = vmatmul.bf16.gmra.mxu0 %v1997
        %v6422 = vpop.f32.mrf.mxu0
        %v6423 = vadd.f32 %v6334, %v6422
        %v6424 = vpop.f32.mrf.mxu0
        %v6425 = vadd.f32 %v6336, %v6424
        %6426 = vmatmul.bf16.gmra.mxu0 %v2005
        %v6427 = vpop.f32.mrf.mxu0
        %v6428 = vadd.f32 %v6339, %v6427
        %v6429 = vpop.f32.mrf.mxu0
        %v6430 = vadd.f32 %v6341, %v6429
        %6431 = vdwg.mxu0
        %6432 = vmatpush.bf16.msra.mxu0 %v4578
        %6433 = vmatpush.bf16.msra.mxu0 %v4570
        %6434 = vmatpush.bf16.msra.mxu0 %v4562
        %6435 = vmatpush.bf16.msra.mxu0 %v4554
        %6436 = vmatpush.bf16.msra.mxu0 %v4546
        %6437 = vmatpush.bf16.msra.mxu0 %v4538
        %6438 = vmatpush.bf16.msra.mxu0 %v4530
        %6439 = vmatpush.bf16.msra.mxu0 %v4522
        %6440 = vmatmul.bf16.gmra.mxu0 %v1886
        %v6441 = vpop.f32.mrf.mxu0
        %v6442 = vadd.f32 %v6353, %v6441
        %v6443 = vpop.f32.mrf.mxu0
        %v6444 = vadd.f32 %v6355, %v6443
        %6445 = vmatmul.bf16.gmra.mxu0 %v1894
        %v6446 = vpop.f32.mrf.mxu0
        %v6447 = vadd.f32 %v6358, %v6446
        %v6448 = vpop.f32.mrf.mxu0
        %v6449 = vadd.f32 %v6360, %v6448
        %6450 = vmatmul.bf16.gmra.mxu0 %v1902
        %v6451 = vpop.f32.mrf.mxu0
        %v6452 = vadd.f32 %v6363, %v6451
        %v6453 = vpop.f32.mrf.mxu0
        %v6454 = vadd.f32 %v6365, %v6453
        %6455 = vmatmul.bf16.gmra.mxu0 %v1910
        %v6456 = vpop.f32.mrf.mxu0
        %v6457 = vadd.f32 %v6368, %v6456
        %v6458 = vpop.f32.mrf.mxu0
        %v6459 = vadd.f32 %v6370, %v6458
        %6460 = vmatmul.bf16.gmra.mxu0 %v1918
        %v6461 = vpop.f32.mrf.mxu0
        %v6462 = vadd.f32 %v6373, %v6461
        %v6463 = vpop.f32.mrf.mxu0
        %v6464 = vadd.f32 %v6375, %v6463
        %6465 = vmatmul.bf16.gmra.mxu0 %v1926
        %v6466 = vpop.f32.mrf.mxu0
        %v6467 = vadd.f32 %v6378, %v6466
        %v6468 = vpop.f32.mrf.mxu0
        %v6469 = vadd.f32 %v6380, %v6468
        %6470 = vmatmul.bf16.gmra.mxu0 %v1934
        %v6471 = vpop.f32.mrf.mxu0
        %v6472 = vadd.f32 %v6383, %v6471
        %v6473 = vpop.f32.mrf.mxu0
        %v6474 = vadd.f32 %v6385, %v6473
        %6475 = vmatmul.bf16.gmra.mxu0 %v1942
        %v6476 = vpop.f32.mrf.mxu0
        %v6477 = vadd.f32 %v6388, %v6476
        %v6478 = vpop.f32.mrf.mxu0
        %v6479 = vadd.f32 %v6390, %v6478
        %6480 = vmatmul.bf16.gmra.mxu0 %v1950
        %v6481 = vpop.f32.mrf.mxu0
        %v6482 = vadd.f32 %v6393, %v6481
        %v6483 = vpop.f32.mrf.mxu0
        %v6484 = vadd.f32 %v6395, %v6483
        %6485 = vmatmul.bf16.gmra.mxu0 %v1958
        %v6486 = vpop.f32.mrf.mxu0
        %v6487 = vadd.f32 %v6398, %v6486
        %v6488 = vpop.f32.mrf.mxu0
        %v6489 = vadd.f32 %v6400, %v6488
        %6490 = vmatmul.bf16.gmra.mxu0 %v1966
        %v6491 = vpop.f32.mrf.mxu0
        %v6492 = vadd.f32 %v6403, %v6491
        %v6493 = vpop.f32.mrf.mxu0
        %v6494 = vadd.f32 %v6405, %v6493
        %6495 = vmatmul.bf16.gmra.mxu0 %v1974
        %v6496 = vpop.f32.mrf.mxu0
        %v6497 = vadd.f32 %v6408, %v6496
        %v6498 = vpop.f32.mrf.mxu0
        %v6499 = vadd.f32 %v6410, %v6498
        %6500 = vmatmul.bf16.gmra.mxu0 %v1982
        %v6501 = vpop.f32.mrf.mxu0
        %v6502 = vadd.f32 %v6413, %v6501
        %v6503 = vpop.f32.mrf.mxu0
        %v6504 = vadd.f32 %v6415, %v6503
        %6505 = vmatmul.bf16.gmra.mxu0 %v1990
        %v6506 = vpop.f32.mrf.mxu0
        %v6507 = vadd.f32 %v6418, %v6506
        %v6508 = vpop.f32.mrf.mxu0
        %v6509 = vadd.f32 %v6420, %v6508
        %6510 = vmatmul.bf16.gmra.mxu0 %v1998
        %v6511 = vpop.f32.mrf.mxu0
        %v6512 = vadd.f32 %v6423, %v6511
        %v6513 = vpop.f32.mrf.mxu0
        %v6514 = vadd.f32 %v6425, %v6513
        %6515 = vmatmul.bf16.gmra.mxu0 %v2006
        %v6516 = vpop.f32.mrf.mxu0
        %v6517 = vadd.f32 %v6428, %v6516
        %v6518 = vpop.f32.mrf.mxu0
        %v6519 = vadd.f32 %v6430, %v6518
        %6520 = vdwg.mxu0
        %6521 = vmatpush.bf16.msra.mxu0 %v4131
        %6522 = vmatpush.bf16.msra.mxu0 %v4123
        %6523 = vmatpush.bf16.msra.mxu0 %v4115
        %6524 = vmatpush.bf16.msra.mxu0 %v4107
        %6525 = vmatpush.bf16.msra.mxu0 %v4099
        %6526 = vmatpush.bf16.msra.mxu0 %v4091
        %6527 = vmatpush.bf16.msra.mxu0 %v4083
        %6528 = vmatpush.bf16.msra.mxu0 %v4075
        %6529 = vmatmul.bf16.gmra.mxu0 %v1879
        %v6530 = vpop.f32.mrf.mxu0
        %v6531 = vadd.f32 %v2523, %v6530
        %v6532 = vpop.f32.mrf.mxu0
        %v6533 = vadd.f32 %v2523, %v6532
        %6534 = vmatmul.bf16.gmra.mxu0 %v1887
        %v6535 = vpop.f32.mrf.mxu0
        %v6536 = vadd.f32 %v2523, %v6535
        %v6537 = vpop.f32.mrf.mxu0
        %v6538 = vadd.f32 %v2523, %v6537
        %6539 = vmatmul.bf16.gmra.mxu0 %v1895
        %v6540 = vpop.f32.mrf.mxu0
        %v6541 = vadd.f32 %v2523, %v6540
        %v6542 = vpop.f32.mrf.mxu0
        %v6543 = vadd.f32 %v2523, %v6542
        %6544 = vmatmul.bf16.gmra.mxu0 %v1903
        %v6545 = vpop.f32.mrf.mxu0
        %v6546 = vadd.f32 %v2523, %v6545
        %v6547 = vpop.f32.mrf.mxu0
        %v6548 = vadd.f32 %v2523, %v6547
        %6549 = vmatmul.bf16.gmra.mxu0 %v1911
        %v6550 = vpop.f32.mrf.mxu0
        %v6551 = vadd.f32 %v2523, %v6550
        %v6552 = vpop.f32.mrf.mxu0
        %v6553 = vadd.f32 %v2523, %v6552
        %6554 = vmatmul.bf16.gmra.mxu0 %v1919
        %v6555 = vpop.f32.mrf.mxu0
        %v6556 = vadd.f32 %v2523, %v6555
        %v6557 = vpop.f32.mrf.mxu0
        %v6558 = vadd.f32 %v2523, %v6557
        %6559 = vmatmul.bf16.gmra.mxu0 %v1927
        %v6560 = vpop.f32.mrf.mxu0
        %v6561 = vadd.f32 %v2523, %v6560
        %v6562 = vpop.f32.mrf.mxu0
        %v6563 = vadd.f32 %v2523, %v6562
        %6564 = vmatmul.bf16.gmra.mxu0 %v1935
        %v6565 = vpop.f32.mrf.mxu0
        %v6566 = vadd.f32 %v2523, %v6565
        %v6567 = vpop.f32.mrf.mxu0
        %v6568 = vadd.f32 %v2523, %v6567
        %6569 = vmatmul.bf16.gmra.mxu0 %v1943
        %v6570 = vpop.f32.mrf.mxu0
        %v6571 = vadd.f32 %v2523, %v6570
        %v6572 = vpop.f32.mrf.mxu0
        %v6573 = vadd.f32 %v2523, %v6572
        %6574 = vmatmul.bf16.gmra.mxu0 %v1951
        %v6575 = vpop.f32.mrf.mxu0
        %v6576 = vadd.f32 %v2523, %v6575
        %v6577 = vpop.f32.mrf.mxu0
        %v6578 = vadd.f32 %v2523, %v6577
        %6579 = vmatmul.bf16.gmra.mxu0 %v1959
        %v6580 = vpop.f32.mrf.mxu0
        %v6581 = vadd.f32 %v2523, %v6580
        %v6582 = vpop.f32.mrf.mxu0
        %v6583 = vadd.f32 %v2523, %v6582
        %6584 = vmatmul.bf16.gmra.mxu0 %v1967
        %v6585 = vpop.f32.mrf.mxu0
        %v6586 = vadd.f32 %v2523, %v6585
        %v6587 = vpop.f32.mrf.mxu0
        %v6588 = vadd.f32 %v2523, %v6587
        %6589 = vmatmul.bf16.gmra.mxu0 %v1975
        %v6590 = vpop.f32.mrf.mxu0
        %v6591 = vadd.f32 %v2523, %v6590
        %v6592 = vpop.f32.mrf.mxu0
        %v6593 = vadd.f32 %v2523, %v6592
        %6594 = vmatmul.bf16.gmra.mxu0 %v1983
        %v6595 = vpop.f32.mrf.mxu0
        %v6596 = vadd.f32 %v2523, %v6595
        %v6597 = vpop.f32.mrf.mxu0
        %v6598 = vadd.f32 %v2523, %v6597
        %6599 = vmatmul.bf16.gmra.mxu0 %v1991
        %v6600 = vpop.f32.mrf.mxu0
        %v6601 = vadd.f32 %v2523, %v6600
        %v6602 = vpop.f32.mrf.mxu0
        %v6603 = vadd.f32 %v2523, %v6602
        %6604 = vmatmul.bf16.gmra.mxu0 %v1999
        %v6605 = vpop.f32.mrf.mxu0
        %v6606 = vadd.f32 %v2523, %v6605
        %v6607 = vpop.f32.mrf.mxu0
        %v6608 = vadd.f32 %v2523, %v6607
        %6609 = vdwg.mxu0
        %6610 = vmatpush.bf16.msra.mxu0 %v4195
        %6611 = vmatpush.bf16.msra.mxu0 %v4187
        %6612 = vmatpush.bf16.msra.mxu0 %v4179
        %6613 = vmatpush.bf16.msra.mxu0 %v4171
        %6614 = vmatpush.bf16.msra.mxu0 %v4163
        %6615 = vmatpush.bf16.msra.mxu0 %v4155
        %6616 = vmatpush.bf16.msra.mxu0 %v4147
        %6617 = vmatpush.bf16.msra.mxu0 %v4139
        %6618 = vmatmul.bf16.gmra.mxu0 %v1880
        %v6619 = vpop.f32.mrf.mxu0
        %v6620 = vadd.f32 %v6531, %v6619
        %v6621 = vpop.f32.mrf.mxu0
        %v6622 = vadd.f32 %v6533, %v6621
        %6623 = vmatmul.bf16.gmra.mxu0 %v1888
        %v6624 = vpop.f32.mrf.mxu0
        %v6625 = vadd.f32 %v6536, %v6624
        %v6626 = vpop.f32.mrf.mxu0
        %v6627 = vadd.f32 %v6538, %v6626
        %6628 = vmatmul.bf16.gmra.mxu0 %v1896
        %v6629 = vpop.f32.mrf.mxu0
        %v6630 = vadd.f32 %v6541, %v6629
        %v6631 = vpop.f32.mrf.mxu0
        %v6632 = vadd.f32 %v6543, %v6631
        %6633 = vmatmul.bf16.gmra.mxu0 %v1904
        %v6634 = vpop.f32.mrf.mxu0
        %v6635 = vadd.f32 %v6546, %v6634
        %v6636 = vpop.f32.mrf.mxu0
        %v6637 = vadd.f32 %v6548, %v6636
        %6638 = vmatmul.bf16.gmra.mxu0 %v1912
        %v6639 = vpop.f32.mrf.mxu0
        %v6640 = vadd.f32 %v6551, %v6639
        %v6641 = vpop.f32.mrf.mxu0
        %v6642 = vadd.f32 %v6553, %v6641
        %6643 = vmatmul.bf16.gmra.mxu0 %v1920
        %v6644 = vpop.f32.mrf.mxu0
        %v6645 = vadd.f32 %v6556, %v6644
        %v6646 = vpop.f32.mrf.mxu0
        %v6647 = vadd.f32 %v6558, %v6646
        %6648 = vmatmul.bf16.gmra.mxu0 %v1928
        %v6649 = vpop.f32.mrf.mxu0
        %v6650 = vadd.f32 %v6561, %v6649
        %v6651 = vpop.f32.mrf.mxu0
        %v6652 = vadd.f32 %v6563, %v6651
        %6653 = vmatmul.bf16.gmra.mxu0 %v1936
        %v6654 = vpop.f32.mrf.mxu0
        %v6655 = vadd.f32 %v6566, %v6654
        %v6656 = vpop.f32.mrf.mxu0
        %v6657 = vadd.f32 %v6568, %v6656
        %6658 = vmatmul.bf16.gmra.mxu0 %v1944
        %v6659 = vpop.f32.mrf.mxu0
        %v6660 = vadd.f32 %v6571, %v6659
        %v6661 = vpop.f32.mrf.mxu0
        %v6662 = vadd.f32 %v6573, %v6661
        %6663 = vmatmul.bf16.gmra.mxu0 %v1952
        %v6664 = vpop.f32.mrf.mxu0
        %v6665 = vadd.f32 %v6576, %v6664
        %v6666 = vpop.f32.mrf.mxu0
        %v6667 = vadd.f32 %v6578, %v6666
        %6668 = vmatmul.bf16.gmra.mxu0 %v1960
        %v6669 = vpop.f32.mrf.mxu0
        %v6670 = vadd.f32 %v6581, %v6669
        %v6671 = vpop.f32.mrf.mxu0
        %v6672 = vadd.f32 %v6583, %v6671
        %6673 = vmatmul.bf16.gmra.mxu0 %v1968
        %v6674 = vpop.f32.mrf.mxu0
        %v6675 = vadd.f32 %v6586, %v6674
        %v6676 = vpop.f32.mrf.mxu0
        %v6677 = vadd.f32 %v6588, %v6676
        %6678 = vmatmul.bf16.gmra.mxu0 %v1976
        %v6679 = vpop.f32.mrf.mxu0
        %v6680 = vadd.f32 %v6591, %v6679
        %v6681 = vpop.f32.mrf.mxu0
        %v6682 = vadd.f32 %v6593, %v6681
        %6683 = vmatmul.bf16.gmra.mxu0 %v1984
        %v6684 = vpop.f32.mrf.mxu0
        %v6685 = vadd.f32 %v6596, %v6684
        %v6686 = vpop.f32.mrf.mxu0
        %v6687 = vadd.f32 %v6598, %v6686
        %6688 = vmatmul.bf16.gmra.mxu0 %v1992
        %v6689 = vpop.f32.mrf.mxu0
        %v6690 = vadd.f32 %v6601, %v6689
        %v6691 = vpop.f32.mrf.mxu0
        %v6692 = vadd.f32 %v6603, %v6691
        %6693 = vmatmul.bf16.gmra.mxu0 %v2000
        %v6694 = vpop.f32.mrf.mxu0
        %v6695 = vadd.f32 %v6606, %v6694
        %v6696 = vpop.f32.mrf.mxu0
        %v6697 = vadd.f32 %v6608, %v6696
        %6698 = vdwg.mxu0
        %6699 = vmatpush.bf16.msra.mxu0 %v4259
        %6700 = vmatpush.bf16.msra.mxu0 %v4251
        %6701 = vmatpush.bf16.msra.mxu0 %v4243
        %6702 = vmatpush.bf16.msra.mxu0 %v4235
        %6703 = vmatpush.bf16.msra.mxu0 %v4227
        %6704 = vmatpush.bf16.msra.mxu0 %v4219
        %6705 = vmatpush.bf16.msra.mxu0 %v4211
        %6706 = vmatpush.bf16.msra.mxu0 %v4203
        %6707 = vmatmul.bf16.gmra.mxu0 %v1881
        %v6708 = vpop.f32.mrf.mxu0
        %v6709 = vadd.f32 %v6620, %v6708
        %v6710 = vpop.f32.mrf.mxu0
        %v6711 = vadd.f32 %v6622, %v6710
        %6712 = vmatmul.bf16.gmra.mxu0 %v1889
        %v6713 = vpop.f32.mrf.mxu0
        %v6714 = vadd.f32 %v6625, %v6713
        %v6715 = vpop.f32.mrf.mxu0
        %v6716 = vadd.f32 %v6627, %v6715
        %6717 = vmatmul.bf16.gmra.mxu0 %v1897
        %v6718 = vpop.f32.mrf.mxu0
        %v6719 = vadd.f32 %v6630, %v6718
        %v6720 = vpop.f32.mrf.mxu0
        %v6721 = vadd.f32 %v6632, %v6720
        %6722 = vmatmul.bf16.gmra.mxu0 %v1905
        %v6723 = vpop.f32.mrf.mxu0
        %v6724 = vadd.f32 %v6635, %v6723
        %v6725 = vpop.f32.mrf.mxu0
        %v6726 = vadd.f32 %v6637, %v6725
        %6727 = vmatmul.bf16.gmra.mxu0 %v1913
        %v6728 = vpop.f32.mrf.mxu0
        %v6729 = vadd.f32 %v6640, %v6728
        %v6730 = vpop.f32.mrf.mxu0
        %v6731 = vadd.f32 %v6642, %v6730
        %6732 = vmatmul.bf16.gmra.mxu0 %v1921
        %v6733 = vpop.f32.mrf.mxu0
        %v6734 = vadd.f32 %v6645, %v6733
        %v6735 = vpop.f32.mrf.mxu0
        %v6736 = vadd.f32 %v6647, %v6735
        %6737 = vmatmul.bf16.gmra.mxu0 %v1929
        %v6738 = vpop.f32.mrf.mxu0
        %v6739 = vadd.f32 %v6650, %v6738
        %v6740 = vpop.f32.mrf.mxu0
        %v6741 = vadd.f32 %v6652, %v6740
        %6742 = vmatmul.bf16.gmra.mxu0 %v1937
        %v6743 = vpop.f32.mrf.mxu0
        %v6744 = vadd.f32 %v6655, %v6743
        %v6745 = vpop.f32.mrf.mxu0
        %v6746 = vadd.f32 %v6657, %v6745
        %6747 = vmatmul.bf16.gmra.mxu0 %v1945
        %v6748 = vpop.f32.mrf.mxu0
        %v6749 = vadd.f32 %v6660, %v6748
        %v6750 = vpop.f32.mrf.mxu0
        %v6751 = vadd.f32 %v6662, %v6750
        %6752 = vmatmul.bf16.gmra.mxu0 %v1953
        %v6753 = vpop.f32.mrf.mxu0
        %v6754 = vadd.f32 %v6665, %v6753
        %v6755 = vpop.f32.mrf.mxu0
        %v6756 = vadd.f32 %v6667, %v6755
        %6757 = vmatmul.bf16.gmra.mxu0 %v1961
        %v6758 = vpop.f32.mrf.mxu0
        %v6759 = vadd.f32 %v6670, %v6758
        %v6760 = vpop.f32.mrf.mxu0
        %v6761 = vadd.f32 %v6672, %v6760
        %6762 = vmatmul.bf16.gmra.mxu0 %v1969
        %v6763 = vpop.f32.mrf.mxu0
        %v6764 = vadd.f32 %v6675, %v6763
        %v6765 = vpop.f32.mrf.mxu0
        %v6766 = vadd.f32 %v6677, %v6765
        %6767 = vmatmul.bf16.gmra.mxu0 %v1977
        %v6768 = vpop.f32.mrf.mxu0
        %v6769 = vadd.f32 %v6680, %v6768
        %v6770 = vpop.f32.mrf.mxu0
        %v6771 = vadd.f32 %v6682, %v6770
        %6772 = vmatmul.bf16.gmra.mxu0 %v1985
        %v6773 = vpop.f32.mrf.mxu0
        %v6774 = vadd.f32 %v6685, %v6773
        %v6775 = vpop.f32.mrf.mxu0
        %v6776 = vadd.f32 %v6687, %v6775
        %6777 = vmatmul.bf16.gmra.mxu0 %v1993
        %v6778 = vpop.f32.mrf.mxu0
        %v6779 = vadd.f32 %v6690, %v6778
        %v6780 = vpop.f32.mrf.mxu0
        %v6781 = vadd.f32 %v6692, %v6780
        %6782 = vmatmul.bf16.gmra.mxu0 %v2001
        %v6783 = vpop.f32.mrf.mxu0
        %v6784 = vadd.f32 %v6695, %v6783
        %v6785 = vpop.f32.mrf.mxu0
        %v6786 = vadd.f32 %v6697, %v6785
        %6787 = vdwg.mxu0
        %6788 = vmatpush.bf16.msra.mxu0 %v4323
        %6789 = vmatpush.bf16.msra.mxu0 %v4315
        %6790 = vmatpush.bf16.msra.mxu0 %v4307
        %6791 = vmatpush.bf16.msra.mxu0 %v4299
        %6792 = vmatpush.bf16.msra.mxu0 %v4291
        %6793 = vmatpush.bf16.msra.mxu0 %v4283
        %6794 = vmatpush.bf16.msra.mxu0 %v4275
        %6795 = vmatpush.bf16.msra.mxu0 %v4267
        %6796 = vmatmul.bf16.gmra.mxu0 %v1882
        %v6797 = vpop.f32.mrf.mxu0
        %v6798 = vadd.f32 %v6709, %v6797
        %v6799 = vpop.f32.mrf.mxu0
        %v6800 = vadd.f32 %v6711, %v6799
        %6801 = vmatmul.bf16.gmra.mxu0 %v1890
        %v6802 = vpop.f32.mrf.mxu0
        %v6803 = vadd.f32 %v6714, %v6802
        %v6804 = vpop.f32.mrf.mxu0
        %v6805 = vadd.f32 %v6716, %v6804
        %6806 = vmatmul.bf16.gmra.mxu0 %v1898
        %v6807 = vpop.f32.mrf.mxu0
        %v6808 = vadd.f32 %v6719, %v6807
        %v6809 = vpop.f32.mrf.mxu0
        %v6810 = vadd.f32 %v6721, %v6809
        %6811 = vmatmul.bf16.gmra.mxu0 %v1906
        %v6812 = vpop.f32.mrf.mxu0
        %v6813 = vadd.f32 %v6724, %v6812
        %v6814 = vpop.f32.mrf.mxu0
        %v6815 = vadd.f32 %v6726, %v6814
        %6816 = vmatmul.bf16.gmra.mxu0 %v1914
        %v6817 = vpop.f32.mrf.mxu0
        %v6818 = vadd.f32 %v6729, %v6817
        %v6819 = vpop.f32.mrf.mxu0
        %v6820 = vadd.f32 %v6731, %v6819
        %6821 = vmatmul.bf16.gmra.mxu0 %v1922
        %v6822 = vpop.f32.mrf.mxu0
        %v6823 = vadd.f32 %v6734, %v6822
        %v6824 = vpop.f32.mrf.mxu0
        %v6825 = vadd.f32 %v6736, %v6824
        %6826 = vmatmul.bf16.gmra.mxu0 %v1930
        %v6827 = vpop.f32.mrf.mxu0
        %v6828 = vadd.f32 %v6739, %v6827
        %v6829 = vpop.f32.mrf.mxu0
        %v6830 = vadd.f32 %v6741, %v6829
        %6831 = vmatmul.bf16.gmra.mxu0 %v1938
        %v6832 = vpop.f32.mrf.mxu0
        %v6833 = vadd.f32 %v6744, %v6832
        %v6834 = vpop.f32.mrf.mxu0
        %v6835 = vadd.f32 %v6746, %v6834
        %6836 = vmatmul.bf16.gmra.mxu0 %v1946
        %v6837 = vpop.f32.mrf.mxu0
        %v6838 = vadd.f32 %v6749, %v6837
        %v6839 = vpop.f32.mrf.mxu0
        %v6840 = vadd.f32 %v6751, %v6839
        %6841 = vmatmul.bf16.gmra.mxu0 %v1954
        %v6842 = vpop.f32.mrf.mxu0
        %v6843 = vadd.f32 %v6754, %v6842
        %v6844 = vpop.f32.mrf.mxu0
        %v6845 = vadd.f32 %v6756, %v6844
        %6846 = vmatmul.bf16.gmra.mxu0 %v1962
        %v6847 = vpop.f32.mrf.mxu0
        %v6848 = vadd.f32 %v6759, %v6847
        %v6849 = vpop.f32.mrf.mxu0
        %v6850 = vadd.f32 %v6761, %v6849
        %6851 = vmatmul.bf16.gmra.mxu0 %v1970
        %v6852 = vpop.f32.mrf.mxu0
        %v6853 = vadd.f32 %v6764, %v6852
        %v6854 = vpop.f32.mrf.mxu0
        %v6855 = vadd.f32 %v6766, %v6854
        %6856 = vmatmul.bf16.gmra.mxu0 %v1978
        %v6857 = vpop.f32.mrf.mxu0
        %v6858 = vadd.f32 %v6769, %v6857
        %v6859 = vpop.f32.mrf.mxu0
        %v6860 = vadd.f32 %v6771, %v6859
        %6861 = vmatmul.bf16.gmra.mxu0 %v1986
        %v6862 = vpop.f32.mrf.mxu0
        %v6863 = vadd.f32 %v6774, %v6862
        %v6864 = vpop.f32.mrf.mxu0
        %v6865 = vadd.f32 %v6776, %v6864
        %6866 = vmatmul.bf16.gmra.mxu0 %v1994
        %v6867 = vpop.f32.mrf.mxu0
        %v6868 = vadd.f32 %v6779, %v6867
        %v6869 = vpop.f32.mrf.mxu0
        %v6870 = vadd.f32 %v6781, %v6869
        %6871 = vmatmul.bf16.gmra.mxu0 %v2002
        %v6872 = vpop.f32.mrf.mxu0
        %v6873 = vadd.f32 %v6784, %v6872
        %v6874 = vpop.f32.mrf.mxu0
        %v6875 = vadd.f32 %v6786, %v6874
        %6876 = vdwg.mxu0
        %6877 = vmatpush.bf16.msra.mxu0 %v4387
        %6878 = vmatpush.bf16.msra.mxu0 %v4379
        %6879 = vmatpush.bf16.msra.mxu0 %v4371
        %6880 = vmatpush.bf16.msra.mxu0 %v4363
        %6881 = vmatpush.bf16.msra.mxu0 %v4355
        %6882 = vmatpush.bf16.msra.mxu0 %v4347
        %6883 = vmatpush.bf16.msra.mxu0 %v4339
        %6884 = vmatpush.bf16.msra.mxu0 %v4331
        %6885 = vmatmul.bf16.gmra.mxu0 %v1883
        %v6886 = vpop.f32.mrf.mxu0
        %v6887 = vadd.f32 %v6798, %v6886
        %v6888 = vpop.f32.mrf.mxu0
        %v6889 = vadd.f32 %v6800, %v6888
        %6890 = vmatmul.bf16.gmra.mxu0 %v1891
        %v6891 = vpop.f32.mrf.mxu0
        %v6892 = vadd.f32 %v6803, %v6891
        %v6893 = vpop.f32.mrf.mxu0
        %v6894 = vadd.f32 %v6805, %v6893
        %6895 = vmatmul.bf16.gmra.mxu0 %v1899
        %v6896 = vpop.f32.mrf.mxu0
        %v6897 = vadd.f32 %v6808, %v6896
        %v6898 = vpop.f32.mrf.mxu0
        %v6899 = vadd.f32 %v6810, %v6898
        %6900 = vmatmul.bf16.gmra.mxu0 %v1907
        %v6901 = vpop.f32.mrf.mxu0
        %v6902 = vadd.f32 %v6813, %v6901
        %v6903 = vpop.f32.mrf.mxu0
        %v6904 = vadd.f32 %v6815, %v6903
        %6905 = vmatmul.bf16.gmra.mxu0 %v1915
        %v6906 = vpop.f32.mrf.mxu0
        %v6907 = vadd.f32 %v6818, %v6906
        %v6908 = vpop.f32.mrf.mxu0
        %v6909 = vadd.f32 %v6820, %v6908
        %6910 = vmatmul.bf16.gmra.mxu0 %v1923
        %v6911 = vpop.f32.mrf.mxu0
        %v6912 = vadd.f32 %v6823, %v6911
        %v6913 = vpop.f32.mrf.mxu0
        %v6914 = vadd.f32 %v6825, %v6913
        %6915 = vmatmul.bf16.gmra.mxu0 %v1931
        %v6916 = vpop.f32.mrf.mxu0
        %v6917 = vadd.f32 %v6828, %v6916
        %v6918 = vpop.f32.mrf.mxu0
        %v6919 = vadd.f32 %v6830, %v6918
        %6920 = vmatmul.bf16.gmra.mxu0 %v1939
        %v6921 = vpop.f32.mrf.mxu0
        %v6922 = vadd.f32 %v6833, %v6921
        %v6923 = vpop.f32.mrf.mxu0
        %v6924 = vadd.f32 %v6835, %v6923
        %6925 = vmatmul.bf16.gmra.mxu0 %v1947
        %v6926 = vpop.f32.mrf.mxu0
        %v6927 = vadd.f32 %v6838, %v6926
        %v6928 = vpop.f32.mrf.mxu0
        %v6929 = vadd.f32 %v6840, %v6928
        %6930 = vmatmul.bf16.gmra.mxu0 %v1955
        %v6931 = vpop.f32.mrf.mxu0
        %v6932 = vadd.f32 %v6843, %v6931
        %v6933 = vpop.f32.mrf.mxu0
        %v6934 = vadd.f32 %v6845, %v6933
        %6935 = vmatmul.bf16.gmra.mxu0 %v1963
        %v6936 = vpop.f32.mrf.mxu0
        %v6937 = vadd.f32 %v6848, %v6936
        %v6938 = vpop.f32.mrf.mxu0
        %v6939 = vadd.f32 %v6850, %v6938
        %6940 = vmatmul.bf16.gmra.mxu0 %v1971
        %v6941 = vpop.f32.mrf.mxu0
        %v6942 = vadd.f32 %v6853, %v6941
        %v6943 = vpop.f32.mrf.mxu0
        %v6944 = vadd.f32 %v6855, %v6943
        %6945 = vmatmul.bf16.gmra.mxu0 %v1979
        %v6946 = vpop.f32.mrf.mxu0
        %v6947 = vadd.f32 %v6858, %v6946
        %v6948 = vpop.f32.mrf.mxu0
        %v6949 = vadd.f32 %v6860, %v6948
        %6950 = vmatmul.bf16.gmra.mxu0 %v1987
        %v6951 = vpop.f32.mrf.mxu0
        %v6952 = vadd.f32 %v6863, %v6951
        %v6953 = vpop.f32.mrf.mxu0
        %v6954 = vadd.f32 %v6865, %v6953
        %6955 = vmatmul.bf16.gmra.mxu0 %v1995
        %v6956 = vpop.f32.mrf.mxu0
        %v6957 = vadd.f32 %v6868, %v6956
        %v6958 = vpop.f32.mrf.mxu0
        %v6959 = vadd.f32 %v6870, %v6958
        %6960 = vmatmul.bf16.gmra.mxu0 %v2003
        %v6961 = vpop.f32.mrf.mxu0
        %v6962 = vadd.f32 %v6873, %v6961
        %v6963 = vpop.f32.mrf.mxu0
        %v6964 = vadd.f32 %v6875, %v6963
        %6965 = vdwg.mxu0
        %6966 = vmatpush.bf16.msra.mxu0 %v4451
        %6967 = vmatpush.bf16.msra.mxu0 %v4443
        %6968 = vmatpush.bf16.msra.mxu0 %v4435
        %6969 = vmatpush.bf16.msra.mxu0 %v4427
        %6970 = vmatpush.bf16.msra.mxu0 %v4419
        %6971 = vmatpush.bf16.msra.mxu0 %v4411
        %6972 = vmatpush.bf16.msra.mxu0 %v4403
        %6973 = vmatpush.bf16.msra.mxu0 %v4395
        %6974 = vmatmul.bf16.gmra.mxu0 %v1884
        %v6975 = vpop.f32.mrf.mxu0
        %v6976 = vadd.f32 %v6887, %v6975
        %v6977 = vpop.f32.mrf.mxu0
        %v6978 = vadd.f32 %v6889, %v6977
        %6979 = vmatmul.bf16.gmra.mxu0 %v1892
        %v6980 = vpop.f32.mrf.mxu0
        %v6981 = vadd.f32 %v6892, %v6980
        %v6982 = vpop.f32.mrf.mxu0
        %v6983 = vadd.f32 %v6894, %v6982
        %6984 = vmatmul.bf16.gmra.mxu0 %v1900
        %v6985 = vpop.f32.mrf.mxu0
        %v6986 = vadd.f32 %v6897, %v6985
        %v6987 = vpop.f32.mrf.mxu0
        %v6988 = vadd.f32 %v6899, %v6987
        %6989 = vmatmul.bf16.gmra.mxu0 %v1908
        %v6990 = vpop.f32.mrf.mxu0
        %v6991 = vadd.f32 %v6902, %v6990
        %v6992 = vpop.f32.mrf.mxu0
        %v6993 = vadd.f32 %v6904, %v6992
        %6994 = vmatmul.bf16.gmra.mxu0 %v1916
        %v6995 = vpop.f32.mrf.mxu0
        %v6996 = vadd.f32 %v6907, %v6995
        %v6997 = vpop.f32.mrf.mxu0
        %v6998 = vadd.f32 %v6909, %v6997
        %6999 = vmatmul.bf16.gmra.mxu0 %v1924
        %v7000 = vpop.f32.mrf.mxu0
        %v7001 = vadd.f32 %v6912, %v7000
        %v7002 = vpop.f32.mrf.mxu0
        %v7003 = vadd.f32 %v6914, %v7002
        %7004 = vmatmul.bf16.gmra.mxu0 %v1932
        %v7005 = vpop.f32.mrf.mxu0
        %v7006 = vadd.f32 %v6917, %v7005
        %v7007 = vpop.f32.mrf.mxu0
        %v7008 = vadd.f32 %v6919, %v7007
        %7009 = vmatmul.bf16.gmra.mxu0 %v1940
        %v7010 = vpop.f32.mrf.mxu0
        %v7011 = vadd.f32 %v6922, %v7010
        %v7012 = vpop.f32.mrf.mxu0
        %v7013 = vadd.f32 %v6924, %v7012
        %7014 = vmatmul.bf16.gmra.mxu0 %v1948
        %v7015 = vpop.f32.mrf.mxu0
        %v7016 = vadd.f32 %v6927, %v7015
        %v7017 = vpop.f32.mrf.mxu0
        %v7018 = vadd.f32 %v6929, %v7017
        %7019 = vmatmul.bf16.gmra.mxu0 %v1956
        %v7020 = vpop.f32.mrf.mxu0
        %v7021 = vadd.f32 %v6932, %v7020
        %v7022 = vpop.f32.mrf.mxu0
        %v7023 = vadd.f32 %v6934, %v7022
        %7024 = vmatmul.bf16.gmra.mxu0 %v1964
        %v7025 = vpop.f32.mrf.mxu0
        %v7026 = vadd.f32 %v6937, %v7025
        %v7027 = vpop.f32.mrf.mxu0
        %v7028 = vadd.f32 %v6939, %v7027
        %7029 = vmatmul.bf16.gmra.mxu0 %v1972
        %v7030 = vpop.f32.mrf.mxu0
        %v7031 = vadd.f32 %v6942, %v7030
        %v7032 = vpop.f32.mrf.mxu0
        %v7033 = vadd.f32 %v6944, %v7032
        %7034 = vmatmul.bf16.gmra.mxu0 %v1980
        %v7035 = vpop.f32.mrf.mxu0
        %v7036 = vadd.f32 %v6947, %v7035
        %v7037 = vpop.f32.mrf.mxu0
        %v7038 = vadd.f32 %v6949, %v7037
        %7039 = vmatmul.bf16.gmra.mxu0 %v1988
        %v7040 = vpop.f32.mrf.mxu0
        %v7041 = vadd.f32 %v6952, %v7040
        %v7042 = vpop.f32.mrf.mxu0
        %v7043 = vadd.f32 %v6954, %v7042
        %7044 = vmatmul.bf16.gmra.mxu0 %v1996
        %v7045 = vpop.f32.mrf.mxu0
        %v7046 = vadd.f32 %v6957, %v7045
        %v7047 = vpop.f32.mrf.mxu0
        %v7048 = vadd.f32 %v6959, %v7047
        %7049 = vmatmul.bf16.gmra.mxu0 %v2004
        %v7050 = vpop.f32.mrf.mxu0
        %v7051 = vadd.f32 %v6962, %v7050
        %v7052 = vpop.f32.mrf.mxu0
        %v7053 = vadd.f32 %v6964, %v7052
        %7054 = vdwg.mxu0
        %7055 = vmatpush.bf16.msra.mxu0 %v4515
        %7056 = vmatpush.bf16.msra.mxu0 %v4507
        %7057 = vmatpush.bf16.msra.mxu0 %v4499
        %7058 = vmatpush.bf16.msra.mxu0 %v4491
        %7059 = vmatpush.bf16.msra.mxu0 %v4483
        %7060 = vmatpush.bf16.msra.mxu0 %v4475
        %7061 = vmatpush.bf16.msra.mxu0 %v4467
        %7062 = vmatpush.bf16.msra.mxu0 %v4459
        %7063 = vmatmul.bf16.gmra.mxu0 %v1885
        %v7064 = vpop.f32.mrf.mxu0
        %v7065 = vadd.f32 %v6976, %v7064
        %v7066 = vpop.f32.mrf.mxu0
        %v7067 = vadd.f32 %v6978, %v7066
        %7068 = vmatmul.bf16.gmra.mxu0 %v1893
        %v7069 = vpop.f32.mrf.mxu0
        %v7070 = vadd.f32 %v6981, %v7069
        %v7071 = vpop.f32.mrf.mxu0
        %v7072 = vadd.f32 %v6983, %v7071
        %7073 = vmatmul.bf16.gmra.mxu0 %v1901
        %v7074 = vpop.f32.mrf.mxu0
        %v7075 = vadd.f32 %v6986, %v7074
        %v7076 = vpop.f32.mrf.mxu0
        %v7077 = vadd.f32 %v6988, %v7076
        %7078 = vmatmul.bf16.gmra.mxu0 %v1909
        %v7079 = vpop.f32.mrf.mxu0
        %v7080 = vadd.f32 %v6991, %v7079
        %v7081 = vpop.f32.mrf.mxu0
        %v7082 = vadd.f32 %v6993, %v7081
        %7083 = vmatmul.bf16.gmra.mxu0 %v1917
        %v7084 = vpop.f32.mrf.mxu0
        %v7085 = vadd.f32 %v6996, %v7084
        %v7086 = vpop.f32.mrf.mxu0
        %v7087 = vadd.f32 %v6998, %v7086
        %7088 = vmatmul.bf16.gmra.mxu0 %v1925
        %v7089 = vpop.f32.mrf.mxu0
        %v7090 = vadd.f32 %v7001, %v7089
        %v7091 = vpop.f32.mrf.mxu0
        %v7092 = vadd.f32 %v7003, %v7091
        %7093 = vmatmul.bf16.gmra.mxu0 %v1933
        %v7094 = vpop.f32.mrf.mxu0
        %v7095 = vadd.f32 %v7006, %v7094
        %v7096 = vpop.f32.mrf.mxu0
        %v7097 = vadd.f32 %v7008, %v7096
        %7098 = vmatmul.bf16.gmra.mxu0 %v1941
        %v7099 = vpop.f32.mrf.mxu0
        %v7100 = vadd.f32 %v7011, %v7099
        %v7101 = vpop.f32.mrf.mxu0
        %v7102 = vadd.f32 %v7013, %v7101
        %7103 = vmatmul.bf16.gmra.mxu0 %v1949
        %v7104 = vpop.f32.mrf.mxu0
        %v7105 = vadd.f32 %v7016, %v7104
        %v7106 = vpop.f32.mrf.mxu0
        %v7107 = vadd.f32 %v7018, %v7106
        %7108 = vmatmul.bf16.gmra.mxu0 %v1957
        %v7109 = vpop.f32.mrf.mxu0
        %v7110 = vadd.f32 %v7021, %v7109
        %v7111 = vpop.f32.mrf.mxu0
        %v7112 = vadd.f32 %v7023, %v7111
        %7113 = vmatmul.bf16.gmra.mxu0 %v1965
        %v7114 = vpop.f32.mrf.mxu0
        %v7115 = vadd.f32 %v7026, %v7114
        %v7116 = vpop.f32.mrf.mxu0
        %v7117 = vadd.f32 %v7028, %v7116
        %7118 = vmatmul.bf16.gmra.mxu0 %v1973
        %v7119 = vpop.f32.mrf.mxu0
        %v7120 = vadd.f32 %v7031, %v7119
        %v7121 = vpop.f32.mrf.mxu0
        %v7122 = vadd.f32 %v7033, %v7121
        %7123 = vmatmul.bf16.gmra.mxu0 %v1981
        %v7124 = vpop.f32.mrf.mxu0
        %v7125 = vadd.f32 %v7036, %v7124
        %v7126 = vpop.f32.mrf.mxu0
        %v7127 = vadd.f32 %v7038, %v7126
        %7128 = vmatmul.bf16.gmra.mxu0 %v1989
        %v7129 = vpop.f32.mrf.mxu0
        %v7130 = vadd.f32 %v7041, %v7129
        %v7131 = vpop.f32.mrf.mxu0
        %v7132 = vadd.f32 %v7043, %v7131
        %7133 = vmatmul.bf16.gmra.mxu0 %v1997
        %v7134 = vpop.f32.mrf.mxu0
        %v7135 = vadd.f32 %v7046, %v7134
        %v7136 = vpop.f32.mrf.mxu0
        %v7137 = vadd.f32 %v7048, %v7136
        %7138 = vmatmul.bf16.gmra.mxu0 %v2005
        %v7139 = vpop.f32.mrf.mxu0
        %v7140 = vadd.f32 %v7051, %v7139
        %v7141 = vpop.f32.mrf.mxu0
        %v7142 = vadd.f32 %v7053, %v7141
        %7143 = vdwg.mxu0
        %7144 = vmatpush.bf16.msra.mxu0 %v4579
        %7145 = vmatpush.bf16.msra.mxu0 %v4571
        %7146 = vmatpush.bf16.msra.mxu0 %v4563
        %7147 = vmatpush.bf16.msra.mxu0 %v4555
        %7148 = vmatpush.bf16.msra.mxu0 %v4547
        %7149 = vmatpush.bf16.msra.mxu0 %v4539
        %7150 = vmatpush.bf16.msra.mxu0 %v4531
        %7151 = vmatpush.bf16.msra.mxu0 %v4523
        %7152 = vmatmul.bf16.gmra.mxu0 %v1886
        %v7153 = vpop.f32.mrf.mxu0
        %v7154 = vadd.f32 %v7065, %v7153
        %v7155 = vpop.f32.mrf.mxu0
        %v7156 = vadd.f32 %v7067, %v7155
        %7157 = vmatmul.bf16.gmra.mxu0 %v1894
        %v7158 = vpop.f32.mrf.mxu0
        %v7159 = vadd.f32 %v7070, %v7158
        %v7160 = vpop.f32.mrf.mxu0
        %v7161 = vadd.f32 %v7072, %v7160
        %7162 = vmatmul.bf16.gmra.mxu0 %v1902
        %v7163 = vpop.f32.mrf.mxu0
        %v7164 = vadd.f32 %v7075, %v7163
        %v7165 = vpop.f32.mrf.mxu0
        %v7166 = vadd.f32 %v7077, %v7165
        %7167 = vmatmul.bf16.gmra.mxu0 %v1910
        %v7168 = vpop.f32.mrf.mxu0
        %v7169 = vadd.f32 %v7080, %v7168
        %v7170 = vpop.f32.mrf.mxu0
        %v7171 = vadd.f32 %v7082, %v7170
        %7172 = vmatmul.bf16.gmra.mxu0 %v1918
        %v7173 = vpop.f32.mrf.mxu0
        %v7174 = vadd.f32 %v7085, %v7173
        %v7175 = vpop.f32.mrf.mxu0
        %v7176 = vadd.f32 %v7087, %v7175
        %7177 = vmatmul.bf16.gmra.mxu0 %v1926
        %v7178 = vpop.f32.mrf.mxu0
        %v7179 = vadd.f32 %v7090, %v7178
        %v7180 = vpop.f32.mrf.mxu0
        %v7181 = vadd.f32 %v7092, %v7180
        %7182 = vmatmul.bf16.gmra.mxu0 %v1934
        %v7183 = vpop.f32.mrf.mxu0
        %v7184 = vadd.f32 %v7095, %v7183
        %v7185 = vpop.f32.mrf.mxu0
        %v7186 = vadd.f32 %v7097, %v7185
        %7187 = vmatmul.bf16.gmra.mxu0 %v1942
        %v7188 = vpop.f32.mrf.mxu0
        %v7189 = vadd.f32 %v7100, %v7188
        %v7190 = vpop.f32.mrf.mxu0
        %v7191 = vadd.f32 %v7102, %v7190
        %7192 = vmatmul.bf16.gmra.mxu0 %v1950
        %v7193 = vpop.f32.mrf.mxu0
        %v7194 = vadd.f32 %v7105, %v7193
        %v7195 = vpop.f32.mrf.mxu0
        %v7196 = vadd.f32 %v7107, %v7195
        %7197 = vmatmul.bf16.gmra.mxu0 %v1958
        %v7198 = vpop.f32.mrf.mxu0
        %v7199 = vadd.f32 %v7110, %v7198
        %v7200 = vpop.f32.mrf.mxu0
        %v7201 = vadd.f32 %v7112, %v7200
        %7202 = vmatmul.bf16.gmra.mxu0 %v1966
        %v7203 = vpop.f32.mrf.mxu0
        %v7204 = vadd.f32 %v7115, %v7203
        %v7205 = vpop.f32.mrf.mxu0
        %v7206 = vadd.f32 %v7117, %v7205
        %7207 = vmatmul.bf16.gmra.mxu0 %v1974
        %v7208 = vpop.f32.mrf.mxu0
        %v7209 = vadd.f32 %v7120, %v7208
        %v7210 = vpop.f32.mrf.mxu0
        %v7211 = vadd.f32 %v7122, %v7210
        %7212 = vmatmul.bf16.gmra.mxu0 %v1982
        %v7213 = vpop.f32.mrf.mxu0
        %v7214 = vadd.f32 %v7125, %v7213
        %v7215 = vpop.f32.mrf.mxu0
        %v7216 = vadd.f32 %v7127, %v7215
        %7217 = vmatmul.bf16.gmra.mxu0 %v1990
        %v7218 = vpop.f32.mrf.mxu0
        %v7219 = vadd.f32 %v7130, %v7218
        %v7220 = vpop.f32.mrf.mxu0
        %v7221 = vadd.f32 %v7132, %v7220
        %7222 = vmatmul.bf16.gmra.mxu0 %v1998
        %v7223 = vpop.f32.mrf.mxu0
        %v7224 = vadd.f32 %v7135, %v7223
        %v7225 = vpop.f32.mrf.mxu0
        %v7226 = vadd.f32 %v7137, %v7225
        %7227 = vmatmul.bf16.gmra.mxu0 %v2006
        %v7228 = vpop.f32.mrf.mxu0
        %v7229 = vadd.f32 %v7140, %v7228
        %v7230 = vpop.f32.mrf.mxu0
        %v7231 = vadd.f32 %v7142, %v7230
        %7232 = vdwg.mxu0
        %7233 = vmatpush.bf16.msra.mxu0 %v4132
        %7234 = vmatpush.bf16.msra.mxu0 %v4124
        %7235 = vmatpush.bf16.msra.mxu0 %v4116
        %7236 = vmatpush.bf16.msra.mxu0 %v4108
        %7237 = vmatpush.bf16.msra.mxu0 %v4100
        %7238 = vmatpush.bf16.msra.mxu0 %v4092
        %7239 = vmatpush.bf16.msra.mxu0 %v4084
        %7240 = vmatpush.bf16.msra.mxu0 %v4076
        %7241 = vmatmul.bf16.gmra.mxu0 %v1879
        %v7242 = vpop.f32.mrf.mxu0
        %v7243 = vadd.f32 %v2524, %v7242
        %v7244 = vpop.f32.mrf.mxu0
        %v7245 = vadd.f32 %v2524, %v7244
        %7246 = vmatmul.bf16.gmra.mxu0 %v1887
        %v7247 = vpop.f32.mrf.mxu0
        %v7248 = vadd.f32 %v2524, %v7247
        %v7249 = vpop.f32.mrf.mxu0
        %v7250 = vadd.f32 %v2524, %v7249
        %7251 = vmatmul.bf16.gmra.mxu0 %v1895
        %v7252 = vpop.f32.mrf.mxu0
        %v7253 = vadd.f32 %v2524, %v7252
        %v7254 = vpop.f32.mrf.mxu0
        %v7255 = vadd.f32 %v2524, %v7254
        %7256 = vmatmul.bf16.gmra.mxu0 %v1903
        %v7257 = vpop.f32.mrf.mxu0
        %v7258 = vadd.f32 %v2524, %v7257
        %v7259 = vpop.f32.mrf.mxu0
        %v7260 = vadd.f32 %v2524, %v7259
        %7261 = vmatmul.bf16.gmra.mxu0 %v1911
        %v7262 = vpop.f32.mrf.mxu0
        %v7263 = vadd.f32 %v2524, %v7262
        %v7264 = vpop.f32.mrf.mxu0
        %v7265 = vadd.f32 %v2524, %v7264
        %7266 = vmatmul.bf16.gmra.mxu0 %v1919
        %v7267 = vpop.f32.mrf.mxu0
        %v7268 = vadd.f32 %v2524, %v7267
        %v7269 = vpop.f32.mrf.mxu0
        %v7270 = vadd.f32 %v2524, %v7269
        %7271 = vmatmul.bf16.gmra.mxu0 %v1927
        %v7272 = vpop.f32.mrf.mxu0
        %v7273 = vadd.f32 %v2524, %v7272
        %v7274 = vpop.f32.mrf.mxu0
        %v7275 = vadd.f32 %v2524, %v7274
        %7276 = vmatmul.bf16.gmra.mxu0 %v1935
        %v7277 = vpop.f32.mrf.mxu0
        %v7278 = vadd.f32 %v2524, %v7277
        %v7279 = vpop.f32.mrf.mxu0
        %v7280 = vadd.f32 %v2524, %v7279
        %7281 = vmatmul.bf16.gmra.mxu0 %v1943
        %v7282 = vpop.f32.mrf.mxu0
        %v7283 = vadd.f32 %v2524, %v7282
        %v7284 = vpop.f32.mrf.mxu0
        %v7285 = vadd.f32 %v2524, %v7284
        %7286 = vmatmul.bf16.gmra.mxu0 %v1951
        %v7287 = vpop.f32.mrf.mxu0
        %v7288 = vadd.f32 %v2524, %v7287
        %v7289 = vpop.f32.mrf.mxu0
        %v7290 = vadd.f32 %v2524, %v7289
        %7291 = vmatmul.bf16.gmra.mxu0 %v1959
        %v7292 = vpop.f32.mrf.mxu0
        %v7293 = vadd.f32 %v2524, %v7292
        %v7294 = vpop.f32.mrf.mxu0
        %v7295 = vadd.f32 %v2524, %v7294
        %7296 = vmatmul.bf16.gmra.mxu0 %v1967
        %v7297 = vpop.f32.mrf.mxu0
        %v7298 = vadd.f32 %v2524, %v7297
        %v7299 = vpop.f32.mrf.mxu0
        %v7300 = vadd.f32 %v2524, %v7299
        %7301 = vmatmul.bf16.gmra.mxu0 %v1975
        %v7302 = vpop.f32.mrf.mxu0
        %v7303 = vadd.f32 %v2524, %v7302
        %v7304 = vpop.f32.mrf.mxu0
        %v7305 = vadd.f32 %v2524, %v7304
        %7306 = vmatmul.bf16.gmra.mxu0 %v1983
        %v7307 = vpop.f32.mrf.mxu0
        %v7308 = vadd.f32 %v2524, %v7307
        %v7309 = vpop.f32.mrf.mxu0
        %v7310 = vadd.f32 %v2524, %v7309
        %7311 = vmatmul.bf16.gmra.mxu0 %v1991
        %v7312 = vpop.f32.mrf.mxu0
        %v7313 = vadd.f32 %v2524, %v7312
        %v7314 = vpop.f32.mrf.mxu0
        %v7315 = vadd.f32 %v2524, %v7314
        %7316 = vmatmul.bf16.gmra.mxu0 %v1999
        %v7317 = vpop.f32.mrf.mxu0
        %v7318 = vadd.f32 %v2524, %v7317
        %v7319 = vpop.f32.mrf.mxu0
        %v7320 = vadd.f32 %v2524, %v7319
        %7321 = vdwg.mxu0
        %7322 = vmatpush.bf16.msra.mxu0 %v4196
        %7323 = vmatpush.bf16.msra.mxu0 %v4188
        %7324 = vmatpush.bf16.msra.mxu0 %v4180
        %7325 = vmatpush.bf16.msra.mxu0 %v4172
        %7326 = vmatpush.bf16.msra.mxu0 %v4164
        %7327 = vmatpush.bf16.msra.mxu0 %v4156
        %7328 = vmatpush.bf16.msra.mxu0 %v4148
        %7329 = vmatpush.bf16.msra.mxu0 %v4140
        %7330 = vmatmul.bf16.gmra.mxu0 %v1880
        %v7331 = vpop.f32.mrf.mxu0
        %v7332 = vadd.f32 %v7243, %v7331
        %v7333 = vpop.f32.mrf.mxu0
        %v7334 = vadd.f32 %v7245, %v7333
        %7335 = vmatmul.bf16.gmra.mxu0 %v1888
        %v7336 = vpop.f32.mrf.mxu0
        %v7337 = vadd.f32 %v7248, %v7336
        %v7338 = vpop.f32.mrf.mxu0
        %v7339 = vadd.f32 %v7250, %v7338
        %7340 = vmatmul.bf16.gmra.mxu0 %v1896
        %v7341 = vpop.f32.mrf.mxu0
        %v7342 = vadd.f32 %v7253, %v7341
        %v7343 = vpop.f32.mrf.mxu0
        %v7344 = vadd.f32 %v7255, %v7343
        %7345 = vmatmul.bf16.gmra.mxu0 %v1904
        %v7346 = vpop.f32.mrf.mxu0
        %v7347 = vadd.f32 %v7258, %v7346
        %v7348 = vpop.f32.mrf.mxu0
        %v7349 = vadd.f32 %v7260, %v7348
        %7350 = vmatmul.bf16.gmra.mxu0 %v1912
        %v7351 = vpop.f32.mrf.mxu0
        %v7352 = vadd.f32 %v7263, %v7351
        %v7353 = vpop.f32.mrf.mxu0
        %v7354 = vadd.f32 %v7265, %v7353
        %7355 = vmatmul.bf16.gmra.mxu0 %v1920
        %v7356 = vpop.f32.mrf.mxu0
        %v7357 = vadd.f32 %v7268, %v7356
        %v7358 = vpop.f32.mrf.mxu0
        %v7359 = vadd.f32 %v7270, %v7358
        %7360 = vmatmul.bf16.gmra.mxu0 %v1928
        %v7361 = vpop.f32.mrf.mxu0
        %v7362 = vadd.f32 %v7273, %v7361
        %v7363 = vpop.f32.mrf.mxu0
        %v7364 = vadd.f32 %v7275, %v7363
        %7365 = vmatmul.bf16.gmra.mxu0 %v1936
        %v7366 = vpop.f32.mrf.mxu0
        %v7367 = vadd.f32 %v7278, %v7366
        %v7368 = vpop.f32.mrf.mxu0
        %v7369 = vadd.f32 %v7280, %v7368
        %7370 = vmatmul.bf16.gmra.mxu0 %v1944
        %v7371 = vpop.f32.mrf.mxu0
        %v7372 = vadd.f32 %v7283, %v7371
        %v7373 = vpop.f32.mrf.mxu0
        %v7374 = vadd.f32 %v7285, %v7373
        %7375 = vmatmul.bf16.gmra.mxu0 %v1952
        %v7376 = vpop.f32.mrf.mxu0
        %v7377 = vadd.f32 %v7288, %v7376
        %v7378 = vpop.f32.mrf.mxu0
        %v7379 = vadd.f32 %v7290, %v7378
        %7380 = vmatmul.bf16.gmra.mxu0 %v1960
        %v7381 = vpop.f32.mrf.mxu0
        %v7382 = vadd.f32 %v7293, %v7381
        %v7383 = vpop.f32.mrf.mxu0
        %v7384 = vadd.f32 %v7295, %v7383
        %7385 = vmatmul.bf16.gmra.mxu0 %v1968
        %v7386 = vpop.f32.mrf.mxu0
        %v7387 = vadd.f32 %v7298, %v7386
        %v7388 = vpop.f32.mrf.mxu0
        %v7389 = vadd.f32 %v7300, %v7388
        %7390 = vmatmul.bf16.gmra.mxu0 %v1976
        %v7391 = vpop.f32.mrf.mxu0
        %v7392 = vadd.f32 %v7303, %v7391
        %v7393 = vpop.f32.mrf.mxu0
        %v7394 = vadd.f32 %v7305, %v7393
        %7395 = vmatmul.bf16.gmra.mxu0 %v1984
        %v7396 = vpop.f32.mrf.mxu0
        %v7397 = vadd.f32 %v7308, %v7396
        %v7398 = vpop.f32.mrf.mxu0
        %v7399 = vadd.f32 %v7310, %v7398
        %7400 = vmatmul.bf16.gmra.mxu0 %v1992
        %v7401 = vpop.f32.mrf.mxu0
        %v7402 = vadd.f32 %v7313, %v7401
        %v7403 = vpop.f32.mrf.mxu0
        %v7404 = vadd.f32 %v7315, %v7403
        %7405 = vmatmul.bf16.gmra.mxu0 %v2000
        %v7406 = vpop.f32.mrf.mxu0
        %v7407 = vadd.f32 %v7318, %v7406
        %v7408 = vpop.f32.mrf.mxu0
        %v7409 = vadd.f32 %v7320, %v7408
        %7410 = vdwg.mxu0
        %7411 = vmatpush.bf16.msra.mxu0 %v4260
        %7412 = vmatpush.bf16.msra.mxu0 %v4252
        %7413 = vmatpush.bf16.msra.mxu0 %v4244
        %7414 = vmatpush.bf16.msra.mxu0 %v4236
        %7415 = vmatpush.bf16.msra.mxu0 %v4228
        %7416 = vmatpush.bf16.msra.mxu0 %v4220
        %7417 = vmatpush.bf16.msra.mxu0 %v4212
        %7418 = vmatpush.bf16.msra.mxu0 %v4204
        %7419 = vmatmul.bf16.gmra.mxu0 %v1881
        %v7420 = vpop.f32.mrf.mxu0
        %v7421 = vadd.f32 %v7332, %v7420
        %v7422 = vpop.f32.mrf.mxu0
        %v7423 = vadd.f32 %v7334, %v7422
        %7424 = vmatmul.bf16.gmra.mxu0 %v1889
        %v7425 = vpop.f32.mrf.mxu0
        %v7426 = vadd.f32 %v7337, %v7425
        %v7427 = vpop.f32.mrf.mxu0
        %v7428 = vadd.f32 %v7339, %v7427
        %7429 = vmatmul.bf16.gmra.mxu0 %v1897
        %v7430 = vpop.f32.mrf.mxu0
        %v7431 = vadd.f32 %v7342, %v7430
        %v7432 = vpop.f32.mrf.mxu0
        %v7433 = vadd.f32 %v7344, %v7432
        %7434 = vmatmul.bf16.gmra.mxu0 %v1905
        %v7435 = vpop.f32.mrf.mxu0
        %v7436 = vadd.f32 %v7347, %v7435
        %v7437 = vpop.f32.mrf.mxu0
        %v7438 = vadd.f32 %v7349, %v7437
        %7439 = vmatmul.bf16.gmra.mxu0 %v1913
        %v7440 = vpop.f32.mrf.mxu0
        %v7441 = vadd.f32 %v7352, %v7440
        %v7442 = vpop.f32.mrf.mxu0
        %v7443 = vadd.f32 %v7354, %v7442
        %7444 = vmatmul.bf16.gmra.mxu0 %v1921
        %v7445 = vpop.f32.mrf.mxu0
        %v7446 = vadd.f32 %v7357, %v7445
        %v7447 = vpop.f32.mrf.mxu0
        %v7448 = vadd.f32 %v7359, %v7447
        %7449 = vmatmul.bf16.gmra.mxu0 %v1929
        %v7450 = vpop.f32.mrf.mxu0
        %v7451 = vadd.f32 %v7362, %v7450
        %v7452 = vpop.f32.mrf.mxu0
        %v7453 = vadd.f32 %v7364, %v7452
        %7454 = vmatmul.bf16.gmra.mxu0 %v1937
        %v7455 = vpop.f32.mrf.mxu0
        %v7456 = vadd.f32 %v7367, %v7455
        %v7457 = vpop.f32.mrf.mxu0
        %v7458 = vadd.f32 %v7369, %v7457
        %7459 = vmatmul.bf16.gmra.mxu0 %v1945
        %v7460 = vpop.f32.mrf.mxu0
        %v7461 = vadd.f32 %v7372, %v7460
        %v7462 = vpop.f32.mrf.mxu0
        %v7463 = vadd.f32 %v7374, %v7462
        %7464 = vmatmul.bf16.gmra.mxu0 %v1953
        %v7465 = vpop.f32.mrf.mxu0
        %v7466 = vadd.f32 %v7377, %v7465
        %v7467 = vpop.f32.mrf.mxu0
        %v7468 = vadd.f32 %v7379, %v7467
        %7469 = vmatmul.bf16.gmra.mxu0 %v1961
        %v7470 = vpop.f32.mrf.mxu0
        %v7471 = vadd.f32 %v7382, %v7470
        %v7472 = vpop.f32.mrf.mxu0
        %v7473 = vadd.f32 %v7384, %v7472
        %7474 = vmatmul.bf16.gmra.mxu0 %v1969
        %v7475 = vpop.f32.mrf.mxu0
        %v7476 = vadd.f32 %v7387, %v7475
        %v7477 = vpop.f32.mrf.mxu0
        %v7478 = vadd.f32 %v7389, %v7477
        %7479 = vmatmul.bf16.gmra.mxu0 %v1977
        %v7480 = vpop.f32.mrf.mxu0
        %v7481 = vadd.f32 %v7392, %v7480
        %v7482 = vpop.f32.mrf.mxu0
        %v7483 = vadd.f32 %v7394, %v7482
        %7484 = vmatmul.bf16.gmra.mxu0 %v1985
        %v7485 = vpop.f32.mrf.mxu0
        %v7486 = vadd.f32 %v7397, %v7485
        %v7487 = vpop.f32.mrf.mxu0
        %v7488 = vadd.f32 %v7399, %v7487
        %7489 = vmatmul.bf16.gmra.mxu0 %v1993
        %v7490 = vpop.f32.mrf.mxu0
        %v7491 = vadd.f32 %v7402, %v7490
        %v7492 = vpop.f32.mrf.mxu0
        %v7493 = vadd.f32 %v7404, %v7492
        %7494 = vmatmul.bf16.gmra.mxu0 %v2001
        %v7495 = vpop.f32.mrf.mxu0
        %v7496 = vadd.f32 %v7407, %v7495
        %v7497 = vpop.f32.mrf.mxu0
        %v7498 = vadd.f32 %v7409, %v7497
        %7499 = vdwg.mxu0
        %7500 = vmatpush.bf16.msra.mxu0 %v4324
        %7501 = vmatpush.bf16.msra.mxu0 %v4316
        %7502 = vmatpush.bf16.msra.mxu0 %v4308
        %7503 = vmatpush.bf16.msra.mxu0 %v4300
        %7504 = vmatpush.bf16.msra.mxu0 %v4292
        %7505 = vmatpush.bf16.msra.mxu0 %v4284
        %7506 = vmatpush.bf16.msra.mxu0 %v4276
        %7507 = vmatpush.bf16.msra.mxu0 %v4268
        %7508 = vmatmul.bf16.gmra.mxu0 %v1882
        %v7509 = vpop.f32.mrf.mxu0
        %v7510 = vadd.f32 %v7421, %v7509
        %v7511 = vpop.f32.mrf.mxu0
        %v7512 = vadd.f32 %v7423, %v7511
        %7513 = vmatmul.bf16.gmra.mxu0 %v1890
        %v7514 = vpop.f32.mrf.mxu0
        %v7515 = vadd.f32 %v7426, %v7514
        %v7516 = vpop.f32.mrf.mxu0
        %v7517 = vadd.f32 %v7428, %v7516
        %7518 = vmatmul.bf16.gmra.mxu0 %v1898
        %v7519 = vpop.f32.mrf.mxu0
        %v7520 = vadd.f32 %v7431, %v7519
        %v7521 = vpop.f32.mrf.mxu0
        %v7522 = vadd.f32 %v7433, %v7521
        %7523 = vmatmul.bf16.gmra.mxu0 %v1906
        %v7524 = vpop.f32.mrf.mxu0
        %v7525 = vadd.f32 %v7436, %v7524
        %v7526 = vpop.f32.mrf.mxu0
        %v7527 = vadd.f32 %v7438, %v7526
        %7528 = vmatmul.bf16.gmra.mxu0 %v1914
        %v7529 = vpop.f32.mrf.mxu0
        %v7530 = vadd.f32 %v7441, %v7529
        %v7531 = vpop.f32.mrf.mxu0
        %v7532 = vadd.f32 %v7443, %v7531
        %7533 = vmatmul.bf16.gmra.mxu0 %v1922
        %v7534 = vpop.f32.mrf.mxu0
        %v7535 = vadd.f32 %v7446, %v7534
        %v7536 = vpop.f32.mrf.mxu0
        %v7537 = vadd.f32 %v7448, %v7536
        %7538 = vmatmul.bf16.gmra.mxu0 %v1930
        %v7539 = vpop.f32.mrf.mxu0
        %v7540 = vadd.f32 %v7451, %v7539
        %v7541 = vpop.f32.mrf.mxu0
        %v7542 = vadd.f32 %v7453, %v7541
        %7543 = vmatmul.bf16.gmra.mxu0 %v1938
        %v7544 = vpop.f32.mrf.mxu0
        %v7545 = vadd.f32 %v7456, %v7544
        %v7546 = vpop.f32.mrf.mxu0
        %v7547 = vadd.f32 %v7458, %v7546
        %7548 = vmatmul.bf16.gmra.mxu0 %v1946
        %v7549 = vpop.f32.mrf.mxu0
        %v7550 = vadd.f32 %v7461, %v7549
        %v7551 = vpop.f32.mrf.mxu0
        %v7552 = vadd.f32 %v7463, %v7551
        %7553 = vmatmul.bf16.gmra.mxu0 %v1954
        %v7554 = vpop.f32.mrf.mxu0
        %v7555 = vadd.f32 %v7466, %v7554
        %v7556 = vpop.f32.mrf.mxu0
        %v7557 = vadd.f32 %v7468, %v7556
        %7558 = vmatmul.bf16.gmra.mxu0 %v1962
        %v7559 = vpop.f32.mrf.mxu0
        %v7560 = vadd.f32 %v7471, %v7559
        %v7561 = vpop.f32.mrf.mxu0
        %v7562 = vadd.f32 %v7473, %v7561
        %7563 = vmatmul.bf16.gmra.mxu0 %v1970
        %v7564 = vpop.f32.mrf.mxu0
        %v7565 = vadd.f32 %v7476, %v7564
        %v7566 = vpop.f32.mrf.mxu0
        %v7567 = vadd.f32 %v7478, %v7566
        %7568 = vmatmul.bf16.gmra.mxu0 %v1978
        %v7569 = vpop.f32.mrf.mxu0
        %v7570 = vadd.f32 %v7481, %v7569
        %v7571 = vpop.f32.mrf.mxu0
        %v7572 = vadd.f32 %v7483, %v7571
        %7573 = vmatmul.bf16.gmra.mxu0 %v1986
        %v7574 = vpop.f32.mrf.mxu0
        %v7575 = vadd.f32 %v7486, %v7574
        %v7576 = vpop.f32.mrf.mxu0
        %v7577 = vadd.f32 %v7488, %v7576
        %7578 = vmatmul.bf16.gmra.mxu0 %v1994
        %v7579 = vpop.f32.mrf.mxu0
        %v7580 = vadd.f32 %v7491, %v7579
        %v7581 = vpop.f32.mrf.mxu0
        %v7582 = vadd.f32 %v7493, %v7581
        %7583 = vmatmul.bf16.gmra.mxu0 %v2002
        %v7584 = vpop.f32.mrf.mxu0
        %v7585 = vadd.f32 %v7496, %v7584
        %v7586 = vpop.f32.mrf.mxu0
        %v7587 = vadd.f32 %v7498, %v7586
        %7588 = vdwg.mxu0
        %7589 = vmatpush.bf16.msra.mxu0 %v4388
        %7590 = vmatpush.bf16.msra.mxu0 %v4380
        %7591 = vmatpush.bf16.msra.mxu0 %v4372
        %7592 = vmatpush.bf16.msra.mxu0 %v4364
        %7593 = vmatpush.bf16.msra.mxu0 %v4356
        %7594 = vmatpush.bf16.msra.mxu0 %v4348
        %7595 = vmatpush.bf16.msra.mxu0 %v4340
        %7596 = vmatpush.bf16.msra.mxu0 %v4332
        %7597 = vmatmul.bf16.gmra.mxu0 %v1883
        %v7598 = vpop.f32.mrf.mxu0
        %v7599 = vadd.f32 %v7510, %v7598
        %v7600 = vpop.f32.mrf.mxu0
        %v7601 = vadd.f32 %v7512, %v7600
        %7602 = vmatmul.bf16.gmra.mxu0 %v1891
        %v7603 = vpop.f32.mrf.mxu0
        %v7604 = vadd.f32 %v7515, %v7603
        %v7605 = vpop.f32.mrf.mxu0
        %v7606 = vadd.f32 %v7517, %v7605
        %7607 = vmatmul.bf16.gmra.mxu0 %v1899
        %v7608 = vpop.f32.mrf.mxu0
        %v7609 = vadd.f32 %v7520, %v7608
        %v7610 = vpop.f32.mrf.mxu0
        %v7611 = vadd.f32 %v7522, %v7610
        %7612 = vmatmul.bf16.gmra.mxu0 %v1907
        %v7613 = vpop.f32.mrf.mxu0
        %v7614 = vadd.f32 %v7525, %v7613
        %v7615 = vpop.f32.mrf.mxu0
        %v7616 = vadd.f32 %v7527, %v7615
        %7617 = vmatmul.bf16.gmra.mxu0 %v1915
        %v7618 = vpop.f32.mrf.mxu0
        %v7619 = vadd.f32 %v7530, %v7618
        %v7620 = vpop.f32.mrf.mxu0
        %v7621 = vadd.f32 %v7532, %v7620
        %7622 = vmatmul.bf16.gmra.mxu0 %v1923
        %v7623 = vpop.f32.mrf.mxu0
        %v7624 = vadd.f32 %v7535, %v7623
        %v7625 = vpop.f32.mrf.mxu0
        %v7626 = vadd.f32 %v7537, %v7625
        %7627 = vmatmul.bf16.gmra.mxu0 %v1931
        %v7628 = vpop.f32.mrf.mxu0
        %v7629 = vadd.f32 %v7540, %v7628
        %v7630 = vpop.f32.mrf.mxu0
        %v7631 = vadd.f32 %v7542, %v7630
        %7632 = vmatmul.bf16.gmra.mxu0 %v1939
        %v7633 = vpop.f32.mrf.mxu0
        %v7634 = vadd.f32 %v7545, %v7633
        %v7635 = vpop.f32.mrf.mxu0
        %v7636 = vadd.f32 %v7547, %v7635
        %7637 = vmatmul.bf16.gmra.mxu0 %v1947
        %v7638 = vpop.f32.mrf.mxu0
        %v7639 = vadd.f32 %v7550, %v7638
        %v7640 = vpop.f32.mrf.mxu0
        %v7641 = vadd.f32 %v7552, %v7640
        %7642 = vmatmul.bf16.gmra.mxu0 %v1955
        %v7643 = vpop.f32.mrf.mxu0
        %v7644 = vadd.f32 %v7555, %v7643
        %v7645 = vpop.f32.mrf.mxu0
        %v7646 = vadd.f32 %v7557, %v7645
        %7647 = vmatmul.bf16.gmra.mxu0 %v1963
        %v7648 = vpop.f32.mrf.mxu0
        %v7649 = vadd.f32 %v7560, %v7648
        %v7650 = vpop.f32.mrf.mxu0
        %v7651 = vadd.f32 %v7562, %v7650
        %7652 = vmatmul.bf16.gmra.mxu0 %v1971
        %v7653 = vpop.f32.mrf.mxu0
        %v7654 = vadd.f32 %v7565, %v7653
        %v7655 = vpop.f32.mrf.mxu0
        %v7656 = vadd.f32 %v7567, %v7655
        %7657 = vmatmul.bf16.gmra.mxu0 %v1979
        %v7658 = vpop.f32.mrf.mxu0
        %v7659 = vadd.f32 %v7570, %v7658
        %v7660 = vpop.f32.mrf.mxu0
        %v7661 = vadd.f32 %v7572, %v7660
        %7662 = vmatmul.bf16.gmra.mxu0 %v1987
        %v7663 = vpop.f32.mrf.mxu0
        %v7664 = vadd.f32 %v7575, %v7663
        %v7665 = vpop.f32.mrf.mxu0
        %v7666 = vadd.f32 %v7577, %v7665
        %7667 = vmatmul.bf16.gmra.mxu0 %v1995
        %v7668 = vpop.f32.mrf.mxu0
        %v7669 = vadd.f32 %v7580, %v7668
        %v7670 = vpop.f32.mrf.mxu0
        %v7671 = vadd.f32 %v7582, %v7670
        %7672 = vmatmul.bf16.gmra.mxu0 %v2003
        %v7673 = vpop.f32.mrf.mxu0
        %v7674 = vadd.f32 %v7585, %v7673
        %v7675 = vpop.f32.mrf.mxu0
        %v7676 = vadd.f32 %v7587, %v7675
        %7677 = vdwg.mxu0
        %7678 = vmatpush.bf16.msra.mxu0 %v4452
        %7679 = vmatpush.bf16.msra.mxu0 %v4444
        %7680 = vmatpush.bf16.msra.mxu0 %v4436
        %7681 = vmatpush.bf16.msra.mxu0 %v4428
        %7682 = vmatpush.bf16.msra.mxu0 %v4420
        %7683 = vmatpush.bf16.msra.mxu0 %v4412
        %7684 = vmatpush.bf16.msra.mxu0 %v4404
        %7685 = vmatpush.bf16.msra.mxu0 %v4396
        %7686 = vmatmul.bf16.gmra.mxu0 %v1884
        %v7687 = vpop.f32.mrf.mxu0
        %v7688 = vadd.f32 %v7599, %v7687
        %v7689 = vpop.f32.mrf.mxu0
        %v7690 = vadd.f32 %v7601, %v7689
        %7691 = vmatmul.bf16.gmra.mxu0 %v1892
        %v7692 = vpop.f32.mrf.mxu0
        %v7693 = vadd.f32 %v7604, %v7692
        %v7694 = vpop.f32.mrf.mxu0
        %v7695 = vadd.f32 %v7606, %v7694
        %7696 = vmatmul.bf16.gmra.mxu0 %v1900
        %v7697 = vpop.f32.mrf.mxu0
        %v7698 = vadd.f32 %v7609, %v7697
        %v7699 = vpop.f32.mrf.mxu0
        %v7700 = vadd.f32 %v7611, %v7699
        %7701 = vmatmul.bf16.gmra.mxu0 %v1908
        %v7702 = vpop.f32.mrf.mxu0
        %v7703 = vadd.f32 %v7614, %v7702
        %v7704 = vpop.f32.mrf.mxu0
        %v7705 = vadd.f32 %v7616, %v7704
        %7706 = vmatmul.bf16.gmra.mxu0 %v1916
        %v7707 = vpop.f32.mrf.mxu0
        %v7708 = vadd.f32 %v7619, %v7707
        %v7709 = vpop.f32.mrf.mxu0
        %v7710 = vadd.f32 %v7621, %v7709
        %7711 = vmatmul.bf16.gmra.mxu0 %v1924
        %v7712 = vpop.f32.mrf.mxu0
        %v7713 = vadd.f32 %v7624, %v7712
        %v7714 = vpop.f32.mrf.mxu0
        %v7715 = vadd.f32 %v7626, %v7714
        %7716 = vmatmul.bf16.gmra.mxu0 %v1932
        %v7717 = vpop.f32.mrf.mxu0
        %v7718 = vadd.f32 %v7629, %v7717
        %v7719 = vpop.f32.mrf.mxu0
        %v7720 = vadd.f32 %v7631, %v7719
        %7721 = vmatmul.bf16.gmra.mxu0 %v1940
        %v7722 = vpop.f32.mrf.mxu0
        %v7723 = vadd.f32 %v7634, %v7722
        %v7724 = vpop.f32.mrf.mxu0
        %v7725 = vadd.f32 %v7636, %v7724
        %7726 = vmatmul.bf16.gmra.mxu0 %v1948
        %v7727 = vpop.f32.mrf.mxu0
        %v7728 = vadd.f32 %v7639, %v7727
        %v7729 = vpop.f32.mrf.mxu0
        %v7730 = vadd.f32 %v7641, %v7729
        %7731 = vmatmul.bf16.gmra.mxu0 %v1956
        %v7732 = vpop.f32.mrf.mxu0
        %v7733 = vadd.f32 %v7644, %v7732
        %v7734 = vpop.f32.mrf.mxu0
        %v7735 = vadd.f32 %v7646, %v7734
        %7736 = vmatmul.bf16.gmra.mxu0 %v1964
        %v7737 = vpop.f32.mrf.mxu0
        %v7738 = vadd.f32 %v7649, %v7737
        %v7739 = vpop.f32.mrf.mxu0
        %v7740 = vadd.f32 %v7651, %v7739
        %7741 = vmatmul.bf16.gmra.mxu0 %v1972
        %v7742 = vpop.f32.mrf.mxu0
        %v7743 = vadd.f32 %v7654, %v7742
        %v7744 = vpop.f32.mrf.mxu0
        %v7745 = vadd.f32 %v7656, %v7744
        %7746 = vmatmul.bf16.gmra.mxu0 %v1980
        %v7747 = vpop.f32.mrf.mxu0
        %v7748 = vadd.f32 %v7659, %v7747
        %v7749 = vpop.f32.mrf.mxu0
        %v7750 = vadd.f32 %v7661, %v7749
        %7751 = vmatmul.bf16.gmra.mxu0 %v1988
        %v7752 = vpop.f32.mrf.mxu0
        %v7753 = vadd.f32 %v7664, %v7752
        %v7754 = vpop.f32.mrf.mxu0
        %v7755 = vadd.f32 %v7666, %v7754
        %7756 = vmatmul.bf16.gmra.mxu0 %v1996
        %v7757 = vpop.f32.mrf.mxu0
        %v7758 = vadd.f32 %v7669, %v7757
        %v7759 = vpop.f32.mrf.mxu0
        %v7760 = vadd.f32 %v7671, %v7759
        %7761 = vmatmul.bf16.gmra.mxu0 %v2004
        %v7762 = vpop.f32.mrf.mxu0
        %v7763 = vadd.f32 %v7674, %v7762
        %v7764 = vpop.f32.mrf.mxu0
        %v7765 = vadd.f32 %v7676, %v7764
        %7766 = vdwg.mxu0
        %7767 = vmatpush.bf16.msra.mxu0 %v4516
        %7768 = vmatpush.bf16.msra.mxu0 %v4508
        %7769 = vmatpush.bf16.msra.mxu0 %v4500
        %7770 = vmatpush.bf16.msra.mxu0 %v4492
        %7771 = vmatpush.bf16.msra.mxu0 %v4484
        %7772 = vmatpush.bf16.msra.mxu0 %v4476
        %7773 = vmatpush.bf16.msra.mxu0 %v4468
        %7774 = vmatpush.bf16.msra.mxu0 %v4460
        %7775 = vmatmul.bf16.gmra.mxu0 %v1885
        %v7776 = vpop.f32.mrf.mxu0
        %v7777 = vadd.f32 %v7688, %v7776
        %v7778 = vpop.f32.mrf.mxu0
        %v7779 = vadd.f32 %v7690, %v7778
        %7780 = vmatmul.bf16.gmra.mxu0 %v1893
        %v7781 = vpop.f32.mrf.mxu0
        %v7782 = vadd.f32 %v7693, %v7781
        %v7783 = vpop.f32.mrf.mxu0
        %v7784 = vadd.f32 %v7695, %v7783
        %7785 = vmatmul.bf16.gmra.mxu0 %v1901
        %v7786 = vpop.f32.mrf.mxu0
        %v7787 = vadd.f32 %v7698, %v7786
        %v7788 = vpop.f32.mrf.mxu0
        %v7789 = vadd.f32 %v7700, %v7788
        %7790 = vmatmul.bf16.gmra.mxu0 %v1909
        %v7791 = vpop.f32.mrf.mxu0
        %v7792 = vadd.f32 %v7703, %v7791
        %v7793 = vpop.f32.mrf.mxu0
        %v7794 = vadd.f32 %v7705, %v7793
        %7795 = vmatmul.bf16.gmra.mxu0 %v1917
        %v7796 = vpop.f32.mrf.mxu0
        %v7797 = vadd.f32 %v7708, %v7796
        %v7798 = vpop.f32.mrf.mxu0
        %v7799 = vadd.f32 %v7710, %v7798
        %7800 = vmatmul.bf16.gmra.mxu0 %v1925
        %v7801 = vpop.f32.mrf.mxu0
        %v7802 = vadd.f32 %v7713, %v7801
        %v7803 = vpop.f32.mrf.mxu0
        %v7804 = vadd.f32 %v7715, %v7803
        %7805 = vmatmul.bf16.gmra.mxu0 %v1933
        %v7806 = vpop.f32.mrf.mxu0
        %v7807 = vadd.f32 %v7718, %v7806
        %v7808 = vpop.f32.mrf.mxu0
        %v7809 = vadd.f32 %v7720, %v7808
        %7810 = vmatmul.bf16.gmra.mxu0 %v1941
        %v7811 = vpop.f32.mrf.mxu0
        %v7812 = vadd.f32 %v7723, %v7811
        %v7813 = vpop.f32.mrf.mxu0
        %v7814 = vadd.f32 %v7725, %v7813
        %7815 = vmatmul.bf16.gmra.mxu0 %v1949
        %v7816 = vpop.f32.mrf.mxu0
        %v7817 = vadd.f32 %v7728, %v7816
        %v7818 = vpop.f32.mrf.mxu0
        %v7819 = vadd.f32 %v7730, %v7818
        %7820 = vmatmul.bf16.gmra.mxu0 %v1957
        %v7821 = vpop.f32.mrf.mxu0
        %v7822 = vadd.f32 %v7733, %v7821
        %v7823 = vpop.f32.mrf.mxu0
        %v7824 = vadd.f32 %v7735, %v7823
        %7825 = vmatmul.bf16.gmra.mxu0 %v1965
        %v7826 = vpop.f32.mrf.mxu0
        %v7827 = vadd.f32 %v7738, %v7826
        %v7828 = vpop.f32.mrf.mxu0
        %v7829 = vadd.f32 %v7740, %v7828
        %7830 = vmatmul.bf16.gmra.mxu0 %v1973
        %v7831 = vpop.f32.mrf.mxu0
        %v7832 = vadd.f32 %v7743, %v7831
        %v7833 = vpop.f32.mrf.mxu0
        %v7834 = vadd.f32 %v7745, %v7833
        %7835 = vmatmul.bf16.gmra.mxu0 %v1981
        %v7836 = vpop.f32.mrf.mxu0
        %v7837 = vadd.f32 %v7748, %v7836
        %v7838 = vpop.f32.mrf.mxu0
        %v7839 = vadd.f32 %v7750, %v7838
        %7840 = vmatmul.bf16.gmra.mxu0 %v1989
        %v7841 = vpop.f32.mrf.mxu0
        %v7842 = vadd.f32 %v7753, %v7841
        %v7843 = vpop.f32.mrf.mxu0
        %v7844 = vadd.f32 %v7755, %v7843
        %7845 = vmatmul.bf16.gmra.mxu0 %v1997
        %v7846 = vpop.f32.mrf.mxu0
        %v7847 = vadd.f32 %v7758, %v7846
        %v7848 = vpop.f32.mrf.mxu0
        %v7849 = vadd.f32 %v7760, %v7848
        %7850 = vmatmul.bf16.gmra.mxu0 %v2005
        %v7851 = vpop.f32.mrf.mxu0
        %v7852 = vadd.f32 %v7763, %v7851
        %v7853 = vpop.f32.mrf.mxu0
        %v7854 = vadd.f32 %v7765, %v7853
        %7855 = vdwg.mxu0
        %7856 = vmatpush.bf16.msra.mxu0 %v4580
        %7857 = vmatpush.bf16.msra.mxu0 %v4572
        %7858 = vmatpush.bf16.msra.mxu0 %v4564
        %7859 = vmatpush.bf16.msra.mxu0 %v4556
        %7860 = vmatpush.bf16.msra.mxu0 %v4548
        %7861 = vmatpush.bf16.msra.mxu0 %v4540
        %7862 = vmatpush.bf16.msra.mxu0 %v4532
        %7863 = vmatpush.bf16.msra.mxu0 %v4524
        %7864 = vmatmul.bf16.gmra.mxu0 %v1886
        %v7865 = vpop.f32.mrf.mxu0
        %v7866 = vadd.f32 %v7777, %v7865
        %v7867 = vpop.f32.mrf.mxu0
        %v7868 = vadd.f32 %v7779, %v7867
        %7869 = vmatmul.bf16.gmra.mxu0 %v1894
        %v7870 = vpop.f32.mrf.mxu0
        %v7871 = vadd.f32 %v7782, %v7870
        %v7872 = vpop.f32.mrf.mxu0
        %v7873 = vadd.f32 %v7784, %v7872
        %7874 = vmatmul.bf16.gmra.mxu0 %v1902
        %v7875 = vpop.f32.mrf.mxu0
        %v7876 = vadd.f32 %v7787, %v7875
        %v7877 = vpop.f32.mrf.mxu0
        %v7878 = vadd.f32 %v7789, %v7877
        %7879 = vmatmul.bf16.gmra.mxu0 %v1910
        %v7880 = vpop.f32.mrf.mxu0
        %v7881 = vadd.f32 %v7792, %v7880
        %v7882 = vpop.f32.mrf.mxu0
        %v7883 = vadd.f32 %v7794, %v7882
        %7884 = vmatmul.bf16.gmra.mxu0 %v1918
        %v7885 = vpop.f32.mrf.mxu0
        %v7886 = vadd.f32 %v7797, %v7885
        %v7887 = vpop.f32.mrf.mxu0
        %v7888 = vadd.f32 %v7799, %v7887
        %7889 = vmatmul.bf16.gmra.mxu0 %v1926
        %v7890 = vpop.f32.mrf.mxu0
        %v7891 = vadd.f32 %v7802, %v7890
        %v7892 = vpop.f32.mrf.mxu0
        %v7893 = vadd.f32 %v7804, %v7892
        %7894 = vmatmul.bf16.gmra.mxu0 %v1934
        %v7895 = vpop.f32.mrf.mxu0
        %v7896 = vadd.f32 %v7807, %v7895
        %v7897 = vpop.f32.mrf.mxu0
        %v7898 = vadd.f32 %v7809, %v7897
        %7899 = vmatmul.bf16.gmra.mxu0 %v1942
        %v7900 = vpop.f32.mrf.mxu0
        %v7901 = vadd.f32 %v7812, %v7900
        %v7902 = vpop.f32.mrf.mxu0
        %v7903 = vadd.f32 %v7814, %v7902
        %7904 = vmatmul.bf16.gmra.mxu0 %v1950
        %v7905 = vpop.f32.mrf.mxu0
        %v7906 = vadd.f32 %v7817, %v7905
        %v7907 = vpop.f32.mrf.mxu0
        %v7908 = vadd.f32 %v7819, %v7907
        %7909 = vmatmul.bf16.gmra.mxu0 %v1958
        %v7910 = vpop.f32.mrf.mxu0
        %v7911 = vadd.f32 %v7822, %v7910
        %v7912 = vpop.f32.mrf.mxu0
        %v7913 = vadd.f32 %v7824, %v7912
        %7914 = vmatmul.bf16.gmra.mxu0 %v1966
        %v7915 = vpop.f32.mrf.mxu0
        %v7916 = vadd.f32 %v7827, %v7915
        %v7917 = vpop.f32.mrf.mxu0
        %v7918 = vadd.f32 %v7829, %v7917
        %7919 = vmatmul.bf16.gmra.mxu0 %v1974
        %v7920 = vpop.f32.mrf.mxu0
        %v7921 = vadd.f32 %v7832, %v7920
        %v7922 = vpop.f32.mrf.mxu0
        %v7923 = vadd.f32 %v7834, %v7922
        %7924 = vmatmul.bf16.gmra.mxu0 %v1982
        %v7925 = vpop.f32.mrf.mxu0
        %v7926 = vadd.f32 %v7837, %v7925
        %v7927 = vpop.f32.mrf.mxu0
        %v7928 = vadd.f32 %v7839, %v7927
        %7929 = vmatmul.bf16.gmra.mxu0 %v1990
        %v7930 = vpop.f32.mrf.mxu0
        %v7931 = vadd.f32 %v7842, %v7930
        %v7932 = vpop.f32.mrf.mxu0
        %v7933 = vadd.f32 %v7844, %v7932
        %7934 = vmatmul.bf16.gmra.mxu0 %v1998
        %v7935 = vpop.f32.mrf.mxu0
        %v7936 = vadd.f32 %v7847, %v7935
        %v7937 = vpop.f32.mrf.mxu0
        %v7938 = vadd.f32 %v7849, %v7937
        %7939 = vmatmul.bf16.gmra.mxu0 %v2006
        %v7940 = vpop.f32.mrf.mxu0
        %v7941 = vadd.f32 %v7852, %v7940
        %v7942 = vpop.f32.mrf.mxu0
        %v7943 = vadd.f32 %v7854, %v7942
        %7944 = vdwg.mxu0
        %7945 = vmatpush.bf16.msra.mxu0 %v4133
        %7946 = vmatpush.bf16.msra.mxu0 %v4125
        %7947 = vmatpush.bf16.msra.mxu0 %v4117
        %7948 = vmatpush.bf16.msra.mxu0 %v4109
        %7949 = vmatpush.bf16.msra.mxu0 %v4101
        %7950 = vmatpush.bf16.msra.mxu0 %v4093
        %7951 = vmatpush.bf16.msra.mxu0 %v4085
        %7952 = vmatpush.bf16.msra.mxu0 %v4077
        %7953 = vmatmul.bf16.gmra.mxu0 %v1879
        %v7954 = vpop.f32.mrf.mxu0
        %v7955 = vadd.f32 %v2525, %v7954
        %v7956 = vpop.f32.mrf.mxu0
        %v7957 = vadd.f32 %v2525, %v7956
        %7958 = vmatmul.bf16.gmra.mxu0 %v1887
        %v7959 = vpop.f32.mrf.mxu0
        %v7960 = vadd.f32 %v2525, %v7959
        %v7961 = vpop.f32.mrf.mxu0
        %v7962 = vadd.f32 %v2525, %v7961
        %7963 = vmatmul.bf16.gmra.mxu0 %v1895
        %v7964 = vpop.f32.mrf.mxu0
        %v7965 = vadd.f32 %v2525, %v7964
        %v7966 = vpop.f32.mrf.mxu0
        %v7967 = vadd.f32 %v2525, %v7966
        %7968 = vmatmul.bf16.gmra.mxu0 %v1903
        %v7969 = vpop.f32.mrf.mxu0
        %v7970 = vadd.f32 %v2525, %v7969
        %v7971 = vpop.f32.mrf.mxu0
        %v7972 = vadd.f32 %v2525, %v7971
        %7973 = vmatmul.bf16.gmra.mxu0 %v1911
        %v7974 = vpop.f32.mrf.mxu0
        %v7975 = vadd.f32 %v2525, %v7974
        %v7976 = vpop.f32.mrf.mxu0
        %v7977 = vadd.f32 %v2525, %v7976
        %7978 = vmatmul.bf16.gmra.mxu0 %v1919
        %v7979 = vpop.f32.mrf.mxu0
        %v7980 = vadd.f32 %v2525, %v7979
        %v7981 = vpop.f32.mrf.mxu0
        %v7982 = vadd.f32 %v2525, %v7981
        %7983 = vmatmul.bf16.gmra.mxu0 %v1927
        %v7984 = vpop.f32.mrf.mxu0
        %v7985 = vadd.f32 %v2525, %v7984
        %v7986 = vpop.f32.mrf.mxu0
        %v7987 = vadd.f32 %v2525, %v7986
        %7988 = vmatmul.bf16.gmra.mxu0 %v1935
        %v7989 = vpop.f32.mrf.mxu0
        %v7990 = vadd.f32 %v2525, %v7989
        %v7991 = vpop.f32.mrf.mxu0
        %v7992 = vadd.f32 %v2525, %v7991
        %7993 = vmatmul.bf16.gmra.mxu0 %v1943
        %v7994 = vpop.f32.mrf.mxu0
        %v7995 = vadd.f32 %v2525, %v7994
        %v7996 = vpop.f32.mrf.mxu0
        %v7997 = vadd.f32 %v2525, %v7996
        %7998 = vmatmul.bf16.gmra.mxu0 %v1951
        %v7999 = vpop.f32.mrf.mxu0
        %v8000 = vadd.f32 %v2525, %v7999
        %v8001 = vpop.f32.mrf.mxu0
        %v8002 = vadd.f32 %v2525, %v8001
        %8003 = vmatmul.bf16.gmra.mxu0 %v1959
        %v8004 = vpop.f32.mrf.mxu0
        %v8005 = vadd.f32 %v2525, %v8004
        %v8006 = vpop.f32.mrf.mxu0
        %v8007 = vadd.f32 %v2525, %v8006
        %8008 = vmatmul.bf16.gmra.mxu0 %v1967
        %v8009 = vpop.f32.mrf.mxu0
        %v8010 = vadd.f32 %v2525, %v8009
        %v8011 = vpop.f32.mrf.mxu0
        %v8012 = vadd.f32 %v2525, %v8011
        %8013 = vmatmul.bf16.gmra.mxu0 %v1975
        %v8014 = vpop.f32.mrf.mxu0
        %v8015 = vadd.f32 %v2525, %v8014
        %v8016 = vpop.f32.mrf.mxu0
        %v8017 = vadd.f32 %v2525, %v8016
        %8018 = vmatmul.bf16.gmra.mxu0 %v1983
        %v8019 = vpop.f32.mrf.mxu0
        %v8020 = vadd.f32 %v2525, %v8019
        %v8021 = vpop.f32.mrf.mxu0
        %v8022 = vadd.f32 %v2525, %v8021
        %8023 = vmatmul.bf16.gmra.mxu0 %v1991
        %v8024 = vpop.f32.mrf.mxu0
        %v8025 = vadd.f32 %v2525, %v8024
        %v8026 = vpop.f32.mrf.mxu0
        %v8027 = vadd.f32 %v2525, %v8026
        %8028 = vmatmul.bf16.gmra.mxu0 %v1999
        %v8029 = vpop.f32.mrf.mxu0
        %v8030 = vadd.f32 %v2525, %v8029
        %v8031 = vpop.f32.mrf.mxu0
        %v8032 = vadd.f32 %v2525, %v8031
        %8033 = vdwg.mxu0
        %8034 = vmatpush.bf16.msra.mxu0 %v4197
        %8035 = vmatpush.bf16.msra.mxu0 %v4189
        %8036 = vmatpush.bf16.msra.mxu0 %v4181
        %8037 = vmatpush.bf16.msra.mxu0 %v4173
        %8038 = vmatpush.bf16.msra.mxu0 %v4165
        %8039 = vmatpush.bf16.msra.mxu0 %v4157
        %8040 = vmatpush.bf16.msra.mxu0 %v4149
        %8041 = vmatpush.bf16.msra.mxu0 %v4141
        %8042 = vmatmul.bf16.gmra.mxu0 %v1880
        %v8043 = vpop.f32.mrf.mxu0
        %v8044 = vadd.f32 %v7955, %v8043
        %v8045 = vpop.f32.mrf.mxu0
        %v8046 = vadd.f32 %v7957, %v8045
        %8047 = vmatmul.bf16.gmra.mxu0 %v1888
        %v8048 = vpop.f32.mrf.mxu0
        %v8049 = vadd.f32 %v7960, %v8048
        %v8050 = vpop.f32.mrf.mxu0
        %v8051 = vadd.f32 %v7962, %v8050
        %8052 = vmatmul.bf16.gmra.mxu0 %v1896
        %v8053 = vpop.f32.mrf.mxu0
        %v8054 = vadd.f32 %v7965, %v8053
        %v8055 = vpop.f32.mrf.mxu0
        %v8056 = vadd.f32 %v7967, %v8055
        %8057 = vmatmul.bf16.gmra.mxu0 %v1904
        %v8058 = vpop.f32.mrf.mxu0
        %v8059 = vadd.f32 %v7970, %v8058
        %v8060 = vpop.f32.mrf.mxu0
        %v8061 = vadd.f32 %v7972, %v8060
        %8062 = vmatmul.bf16.gmra.mxu0 %v1912
        %v8063 = vpop.f32.mrf.mxu0
        %v8064 = vadd.f32 %v7975, %v8063
        %v8065 = vpop.f32.mrf.mxu0
        %v8066 = vadd.f32 %v7977, %v8065
        %8067 = vmatmul.bf16.gmra.mxu0 %v1920
        %v8068 = vpop.f32.mrf.mxu0
        %v8069 = vadd.f32 %v7980, %v8068
        %v8070 = vpop.f32.mrf.mxu0
        %v8071 = vadd.f32 %v7982, %v8070
        %8072 = vmatmul.bf16.gmra.mxu0 %v1928
        %v8073 = vpop.f32.mrf.mxu0
        %v8074 = vadd.f32 %v7985, %v8073
        %v8075 = vpop.f32.mrf.mxu0
        %v8076 = vadd.f32 %v7987, %v8075
        %8077 = vmatmul.bf16.gmra.mxu0 %v1936
        %v8078 = vpop.f32.mrf.mxu0
        %v8079 = vadd.f32 %v7990, %v8078
        %v8080 = vpop.f32.mrf.mxu0
        %v8081 = vadd.f32 %v7992, %v8080
        %8082 = vmatmul.bf16.gmra.mxu0 %v1944
        %v8083 = vpop.f32.mrf.mxu0
        %v8084 = vadd.f32 %v7995, %v8083
        %v8085 = vpop.f32.mrf.mxu0
        %v8086 = vadd.f32 %v7997, %v8085
        %8087 = vmatmul.bf16.gmra.mxu0 %v1952
        %v8088 = vpop.f32.mrf.mxu0
        %v8089 = vadd.f32 %v8000, %v8088
        %v8090 = vpop.f32.mrf.mxu0
        %v8091 = vadd.f32 %v8002, %v8090
        %8092 = vmatmul.bf16.gmra.mxu0 %v1960
        %v8093 = vpop.f32.mrf.mxu0
        %v8094 = vadd.f32 %v8005, %v8093
        %v8095 = vpop.f32.mrf.mxu0
        %v8096 = vadd.f32 %v8007, %v8095
        %8097 = vmatmul.bf16.gmra.mxu0 %v1968
        %v8098 = vpop.f32.mrf.mxu0
        %v8099 = vadd.f32 %v8010, %v8098
        %v8100 = vpop.f32.mrf.mxu0
        %v8101 = vadd.f32 %v8012, %v8100
        %8102 = vmatmul.bf16.gmra.mxu0 %v1976
        %v8103 = vpop.f32.mrf.mxu0
        %v8104 = vadd.f32 %v8015, %v8103
        %v8105 = vpop.f32.mrf.mxu0
        %v8106 = vadd.f32 %v8017, %v8105
        %8107 = vmatmul.bf16.gmra.mxu0 %v1984
        %v8108 = vpop.f32.mrf.mxu0
        %v8109 = vadd.f32 %v8020, %v8108
        %v8110 = vpop.f32.mrf.mxu0
        %v8111 = vadd.f32 %v8022, %v8110
        %8112 = vmatmul.bf16.gmra.mxu0 %v1992
        %v8113 = vpop.f32.mrf.mxu0
        %v8114 = vadd.f32 %v8025, %v8113
        %v8115 = vpop.f32.mrf.mxu0
        %v8116 = vadd.f32 %v8027, %v8115
        %8117 = vmatmul.bf16.gmra.mxu0 %v2000
        %v8118 = vpop.f32.mrf.mxu0
        %v8119 = vadd.f32 %v8030, %v8118
        %v8120 = vpop.f32.mrf.mxu0
        %v8121 = vadd.f32 %v8032, %v8120
        %8122 = vdwg.mxu0
        %8123 = vmatpush.bf16.msra.mxu0 %v4261
        %8124 = vmatpush.bf16.msra.mxu0 %v4253
        %8125 = vmatpush.bf16.msra.mxu0 %v4245
        %8126 = vmatpush.bf16.msra.mxu0 %v4237
        %8127 = vmatpush.bf16.msra.mxu0 %v4229
        %8128 = vmatpush.bf16.msra.mxu0 %v4221
        %8129 = vmatpush.bf16.msra.mxu0 %v4213
        %8130 = vmatpush.bf16.msra.mxu0 %v4205
        %8131 = vmatmul.bf16.gmra.mxu0 %v1881
        %v8132 = vpop.f32.mrf.mxu0
        %v8133 = vadd.f32 %v8044, %v8132
        %v8134 = vpop.f32.mrf.mxu0
        %v8135 = vadd.f32 %v8046, %v8134
        %8136 = vmatmul.bf16.gmra.mxu0 %v1889
        %v8137 = vpop.f32.mrf.mxu0
        %v8138 = vadd.f32 %v8049, %v8137
        %v8139 = vpop.f32.mrf.mxu0
        %v8140 = vadd.f32 %v8051, %v8139
        %8141 = vmatmul.bf16.gmra.mxu0 %v1897
        %v8142 = vpop.f32.mrf.mxu0
        %v8143 = vadd.f32 %v8054, %v8142
        %v8144 = vpop.f32.mrf.mxu0
        %v8145 = vadd.f32 %v8056, %v8144
        %8146 = vmatmul.bf16.gmra.mxu0 %v1905
        %v8147 = vpop.f32.mrf.mxu0
        %v8148 = vadd.f32 %v8059, %v8147
        %v8149 = vpop.f32.mrf.mxu0
        %v8150 = vadd.f32 %v8061, %v8149
        %8151 = vmatmul.bf16.gmra.mxu0 %v1913
        %v8152 = vpop.f32.mrf.mxu0
        %v8153 = vadd.f32 %v8064, %v8152
        %v8154 = vpop.f32.mrf.mxu0
        %v8155 = vadd.f32 %v8066, %v8154
        %8156 = vmatmul.bf16.gmra.mxu0 %v1921
        %v8157 = vpop.f32.mrf.mxu0
        %v8158 = vadd.f32 %v8069, %v8157
        %v8159 = vpop.f32.mrf.mxu0
        %v8160 = vadd.f32 %v8071, %v8159
        %8161 = vmatmul.bf16.gmra.mxu0 %v1929
        %v8162 = vpop.f32.mrf.mxu0
        %v8163 = vadd.f32 %v8074, %v8162
        %v8164 = vpop.f32.mrf.mxu0
        %v8165 = vadd.f32 %v8076, %v8164
        %8166 = vmatmul.bf16.gmra.mxu0 %v1937
        %v8167 = vpop.f32.mrf.mxu0
        %v8168 = vadd.f32 %v8079, %v8167
        %v8169 = vpop.f32.mrf.mxu0
        %v8170 = vadd.f32 %v8081, %v8169
        %8171 = vmatmul.bf16.gmra.mxu0 %v1945
        %v8172 = vpop.f32.mrf.mxu0
        %v8173 = vadd.f32 %v8084, %v8172
        %v8174 = vpop.f32.mrf.mxu0
        %v8175 = vadd.f32 %v8086, %v8174
        %8176 = vmatmul.bf16.gmra.mxu0 %v1953
        %v8177 = vpop.f32.mrf.mxu0
        %v8178 = vadd.f32 %v8089, %v8177
        %v8179 = vpop.f32.mrf.mxu0
        %v8180 = vadd.f32 %v8091, %v8179
        %8181 = vmatmul.bf16.gmra.mxu0 %v1961
        %v8182 = vpop.f32.mrf.mxu0
        %v8183 = vadd.f32 %v8094, %v8182
        %v8184 = vpop.f32.mrf.mxu0
        %v8185 = vadd.f32 %v8096, %v8184
        %8186 = vmatmul.bf16.gmra.mxu0 %v1969
        %v8187 = vpop.f32.mrf.mxu0
        %v8188 = vadd.f32 %v8099, %v8187
        %v8189 = vpop.f32.mrf.mxu0
        %v8190 = vadd.f32 %v8101, %v8189
        %8191 = vmatmul.bf16.gmra.mxu0 %v1977
        %v8192 = vpop.f32.mrf.mxu0
        %v8193 = vadd.f32 %v8104, %v8192
        %v8194 = vpop.f32.mrf.mxu0
        %v8195 = vadd.f32 %v8106, %v8194
        %8196 = vmatmul.bf16.gmra.mxu0 %v1985
        %v8197 = vpop.f32.mrf.mxu0
        %v8198 = vadd.f32 %v8109, %v8197
        %v8199 = vpop.f32.mrf.mxu0
        %v8200 = vadd.f32 %v8111, %v8199
        %8201 = vmatmul.bf16.gmra.mxu0 %v1993
        %v8202 = vpop.f32.mrf.mxu0
        %v8203 = vadd.f32 %v8114, %v8202
        %v8204 = vpop.f32.mrf.mxu0
        %v8205 = vadd.f32 %v8116, %v8204
        %8206 = vmatmul.bf16.gmra.mxu0 %v2001
        %v8207 = vpop.f32.mrf.mxu0
        %v8208 = vadd.f32 %v8119, %v8207
        %v8209 = vpop.f32.mrf.mxu0
        %v8210 = vadd.f32 %v8121, %v8209
        %8211 = vdwg.mxu0
        %8212 = vmatpush.bf16.msra.mxu0 %v4325
        %8213 = vmatpush.bf16.msra.mxu0 %v4317
        %8214 = vmatpush.bf16.msra.mxu0 %v4309
        %8215 = vmatpush.bf16.msra.mxu0 %v4301
        %8216 = vmatpush.bf16.msra.mxu0 %v4293
        %8217 = vmatpush.bf16.msra.mxu0 %v4285
        %8218 = vmatpush.bf16.msra.mxu0 %v4277
        %8219 = vmatpush.bf16.msra.mxu0 %v4269
        %8220 = vmatmul.bf16.gmra.mxu0 %v1882
        %v8221 = vpop.f32.mrf.mxu0
        %v8222 = vadd.f32 %v8133, %v8221
        %v8223 = vpop.f32.mrf.mxu0
        %v8224 = vadd.f32 %v8135, %v8223
        %8225 = vmatmul.bf16.gmra.mxu0 %v1890
        %v8226 = vpop.f32.mrf.mxu0
        %v8227 = vadd.f32 %v8138, %v8226
        %v8228 = vpop.f32.mrf.mxu0
        %v8229 = vadd.f32 %v8140, %v8228
        %8230 = vmatmul.bf16.gmra.mxu0 %v1898
        %v8231 = vpop.f32.mrf.mxu0
        %v8232 = vadd.f32 %v8143, %v8231
        %v8233 = vpop.f32.mrf.mxu0
        %v8234 = vadd.f32 %v8145, %v8233
        %8235 = vmatmul.bf16.gmra.mxu0 %v1906
        %v8236 = vpop.f32.mrf.mxu0
        %v8237 = vadd.f32 %v8148, %v8236
        %v8238 = vpop.f32.mrf.mxu0
        %v8239 = vadd.f32 %v8150, %v8238
        %8240 = vmatmul.bf16.gmra.mxu0 %v1914
        %v8241 = vpop.f32.mrf.mxu0
        %v8242 = vadd.f32 %v8153, %v8241
        %v8243 = vpop.f32.mrf.mxu0
        %v8244 = vadd.f32 %v8155, %v8243
        %8245 = vmatmul.bf16.gmra.mxu0 %v1922
        %v8246 = vpop.f32.mrf.mxu0
        %v8247 = vadd.f32 %v8158, %v8246
        %v8248 = vpop.f32.mrf.mxu0
        %v8249 = vadd.f32 %v8160, %v8248
        %8250 = vmatmul.bf16.gmra.mxu0 %v1930
        %v8251 = vpop.f32.mrf.mxu0
        %v8252 = vadd.f32 %v8163, %v8251
        %v8253 = vpop.f32.mrf.mxu0
        %v8254 = vadd.f32 %v8165, %v8253
        %8255 = vmatmul.bf16.gmra.mxu0 %v1938
        %v8256 = vpop.f32.mrf.mxu0
        %v8257 = vadd.f32 %v8168, %v8256
        %v8258 = vpop.f32.mrf.mxu0
        %v8259 = vadd.f32 %v8170, %v8258
        %8260 = vmatmul.bf16.gmra.mxu0 %v1946
        %v8261 = vpop.f32.mrf.mxu0
        %v8262 = vadd.f32 %v8173, %v8261
        %v8263 = vpop.f32.mrf.mxu0
        %v8264 = vadd.f32 %v8175, %v8263
        %8265 = vmatmul.bf16.gmra.mxu0 %v1954
        %v8266 = vpop.f32.mrf.mxu0
        %v8267 = vadd.f32 %v8178, %v8266
        %v8268 = vpop.f32.mrf.mxu0
        %v8269 = vadd.f32 %v8180, %v8268
        %8270 = vmatmul.bf16.gmra.mxu0 %v1962
        %v8271 = vpop.f32.mrf.mxu0
        %v8272 = vadd.f32 %v8183, %v8271
        %v8273 = vpop.f32.mrf.mxu0
        %v8274 = vadd.f32 %v8185, %v8273
        %8275 = vmatmul.bf16.gmra.mxu0 %v1970
        %v8276 = vpop.f32.mrf.mxu0
        %v8277 = vadd.f32 %v8188, %v8276
        %v8278 = vpop.f32.mrf.mxu0
        %v8279 = vadd.f32 %v8190, %v8278
        %8280 = vmatmul.bf16.gmra.mxu0 %v1978
        %v8281 = vpop.f32.mrf.mxu0
        %v8282 = vadd.f32 %v8193, %v8281
        %v8283 = vpop.f32.mrf.mxu0
        %v8284 = vadd.f32 %v8195, %v8283
        %8285 = vmatmul.bf16.gmra.mxu0 %v1986
        %v8286 = vpop.f32.mrf.mxu0
        %v8287 = vadd.f32 %v8198, %v8286
        %v8288 = vpop.f32.mrf.mxu0
        %v8289 = vadd.f32 %v8200, %v8288
        %8290 = vmatmul.bf16.gmra.mxu0 %v1994
        %v8291 = vpop.f32.mrf.mxu0
        %v8292 = vadd.f32 %v8203, %v8291
        %v8293 = vpop.f32.mrf.mxu0
        %v8294 = vadd.f32 %v8205, %v8293
        %8295 = vmatmul.bf16.gmra.mxu0 %v2002
        %v8296 = vpop.f32.mrf.mxu0
        %v8297 = vadd.f32 %v8208, %v8296
        %v8298 = vpop.f32.mrf.mxu0
        %v8299 = vadd.f32 %v8210, %v8298
        %8300 = vdwg.mxu0
        %8301 = vmatpush.bf16.msra.mxu0 %v4389
        %8302 = vmatpush.bf16.msra.mxu0 %v4381
        %8303 = vmatpush.bf16.msra.mxu0 %v4373
        %8304 = vmatpush.bf16.msra.mxu0 %v4365
        %8305 = vmatpush.bf16.msra.mxu0 %v4357
        %8306 = vmatpush.bf16.msra.mxu0 %v4349
        %8307 = vmatpush.bf16.msra.mxu0 %v4341
        %8308 = vmatpush.bf16.msra.mxu0 %v4333
        %8309 = vmatmul.bf16.gmra.mxu0 %v1883
        %v8310 = vpop.f32.mrf.mxu0
        %v8311 = vadd.f32 %v8222, %v8310
        %v8312 = vpop.f32.mrf.mxu0
        %v8313 = vadd.f32 %v8224, %v8312
        %8314 = vmatmul.bf16.gmra.mxu0 %v1891
        %v8315 = vpop.f32.mrf.mxu0
        %v8316 = vadd.f32 %v8227, %v8315
        %v8317 = vpop.f32.mrf.mxu0
        %v8318 = vadd.f32 %v8229, %v8317
        %8319 = vmatmul.bf16.gmra.mxu0 %v1899
        %v8320 = vpop.f32.mrf.mxu0
        %v8321 = vadd.f32 %v8232, %v8320
        %v8322 = vpop.f32.mrf.mxu0
        %v8323 = vadd.f32 %v8234, %v8322
        %8324 = vmatmul.bf16.gmra.mxu0 %v1907
        %v8325 = vpop.f32.mrf.mxu0
        %v8326 = vadd.f32 %v8237, %v8325
        %v8327 = vpop.f32.mrf.mxu0
        %v8328 = vadd.f32 %v8239, %v8327
        %8329 = vmatmul.bf16.gmra.mxu0 %v1915
        %v8330 = vpop.f32.mrf.mxu0
        %v8331 = vadd.f32 %v8242, %v8330
        %v8332 = vpop.f32.mrf.mxu0
        %v8333 = vadd.f32 %v8244, %v8332
        %8334 = vmatmul.bf16.gmra.mxu0 %v1923
        %v8335 = vpop.f32.mrf.mxu0
        %v8336 = vadd.f32 %v8247, %v8335
        %v8337 = vpop.f32.mrf.mxu0
        %v8338 = vadd.f32 %v8249, %v8337
        %8339 = vmatmul.bf16.gmra.mxu0 %v1931
        %v8340 = vpop.f32.mrf.mxu0
        %v8341 = vadd.f32 %v8252, %v8340
        %v8342 = vpop.f32.mrf.mxu0
        %v8343 = vadd.f32 %v8254, %v8342
        %8344 = vmatmul.bf16.gmra.mxu0 %v1939
        %v8345 = vpop.f32.mrf.mxu0
        %v8346 = vadd.f32 %v8257, %v8345
        %v8347 = vpop.f32.mrf.mxu0
        %v8348 = vadd.f32 %v8259, %v8347
        %8349 = vmatmul.bf16.gmra.mxu0 %v1947
        %v8350 = vpop.f32.mrf.mxu0
        %v8351 = vadd.f32 %v8262, %v8350
        %v8352 = vpop.f32.mrf.mxu0
        %v8353 = vadd.f32 %v8264, %v8352
        %8354 = vmatmul.bf16.gmra.mxu0 %v1955
        %v8355 = vpop.f32.mrf.mxu0
        %v8356 = vadd.f32 %v8267, %v8355
        %v8357 = vpop.f32.mrf.mxu0
        %v8358 = vadd.f32 %v8269, %v8357
        %8359 = vmatmul.bf16.gmra.mxu0 %v1963
        %v8360 = vpop.f32.mrf.mxu0
        %v8361 = vadd.f32 %v8272, %v8360
        %v8362 = vpop.f32.mrf.mxu0
        %v8363 = vadd.f32 %v8274, %v8362
        %8364 = vmatmul.bf16.gmra.mxu0 %v1971
        %v8365 = vpop.f32.mrf.mxu0
        %v8366 = vadd.f32 %v8277, %v8365
        %v8367 = vpop.f32.mrf.mxu0
        %v8368 = vadd.f32 %v8279, %v8367
        %8369 = vmatmul.bf16.gmra.mxu0 %v1979
        %v8370 = vpop.f32.mrf.mxu0
        %v8371 = vadd.f32 %v8282, %v8370
        %v8372 = vpop.f32.mrf.mxu0
        %v8373 = vadd.f32 %v8284, %v8372
        %8374 = vmatmul.bf16.gmra.mxu0 %v1987
        %v8375 = vpop.f32.mrf.mxu0
        %v8376 = vadd.f32 %v8287, %v8375
        %v8377 = vpop.f32.mrf.mxu0
        %v8378 = vadd.f32 %v8289, %v8377
        %8379 = vmatmul.bf16.gmra.mxu0 %v1995
        %v8380 = vpop.f32.mrf.mxu0
        %v8381 = vadd.f32 %v8292, %v8380
        %v8382 = vpop.f32.mrf.mxu0
        %v8383 = vadd.f32 %v8294, %v8382
        %8384 = vmatmul.bf16.gmra.mxu0 %v2003
        %v8385 = vpop.f32.mrf.mxu0
        %v8386 = vadd.f32 %v8297, %v8385
        %v8387 = vpop.f32.mrf.mxu0
        %v8388 = vadd.f32 %v8299, %v8387
        %8389 = vdwg.mxu0
        %8390 = vmatpush.bf16.msra.mxu0 %v4453
        %8391 = vmatpush.bf16.msra.mxu0 %v4445
        %8392 = vmatpush.bf16.msra.mxu0 %v4437
        %8393 = vmatpush.bf16.msra.mxu0 %v4429
        %8394 = vmatpush.bf16.msra.mxu0 %v4421
        %8395 = vmatpush.bf16.msra.mxu0 %v4413
        %8396 = vmatpush.bf16.msra.mxu0 %v4405
        %8397 = vmatpush.bf16.msra.mxu0 %v4397
        %8398 = vmatmul.bf16.gmra.mxu0 %v1884
        %v8399 = vpop.f32.mrf.mxu0
        %v8400 = vadd.f32 %v8311, %v8399
        %v8401 = vpop.f32.mrf.mxu0
        %v8402 = vadd.f32 %v8313, %v8401
        %8403 = vmatmul.bf16.gmra.mxu0 %v1892
        %v8404 = vpop.f32.mrf.mxu0
        %v8405 = vadd.f32 %v8316, %v8404
        %v8406 = vpop.f32.mrf.mxu0
        %v8407 = vadd.f32 %v8318, %v8406
        %8408 = vmatmul.bf16.gmra.mxu0 %v1900
        %v8409 = vpop.f32.mrf.mxu0
        %v8410 = vadd.f32 %v8321, %v8409
        %v8411 = vpop.f32.mrf.mxu0
        %v8412 = vadd.f32 %v8323, %v8411
        %8413 = vmatmul.bf16.gmra.mxu0 %v1908
        %v8414 = vpop.f32.mrf.mxu0
        %v8415 = vadd.f32 %v8326, %v8414
        %v8416 = vpop.f32.mrf.mxu0
        %v8417 = vadd.f32 %v8328, %v8416
        %8418 = vmatmul.bf16.gmra.mxu0 %v1916
        %v8419 = vpop.f32.mrf.mxu0
        %v8420 = vadd.f32 %v8331, %v8419
        %v8421 = vpop.f32.mrf.mxu0
        %v8422 = vadd.f32 %v8333, %v8421
        %8423 = vmatmul.bf16.gmra.mxu0 %v1924
        %v8424 = vpop.f32.mrf.mxu0
        %v8425 = vadd.f32 %v8336, %v8424
        %v8426 = vpop.f32.mrf.mxu0
        %v8427 = vadd.f32 %v8338, %v8426
        %8428 = vmatmul.bf16.gmra.mxu0 %v1932
        %v8429 = vpop.f32.mrf.mxu0
        %v8430 = vadd.f32 %v8341, %v8429
        %v8431 = vpop.f32.mrf.mxu0
        %v8432 = vadd.f32 %v8343, %v8431
        %8433 = vmatmul.bf16.gmra.mxu0 %v1940
        %v8434 = vpop.f32.mrf.mxu0
        %v8435 = vadd.f32 %v8346, %v8434
        %v8436 = vpop.f32.mrf.mxu0
        %v8437 = vadd.f32 %v8348, %v8436
        %8438 = vmatmul.bf16.gmra.mxu0 %v1948
        %v8439 = vpop.f32.mrf.mxu0
        %v8440 = vadd.f32 %v8351, %v8439
        %v8441 = vpop.f32.mrf.mxu0
        %v8442 = vadd.f32 %v8353, %v8441
        %8443 = vmatmul.bf16.gmra.mxu0 %v1956
        %v8444 = vpop.f32.mrf.mxu0
        %v8445 = vadd.f32 %v8356, %v8444
        %v8446 = vpop.f32.mrf.mxu0
        %v8447 = vadd.f32 %v8358, %v8446
        %8448 = vmatmul.bf16.gmra.mxu0 %v1964
        %v8449 = vpop.f32.mrf.mxu0
        %v8450 = vadd.f32 %v8361, %v8449
        %v8451 = vpop.f32.mrf.mxu0
        %v8452 = vadd.f32 %v8363, %v8451
        %8453 = vmatmul.bf16.gmra.mxu0 %v1972
        %v8454 = vpop.f32.mrf.mxu0
        %v8455 = vadd.f32 %v8366, %v8454
        %v8456 = vpop.f32.mrf.mxu0
        %v8457 = vadd.f32 %v8368, %v8456
        %8458 = vmatmul.bf16.gmra.mxu0 %v1980
        %v8459 = vpop.f32.mrf.mxu0
        %v8460 = vadd.f32 %v8371, %v8459
        %v8461 = vpop.f32.mrf.mxu0
        %v8462 = vadd.f32 %v8373, %v8461
        %8463 = vmatmul.bf16.gmra.mxu0 %v1988
        %v8464 = vpop.f32.mrf.mxu0
        %v8465 = vadd.f32 %v8376, %v8464
        %v8466 = vpop.f32.mrf.mxu0
        %v8467 = vadd.f32 %v8378, %v8466
        %8468 = vmatmul.bf16.gmra.mxu0 %v1996
        %v8469 = vpop.f32.mrf.mxu0
        %v8470 = vadd.f32 %v8381, %v8469
        %v8471 = vpop.f32.mrf.mxu0
        %v8472 = vadd.f32 %v8383, %v8471
        %8473 = vmatmul.bf16.gmra.mxu0 %v2004
        %v8474 = vpop.f32.mrf.mxu0
        %v8475 = vadd.f32 %v8386, %v8474
        %v8476 = vpop.f32.mrf.mxu0
        %v8477 = vadd.f32 %v8388, %v8476
        %8478 = vdwg.mxu0
        %8479 = vmatpush.bf16.msra.mxu0 %v4517
        %8480 = vmatpush.bf16.msra.mxu0 %v4509
        %8481 = vmatpush.bf16.msra.mxu0 %v4501
        %8482 = vmatpush.bf16.msra.mxu0 %v4493
        %8483 = vmatpush.bf16.msra.mxu0 %v4485
        %8484 = vmatpush.bf16.msra.mxu0 %v4477
        %8485 = vmatpush.bf16.msra.mxu0 %v4469
        %8486 = vmatpush.bf16.msra.mxu0 %v4461
        %8487 = vmatmul.bf16.gmra.mxu0 %v1885
        %v8488 = vpop.f32.mrf.mxu0
        %v8489 = vadd.f32 %v8400, %v8488
        %v8490 = vpop.f32.mrf.mxu0
        %v8491 = vadd.f32 %v8402, %v8490
        %8492 = vmatmul.bf16.gmra.mxu0 %v1893
        %v8493 = vpop.f32.mrf.mxu0
        %v8494 = vadd.f32 %v8405, %v8493
        %v8495 = vpop.f32.mrf.mxu0
        %v8496 = vadd.f32 %v8407, %v8495
        %8497 = vmatmul.bf16.gmra.mxu0 %v1901
        %v8498 = vpop.f32.mrf.mxu0
        %v8499 = vadd.f32 %v8410, %v8498
        %v8500 = vpop.f32.mrf.mxu0
        %v8501 = vadd.f32 %v8412, %v8500
        %8502 = vmatmul.bf16.gmra.mxu0 %v1909
        %v8503 = vpop.f32.mrf.mxu0
        %v8504 = vadd.f32 %v8415, %v8503
        %v8505 = vpop.f32.mrf.mxu0
        %v8506 = vadd.f32 %v8417, %v8505
        %8507 = vmatmul.bf16.gmra.mxu0 %v1917
        %v8508 = vpop.f32.mrf.mxu0
        %v8509 = vadd.f32 %v8420, %v8508
        %v8510 = vpop.f32.mrf.mxu0
        %v8511 = vadd.f32 %v8422, %v8510
        %8512 = vmatmul.bf16.gmra.mxu0 %v1925
        %v8513 = vpop.f32.mrf.mxu0
        %v8514 = vadd.f32 %v8425, %v8513
        %v8515 = vpop.f32.mrf.mxu0
        %v8516 = vadd.f32 %v8427, %v8515
        %8517 = vmatmul.bf16.gmra.mxu0 %v1933
        %v8518 = vpop.f32.mrf.mxu0
        %v8519 = vadd.f32 %v8430, %v8518
        %v8520 = vpop.f32.mrf.mxu0
        %v8521 = vadd.f32 %v8432, %v8520
        %8522 = vmatmul.bf16.gmra.mxu0 %v1941
        %v8523 = vpop.f32.mrf.mxu0
        %v8524 = vadd.f32 %v8435, %v8523
        %v8525 = vpop.f32.mrf.mxu0
        %v8526 = vadd.f32 %v8437, %v8525
        %8527 = vmatmul.bf16.gmra.mxu0 %v1949
        %v8528 = vpop.f32.mrf.mxu0
        %v8529 = vadd.f32 %v8440, %v8528
        %v8530 = vpop.f32.mrf.mxu0
        %v8531 = vadd.f32 %v8442, %v8530
        %8532 = vmatmul.bf16.gmra.mxu0 %v1957
        %v8533 = vpop.f32.mrf.mxu0
        %v8534 = vadd.f32 %v8445, %v8533
        %v8535 = vpop.f32.mrf.mxu0
        %v8536 = vadd.f32 %v8447, %v8535
        %8537 = vmatmul.bf16.gmra.mxu0 %v1965
        %v8538 = vpop.f32.mrf.mxu0
        %v8539 = vadd.f32 %v8450, %v8538
        %v8540 = vpop.f32.mrf.mxu0
        %v8541 = vadd.f32 %v8452, %v8540
        %8542 = vmatmul.bf16.gmra.mxu0 %v1973
        %v8543 = vpop.f32.mrf.mxu0
        %v8544 = vadd.f32 %v8455, %v8543
        %v8545 = vpop.f32.mrf.mxu0
        %v8546 = vadd.f32 %v8457, %v8545
        %8547 = vmatmul.bf16.gmra.mxu0 %v1981
        %v8548 = vpop.f32.mrf.mxu0
        %v8549 = vadd.f32 %v8460, %v8548
        %v8550 = vpop.f32.mrf.mxu0
        %v8551 = vadd.f32 %v8462, %v8550
        %8552 = vmatmul.bf16.gmra.mxu0 %v1989
        %v8553 = vpop.f32.mrf.mxu0
        %v8554 = vadd.f32 %v8465, %v8553
        %v8555 = vpop.f32.mrf.mxu0
        %v8556 = vadd.f32 %v8467, %v8555
        %8557 = vmatmul.bf16.gmra.mxu0 %v1997
        %v8558 = vpop.f32.mrf.mxu0
        %v8559 = vadd.f32 %v8470, %v8558
        %v8560 = vpop.f32.mrf.mxu0
        %v8561 = vadd.f32 %v8472, %v8560
        %8562 = vmatmul.bf16.gmra.mxu0 %v2005
        %v8563 = vpop.f32.mrf.mxu0
        %v8564 = vadd.f32 %v8475, %v8563
        %v8565 = vpop.f32.mrf.mxu0
        %v8566 = vadd.f32 %v8477, %v8565
        %8567 = vdwg.mxu0
        %8568 = vmatpush.bf16.msra.mxu0 %v4581
        %8569 = vmatpush.bf16.msra.mxu0 %v4573
        %8570 = vmatpush.bf16.msra.mxu0 %v4565
        %8571 = vmatpush.bf16.msra.mxu0 %v4557
        %8572 = vmatpush.bf16.msra.mxu0 %v4549
        %8573 = vmatpush.bf16.msra.mxu0 %v4541
        %8574 = vmatpush.bf16.msra.mxu0 %v4533
        %8575 = vmatpush.bf16.msra.mxu0 %v4525
        %8576 = vmatmul.bf16.gmra.mxu0 %v1886
        %v8577 = vpop.f32.mrf.mxu0
        %v8578 = vadd.f32 %v8489, %v8577
        %v8579 = vpop.f32.mrf.mxu0
        %v8580 = vadd.f32 %v8491, %v8579
        %8581 = vmatmul.bf16.gmra.mxu0 %v1894
        %v8582 = vpop.f32.mrf.mxu0
        %v8583 = vadd.f32 %v8494, %v8582
        %v8584 = vpop.f32.mrf.mxu0
        %v8585 = vadd.f32 %v8496, %v8584
        %8586 = vmatmul.bf16.gmra.mxu0 %v1902
        %v8587 = vpop.f32.mrf.mxu0
        %v8588 = vadd.f32 %v8499, %v8587
        %v8589 = vpop.f32.mrf.mxu0
        %v8590 = vadd.f32 %v8501, %v8589
        %8591 = vmatmul.bf16.gmra.mxu0 %v1910
        %v8592 = vpop.f32.mrf.mxu0
        %v8593 = vadd.f32 %v8504, %v8592
        %v8594 = vpop.f32.mrf.mxu0
        %v8595 = vadd.f32 %v8506, %v8594
        %8596 = vmatmul.bf16.gmra.mxu0 %v1918
        %v8597 = vpop.f32.mrf.mxu0
        %v8598 = vadd.f32 %v8509, %v8597
        %v8599 = vpop.f32.mrf.mxu0
        %v8600 = vadd.f32 %v8511, %v8599
        %8601 = vmatmul.bf16.gmra.mxu0 %v1926
        %v8602 = vpop.f32.mrf.mxu0
        %v8603 = vadd.f32 %v8514, %v8602
        %v8604 = vpop.f32.mrf.mxu0
        %v8605 = vadd.f32 %v8516, %v8604
        %8606 = vmatmul.bf16.gmra.mxu0 %v1934
        %v8607 = vpop.f32.mrf.mxu0
        %v8608 = vadd.f32 %v8519, %v8607
        %v8609 = vpop.f32.mrf.mxu0
        %v8610 = vadd.f32 %v8521, %v8609
        %8611 = vmatmul.bf16.gmra.mxu0 %v1942
        %v8612 = vpop.f32.mrf.mxu0
        %v8613 = vadd.f32 %v8524, %v8612
        %v8614 = vpop.f32.mrf.mxu0
        %v8615 = vadd.f32 %v8526, %v8614
        %8616 = vmatmul.bf16.gmra.mxu0 %v1950
        %v8617 = vpop.f32.mrf.mxu0
        %v8618 = vadd.f32 %v8529, %v8617
        %v8619 = vpop.f32.mrf.mxu0
        %v8620 = vadd.f32 %v8531, %v8619
        %8621 = vmatmul.bf16.gmra.mxu0 %v1958
        %v8622 = vpop.f32.mrf.mxu0
        %v8623 = vadd.f32 %v8534, %v8622
        %v8624 = vpop.f32.mrf.mxu0
        %v8625 = vadd.f32 %v8536, %v8624
        %8626 = vmatmul.bf16.gmra.mxu0 %v1966
        %v8627 = vpop.f32.mrf.mxu0
        %v8628 = vadd.f32 %v8539, %v8627
        %v8629 = vpop.f32.mrf.mxu0
        %v8630 = vadd.f32 %v8541, %v8629
        %8631 = vmatmul.bf16.gmra.mxu0 %v1974
        %v8632 = vpop.f32.mrf.mxu0
        %v8633 = vadd.f32 %v8544, %v8632
        %v8634 = vpop.f32.mrf.mxu0
        %v8635 = vadd.f32 %v8546, %v8634
        %8636 = vmatmul.bf16.gmra.mxu0 %v1982
        %v8637 = vpop.f32.mrf.mxu0
        %v8638 = vadd.f32 %v8549, %v8637
        %v8639 = vpop.f32.mrf.mxu0
        %v8640 = vadd.f32 %v8551, %v8639
        %8641 = vmatmul.bf16.gmra.mxu0 %v1990
        %v8642 = vpop.f32.mrf.mxu0
        %v8643 = vadd.f32 %v8554, %v8642
        %v8644 = vpop.f32.mrf.mxu0
        %v8645 = vadd.f32 %v8556, %v8644
        %8646 = vmatmul.bf16.gmra.mxu0 %v1998
        %v8647 = vpop.f32.mrf.mxu0
        %v8648 = vadd.f32 %v8559, %v8647
        %v8649 = vpop.f32.mrf.mxu0
        %v8650 = vadd.f32 %v8561, %v8649
        %8651 = vmatmul.bf16.gmra.mxu0 %v2006
        %v8652 = vpop.f32.mrf.mxu0
        %v8653 = vadd.f32 %v8564, %v8652
        %v8654 = vpop.f32.mrf.mxu0
        %v8655 = vadd.f32 %v8566, %v8654
        %8656 = vdwg.mxu0
        %8657 = vmatpush.bf16.msra.mxu0 %v4134
        %8658 = vmatpush.bf16.msra.mxu0 %v4126
        %8659 = vmatpush.bf16.msra.mxu0 %v4118
        %8660 = vmatpush.bf16.msra.mxu0 %v4110
        %8661 = vmatpush.bf16.msra.mxu0 %v4102
        %8662 = vmatpush.bf16.msra.mxu0 %v4094
        %8663 = vmatpush.bf16.msra.mxu0 %v4086
        %8664 = vmatpush.bf16.msra.mxu0 %v4078
        %8665 = vmatmul.bf16.gmra.mxu0 %v1879
        %v8666 = vpop.f32.mrf.mxu0
        %v8667 = vadd.f32 %v2526, %v8666
        %v8668 = vpop.f32.mrf.mxu0
        %v8669 = vadd.f32 %v2526, %v8668
        %8670 = vmatmul.bf16.gmra.mxu0 %v1887
        %v8671 = vpop.f32.mrf.mxu0
        %v8672 = vadd.f32 %v2526, %v8671
        %v8673 = vpop.f32.mrf.mxu0
        %v8674 = vadd.f32 %v2526, %v8673
        %8675 = vmatmul.bf16.gmra.mxu0 %v1895
        %v8676 = vpop.f32.mrf.mxu0
        %v8677 = vadd.f32 %v2526, %v8676
        %v8678 = vpop.f32.mrf.mxu0
        %v8679 = vadd.f32 %v2526, %v8678
        %8680 = vmatmul.bf16.gmra.mxu0 %v1903
        %v8681 = vpop.f32.mrf.mxu0
        %v8682 = vadd.f32 %v2526, %v8681
        %v8683 = vpop.f32.mrf.mxu0
        %v8684 = vadd.f32 %v2526, %v8683
        %8685 = vmatmul.bf16.gmra.mxu0 %v1911
        %v8686 = vpop.f32.mrf.mxu0
        %v8687 = vadd.f32 %v2526, %v8686
        %v8688 = vpop.f32.mrf.mxu0
        %v8689 = vadd.f32 %v2526, %v8688
        %8690 = vmatmul.bf16.gmra.mxu0 %v1919
        %v8691 = vpop.f32.mrf.mxu0
        %v8692 = vadd.f32 %v2526, %v8691
        %v8693 = vpop.f32.mrf.mxu0
        %v8694 = vadd.f32 %v2526, %v8693
        %8695 = vmatmul.bf16.gmra.mxu0 %v1927
        %v8696 = vpop.f32.mrf.mxu0
        %v8697 = vadd.f32 %v2526, %v8696
        %v8698 = vpop.f32.mrf.mxu0
        %v8699 = vadd.f32 %v2526, %v8698
        %8700 = vmatmul.bf16.gmra.mxu0 %v1935
        %v8701 = vpop.f32.mrf.mxu0
        %v8702 = vadd.f32 %v2526, %v8701
        %v8703 = vpop.f32.mrf.mxu0
        %v8704 = vadd.f32 %v2526, %v8703
        %8705 = vmatmul.bf16.gmra.mxu0 %v1943
        %v8706 = vpop.f32.mrf.mxu0
        %v8707 = vadd.f32 %v2526, %v8706
        %v8708 = vpop.f32.mrf.mxu0
        %v8709 = vadd.f32 %v2526, %v8708
        %8710 = vmatmul.bf16.gmra.mxu0 %v1951
        %v8711 = vpop.f32.mrf.mxu0
        %v8712 = vadd.f32 %v2526, %v8711
        %v8713 = vpop.f32.mrf.mxu0
        %v8714 = vadd.f32 %v2526, %v8713
        %8715 = vmatmul.bf16.gmra.mxu0 %v1959
        %v8716 = vpop.f32.mrf.mxu0
        %v8717 = vadd.f32 %v2526, %v8716
        %v8718 = vpop.f32.mrf.mxu0
        %v8719 = vadd.f32 %v2526, %v8718
        %8720 = vmatmul.bf16.gmra.mxu0 %v1967
        %v8721 = vpop.f32.mrf.mxu0
        %v8722 = vadd.f32 %v2526, %v8721
        %v8723 = vpop.f32.mrf.mxu0
        %v8724 = vadd.f32 %v2526, %v8723
        %8725 = vmatmul.bf16.gmra.mxu0 %v1975
        %v8726 = vpop.f32.mrf.mxu0
        %v8727 = vadd.f32 %v2526, %v8726
        %v8728 = vpop.f32.mrf.mxu0
        %v8729 = vadd.f32 %v2526, %v8728
        %8730 = vmatmul.bf16.gmra.mxu0 %v1983
        %v8731 = vpop.f32.mrf.mxu0
        %v8732 = vadd.f32 %v2526, %v8731
        %v8733 = vpop.f32.mrf.mxu0
        %v8734 = vadd.f32 %v2526, %v8733
        %8735 = vmatmul.bf16.gmra.mxu0 %v1991
        %v8736 = vpop.f32.mrf.mxu0
        %v8737 = vadd.f32 %v2526, %v8736
        %v8738 = vpop.f32.mrf.mxu0
        %v8739 = vadd.f32 %v2526, %v8738
        %8740 = vmatmul.bf16.gmra.mxu0 %v1999
        %v8741 = vpop.f32.mrf.mxu0
        %v8742 = vadd.f32 %v2526, %v8741
        %v8743 = vpop.f32.mrf.mxu0
        %v8744 = vadd.f32 %v2526, %v8743
        %8745 = vdwg.mxu0
        %8746 = vmatpush.bf16.msra.mxu0 %v4198
        %8747 = vmatpush.bf16.msra.mxu0 %v4190
        %8748 = vmatpush.bf16.msra.mxu0 %v4182
        %8749 = vmatpush.bf16.msra.mxu0 %v4174
        %8750 = vmatpush.bf16.msra.mxu0 %v4166
        %8751 = vmatpush.bf16.msra.mxu0 %v4158
        %8752 = vmatpush.bf16.msra.mxu0 %v4150
        %8753 = vmatpush.bf16.msra.mxu0 %v4142
        %8754 = vmatmul.bf16.gmra.mxu0 %v1880
        %v8755 = vpop.f32.mrf.mxu0
        %v8756 = vadd.f32 %v8667, %v8755
        %v8757 = vpop.f32.mrf.mxu0
        %v8758 = vadd.f32 %v8669, %v8757
        %8759 = vmatmul.bf16.gmra.mxu0 %v1888
        %v8760 = vpop.f32.mrf.mxu0
        %v8761 = vadd.f32 %v8672, %v8760
        %v8762 = vpop.f32.mrf.mxu0
        %v8763 = vadd.f32 %v8674, %v8762
        %8764 = vmatmul.bf16.gmra.mxu0 %v1896
        %v8765 = vpop.f32.mrf.mxu0
        %v8766 = vadd.f32 %v8677, %v8765
        %v8767 = vpop.f32.mrf.mxu0
        %v8768 = vadd.f32 %v8679, %v8767
        %8769 = vmatmul.bf16.gmra.mxu0 %v1904
        %v8770 = vpop.f32.mrf.mxu0
        %v8771 = vadd.f32 %v8682, %v8770
        %v8772 = vpop.f32.mrf.mxu0
        %v8773 = vadd.f32 %v8684, %v8772
        %8774 = vmatmul.bf16.gmra.mxu0 %v1912
        %v8775 = vpop.f32.mrf.mxu0
        %v8776 = vadd.f32 %v8687, %v8775
        %v8777 = vpop.f32.mrf.mxu0
        %v8778 = vadd.f32 %v8689, %v8777
        %8779 = vmatmul.bf16.gmra.mxu0 %v1920
        %v8780 = vpop.f32.mrf.mxu0
        %v8781 = vadd.f32 %v8692, %v8780
        %v8782 = vpop.f32.mrf.mxu0
        %v8783 = vadd.f32 %v8694, %v8782
        %8784 = vmatmul.bf16.gmra.mxu0 %v1928
        %v8785 = vpop.f32.mrf.mxu0
        %v8786 = vadd.f32 %v8697, %v8785
        %v8787 = vpop.f32.mrf.mxu0
        %v8788 = vadd.f32 %v8699, %v8787
        %8789 = vmatmul.bf16.gmra.mxu0 %v1936
        %v8790 = vpop.f32.mrf.mxu0
        %v8791 = vadd.f32 %v8702, %v8790
        %v8792 = vpop.f32.mrf.mxu0
        %v8793 = vadd.f32 %v8704, %v8792
        %8794 = vmatmul.bf16.gmra.mxu0 %v1944
        %v8795 = vpop.f32.mrf.mxu0
        %v8796 = vadd.f32 %v8707, %v8795
        %v8797 = vpop.f32.mrf.mxu0
        %v8798 = vadd.f32 %v8709, %v8797
        %8799 = vmatmul.bf16.gmra.mxu0 %v1952
        %v8800 = vpop.f32.mrf.mxu0
        %v8801 = vadd.f32 %v8712, %v8800
        %v8802 = vpop.f32.mrf.mxu0
        %v8803 = vadd.f32 %v8714, %v8802
        %8804 = vmatmul.bf16.gmra.mxu0 %v1960
        %v8805 = vpop.f32.mrf.mxu0
        %v8806 = vadd.f32 %v8717, %v8805
        %v8807 = vpop.f32.mrf.mxu0
        %v8808 = vadd.f32 %v8719, %v8807
        %8809 = vmatmul.bf16.gmra.mxu0 %v1968
        %v8810 = vpop.f32.mrf.mxu0
        %v8811 = vadd.f32 %v8722, %v8810
        %v8812 = vpop.f32.mrf.mxu0
        %v8813 = vadd.f32 %v8724, %v8812
        %8814 = vmatmul.bf16.gmra.mxu0 %v1976
        %v8815 = vpop.f32.mrf.mxu0
        %v8816 = vadd.f32 %v8727, %v8815
        %v8817 = vpop.f32.mrf.mxu0
        %v8818 = vadd.f32 %v8729, %v8817
        %8819 = vmatmul.bf16.gmra.mxu0 %v1984
        %v8820 = vpop.f32.mrf.mxu0
        %v8821 = vadd.f32 %v8732, %v8820
        %v8822 = vpop.f32.mrf.mxu0
        %v8823 = vadd.f32 %v8734, %v8822
        %8824 = vmatmul.bf16.gmra.mxu0 %v1992
        %v8825 = vpop.f32.mrf.mxu0
        %v8826 = vadd.f32 %v8737, %v8825
        %v8827 = vpop.f32.mrf.mxu0
        %v8828 = vadd.f32 %v8739, %v8827
        %8829 = vmatmul.bf16.gmra.mxu0 %v2000
        %v8830 = vpop.f32.mrf.mxu0
        %v8831 = vadd.f32 %v8742, %v8830
        %v8832 = vpop.f32.mrf.mxu0
        %v8833 = vadd.f32 %v8744, %v8832
        %8834 = vdwg.mxu0
        %8835 = vmatpush.bf16.msra.mxu0 %v4262
        %8836 = vmatpush.bf16.msra.mxu0 %v4254
        %8837 = vmatpush.bf16.msra.mxu0 %v4246
        %8838 = vmatpush.bf16.msra.mxu0 %v4238
        %8839 = vmatpush.bf16.msra.mxu0 %v4230
        %8840 = vmatpush.bf16.msra.mxu0 %v4222
        %8841 = vmatpush.bf16.msra.mxu0 %v4214
        %8842 = vmatpush.bf16.msra.mxu0 %v4206
        %8843 = vmatmul.bf16.gmra.mxu0 %v1881
        %v8844 = vpop.f32.mrf.mxu0
        %v8845 = vadd.f32 %v8756, %v8844
        %v8846 = vpop.f32.mrf.mxu0
        %v8847 = vadd.f32 %v8758, %v8846
        %8848 = vmatmul.bf16.gmra.mxu0 %v1889
        %v8849 = vpop.f32.mrf.mxu0
        %v8850 = vadd.f32 %v8761, %v8849
        %v8851 = vpop.f32.mrf.mxu0
        %v8852 = vadd.f32 %v8763, %v8851
        %8853 = vmatmul.bf16.gmra.mxu0 %v1897
        %v8854 = vpop.f32.mrf.mxu0
        %v8855 = vadd.f32 %v8766, %v8854
        %v8856 = vpop.f32.mrf.mxu0
        %v8857 = vadd.f32 %v8768, %v8856
        %8858 = vmatmul.bf16.gmra.mxu0 %v1905
        %v8859 = vpop.f32.mrf.mxu0
        %v8860 = vadd.f32 %v8771, %v8859
        %v8861 = vpop.f32.mrf.mxu0
        %v8862 = vadd.f32 %v8773, %v8861
        %8863 = vmatmul.bf16.gmra.mxu0 %v1913
        %v8864 = vpop.f32.mrf.mxu0
        %v8865 = vadd.f32 %v8776, %v8864
        %v8866 = vpop.f32.mrf.mxu0
        %v8867 = vadd.f32 %v8778, %v8866
        %8868 = vmatmul.bf16.gmra.mxu0 %v1921
        %v8869 = vpop.f32.mrf.mxu0
        %v8870 = vadd.f32 %v8781, %v8869
        %v8871 = vpop.f32.mrf.mxu0
        %v8872 = vadd.f32 %v8783, %v8871
        %8873 = vmatmul.bf16.gmra.mxu0 %v1929
        %v8874 = vpop.f32.mrf.mxu0
        %v8875 = vadd.f32 %v8786, %v8874
        %v8876 = vpop.f32.mrf.mxu0
        %v8877 = vadd.f32 %v8788, %v8876
        %8878 = vmatmul.bf16.gmra.mxu0 %v1937
        %v8879 = vpop.f32.mrf.mxu0
        %v8880 = vadd.f32 %v8791, %v8879
        %v8881 = vpop.f32.mrf.mxu0
        %v8882 = vadd.f32 %v8793, %v8881
        %8883 = vmatmul.bf16.gmra.mxu0 %v1945
        %v8884 = vpop.f32.mrf.mxu0
        %v8885 = vadd.f32 %v8796, %v8884
        %v8886 = vpop.f32.mrf.mxu0
        %v8887 = vadd.f32 %v8798, %v8886
        %8888 = vmatmul.bf16.gmra.mxu0 %v1953
        %v8889 = vpop.f32.mrf.mxu0
        %v8890 = vadd.f32 %v8801, %v8889
        %v8891 = vpop.f32.mrf.mxu0
        %v8892 = vadd.f32 %v8803, %v8891
        %8893 = vmatmul.bf16.gmra.mxu0 %v1961
        %v8894 = vpop.f32.mrf.mxu0
        %v8895 = vadd.f32 %v8806, %v8894
        %v8896 = vpop.f32.mrf.mxu0
        %v8897 = vadd.f32 %v8808, %v8896
        %8898 = vmatmul.bf16.gmra.mxu0 %v1969
        %v8899 = vpop.f32.mrf.mxu0
        %v8900 = vadd.f32 %v8811, %v8899
        %v8901 = vpop.f32.mrf.mxu0
        %v8902 = vadd.f32 %v8813, %v8901
        %8903 = vmatmul.bf16.gmra.mxu0 %v1977
        %v8904 = vpop.f32.mrf.mxu0
        %v8905 = vadd.f32 %v8816, %v8904
        %v8906 = vpop.f32.mrf.mxu0
        %v8907 = vadd.f32 %v8818, %v8906
        %8908 = vmatmul.bf16.gmra.mxu0 %v1985
        %v8909 = vpop.f32.mrf.mxu0
        %v8910 = vadd.f32 %v8821, %v8909
        %v8911 = vpop.f32.mrf.mxu0
        %v8912 = vadd.f32 %v8823, %v8911
        %8913 = vmatmul.bf16.gmra.mxu0 %v1993
        %v8914 = vpop.f32.mrf.mxu0
        %v8915 = vadd.f32 %v8826, %v8914
        %v8916 = vpop.f32.mrf.mxu0
        %v8917 = vadd.f32 %v8828, %v8916
        %8918 = vmatmul.bf16.gmra.mxu0 %v2001
        %v8919 = vpop.f32.mrf.mxu0
        %v8920 = vadd.f32 %v8831, %v8919
        %v8921 = vpop.f32.mrf.mxu0
        %v8922 = vadd.f32 %v8833, %v8921
        %8923 = vdwg.mxu0
        %8924 = vmatpush.bf16.msra.mxu0 %v4326
        %8925 = vmatpush.bf16.msra.mxu0 %v4318
        %8926 = vmatpush.bf16.msra.mxu0 %v4310
        %8927 = vmatpush.bf16.msra.mxu0 %v4302
        %8928 = vmatpush.bf16.msra.mxu0 %v4294
        %8929 = vmatpush.bf16.msra.mxu0 %v4286
        %8930 = vmatpush.bf16.msra.mxu0 %v4278
        %8931 = vmatpush.bf16.msra.mxu0 %v4270
        %8932 = vmatmul.bf16.gmra.mxu0 %v1882
        %v8933 = vpop.f32.mrf.mxu0
        %v8934 = vadd.f32 %v8845, %v8933
        %v8935 = vpop.f32.mrf.mxu0
        %v8936 = vadd.f32 %v8847, %v8935
        %8937 = vmatmul.bf16.gmra.mxu0 %v1890
        %v8938 = vpop.f32.mrf.mxu0
        %v8939 = vadd.f32 %v8850, %v8938
        %v8940 = vpop.f32.mrf.mxu0
        %v8941 = vadd.f32 %v8852, %v8940
        %8942 = vmatmul.bf16.gmra.mxu0 %v1898
        %v8943 = vpop.f32.mrf.mxu0
        %v8944 = vadd.f32 %v8855, %v8943
        %v8945 = vpop.f32.mrf.mxu0
        %v8946 = vadd.f32 %v8857, %v8945
        %8947 = vmatmul.bf16.gmra.mxu0 %v1906
        %v8948 = vpop.f32.mrf.mxu0
        %v8949 = vadd.f32 %v8860, %v8948
        %v8950 = vpop.f32.mrf.mxu0
        %v8951 = vadd.f32 %v8862, %v8950
        %8952 = vmatmul.bf16.gmra.mxu0 %v1914
        %v8953 = vpop.f32.mrf.mxu0
        %v8954 = vadd.f32 %v8865, %v8953
        %v8955 = vpop.f32.mrf.mxu0
        %v8956 = vadd.f32 %v8867, %v8955
        %8957 = vmatmul.bf16.gmra.mxu0 %v1922
        %v8958 = vpop.f32.mrf.mxu0
        %v8959 = vadd.f32 %v8870, %v8958
        %v8960 = vpop.f32.mrf.mxu0
        %v8961 = vadd.f32 %v8872, %v8960
        %8962 = vmatmul.bf16.gmra.mxu0 %v1930
        %v8963 = vpop.f32.mrf.mxu0
        %v8964 = vadd.f32 %v8875, %v8963
        %v8965 = vpop.f32.mrf.mxu0
        %v8966 = vadd.f32 %v8877, %v8965
        %8967 = vmatmul.bf16.gmra.mxu0 %v1938
        %v8968 = vpop.f32.mrf.mxu0
        %v8969 = vadd.f32 %v8880, %v8968
        %v8970 = vpop.f32.mrf.mxu0
        %v8971 = vadd.f32 %v8882, %v8970
        %8972 = vmatmul.bf16.gmra.mxu0 %v1946
        %v8973 = vpop.f32.mrf.mxu0
        %v8974 = vadd.f32 %v8885, %v8973
        %v8975 = vpop.f32.mrf.mxu0
        %v8976 = vadd.f32 %v8887, %v8975
        %8977 = vmatmul.bf16.gmra.mxu0 %v1954
        %v8978 = vpop.f32.mrf.mxu0
        %v8979 = vadd.f32 %v8890, %v8978
        %v8980 = vpop.f32.mrf.mxu0
        %v8981 = vadd.f32 %v8892, %v8980
        %8982 = vmatmul.bf16.gmra.mxu0 %v1962
        %v8983 = vpop.f32.mrf.mxu0
        %v8984 = vadd.f32 %v8895, %v8983
        %v8985 = vpop.f32.mrf.mxu0
        %v8986 = vadd.f32 %v8897, %v8985
        %8987 = vmatmul.bf16.gmra.mxu0 %v1970
        %v8988 = vpop.f32.mrf.mxu0
        %v8989 = vadd.f32 %v8900, %v8988
        %v8990 = vpop.f32.mrf.mxu0
        %v8991 = vadd.f32 %v8902, %v8990
        %8992 = vmatmul.bf16.gmra.mxu0 %v1978
        %v8993 = vpop.f32.mrf.mxu0
        %v8994 = vadd.f32 %v8905, %v8993
        %v8995 = vpop.f32.mrf.mxu0
        %v8996 = vadd.f32 %v8907, %v8995
        %8997 = vmatmul.bf16.gmra.mxu0 %v1986
        %v8998 = vpop.f32.mrf.mxu0
        %v8999 = vadd.f32 %v8910, %v8998
        %v9000 = vpop.f32.mrf.mxu0
        %v9001 = vadd.f32 %v8912, %v9000
        %9002 = vmatmul.bf16.gmra.mxu0 %v1994
        %v9003 = vpop.f32.mrf.mxu0
        %v9004 = vadd.f32 %v8915, %v9003
        %v9005 = vpop.f32.mrf.mxu0
        %v9006 = vadd.f32 %v8917, %v9005
        %9007 = vmatmul.bf16.gmra.mxu0 %v2002
        %v9008 = vpop.f32.mrf.mxu0
        %v9009 = vadd.f32 %v8920, %v9008
        %v9010 = vpop.f32.mrf.mxu0
        %v9011 = vadd.f32 %v8922, %v9010
        %9012 = vdwg.mxu0
        %9013 = vmatpush.bf16.msra.mxu0 %v4390
        %9014 = vmatpush.bf16.msra.mxu0 %v4382
        %9015 = vmatpush.bf16.msra.mxu0 %v4374
        %9016 = vmatpush.bf16.msra.mxu0 %v4366
        %9017 = vmatpush.bf16.msra.mxu0 %v4358
        %9018 = vmatpush.bf16.msra.mxu0 %v4350
        %9019 = vmatpush.bf16.msra.mxu0 %v4342
        %9020 = vmatpush.bf16.msra.mxu0 %v4334
        %9021 = vmatmul.bf16.gmra.mxu0 %v1883
        %v9022 = vpop.f32.mrf.mxu0
        %v9023 = vadd.f32 %v8934, %v9022
        %v9024 = vpop.f32.mrf.mxu0
        %v9025 = vadd.f32 %v8936, %v9024
        %9026 = vmatmul.bf16.gmra.mxu0 %v1891
        %v9027 = vpop.f32.mrf.mxu0
        %v9028 = vadd.f32 %v8939, %v9027
        %v9029 = vpop.f32.mrf.mxu0
        %v9030 = vadd.f32 %v8941, %v9029
        %9031 = vmatmul.bf16.gmra.mxu0 %v1899
        %v9032 = vpop.f32.mrf.mxu0
        %v9033 = vadd.f32 %v8944, %v9032
        %v9034 = vpop.f32.mrf.mxu0
        %v9035 = vadd.f32 %v8946, %v9034
        %9036 = vmatmul.bf16.gmra.mxu0 %v1907
        %v9037 = vpop.f32.mrf.mxu0
        %v9038 = vadd.f32 %v8949, %v9037
        %v9039 = vpop.f32.mrf.mxu0
        %v9040 = vadd.f32 %v8951, %v9039
        %9041 = vmatmul.bf16.gmra.mxu0 %v1915
        %v9042 = vpop.f32.mrf.mxu0
        %v9043 = vadd.f32 %v8954, %v9042
        %v9044 = vpop.f32.mrf.mxu0
        %v9045 = vadd.f32 %v8956, %v9044
        %9046 = vmatmul.bf16.gmra.mxu0 %v1923
        %v9047 = vpop.f32.mrf.mxu0
        %v9048 = vadd.f32 %v8959, %v9047
        %v9049 = vpop.f32.mrf.mxu0
        %v9050 = vadd.f32 %v8961, %v9049
        %9051 = vmatmul.bf16.gmra.mxu0 %v1931
        %v9052 = vpop.f32.mrf.mxu0
        %v9053 = vadd.f32 %v8964, %v9052
        %v9054 = vpop.f32.mrf.mxu0
        %v9055 = vadd.f32 %v8966, %v9054
        %9056 = vmatmul.bf16.gmra.mxu0 %v1939
        %v9057 = vpop.f32.mrf.mxu0
        %v9058 = vadd.f32 %v8969, %v9057
        %v9059 = vpop.f32.mrf.mxu0
        %v9060 = vadd.f32 %v8971, %v9059
        %9061 = vmatmul.bf16.gmra.mxu0 %v1947
        %v9062 = vpop.f32.mrf.mxu0
        %v9063 = vadd.f32 %v8974, %v9062
        %v9064 = vpop.f32.mrf.mxu0
        %v9065 = vadd.f32 %v8976, %v9064
        %9066 = vmatmul.bf16.gmra.mxu0 %v1955
        %v9067 = vpop.f32.mrf.mxu0
        %v9068 = vadd.f32 %v8979, %v9067
        %v9069 = vpop.f32.mrf.mxu0
        %v9070 = vadd.f32 %v8981, %v9069
        %9071 = vmatmul.bf16.gmra.mxu0 %v1963
        %v9072 = vpop.f32.mrf.mxu0
        %v9073 = vadd.f32 %v8984, %v9072
        %v9074 = vpop.f32.mrf.mxu0
        %v9075 = vadd.f32 %v8986, %v9074
        %9076 = vmatmul.bf16.gmra.mxu0 %v1971
        %v9077 = vpop.f32.mrf.mxu0
        %v9078 = vadd.f32 %v8989, %v9077
        %v9079 = vpop.f32.mrf.mxu0
        %v9080 = vadd.f32 %v8991, %v9079
        %9081 = vmatmul.bf16.gmra.mxu0 %v1979
        %v9082 = vpop.f32.mrf.mxu0
        %v9083 = vadd.f32 %v8994, %v9082
        %v9084 = vpop.f32.mrf.mxu0
        %v9085 = vadd.f32 %v8996, %v9084
        %9086 = vmatmul.bf16.gmra.mxu0 %v1987
        %v9087 = vpop.f32.mrf.mxu0
        %v9088 = vadd.f32 %v8999, %v9087
        %v9089 = vpop.f32.mrf.mxu0
        %v9090 = vadd.f32 %v9001, %v9089
        %9091 = vmatmul.bf16.gmra.mxu0 %v1995
        %v9092 = vpop.f32.mrf.mxu0
        %v9093 = vadd.f32 %v9004, %v9092
        %v9094 = vpop.f32.mrf.mxu0
        %v9095 = vadd.f32 %v9006, %v9094
        %9096 = vmatmul.bf16.gmra.mxu0 %v2003
        %v9097 = vpop.f32.mrf.mxu0
        %v9098 = vadd.f32 %v9009, %v9097
        %v9099 = vpop.f32.mrf.mxu0
        %v9100 = vadd.f32 %v9011, %v9099
        %9101 = vdwg.mxu0
        %9102 = vmatpush.bf16.msra.mxu0 %v4454
        %9103 = vmatpush.bf16.msra.mxu0 %v4446
        %9104 = vmatpush.bf16.msra.mxu0 %v4438
        %9105 = vmatpush.bf16.msra.mxu0 %v4430
        %9106 = vmatpush.bf16.msra.mxu0 %v4422
        %9107 = vmatpush.bf16.msra.mxu0 %v4414
        %9108 = vmatpush.bf16.msra.mxu0 %v4406
        %9109 = vmatpush.bf16.msra.mxu0 %v4398
        %9110 = vmatmul.bf16.gmra.mxu0 %v1884
        %v9111 = vpop.f32.mrf.mxu0
        %v9112 = vadd.f32 %v9023, %v9111
        %v9113 = vpop.f32.mrf.mxu0
        %v9114 = vadd.f32 %v9025, %v9113
        %9115 = vmatmul.bf16.gmra.mxu0 %v1892
        %v9116 = vpop.f32.mrf.mxu0
        %v9117 = vadd.f32 %v9028, %v9116
        %v9118 = vpop.f32.mrf.mxu0
        %v9119 = vadd.f32 %v9030, %v9118
        %9120 = vmatmul.bf16.gmra.mxu0 %v1900
        %v9121 = vpop.f32.mrf.mxu0
        %v9122 = vadd.f32 %v9033, %v9121
        %v9123 = vpop.f32.mrf.mxu0
        %v9124 = vadd.f32 %v9035, %v9123
        %9125 = vmatmul.bf16.gmra.mxu0 %v1908
        %v9126 = vpop.f32.mrf.mxu0
        %v9127 = vadd.f32 %v9038, %v9126
        %v9128 = vpop.f32.mrf.mxu0
        %v9129 = vadd.f32 %v9040, %v9128
        %9130 = vmatmul.bf16.gmra.mxu0 %v1916
        %v9131 = vpop.f32.mrf.mxu0
        %v9132 = vadd.f32 %v9043, %v9131
        %v9133 = vpop.f32.mrf.mxu0
        %v9134 = vadd.f32 %v9045, %v9133
        %9135 = vmatmul.bf16.gmra.mxu0 %v1924
        %v9136 = vpop.f32.mrf.mxu0
        %v9137 = vadd.f32 %v9048, %v9136
        %v9138 = vpop.f32.mrf.mxu0
        %v9139 = vadd.f32 %v9050, %v9138
        %9140 = vmatmul.bf16.gmra.mxu0 %v1932
        %v9141 = vpop.f32.mrf.mxu0
        %v9142 = vadd.f32 %v9053, %v9141
        %v9143 = vpop.f32.mrf.mxu0
        %v9144 = vadd.f32 %v9055, %v9143
        %9145 = vmatmul.bf16.gmra.mxu0 %v1940
        %v9146 = vpop.f32.mrf.mxu0
        %v9147 = vadd.f32 %v9058, %v9146
        %v9148 = vpop.f32.mrf.mxu0
        %v9149 = vadd.f32 %v9060, %v9148
        %9150 = vmatmul.bf16.gmra.mxu0 %v1948
        %v9151 = vpop.f32.mrf.mxu0
        %v9152 = vadd.f32 %v9063, %v9151
        %v9153 = vpop.f32.mrf.mxu0
        %v9154 = vadd.f32 %v9065, %v9153
        %9155 = vmatmul.bf16.gmra.mxu0 %v1956
        %v9156 = vpop.f32.mrf.mxu0
        %v9157 = vadd.f32 %v9068, %v9156
        %v9158 = vpop.f32.mrf.mxu0
        %v9159 = vadd.f32 %v9070, %v9158
        %9160 = vmatmul.bf16.gmra.mxu0 %v1964
        %v9161 = vpop.f32.mrf.mxu0
        %v9162 = vadd.f32 %v9073, %v9161
        %v9163 = vpop.f32.mrf.mxu0
        %v9164 = vadd.f32 %v9075, %v9163
        %9165 = vmatmul.bf16.gmra.mxu0 %v1972
        %v9166 = vpop.f32.mrf.mxu0
        %v9167 = vadd.f32 %v9078, %v9166
        %v9168 = vpop.f32.mrf.mxu0
        %v9169 = vadd.f32 %v9080, %v9168
        %9170 = vmatmul.bf16.gmra.mxu0 %v1980
        %v9171 = vpop.f32.mrf.mxu0
        %v9172 = vadd.f32 %v9083, %v9171
        %v9173 = vpop.f32.mrf.mxu0
        %v9174 = vadd.f32 %v9085, %v9173
        %9175 = vmatmul.bf16.gmra.mxu0 %v1988
        %v9176 = vpop.f32.mrf.mxu0
        %v9177 = vadd.f32 %v9088, %v9176
        %v9178 = vpop.f32.mrf.mxu0
        %v9179 = vadd.f32 %v9090, %v9178
        %9180 = vmatmul.bf16.gmra.mxu0 %v1996
        %v9181 = vpop.f32.mrf.mxu0
        %v9182 = vadd.f32 %v9093, %v9181
        %v9183 = vpop.f32.mrf.mxu0
        %v9184 = vadd.f32 %v9095, %v9183
        %9185 = vmatmul.bf16.gmra.mxu0 %v2004
        %v9186 = vpop.f32.mrf.mxu0
        %v9187 = vadd.f32 %v9098, %v9186
        %v9188 = vpop.f32.mrf.mxu0
        %v9189 = vadd.f32 %v9100, %v9188
        %9190 = vdwg.mxu0
        %9191 = vmatpush.bf16.msra.mxu0 %v4518
        %9192 = vmatpush.bf16.msra.mxu0 %v4510
        %9193 = vmatpush.bf16.msra.mxu0 %v4502
        %9194 = vmatpush.bf16.msra.mxu0 %v4494
        %9195 = vmatpush.bf16.msra.mxu0 %v4486
        %9196 = vmatpush.bf16.msra.mxu0 %v4478
        %9197 = vmatpush.bf16.msra.mxu0 %v4470
        %9198 = vmatpush.bf16.msra.mxu0 %v4462
        %9199 = vmatmul.bf16.gmra.mxu0 %v1885
        %v9200 = vpop.f32.mrf.mxu0
        %v9201 = vadd.f32 %v9112, %v9200
        %v9202 = vpop.f32.mrf.mxu0
        %v9203 = vadd.f32 %v9114, %v9202
        %9204 = vmatmul.bf16.gmra.mxu0 %v1893
        %v9205 = vpop.f32.mrf.mxu0
        %v9206 = vadd.f32 %v9117, %v9205
        %v9207 = vpop.f32.mrf.mxu0
        %v9208 = vadd.f32 %v9119, %v9207
        %9209 = vmatmul.bf16.gmra.mxu0 %v1901
        %v9210 = vpop.f32.mrf.mxu0
        %v9211 = vadd.f32 %v9122, %v9210
        %v9212 = vpop.f32.mrf.mxu0
        %v9213 = vadd.f32 %v9124, %v9212
        %9214 = vmatmul.bf16.gmra.mxu0 %v1909
        %v9215 = vpop.f32.mrf.mxu0
        %v9216 = vadd.f32 %v9127, %v9215
        %v9217 = vpop.f32.mrf.mxu0
        %v9218 = vadd.f32 %v9129, %v9217
        %9219 = vmatmul.bf16.gmra.mxu0 %v1917
        %v9220 = vpop.f32.mrf.mxu0
        %v9221 = vadd.f32 %v9132, %v9220
        %v9222 = vpop.f32.mrf.mxu0
        %v9223 = vadd.f32 %v9134, %v9222
        %9224 = vmatmul.bf16.gmra.mxu0 %v1925
        %v9225 = vpop.f32.mrf.mxu0
        %v9226 = vadd.f32 %v9137, %v9225
        %v9227 = vpop.f32.mrf.mxu0
        %v9228 = vadd.f32 %v9139, %v9227
        %9229 = vmatmul.bf16.gmra.mxu0 %v1933
        %v9230 = vpop.f32.mrf.mxu0
        %v9231 = vadd.f32 %v9142, %v9230
        %v9232 = vpop.f32.mrf.mxu0
        %v9233 = vadd.f32 %v9144, %v9232
        %9234 = vmatmul.bf16.gmra.mxu0 %v1941
        %v9235 = vpop.f32.mrf.mxu0
        %v9236 = vadd.f32 %v9147, %v9235
        %v9237 = vpop.f32.mrf.mxu0
        %v9238 = vadd.f32 %v9149, %v9237
        %9239 = vmatmul.bf16.gmra.mxu0 %v1949
        %v9240 = vpop.f32.mrf.mxu0
        %v9241 = vadd.f32 %v9152, %v9240
        %v9242 = vpop.f32.mrf.mxu0
        %v9243 = vadd.f32 %v9154, %v9242
        %9244 = vmatmul.bf16.gmra.mxu0 %v1957
        %v9245 = vpop.f32.mrf.mxu0
        %v9246 = vadd.f32 %v9157, %v9245
        %v9247 = vpop.f32.mrf.mxu0
        %v9248 = vadd.f32 %v9159, %v9247
        %9249 = vmatmul.bf16.gmra.mxu0 %v1965
        %v9250 = vpop.f32.mrf.mxu0
        %v9251 = vadd.f32 %v9162, %v9250
        %v9252 = vpop.f32.mrf.mxu0
        %v9253 = vadd.f32 %v9164, %v9252
        %9254 = vmatmul.bf16.gmra.mxu0 %v1973
        %v9255 = vpop.f32.mrf.mxu0
        %v9256 = vadd.f32 %v9167, %v9255
        %v9257 = vpop.f32.mrf.mxu0
        %v9258 = vadd.f32 %v9169, %v9257
        %9259 = vmatmul.bf16.gmra.mxu0 %v1981
        %v9260 = vpop.f32.mrf.mxu0
        %v9261 = vadd.f32 %v9172, %v9260
        %v9262 = vpop.f32.mrf.mxu0
        %v9263 = vadd.f32 %v9174, %v9262
        %9264 = vmatmul.bf16.gmra.mxu0 %v1989
        %v9265 = vpop.f32.mrf.mxu0
        %v9266 = vadd.f32 %v9177, %v9265
        %v9267 = vpop.f32.mrf.mxu0
        %v9268 = vadd.f32 %v9179, %v9267
        %9269 = vmatmul.bf16.gmra.mxu0 %v1997
        %v9270 = vpop.f32.mrf.mxu0
        %v9271 = vadd.f32 %v9182, %v9270
        %v9272 = vpop.f32.mrf.mxu0
        %v9273 = vadd.f32 %v9184, %v9272
        %9274 = vmatmul.bf16.gmra.mxu0 %v2005
        %v9275 = vpop.f32.mrf.mxu0
        %v9276 = vadd.f32 %v9187, %v9275
        %v9277 = vpop.f32.mrf.mxu0
        %v9278 = vadd.f32 %v9189, %v9277
        %9279 = vdwg.mxu0
        %9280 = vmatpush.bf16.msra.mxu0 %v4582
        %9281 = vmatpush.bf16.msra.mxu0 %v4574
        %9282 = vmatpush.bf16.msra.mxu0 %v4566
        %9283 = vmatpush.bf16.msra.mxu0 %v4558
        %9284 = vmatpush.bf16.msra.mxu0 %v4550
        %9285 = vmatpush.bf16.msra.mxu0 %v4542
        %9286 = vmatpush.bf16.msra.mxu0 %v4534
        %9287 = vmatpush.bf16.msra.mxu0 %v4526
        %9288 = vmatmul.bf16.gmra.mxu0 %v1886
        %v9289 = vpop.f32.mrf.mxu0
        %v9290 = vadd.f32 %v9201, %v9289
        %v9291 = vpop.f32.mrf.mxu0
        %v9292 = vadd.f32 %v9203, %v9291
        %9293 = vmatmul.bf16.gmra.mxu0 %v1894
        %v9294 = vpop.f32.mrf.mxu0
        %v9295 = vadd.f32 %v9206, %v9294
        %v9296 = vpop.f32.mrf.mxu0
        %v9297 = vadd.f32 %v9208, %v9296
        %9298 = vmatmul.bf16.gmra.mxu0 %v1902
        %v9299 = vpop.f32.mrf.mxu0
        %v9300 = vadd.f32 %v9211, %v9299
        %v9301 = vpop.f32.mrf.mxu0
        %v9302 = vadd.f32 %v9213, %v9301
        %9303 = vmatmul.bf16.gmra.mxu0 %v1910
        %v9304 = vpop.f32.mrf.mxu0
        %v9305 = vadd.f32 %v9216, %v9304
        %v9306 = vpop.f32.mrf.mxu0
        %v9307 = vadd.f32 %v9218, %v9306
        %9308 = vmatmul.bf16.gmra.mxu0 %v1918
        %v9309 = vpop.f32.mrf.mxu0
        %v9310 = vadd.f32 %v9221, %v9309
        %v9311 = vpop.f32.mrf.mxu0
        %v9312 = vadd.f32 %v9223, %v9311
        %9313 = vmatmul.bf16.gmra.mxu0 %v1926
        %v9314 = vpop.f32.mrf.mxu0
        %v9315 = vadd.f32 %v9226, %v9314
        %v9316 = vpop.f32.mrf.mxu0
        %v9317 = vadd.f32 %v9228, %v9316
        %9318 = vmatmul.bf16.gmra.mxu0 %v1934
        %v9319 = vpop.f32.mrf.mxu0
        %v9320 = vadd.f32 %v9231, %v9319
        %v9321 = vpop.f32.mrf.mxu0
        %v9322 = vadd.f32 %v9233, %v9321
        %9323 = vmatmul.bf16.gmra.mxu0 %v1942
        %v9324 = vpop.f32.mrf.mxu0
        %v9325 = vadd.f32 %v9236, %v9324
        %v9326 = vpop.f32.mrf.mxu0
        %v9327 = vadd.f32 %v9238, %v9326
        %9328 = vmatmul.bf16.gmra.mxu0 %v1950
        %v9329 = vpop.f32.mrf.mxu0
        %v9330 = vadd.f32 %v9241, %v9329
        %v9331 = vpop.f32.mrf.mxu0
        %v9332 = vadd.f32 %v9243, %v9331
        %9333 = vmatmul.bf16.gmra.mxu0 %v1958
        %v9334 = vpop.f32.mrf.mxu0
        %v9335 = vadd.f32 %v9246, %v9334
        %v9336 = vpop.f32.mrf.mxu0
        %v9337 = vadd.f32 %v9248, %v9336
        %9338 = vmatmul.bf16.gmra.mxu0 %v1966
        %v9339 = vpop.f32.mrf.mxu0
        %v9340 = vadd.f32 %v9251, %v9339
        %v9341 = vpop.f32.mrf.mxu0
        %v9342 = vadd.f32 %v9253, %v9341
        %9343 = vmatmul.bf16.gmra.mxu0 %v1974
        %v9344 = vpop.f32.mrf.mxu0
        %v9345 = vadd.f32 %v9256, %v9344
        %v9346 = vpop.f32.mrf.mxu0
        %v9347 = vadd.f32 %v9258, %v9346
        %9348 = vmatmul.bf16.gmra.mxu0 %v1982
        %v9349 = vpop.f32.mrf.mxu0
        %v9350 = vadd.f32 %v9261, %v9349
        %v9351 = vpop.f32.mrf.mxu0
        %v9352 = vadd.f32 %v9263, %v9351
        %9353 = vmatmul.bf16.gmra.mxu0 %v1990
        %v9354 = vpop.f32.mrf.mxu0
        %v9355 = vadd.f32 %v9266, %v9354
        %v9356 = vpop.f32.mrf.mxu0
        %v9357 = vadd.f32 %v9268, %v9356
        %9358 = vmatmul.bf16.gmra.mxu0 %v1998
        %v9359 = vpop.f32.mrf.mxu0
        %v9360 = vadd.f32 %v9271, %v9359
        %v9361 = vpop.f32.mrf.mxu0
        %v9362 = vadd.f32 %v9273, %v9361
        %9363 = vmatmul.bf16.gmra.mxu0 %v2006
        %v9364 = vpop.f32.mrf.mxu0
        %v9365 = vadd.f32 %v9276, %v9364
        %v9366 = vpop.f32.mrf.mxu0
        %v9367 = vadd.f32 %v9278, %v9366
        %9368 = vdwg.mxu0
        %9369 = vmatpush.bf16.msra.mxu0 %v4135
        %9370 = vmatpush.bf16.msra.mxu0 %v4127
        %9371 = vmatpush.bf16.msra.mxu0 %v4119
        %9372 = vmatpush.bf16.msra.mxu0 %v4111
        %9373 = vmatpush.bf16.msra.mxu0 %v4103
        %9374 = vmatpush.bf16.msra.mxu0 %v4095
        %9375 = vmatpush.bf16.msra.mxu0 %v4087
        %9376 = vmatpush.bf16.msra.mxu0 %v4079
        %9377 = vmatmul.bf16.gmra.mxu0 %v1879
        %v9378 = vpop.f32.mrf.mxu0
        %v9379 = vadd.f32 %v2527, %v9378
        %v9380 = vpop.f32.mrf.mxu0
        %v9381 = vadd.f32 %v2527, %v9380
        %9382 = vmatmul.bf16.gmra.mxu0 %v1887
        %v9383 = vpop.f32.mrf.mxu0
        %v9384 = vadd.f32 %v2527, %v9383
        %v9385 = vpop.f32.mrf.mxu0
        %v9386 = vadd.f32 %v2527, %v9385
        %9387 = vmatmul.bf16.gmra.mxu0 %v1895
        %v9388 = vpop.f32.mrf.mxu0
        %v9389 = vadd.f32 %v2527, %v9388
        %v9390 = vpop.f32.mrf.mxu0
        %v9391 = vadd.f32 %v2527, %v9390
        %9392 = vmatmul.bf16.gmra.mxu0 %v1903
        %v9393 = vpop.f32.mrf.mxu0
        %v9394 = vadd.f32 %v2527, %v9393
        %v9395 = vpop.f32.mrf.mxu0
        %v9396 = vadd.f32 %v2527, %v9395
        %9397 = vmatmul.bf16.gmra.mxu0 %v1911
        %v9398 = vpop.f32.mrf.mxu0
        %v9399 = vadd.f32 %v2527, %v9398
        %v9400 = vpop.f32.mrf.mxu0
        %v9401 = vadd.f32 %v2527, %v9400
        %9402 = vmatmul.bf16.gmra.mxu0 %v1919
        %v9403 = vpop.f32.mrf.mxu0
        %v9404 = vadd.f32 %v2527, %v9403
        %v9405 = vpop.f32.mrf.mxu0
        %v9406 = vadd.f32 %v2527, %v9405
        %9407 = vmatmul.bf16.gmra.mxu0 %v1927
        %v9408 = vpop.f32.mrf.mxu0
        %v9409 = vadd.f32 %v2527, %v9408
        %v9410 = vpop.f32.mrf.mxu0
        %v9411 = vadd.f32 %v2527, %v9410
        %9412 = vmatmul.bf16.gmra.mxu0 %v1935
        %v9413 = vpop.f32.mrf.mxu0
        %v9414 = vadd.f32 %v2527, %v9413
        %v9415 = vpop.f32.mrf.mxu0
        %v9416 = vadd.f32 %v2527, %v9415
        %9417 = vmatmul.bf16.gmra.mxu0 %v1943
        %v9418 = vpop.f32.mrf.mxu0
        %v9419 = vadd.f32 %v2527, %v9418
        %v9420 = vpop.f32.mrf.mxu0
        %v9421 = vadd.f32 %v2527, %v9420
        %9422 = vmatmul.bf16.gmra.mxu0 %v1951
        %v9423 = vpop.f32.mrf.mxu0
        %v9424 = vadd.f32 %v2527, %v9423
        %v9425 = vpop.f32.mrf.mxu0
        %v9426 = vadd.f32 %v2527, %v9425
        %9427 = vmatmul.bf16.gmra.mxu0 %v1959
        %v9428 = vpop.f32.mrf.mxu0
        %v9429 = vadd.f32 %v2527, %v9428
        %v9430 = vpop.f32.mrf.mxu0
        %v9431 = vadd.f32 %v2527, %v9430
        %9432 = vmatmul.bf16.gmra.mxu0 %v1967
        %v9433 = vpop.f32.mrf.mxu0
        %v9434 = vadd.f32 %v2527, %v9433
        %v9435 = vpop.f32.mrf.mxu0
        %v9436 = vadd.f32 %v2527, %v9435
        %9437 = vmatmul.bf16.gmra.mxu0 %v1975
        %v9438 = vpop.f32.mrf.mxu0
        %v9439 = vadd.f32 %v2527, %v9438
        %v9440 = vpop.f32.mrf.mxu0
        %v9441 = vadd.f32 %v2527, %v9440
        %9442 = vmatmul.bf16.gmra.mxu0 %v1983
        %v9443 = vpop.f32.mrf.mxu0
        %v9444 = vadd.f32 %v2527, %v9443
        %v9445 = vpop.f32.mrf.mxu0
        %v9446 = vadd.f32 %v2527, %v9445
        %9447 = vmatmul.bf16.gmra.mxu0 %v1991
        %v9448 = vpop.f32.mrf.mxu0
        %v9449 = vadd.f32 %v2527, %v9448
        %v9450 = vpop.f32.mrf.mxu0
        %v9451 = vadd.f32 %v2527, %v9450
        %9452 = vmatmul.bf16.gmra.mxu0 %v1999
        %v9453 = vpop.f32.mrf.mxu0
        %v9454 = vadd.f32 %v2527, %v9453
        %v9455 = vpop.f32.mrf.mxu0
        %v9456 = vadd.f32 %v2527, %v9455
        %9457 = vdwg.mxu0
        %9458 = vmatpush.bf16.msra.mxu0 %v4199
        %9459 = vmatpush.bf16.msra.mxu0 %v4191
        %9460 = vmatpush.bf16.msra.mxu0 %v4183
        %9461 = vmatpush.bf16.msra.mxu0 %v4175
        %9462 = vmatpush.bf16.msra.mxu0 %v4167
        %9463 = vmatpush.bf16.msra.mxu0 %v4159
        %9464 = vmatpush.bf16.msra.mxu0 %v4151
        %9465 = vmatpush.bf16.msra.mxu0 %v4143
        %9466 = vmatmul.bf16.gmra.mxu0 %v1880
        %v9467 = vpop.f32.mrf.mxu0
        %v9468 = vadd.f32 %v9379, %v9467
        %v9469 = vpop.f32.mrf.mxu0
        %v9470 = vadd.f32 %v9381, %v9469
        %9471 = vmatmul.bf16.gmra.mxu0 %v1888
        %v9472 = vpop.f32.mrf.mxu0
        %v9473 = vadd.f32 %v9384, %v9472
        %v9474 = vpop.f32.mrf.mxu0
        %v9475 = vadd.f32 %v9386, %v9474
        %9476 = vmatmul.bf16.gmra.mxu0 %v1896
        %v9477 = vpop.f32.mrf.mxu0
        %v9478 = vadd.f32 %v9389, %v9477
        %v9479 = vpop.f32.mrf.mxu0
        %v9480 = vadd.f32 %v9391, %v9479
        %9481 = vmatmul.bf16.gmra.mxu0 %v1904
        %v9482 = vpop.f32.mrf.mxu0
        %v9483 = vadd.f32 %v9394, %v9482
        %v9484 = vpop.f32.mrf.mxu0
        %v9485 = vadd.f32 %v9396, %v9484
        %9486 = vmatmul.bf16.gmra.mxu0 %v1912
        %v9487 = vpop.f32.mrf.mxu0
        %v9488 = vadd.f32 %v9399, %v9487
        %v9489 = vpop.f32.mrf.mxu0
        %v9490 = vadd.f32 %v9401, %v9489
        %9491 = vmatmul.bf16.gmra.mxu0 %v1920
        %v9492 = vpop.f32.mrf.mxu0
        %v9493 = vadd.f32 %v9404, %v9492
        %v9494 = vpop.f32.mrf.mxu0
        %v9495 = vadd.f32 %v9406, %v9494
        %9496 = vmatmul.bf16.gmra.mxu0 %v1928
        %v9497 = vpop.f32.mrf.mxu0
        %v9498 = vadd.f32 %v9409, %v9497
        %v9499 = vpop.f32.mrf.mxu0
        %v9500 = vadd.f32 %v9411, %v9499
        %9501 = vmatmul.bf16.gmra.mxu0 %v1936
        %v9502 = vpop.f32.mrf.mxu0
        %v9503 = vadd.f32 %v9414, %v9502
        %v9504 = vpop.f32.mrf.mxu0
        %v9505 = vadd.f32 %v9416, %v9504
        %9506 = vmatmul.bf16.gmra.mxu0 %v1944
        %v9507 = vpop.f32.mrf.mxu0
        %v9508 = vadd.f32 %v9419, %v9507
        %v9509 = vpop.f32.mrf.mxu0
        %v9510 = vadd.f32 %v9421, %v9509
        %9511 = vmatmul.bf16.gmra.mxu0 %v1952
        %v9512 = vpop.f32.mrf.mxu0
        %v9513 = vadd.f32 %v9424, %v9512
        %v9514 = vpop.f32.mrf.mxu0
        %v9515 = vadd.f32 %v9426, %v9514
        %9516 = vmatmul.bf16.gmra.mxu0 %v1960
        %v9517 = vpop.f32.mrf.mxu0
        %v9518 = vadd.f32 %v9429, %v9517
        %v9519 = vpop.f32.mrf.mxu0
        %v9520 = vadd.f32 %v9431, %v9519
        %9521 = vmatmul.bf16.gmra.mxu0 %v1968
        %v9522 = vpop.f32.mrf.mxu0
        %v9523 = vadd.f32 %v9434, %v9522
        %v9524 = vpop.f32.mrf.mxu0
        %v9525 = vadd.f32 %v9436, %v9524
        %9526 = vmatmul.bf16.gmra.mxu0 %v1976
        %v9527 = vpop.f32.mrf.mxu0
        %v9528 = vadd.f32 %v9439, %v9527
        %v9529 = vpop.f32.mrf.mxu0
        %v9530 = vadd.f32 %v9441, %v9529
        %9531 = vmatmul.bf16.gmra.mxu0 %v1984
        %v9532 = vpop.f32.mrf.mxu0
        %v9533 = vadd.f32 %v9444, %v9532
        %v9534 = vpop.f32.mrf.mxu0
        %v9535 = vadd.f32 %v9446, %v9534
        %9536 = vmatmul.bf16.gmra.mxu0 %v1992
        %v9537 = vpop.f32.mrf.mxu0
        %v9538 = vadd.f32 %v9449, %v9537
        %v9539 = vpop.f32.mrf.mxu0
        %v9540 = vadd.f32 %v9451, %v9539
        %9541 = vmatmul.bf16.gmra.mxu0 %v2000
        %v9542 = vpop.f32.mrf.mxu0
        %v9543 = vadd.f32 %v9454, %v9542
        %v9544 = vpop.f32.mrf.mxu0
        %v9545 = vadd.f32 %v9456, %v9544
        %9546 = vdwg.mxu0
        %9547 = vmatpush.bf16.msra.mxu0 %v4263
        %9548 = vmatpush.bf16.msra.mxu0 %v4255
        %9549 = vmatpush.bf16.msra.mxu0 %v4247
        %9550 = vmatpush.bf16.msra.mxu0 %v4239
        %9551 = vmatpush.bf16.msra.mxu0 %v4231
        %9552 = vmatpush.bf16.msra.mxu0 %v4223
        %9553 = vmatpush.bf16.msra.mxu0 %v4215
        %9554 = vmatpush.bf16.msra.mxu0 %v4207
        %9555 = vmatmul.bf16.gmra.mxu0 %v1881
        %v9556 = vpop.f32.mrf.mxu0
        %v9557 = vadd.f32 %v9468, %v9556
        %v9558 = vpop.f32.mrf.mxu0
        %v9559 = vadd.f32 %v9470, %v9558
        %9560 = vmatmul.bf16.gmra.mxu0 %v1889
        %v9561 = vpop.f32.mrf.mxu0
        %v9562 = vadd.f32 %v9473, %v9561
        %v9563 = vpop.f32.mrf.mxu0
        %v9564 = vadd.f32 %v9475, %v9563
        %9565 = vmatmul.bf16.gmra.mxu0 %v1897
        %v9566 = vpop.f32.mrf.mxu0
        %v9567 = vadd.f32 %v9478, %v9566
        %v9568 = vpop.f32.mrf.mxu0
        %v9569 = vadd.f32 %v9480, %v9568
        %9570 = vmatmul.bf16.gmra.mxu0 %v1905
        %v9571 = vpop.f32.mrf.mxu0
        %v9572 = vadd.f32 %v9483, %v9571
        %v9573 = vpop.f32.mrf.mxu0
        %v9574 = vadd.f32 %v9485, %v9573
        %9575 = vmatmul.bf16.gmra.mxu0 %v1913
        %v9576 = vpop.f32.mrf.mxu0
        %v9577 = vadd.f32 %v9488, %v9576
        %v9578 = vpop.f32.mrf.mxu0
        %v9579 = vadd.f32 %v9490, %v9578
        %9580 = vmatmul.bf16.gmra.mxu0 %v1921
        %v9581 = vpop.f32.mrf.mxu0
        %v9582 = vadd.f32 %v9493, %v9581
        %v9583 = vpop.f32.mrf.mxu0
        %v9584 = vadd.f32 %v9495, %v9583
        %9585 = vmatmul.bf16.gmra.mxu0 %v1929
        %v9586 = vpop.f32.mrf.mxu0
        %v9587 = vadd.f32 %v9498, %v9586
        %v9588 = vpop.f32.mrf.mxu0
        %v9589 = vadd.f32 %v9500, %v9588
        %9590 = vmatmul.bf16.gmra.mxu0 %v1937
        %v9591 = vpop.f32.mrf.mxu0
        %v9592 = vadd.f32 %v9503, %v9591
        %v9593 = vpop.f32.mrf.mxu0
        %v9594 = vadd.f32 %v9505, %v9593
        %9595 = vmatmul.bf16.gmra.mxu0 %v1945
        %v9596 = vpop.f32.mrf.mxu0
        %v9597 = vadd.f32 %v9508, %v9596
        %v9598 = vpop.f32.mrf.mxu0
        %v9599 = vadd.f32 %v9510, %v9598
        %9600 = vmatmul.bf16.gmra.mxu0 %v1953
        %v9601 = vpop.f32.mrf.mxu0
        %v9602 = vadd.f32 %v9513, %v9601
        %v9603 = vpop.f32.mrf.mxu0
        %v9604 = vadd.f32 %v9515, %v9603
        %9605 = vmatmul.bf16.gmra.mxu0 %v1961
        %v9606 = vpop.f32.mrf.mxu0
        %v9607 = vadd.f32 %v9518, %v9606
        %v9608 = vpop.f32.mrf.mxu0
        %v9609 = vadd.f32 %v9520, %v9608
        %9610 = vmatmul.bf16.gmra.mxu0 %v1969
        %v9611 = vpop.f32.mrf.mxu0
        %v9612 = vadd.f32 %v9523, %v9611
        %v9613 = vpop.f32.mrf.mxu0
        %v9614 = vadd.f32 %v9525, %v9613
        %9615 = vmatmul.bf16.gmra.mxu0 %v1977
        %v9616 = vpop.f32.mrf.mxu0
        %v9617 = vadd.f32 %v9528, %v9616
        %v9618 = vpop.f32.mrf.mxu0
        %v9619 = vadd.f32 %v9530, %v9618
        %9620 = vmatmul.bf16.gmra.mxu0 %v1985
        %v9621 = vpop.f32.mrf.mxu0
        %v9622 = vadd.f32 %v9533, %v9621
        %v9623 = vpop.f32.mrf.mxu0
        %v9624 = vadd.f32 %v9535, %v9623
        %9625 = vmatmul.bf16.gmra.mxu0 %v1993
        %v9626 = vpop.f32.mrf.mxu0
        %v9627 = vadd.f32 %v9538, %v9626
        %v9628 = vpop.f32.mrf.mxu0
        %v9629 = vadd.f32 %v9540, %v9628
        %9630 = vmatmul.bf16.gmra.mxu0 %v2001
        %v9631 = vpop.f32.mrf.mxu0
        %v9632 = vadd.f32 %v9543, %v9631
        %v9633 = vpop.f32.mrf.mxu0
        %v9634 = vadd.f32 %v9545, %v9633
        %9635 = vdwg.mxu0
        %9636 = vmatpush.bf16.msra.mxu0 %v4327
        %9637 = vmatpush.bf16.msra.mxu0 %v4319
        %9638 = vmatpush.bf16.msra.mxu0 %v4311
        %9639 = vmatpush.bf16.msra.mxu0 %v4303
        %9640 = vmatpush.bf16.msra.mxu0 %v4295
        %9641 = vmatpush.bf16.msra.mxu0 %v4287
        %9642 = vmatpush.bf16.msra.mxu0 %v4279
        %9643 = vmatpush.bf16.msra.mxu0 %v4271
        %9644 = vmatmul.bf16.gmra.mxu0 %v1882
        %v9645 = vpop.f32.mrf.mxu0
        %v9646 = vadd.f32 %v9557, %v9645
        %v9647 = vpop.f32.mrf.mxu0
        %v9648 = vadd.f32 %v9559, %v9647
        %9649 = vmatmul.bf16.gmra.mxu0 %v1890
        %v9650 = vpop.f32.mrf.mxu0
        %v9651 = vadd.f32 %v9562, %v9650
        %v9652 = vpop.f32.mrf.mxu0
        %v9653 = vadd.f32 %v9564, %v9652
        %9654 = vmatmul.bf16.gmra.mxu0 %v1898
        %v9655 = vpop.f32.mrf.mxu0
        %v9656 = vadd.f32 %v9567, %v9655
        %v9657 = vpop.f32.mrf.mxu0
        %v9658 = vadd.f32 %v9569, %v9657
        %9659 = vmatmul.bf16.gmra.mxu0 %v1906
        %v9660 = vpop.f32.mrf.mxu0
        %v9661 = vadd.f32 %v9572, %v9660
        %v9662 = vpop.f32.mrf.mxu0
        %v9663 = vadd.f32 %v9574, %v9662
        %9664 = vmatmul.bf16.gmra.mxu0 %v1914
        %v9665 = vpop.f32.mrf.mxu0
        %v9666 = vadd.f32 %v9577, %v9665
        %v9667 = vpop.f32.mrf.mxu0
        %v9668 = vadd.f32 %v9579, %v9667
        %9669 = vmatmul.bf16.gmra.mxu0 %v1922
        %v9670 = vpop.f32.mrf.mxu0
        %v9671 = vadd.f32 %v9582, %v9670
        %v9672 = vpop.f32.mrf.mxu0
        %v9673 = vadd.f32 %v9584, %v9672
        %9674 = vmatmul.bf16.gmra.mxu0 %v1930
        %v9675 = vpop.f32.mrf.mxu0
        %v9676 = vadd.f32 %v9587, %v9675
        %v9677 = vpop.f32.mrf.mxu0
        %v9678 = vadd.f32 %v9589, %v9677
        %9679 = vmatmul.bf16.gmra.mxu0 %v1938
        %v9680 = vpop.f32.mrf.mxu0
        %v9681 = vadd.f32 %v9592, %v9680
        %v9682 = vpop.f32.mrf.mxu0
        %v9683 = vadd.f32 %v9594, %v9682
        %9684 = vmatmul.bf16.gmra.mxu0 %v1946
        %v9685 = vpop.f32.mrf.mxu0
        %v9686 = vadd.f32 %v9597, %v9685
        %v9687 = vpop.f32.mrf.mxu0
        %v9688 = vadd.f32 %v9599, %v9687
        %9689 = vmatmul.bf16.gmra.mxu0 %v1954
        %v9690 = vpop.f32.mrf.mxu0
        %v9691 = vadd.f32 %v9602, %v9690
        %v9692 = vpop.f32.mrf.mxu0
        %v9693 = vadd.f32 %v9604, %v9692
        %9694 = vmatmul.bf16.gmra.mxu0 %v1962
        %v9695 = vpop.f32.mrf.mxu0
        %v9696 = vadd.f32 %v9607, %v9695
        %v9697 = vpop.f32.mrf.mxu0
        %v9698 = vadd.f32 %v9609, %v9697
        %9699 = vmatmul.bf16.gmra.mxu0 %v1970
        %v9700 = vpop.f32.mrf.mxu0
        %v9701 = vadd.f32 %v9612, %v9700
        %v9702 = vpop.f32.mrf.mxu0
        %v9703 = vadd.f32 %v9614, %v9702
        %9704 = vmatmul.bf16.gmra.mxu0 %v1978
        %v9705 = vpop.f32.mrf.mxu0
        %v9706 = vadd.f32 %v9617, %v9705
        %v9707 = vpop.f32.mrf.mxu0
        %v9708 = vadd.f32 %v9619, %v9707
        %9709 = vmatmul.bf16.gmra.mxu0 %v1986
        %v9710 = vpop.f32.mrf.mxu0
        %v9711 = vadd.f32 %v9622, %v9710
        %v9712 = vpop.f32.mrf.mxu0
        %v9713 = vadd.f32 %v9624, %v9712
        %9714 = vmatmul.bf16.gmra.mxu0 %v1994
        %v9715 = vpop.f32.mrf.mxu0
        %v9716 = vadd.f32 %v9627, %v9715
        %v9717 = vpop.f32.mrf.mxu0
        %v9718 = vadd.f32 %v9629, %v9717
        %9719 = vmatmul.bf16.gmra.mxu0 %v2002
        %v9720 = vpop.f32.mrf.mxu0
        %v9721 = vadd.f32 %v9632, %v9720
        %v9722 = vpop.f32.mrf.mxu0
        %v9723 = vadd.f32 %v9634, %v9722
        %9724 = vdwg.mxu0
        %9725 = vmatpush.bf16.msra.mxu0 %v4391
        %9726 = vmatpush.bf16.msra.mxu0 %v4383
        %9727 = vmatpush.bf16.msra.mxu0 %v4375
        %9728 = vmatpush.bf16.msra.mxu0 %v4367
        %9729 = vmatpush.bf16.msra.mxu0 %v4359
        %9730 = vmatpush.bf16.msra.mxu0 %v4351
        %9731 = vmatpush.bf16.msra.mxu0 %v4343
        %9732 = vmatpush.bf16.msra.mxu0 %v4335
        %9733 = vmatmul.bf16.gmra.mxu0 %v1883
        %v9734 = vpop.f32.mrf.mxu0
        %v9735 = vadd.f32 %v9646, %v9734
        %v9736 = vpop.f32.mrf.mxu0
        %v9737 = vadd.f32 %v9648, %v9736
        %9738 = vmatmul.bf16.gmra.mxu0 %v1891
        %v9739 = vpop.f32.mrf.mxu0
        %v9740 = vadd.f32 %v9651, %v9739
        %v9741 = vpop.f32.mrf.mxu0
        %v9742 = vadd.f32 %v9653, %v9741
        %9743 = vmatmul.bf16.gmra.mxu0 %v1899
        %v9744 = vpop.f32.mrf.mxu0
        %v9745 = vadd.f32 %v9656, %v9744
        %v9746 = vpop.f32.mrf.mxu0
        %v9747 = vadd.f32 %v9658, %v9746
        %9748 = vmatmul.bf16.gmra.mxu0 %v1907
        %v9749 = vpop.f32.mrf.mxu0
        %v9750 = vadd.f32 %v9661, %v9749
        %v9751 = vpop.f32.mrf.mxu0
        %v9752 = vadd.f32 %v9663, %v9751
        %9753 = vmatmul.bf16.gmra.mxu0 %v1915
        %v9754 = vpop.f32.mrf.mxu0
        %v9755 = vadd.f32 %v9666, %v9754
        %v9756 = vpop.f32.mrf.mxu0
        %v9757 = vadd.f32 %v9668, %v9756
        %9758 = vmatmul.bf16.gmra.mxu0 %v1923
        %v9759 = vpop.f32.mrf.mxu0
        %v9760 = vadd.f32 %v9671, %v9759
        %v9761 = vpop.f32.mrf.mxu0
        %v9762 = vadd.f32 %v9673, %v9761
        %9763 = vmatmul.bf16.gmra.mxu0 %v1931
        %v9764 = vpop.f32.mrf.mxu0
        %v9765 = vadd.f32 %v9676, %v9764
        %v9766 = vpop.f32.mrf.mxu0
        %v9767 = vadd.f32 %v9678, %v9766
        %9768 = vmatmul.bf16.gmra.mxu0 %v1939
        %v9769 = vpop.f32.mrf.mxu0
        %v9770 = vadd.f32 %v9681, %v9769
        %v9771 = vpop.f32.mrf.mxu0
        %v9772 = vadd.f32 %v9683, %v9771
        %9773 = vmatmul.bf16.gmra.mxu0 %v1947
        %v9774 = vpop.f32.mrf.mxu0
        %v9775 = vadd.f32 %v9686, %v9774
        %v9776 = vpop.f32.mrf.mxu0
        %v9777 = vadd.f32 %v9688, %v9776
        %9778 = vmatmul.bf16.gmra.mxu0 %v1955
        %v9779 = vpop.f32.mrf.mxu0
        %v9780 = vadd.f32 %v9691, %v9779
        %v9781 = vpop.f32.mrf.mxu0
        %v9782 = vadd.f32 %v9693, %v9781
        %9783 = vmatmul.bf16.gmra.mxu0 %v1963
        %v9784 = vpop.f32.mrf.mxu0
        %v9785 = vadd.f32 %v9696, %v9784
        %v9786 = vpop.f32.mrf.mxu0
        %v9787 = vadd.f32 %v9698, %v9786
        %9788 = vmatmul.bf16.gmra.mxu0 %v1971
        %v9789 = vpop.f32.mrf.mxu0
        %v9790 = vadd.f32 %v9701, %v9789
        %v9791 = vpop.f32.mrf.mxu0
        %v9792 = vadd.f32 %v9703, %v9791
        %9793 = vmatmul.bf16.gmra.mxu0 %v1979
        %v9794 = vpop.f32.mrf.mxu0
        %v9795 = vadd.f32 %v9706, %v9794
        %v9796 = vpop.f32.mrf.mxu0
        %v9797 = vadd.f32 %v9708, %v9796
        %9798 = vmatmul.bf16.gmra.mxu0 %v1987
        %v9799 = vpop.f32.mrf.mxu0
        %v9800 = vadd.f32 %v9711, %v9799
        %v9801 = vpop.f32.mrf.mxu0
        %v9802 = vadd.f32 %v9713, %v9801
        %9803 = vmatmul.bf16.gmra.mxu0 %v1995
        %v9804 = vpop.f32.mrf.mxu0
        %v9805 = vadd.f32 %v9716, %v9804
        %v9806 = vpop.f32.mrf.mxu0
        %v9807 = vadd.f32 %v9718, %v9806
        %9808 = vmatmul.bf16.gmra.mxu0 %v2003
        %v9809 = vpop.f32.mrf.mxu0
        %v9810 = vadd.f32 %v9721, %v9809
        %v9811 = vpop.f32.mrf.mxu0
        %v9812 = vadd.f32 %v9723, %v9811
        %9813 = vdwg.mxu0
        %9814 = vmatpush.bf16.msra.mxu0 %v4455
        %9815 = vmatpush.bf16.msra.mxu0 %v4447
        %9816 = vmatpush.bf16.msra.mxu0 %v4439
        %9817 = vmatpush.bf16.msra.mxu0 %v4431
        %9818 = vmatpush.bf16.msra.mxu0 %v4423
        %9819 = vmatpush.bf16.msra.mxu0 %v4415
        %9820 = vmatpush.bf16.msra.mxu0 %v4407
        %9821 = vmatpush.bf16.msra.mxu0 %v4399
        %9822 = vmatmul.bf16.gmra.mxu0 %v1884
        %v9823 = vpop.f32.mrf.mxu0
        %v9824 = vadd.f32 %v9735, %v9823
        %v9825 = vpop.f32.mrf.mxu0
        %v9826 = vadd.f32 %v9737, %v9825
        %9827 = vmatmul.bf16.gmra.mxu0 %v1892
        %v9828 = vpop.f32.mrf.mxu0
        %v9829 = vadd.f32 %v9740, %v9828
        %v9830 = vpop.f32.mrf.mxu0
        %v9831 = vadd.f32 %v9742, %v9830
        %9832 = vmatmul.bf16.gmra.mxu0 %v1900
        %v9833 = vpop.f32.mrf.mxu0
        %v9834 = vadd.f32 %v9745, %v9833
        %v9835 = vpop.f32.mrf.mxu0
        %v9836 = vadd.f32 %v9747, %v9835
        %9837 = vmatmul.bf16.gmra.mxu0 %v1908
        %v9838 = vpop.f32.mrf.mxu0
        %v9839 = vadd.f32 %v9750, %v9838
        %v9840 = vpop.f32.mrf.mxu0
        %v9841 = vadd.f32 %v9752, %v9840
        %9842 = vmatmul.bf16.gmra.mxu0 %v1916
        %v9843 = vpop.f32.mrf.mxu0
        %v9844 = vadd.f32 %v9755, %v9843
        %v9845 = vpop.f32.mrf.mxu0
        %v9846 = vadd.f32 %v9757, %v9845
        %9847 = vmatmul.bf16.gmra.mxu0 %v1924
        %v9848 = vpop.f32.mrf.mxu0
        %v9849 = vadd.f32 %v9760, %v9848
        %v9850 = vpop.f32.mrf.mxu0
        %v9851 = vadd.f32 %v9762, %v9850
        %9852 = vmatmul.bf16.gmra.mxu0 %v1932
        %v9853 = vpop.f32.mrf.mxu0
        %v9854 = vadd.f32 %v9765, %v9853
        %v9855 = vpop.f32.mrf.mxu0
        %v9856 = vadd.f32 %v9767, %v9855
        %9857 = vmatmul.bf16.gmra.mxu0 %v1940
        %v9858 = vpop.f32.mrf.mxu0
        %v9859 = vadd.f32 %v9770, %v9858
        %v9860 = vpop.f32.mrf.mxu0
        %v9861 = vadd.f32 %v9772, %v9860
        %9862 = vmatmul.bf16.gmra.mxu0 %v1948
        %v9863 = vpop.f32.mrf.mxu0
        %v9864 = vadd.f32 %v9775, %v9863
        %v9865 = vpop.f32.mrf.mxu0
        %v9866 = vadd.f32 %v9777, %v9865
        %9867 = vmatmul.bf16.gmra.mxu0 %v1956
        %v9868 = vpop.f32.mrf.mxu0
        %v9869 = vadd.f32 %v9780, %v9868
        %v9870 = vpop.f32.mrf.mxu0
        %v9871 = vadd.f32 %v9782, %v9870
        %9872 = vmatmul.bf16.gmra.mxu0 %v1964
        %v9873 = vpop.f32.mrf.mxu0
        %v9874 = vadd.f32 %v9785, %v9873
        %v9875 = vpop.f32.mrf.mxu0
        %v9876 = vadd.f32 %v9787, %v9875
        %9877 = vmatmul.bf16.gmra.mxu0 %v1972
        %v9878 = vpop.f32.mrf.mxu0
        %v9879 = vadd.f32 %v9790, %v9878
        %v9880 = vpop.f32.mrf.mxu0
        %v9881 = vadd.f32 %v9792, %v9880
        %9882 = vmatmul.bf16.gmra.mxu0 %v1980
        %v9883 = vpop.f32.mrf.mxu0
        %v9884 = vadd.f32 %v9795, %v9883
        %v9885 = vpop.f32.mrf.mxu0
        %v9886 = vadd.f32 %v9797, %v9885
        %9887 = vmatmul.bf16.gmra.mxu0 %v1988
        %v9888 = vpop.f32.mrf.mxu0
        %v9889 = vadd.f32 %v9800, %v9888
        %v9890 = vpop.f32.mrf.mxu0
        %v9891 = vadd.f32 %v9802, %v9890
        %9892 = vmatmul.bf16.gmra.mxu0 %v1996
        %v9893 = vpop.f32.mrf.mxu0
        %v9894 = vadd.f32 %v9805, %v9893
        %v9895 = vpop.f32.mrf.mxu0
        %v9896 = vadd.f32 %v9807, %v9895
        %9897 = vmatmul.bf16.gmra.mxu0 %v2004
        %v9898 = vpop.f32.mrf.mxu0
        %v9899 = vadd.f32 %v9810, %v9898
        %v9900 = vpop.f32.mrf.mxu0
        %v9901 = vadd.f32 %v9812, %v9900
        %9902 = vdwg.mxu0
        %9903 = vmatpush.bf16.msra.mxu0 %v4519
        %9904 = vmatpush.bf16.msra.mxu0 %v4511
        %9905 = vmatpush.bf16.msra.mxu0 %v4503
        %9906 = vmatpush.bf16.msra.mxu0 %v4495
        %9907 = vmatpush.bf16.msra.mxu0 %v4487
        %9908 = vmatpush.bf16.msra.mxu0 %v4479
        %9909 = vmatpush.bf16.msra.mxu0 %v4471
        %9910 = vmatpush.bf16.msra.mxu0 %v4463
        %9911 = vmatmul.bf16.gmra.mxu0 %v1885
        %v9912 = vpop.f32.mrf.mxu0
        %v9913 = vadd.f32 %v9824, %v9912
        %v9914 = vpop.f32.mrf.mxu0
        %v9915 = vadd.f32 %v9826, %v9914
        %9916 = vmatmul.bf16.gmra.mxu0 %v1893
        %v9917 = vpop.f32.mrf.mxu0
        %v9918 = vadd.f32 %v9829, %v9917
        %v9919 = vpop.f32.mrf.mxu0
        %v9920 = vadd.f32 %v9831, %v9919
        %9921 = vmatmul.bf16.gmra.mxu0 %v1901
        %v9922 = vpop.f32.mrf.mxu0
        %v9923 = vadd.f32 %v9834, %v9922
        %v9924 = vpop.f32.mrf.mxu0
        %v9925 = vadd.f32 %v9836, %v9924
        %9926 = vmatmul.bf16.gmra.mxu0 %v1909
        %v9927 = vpop.f32.mrf.mxu0
        %v9928 = vadd.f32 %v9839, %v9927
        %v9929 = vpop.f32.mrf.mxu0
        %v9930 = vadd.f32 %v9841, %v9929
        %9931 = vmatmul.bf16.gmra.mxu0 %v1917
        %v9932 = vpop.f32.mrf.mxu0
        %v9933 = vadd.f32 %v9844, %v9932
        %v9934 = vpop.f32.mrf.mxu0
        %v9935 = vadd.f32 %v9846, %v9934
        %9936 = vmatmul.bf16.gmra.mxu0 %v1925
        %v9937 = vpop.f32.mrf.mxu0
        %v9938 = vadd.f32 %v9849, %v9937
        %v9939 = vpop.f32.mrf.mxu0
        %v9940 = vadd.f32 %v9851, %v9939
        %9941 = vmatmul.bf16.gmra.mxu0 %v1933
        %v9942 = vpop.f32.mrf.mxu0
        %v9943 = vadd.f32 %v9854, %v9942
        %v9944 = vpop.f32.mrf.mxu0
        %v9945 = vadd.f32 %v9856, %v9944
        %9946 = vmatmul.bf16.gmra.mxu0 %v1941
        %v9947 = vpop.f32.mrf.mxu0
        %v9948 = vadd.f32 %v9859, %v9947
        %v9949 = vpop.f32.mrf.mxu0
        %v9950 = vadd.f32 %v9861, %v9949
        %9951 = vmatmul.bf16.gmra.mxu0 %v1949
        %v9952 = vpop.f32.mrf.mxu0
        %v9953 = vadd.f32 %v9864, %v9952
        %v9954 = vpop.f32.mrf.mxu0
        %v9955 = vadd.f32 %v9866, %v9954
        %9956 = vmatmul.bf16.gmra.mxu0 %v1957
        %v9957 = vpop.f32.mrf.mxu0
        %v9958 = vadd.f32 %v9869, %v9957
        %v9959 = vpop.f32.mrf.mxu0
        %v9960 = vadd.f32 %v9871, %v9959
        %9961 = vmatmul.bf16.gmra.mxu0 %v1965
        %v9962 = vpop.f32.mrf.mxu0
        %v9963 = vadd.f32 %v9874, %v9962
        %v9964 = vpop.f32.mrf.mxu0
        %v9965 = vadd.f32 %v9876, %v9964
        %9966 = vmatmul.bf16.gmra.mxu0 %v1973
        %v9967 = vpop.f32.mrf.mxu0
        %v9968 = vadd.f32 %v9879, %v9967
        %v9969 = vpop.f32.mrf.mxu0
        %v9970 = vadd.f32 %v9881, %v9969
        %9971 = vmatmul.bf16.gmra.mxu0 %v1981
        %v9972 = vpop.f32.mrf.mxu0
        %v9973 = vadd.f32 %v9884, %v9972
        %v9974 = vpop.f32.mrf.mxu0
        %v9975 = vadd.f32 %v9886, %v9974
        %9976 = vmatmul.bf16.gmra.mxu0 %v1989
        %v9977 = vpop.f32.mrf.mxu0
        %v9978 = vadd.f32 %v9889, %v9977
        %v9979 = vpop.f32.mrf.mxu0
        %v9980 = vadd.f32 %v9891, %v9979
        %9981 = vmatmul.bf16.gmra.mxu0 %v1997
        %v9982 = vpop.f32.mrf.mxu0
        %v9983 = vadd.f32 %v9894, %v9982
        %v9984 = vpop.f32.mrf.mxu0
        %v9985 = vadd.f32 %v9896, %v9984
        %9986 = vmatmul.bf16.gmra.mxu0 %v2005
        %v9987 = vpop.f32.mrf.mxu0
        %v9988 = vadd.f32 %v9899, %v9987
        %v9989 = vpop.f32.mrf.mxu0
        %v9990 = vadd.f32 %v9901, %v9989
        %9991 = vdwg.mxu0
        %9992 = vmatpush.bf16.msra.mxu0 %v4583
        %9993 = vmatpush.bf16.msra.mxu0 %v4575
        %9994 = vmatpush.bf16.msra.mxu0 %v4567
        %9995 = vmatpush.bf16.msra.mxu0 %v4559
        %9996 = vmatpush.bf16.msra.mxu0 %v4551
        %9997 = vmatpush.bf16.msra.mxu0 %v4543
        %9998 = vmatpush.bf16.msra.mxu0 %v4535
        %9999 = vmatpush.bf16.msra.mxu0 %v4527
        %10000 = vmatmul.bf16.gmra.mxu0 %v1886
        %v10001 = vpop.f32.mrf.mxu0
        %v10002 = vadd.f32 %v9913, %v10001
        %v10003 = vpop.f32.mrf.mxu0
        %v10004 = vadd.f32 %v9915, %v10003
        %10005 = vmatmul.bf16.gmra.mxu0 %v1894
        %v10006 = vpop.f32.mrf.mxu0
        %v10007 = vadd.f32 %v9918, %v10006
        %v10008 = vpop.f32.mrf.mxu0
        %v10009 = vadd.f32 %v9920, %v10008
        %10010 = vmatmul.bf16.gmra.mxu0 %v1902
        %v10011 = vpop.f32.mrf.mxu0
        %v10012 = vadd.f32 %v9923, %v10011
        %v10013 = vpop.f32.mrf.mxu0
        %v10014 = vadd.f32 %v9925, %v10013
        %10015 = vmatmul.bf16.gmra.mxu0 %v1910
        %v10016 = vpop.f32.mrf.mxu0
        %v10017 = vadd.f32 %v9928, %v10016
        %v10018 = vpop.f32.mrf.mxu0
        %v10019 = vadd.f32 %v9930, %v10018
        %10020 = vmatmul.bf16.gmra.mxu0 %v1918
        %v10021 = vpop.f32.mrf.mxu0
        %v10022 = vadd.f32 %v9933, %v10021
        %v10023 = vpop.f32.mrf.mxu0
        %v10024 = vadd.f32 %v9935, %v10023
        %10025 = vmatmul.bf16.gmra.mxu0 %v1926
        %v10026 = vpop.f32.mrf.mxu0
        %v10027 = vadd.f32 %v9938, %v10026
        %v10028 = vpop.f32.mrf.mxu0
        %v10029 = vadd.f32 %v9940, %v10028
        %10030 = vmatmul.bf16.gmra.mxu0 %v1934
        %v10031 = vpop.f32.mrf.mxu0
        %v10032 = vadd.f32 %v9943, %v10031
        %v10033 = vpop.f32.mrf.mxu0
        %v10034 = vadd.f32 %v9945, %v10033
        %10035 = vmatmul.bf16.gmra.mxu0 %v1942
        %v10036 = vpop.f32.mrf.mxu0
        %v10037 = vadd.f32 %v9948, %v10036
        %v10038 = vpop.f32.mrf.mxu0
        %v10039 = vadd.f32 %v9950, %v10038
        %10040 = vmatmul.bf16.gmra.mxu0 %v1950
        %v10041 = vpop.f32.mrf.mxu0
        %v10042 = vadd.f32 %v9953, %v10041
        %v10043 = vpop.f32.mrf.mxu0
        %v10044 = vadd.f32 %v9955, %v10043
        %10045 = vmatmul.bf16.gmra.mxu0 %v1958
        %v10046 = vpop.f32.mrf.mxu0
        %v10047 = vadd.f32 %v9958, %v10046
        %v10048 = vpop.f32.mrf.mxu0
        %v10049 = vadd.f32 %v9960, %v10048
        %10050 = vmatmul.bf16.gmra.mxu0 %v1966
        %v10051 = vpop.f32.mrf.mxu0
        %v10052 = vadd.f32 %v9963, %v10051
        %v10053 = vpop.f32.mrf.mxu0
        %v10054 = vadd.f32 %v9965, %v10053
        %10055 = vmatmul.bf16.gmra.mxu0 %v1974
        %v10056 = vpop.f32.mrf.mxu0
        %v10057 = vadd.f32 %v9968, %v10056
        %v10058 = vpop.f32.mrf.mxu0
        %v10059 = vadd.f32 %v9970, %v10058
        %10060 = vmatmul.bf16.gmra.mxu0 %v1982
        %v10061 = vpop.f32.mrf.mxu0
        %v10062 = vadd.f32 %v9973, %v10061
        %v10063 = vpop.f32.mrf.mxu0
        %v10064 = vadd.f32 %v9975, %v10063
        %10065 = vmatmul.bf16.gmra.mxu0 %v1990
        %v10066 = vpop.f32.mrf.mxu0
        %v10067 = vadd.f32 %v9978, %v10066
        %v10068 = vpop.f32.mrf.mxu0
        %v10069 = vadd.f32 %v9980, %v10068
        %10070 = vmatmul.bf16.gmra.mxu0 %v1998
        %v10071 = vpop.f32.mrf.mxu0
        %v10072 = vadd.f32 %v9983, %v10071
        %v10073 = vpop.f32.mrf.mxu0
        %v10074 = vadd.f32 %v9985, %v10073
        %10075 = vmatmul.bf16.gmra.mxu0 %v2006
        %v10076 = vpop.f32.mrf.mxu0
        %v10077 = vadd.f32 %v9988, %v10076
        %v10078 = vpop.f32.mrf.mxu0
        %v10079 = vadd.f32 %v9990, %v10078
        %10080 = vdwg.mxu0
        %10081 = vmatpush.bf16.msra.mxu0 %v4136
        %10082 = vmatpush.bf16.msra.mxu0 %v4128
        %10083 = vmatpush.bf16.msra.mxu0 %v4120
        %10084 = vmatpush.bf16.msra.mxu0 %v4112
        %10085 = vmatpush.bf16.msra.mxu0 %v4104
        %10086 = vmatpush.bf16.msra.mxu0 %v4096
        %10087 = vmatpush.bf16.msra.mxu0 %v4088
        %10088 = vmatpush.bf16.msra.mxu0 %v4080
        %10089 = vmatmul.bf16.gmra.mxu0 %v1879
        %v10090 = vpop.f32.mrf.mxu0
        %v10091 = vadd.f32 %v2528, %v10090
        %v10092 = vpop.f32.mrf.mxu0
        %v10093 = vadd.f32 %v2528, %v10092
        %10094 = vmatmul.bf16.gmra.mxu0 %v1887
        %v10095 = vpop.f32.mrf.mxu0
        %v10096 = vadd.f32 %v2528, %v10095
        %v10097 = vpop.f32.mrf.mxu0
        %v10098 = vadd.f32 %v2528, %v10097
        %10099 = vmatmul.bf16.gmra.mxu0 %v1895
        %v10100 = vpop.f32.mrf.mxu0
        %v10101 = vadd.f32 %v2528, %v10100
        %v10102 = vpop.f32.mrf.mxu0
        %v10103 = vadd.f32 %v2528, %v10102
        %10104 = vmatmul.bf16.gmra.mxu0 %v1903
        %v10105 = vpop.f32.mrf.mxu0
        %v10106 = vadd.f32 %v2528, %v10105
        %v10107 = vpop.f32.mrf.mxu0
        %v10108 = vadd.f32 %v2528, %v10107
        %10109 = vmatmul.bf16.gmra.mxu0 %v1911
        %v10110 = vpop.f32.mrf.mxu0
        %v10111 = vadd.f32 %v2528, %v10110
        %v10112 = vpop.f32.mrf.mxu0
        %v10113 = vadd.f32 %v2528, %v10112
        %10114 = vmatmul.bf16.gmra.mxu0 %v1919
        %v10115 = vpop.f32.mrf.mxu0
        %v10116 = vadd.f32 %v2528, %v10115
        %v10117 = vpop.f32.mrf.mxu0
        %v10118 = vadd.f32 %v2528, %v10117
        %10119 = vmatmul.bf16.gmra.mxu0 %v1927
        %v10120 = vpop.f32.mrf.mxu0
        %v10121 = vadd.f32 %v2528, %v10120
        %v10122 = vpop.f32.mrf.mxu0
        %v10123 = vadd.f32 %v2528, %v10122
        %10124 = vmatmul.bf16.gmra.mxu0 %v1935
        %v10125 = vpop.f32.mrf.mxu0
        %v10126 = vadd.f32 %v2528, %v10125
        %v10127 = vpop.f32.mrf.mxu0
        %v10128 = vadd.f32 %v2528, %v10127
        %10129 = vmatmul.bf16.gmra.mxu0 %v1943
        %v10130 = vpop.f32.mrf.mxu0
        %v10131 = vadd.f32 %v2528, %v10130
        %v10132 = vpop.f32.mrf.mxu0
        %v10133 = vadd.f32 %v2528, %v10132
        %10134 = vmatmul.bf16.gmra.mxu0 %v1951
        %v10135 = vpop.f32.mrf.mxu0
        %v10136 = vadd.f32 %v2528, %v10135
        %v10137 = vpop.f32.mrf.mxu0
        %v10138 = vadd.f32 %v2528, %v10137
        %10139 = vmatmul.bf16.gmra.mxu0 %v1959
        %v10140 = vpop.f32.mrf.mxu0
        %v10141 = vadd.f32 %v2528, %v10140
        %v10142 = vpop.f32.mrf.mxu0
        %v10143 = vadd.f32 %v2528, %v10142
        %10144 = vmatmul.bf16.gmra.mxu0 %v1967
        %v10145 = vpop.f32.mrf.mxu0
        %v10146 = vadd.f32 %v2528, %v10145
        %v10147 = vpop.f32.mrf.mxu0
        %v10148 = vadd.f32 %v2528, %v10147
        %10149 = vmatmul.bf16.gmra.mxu0 %v1975
        %v10150 = vpop.f32.mrf.mxu0
        %v10151 = vadd.f32 %v2528, %v10150
        %v10152 = vpop.f32.mrf.mxu0
        %v10153 = vadd.f32 %v2528, %v10152
        %10154 = vmatmul.bf16.gmra.mxu0 %v1983
        %v10155 = vpop.f32.mrf.mxu0
        %v10156 = vadd.f32 %v2528, %v10155
        %v10157 = vpop.f32.mrf.mxu0
        %v10158 = vadd.f32 %v2528, %v10157
        %10159 = vmatmul.bf16.gmra.mxu0 %v1991
        %v10160 = vpop.f32.mrf.mxu0
        %v10161 = vadd.f32 %v2528, %v10160
        %v10162 = vpop.f32.mrf.mxu0
        %v10163 = vadd.f32 %v2528, %v10162
        %10164 = vmatmul.bf16.gmra.mxu0 %v1999
        %v10165 = vpop.f32.mrf.mxu0
        %v10166 = vadd.f32 %v2528, %v10165
        %v10167 = vpop.f32.mrf.mxu0
        %v10168 = vadd.f32 %v2528, %v10167
        %10169 = vdwg.mxu0
        %10170 = vmatpush.bf16.msra.mxu0 %v4200
        %10171 = vmatpush.bf16.msra.mxu0 %v4192
        %10172 = vmatpush.bf16.msra.mxu0 %v4184
        %10173 = vmatpush.bf16.msra.mxu0 %v4176
        %10174 = vmatpush.bf16.msra.mxu0 %v4168
        %10175 = vmatpush.bf16.msra.mxu0 %v4160
        %10176 = vmatpush.bf16.msra.mxu0 %v4152
        %10177 = vmatpush.bf16.msra.mxu0 %v4144
        %10178 = vmatmul.bf16.gmra.mxu0 %v1880
        %v10179 = vpop.f32.mrf.mxu0
        %v10180 = vadd.f32 %v10091, %v10179
        %v10181 = vpop.f32.mrf.mxu0
        %v10182 = vadd.f32 %v10093, %v10181
        %10183 = vmatmul.bf16.gmra.mxu0 %v1888
        %v10184 = vpop.f32.mrf.mxu0
        %v10185 = vadd.f32 %v10096, %v10184
        %v10186 = vpop.f32.mrf.mxu0
        %v10187 = vadd.f32 %v10098, %v10186
        %10188 = vmatmul.bf16.gmra.mxu0 %v1896
        %v10189 = vpop.f32.mrf.mxu0
        %v10190 = vadd.f32 %v10101, %v10189
        %v10191 = vpop.f32.mrf.mxu0
        %v10192 = vadd.f32 %v10103, %v10191
        %10193 = vmatmul.bf16.gmra.mxu0 %v1904
        %v10194 = vpop.f32.mrf.mxu0
        %v10195 = vadd.f32 %v10106, %v10194
        %v10196 = vpop.f32.mrf.mxu0
        %v10197 = vadd.f32 %v10108, %v10196
        %10198 = vmatmul.bf16.gmra.mxu0 %v1912
        %v10199 = vpop.f32.mrf.mxu0
        %v10200 = vadd.f32 %v10111, %v10199
        %v10201 = vpop.f32.mrf.mxu0
        %v10202 = vadd.f32 %v10113, %v10201
        %10203 = vmatmul.bf16.gmra.mxu0 %v1920
        %v10204 = vpop.f32.mrf.mxu0
        %v10205 = vadd.f32 %v10116, %v10204
        %v10206 = vpop.f32.mrf.mxu0
        %v10207 = vadd.f32 %v10118, %v10206
        %10208 = vmatmul.bf16.gmra.mxu0 %v1928
        %v10209 = vpop.f32.mrf.mxu0
        %v10210 = vadd.f32 %v10121, %v10209
        %v10211 = vpop.f32.mrf.mxu0
        %v10212 = vadd.f32 %v10123, %v10211
        %10213 = vmatmul.bf16.gmra.mxu0 %v1936
        %v10214 = vpop.f32.mrf.mxu0
        %v10215 = vadd.f32 %v10126, %v10214
        %v10216 = vpop.f32.mrf.mxu0
        %v10217 = vadd.f32 %v10128, %v10216
        %10218 = vmatmul.bf16.gmra.mxu0 %v1944
        %v10219 = vpop.f32.mrf.mxu0
        %v10220 = vadd.f32 %v10131, %v10219
        %v10221 = vpop.f32.mrf.mxu0
        %v10222 = vadd.f32 %v10133, %v10221
        %10223 = vmatmul.bf16.gmra.mxu0 %v1952
        %v10224 = vpop.f32.mrf.mxu0
        %v10225 = vadd.f32 %v10136, %v10224
        %v10226 = vpop.f32.mrf.mxu0
        %v10227 = vadd.f32 %v10138, %v10226
        %10228 = vmatmul.bf16.gmra.mxu0 %v1960
        %v10229 = vpop.f32.mrf.mxu0
        %v10230 = vadd.f32 %v10141, %v10229
        %v10231 = vpop.f32.mrf.mxu0
        %v10232 = vadd.f32 %v10143, %v10231
        %10233 = vmatmul.bf16.gmra.mxu0 %v1968
        %v10234 = vpop.f32.mrf.mxu0
        %v10235 = vadd.f32 %v10146, %v10234
        %v10236 = vpop.f32.mrf.mxu0
        %v10237 = vadd.f32 %v10148, %v10236
        %10238 = vmatmul.bf16.gmra.mxu0 %v1976
        %v10239 = vpop.f32.mrf.mxu0
        %v10240 = vadd.f32 %v10151, %v10239
        %v10241 = vpop.f32.mrf.mxu0
        %v10242 = vadd.f32 %v10153, %v10241
        %10243 = vmatmul.bf16.gmra.mxu0 %v1984
        %v10244 = vpop.f32.mrf.mxu0
        %v10245 = vadd.f32 %v10156, %v10244
        %v10246 = vpop.f32.mrf.mxu0
        %v10247 = vadd.f32 %v10158, %v10246
        %10248 = vmatmul.bf16.gmra.mxu0 %v1992
        %v10249 = vpop.f32.mrf.mxu0
        %v10250 = vadd.f32 %v10161, %v10249
        %v10251 = vpop.f32.mrf.mxu0
        %v10252 = vadd.f32 %v10163, %v10251
        %10253 = vmatmul.bf16.gmra.mxu0 %v2000
        %v10254 = vpop.f32.mrf.mxu0
        %v10255 = vadd.f32 %v10166, %v10254
        %v10256 = vpop.f32.mrf.mxu0
        %v10257 = vadd.f32 %v10168, %v10256
        %10258 = vdwg.mxu0
        %10259 = vmatpush.bf16.msra.mxu0 %v4264
        %10260 = vmatpush.bf16.msra.mxu0 %v4256
        %10261 = vmatpush.bf16.msra.mxu0 %v4248
        %10262 = vmatpush.bf16.msra.mxu0 %v4240
        %10263 = vmatpush.bf16.msra.mxu0 %v4232
        %10264 = vmatpush.bf16.msra.mxu0 %v4224
        %10265 = vmatpush.bf16.msra.mxu0 %v4216
        %10266 = vmatpush.bf16.msra.mxu0 %v4208
        %10267 = vmatmul.bf16.gmra.mxu0 %v1881
        %v10268 = vpop.f32.mrf.mxu0
        %v10269 = vadd.f32 %v10180, %v10268
        %v10270 = vpop.f32.mrf.mxu0
        %v10271 = vadd.f32 %v10182, %v10270
        %10272 = vmatmul.bf16.gmra.mxu0 %v1889
        %v10273 = vpop.f32.mrf.mxu0
        %v10274 = vadd.f32 %v10185, %v10273
        %v10275 = vpop.f32.mrf.mxu0
        %v10276 = vadd.f32 %v10187, %v10275
        %10277 = vmatmul.bf16.gmra.mxu0 %v1897
        %v10278 = vpop.f32.mrf.mxu0
        %v10279 = vadd.f32 %v10190, %v10278
        %v10280 = vpop.f32.mrf.mxu0
        %v10281 = vadd.f32 %v10192, %v10280
        %10282 = vmatmul.bf16.gmra.mxu0 %v1905
        %v10283 = vpop.f32.mrf.mxu0
        %v10284 = vadd.f32 %v10195, %v10283
        %v10285 = vpop.f32.mrf.mxu0
        %v10286 = vadd.f32 %v10197, %v10285
        %10287 = vmatmul.bf16.gmra.mxu0 %v1913
        %v10288 = vpop.f32.mrf.mxu0
        %v10289 = vadd.f32 %v10200, %v10288
        %v10290 = vpop.f32.mrf.mxu0
        %v10291 = vadd.f32 %v10202, %v10290
        %10292 = vmatmul.bf16.gmra.mxu0 %v1921
        %v10293 = vpop.f32.mrf.mxu0
        %v10294 = vadd.f32 %v10205, %v10293
        %v10295 = vpop.f32.mrf.mxu0
        %v10296 = vadd.f32 %v10207, %v10295
        %10297 = vmatmul.bf16.gmra.mxu0 %v1929
        %v10298 = vpop.f32.mrf.mxu0
        %v10299 = vadd.f32 %v10210, %v10298
        %v10300 = vpop.f32.mrf.mxu0
        %v10301 = vadd.f32 %v10212, %v10300
        %10302 = vmatmul.bf16.gmra.mxu0 %v1937
        %v10303 = vpop.f32.mrf.mxu0
        %v10304 = vadd.f32 %v10215, %v10303
        %v10305 = vpop.f32.mrf.mxu0
        %v10306 = vadd.f32 %v10217, %v10305
        %10307 = vmatmul.bf16.gmra.mxu0 %v1945
        %v10308 = vpop.f32.mrf.mxu0
        %v10309 = vadd.f32 %v10220, %v10308
        %v10310 = vpop.f32.mrf.mxu0
        %v10311 = vadd.f32 %v10222, %v10310
        %10312 = vmatmul.bf16.gmra.mxu0 %v1953
        %v10313 = vpop.f32.mrf.mxu0
        %v10314 = vadd.f32 %v10225, %v10313
        %v10315 = vpop.f32.mrf.mxu0
        %v10316 = vadd.f32 %v10227, %v10315
        %10317 = vmatmul.bf16.gmra.mxu0 %v1961
        %v10318 = vpop.f32.mrf.mxu0
        %v10319 = vadd.f32 %v10230, %v10318
        %v10320 = vpop.f32.mrf.mxu0
        %v10321 = vadd.f32 %v10232, %v10320
        %10322 = vmatmul.bf16.gmra.mxu0 %v1969
        %v10323 = vpop.f32.mrf.mxu0
        %v10324 = vadd.f32 %v10235, %v10323
        %v10325 = vpop.f32.mrf.mxu0
        %v10326 = vadd.f32 %v10237, %v10325
        %10327 = vmatmul.bf16.gmra.mxu0 %v1977
        %v10328 = vpop.f32.mrf.mxu0
        %v10329 = vadd.f32 %v10240, %v10328
        %v10330 = vpop.f32.mrf.mxu0
        %v10331 = vadd.f32 %v10242, %v10330
        %10332 = vmatmul.bf16.gmra.mxu0 %v1985
        %v10333 = vpop.f32.mrf.mxu0
        %v10334 = vadd.f32 %v10245, %v10333
        %v10335 = vpop.f32.mrf.mxu0
        %v10336 = vadd.f32 %v10247, %v10335
        %10337 = vmatmul.bf16.gmra.mxu0 %v1993
        %v10338 = vpop.f32.mrf.mxu0
        %v10339 = vadd.f32 %v10250, %v10338
        %v10340 = vpop.f32.mrf.mxu0
        %v10341 = vadd.f32 %v10252, %v10340
        %10342 = vmatmul.bf16.gmra.mxu0 %v2001
        %v10343 = vpop.f32.mrf.mxu0
        %v10344 = vadd.f32 %v10255, %v10343
        %v10345 = vpop.f32.mrf.mxu0
        %v10346 = vadd.f32 %v10257, %v10345
        %10347 = vdwg.mxu0
        %10348 = vmatpush.bf16.msra.mxu0 %v4328
        %10349 = vmatpush.bf16.msra.mxu0 %v4320
        %10350 = vmatpush.bf16.msra.mxu0 %v4312
        %10351 = vmatpush.bf16.msra.mxu0 %v4304
        %10352 = vmatpush.bf16.msra.mxu0 %v4296
        %10353 = vmatpush.bf16.msra.mxu0 %v4288
        %10354 = vmatpush.bf16.msra.mxu0 %v4280
        %10355 = vmatpush.bf16.msra.mxu0 %v4272
        %10356 = vmatmul.bf16.gmra.mxu0 %v1882
        %v10357 = vpop.f32.mrf.mxu0
        %v10358 = vadd.f32 %v10269, %v10357
        %v10359 = vpop.f32.mrf.mxu0
        %v10360 = vadd.f32 %v10271, %v10359
        %10361 = vmatmul.bf16.gmra.mxu0 %v1890
        %v10362 = vpop.f32.mrf.mxu0
        %v10363 = vadd.f32 %v10274, %v10362
        %v10364 = vpop.f32.mrf.mxu0
        %v10365 = vadd.f32 %v10276, %v10364
        %10366 = vmatmul.bf16.gmra.mxu0 %v1898
        %v10367 = vpop.f32.mrf.mxu0
        %v10368 = vadd.f32 %v10279, %v10367
        %v10369 = vpop.f32.mrf.mxu0
        %v10370 = vadd.f32 %v10281, %v10369
        %10371 = vmatmul.bf16.gmra.mxu0 %v1906
        %v10372 = vpop.f32.mrf.mxu0
        %v10373 = vadd.f32 %v10284, %v10372
        %v10374 = vpop.f32.mrf.mxu0
        %v10375 = vadd.f32 %v10286, %v10374
        %10376 = vmatmul.bf16.gmra.mxu0 %v1914
        %v10377 = vpop.f32.mrf.mxu0
        %v10378 = vadd.f32 %v10289, %v10377
        %v10379 = vpop.f32.mrf.mxu0
        %v10380 = vadd.f32 %v10291, %v10379
        %10381 = vmatmul.bf16.gmra.mxu0 %v1922
        %v10382 = vpop.f32.mrf.mxu0
        %v10383 = vadd.f32 %v10294, %v10382
        %v10384 = vpop.f32.mrf.mxu0
        %v10385 = vadd.f32 %v10296, %v10384
        %10386 = vmatmul.bf16.gmra.mxu0 %v1930
        %v10387 = vpop.f32.mrf.mxu0
        %v10388 = vadd.f32 %v10299, %v10387
        %v10389 = vpop.f32.mrf.mxu0
        %v10390 = vadd.f32 %v10301, %v10389
        %10391 = vmatmul.bf16.gmra.mxu0 %v1938
        %v10392 = vpop.f32.mrf.mxu0
        %v10393 = vadd.f32 %v10304, %v10392
        %v10394 = vpop.f32.mrf.mxu0
        %v10395 = vadd.f32 %v10306, %v10394
        %10396 = vmatmul.bf16.gmra.mxu0 %v1946
        %v10397 = vpop.f32.mrf.mxu0
        %v10398 = vadd.f32 %v10309, %v10397
        %v10399 = vpop.f32.mrf.mxu0
        %v10400 = vadd.f32 %v10311, %v10399
        %10401 = vmatmul.bf16.gmra.mxu0 %v1954
        %v10402 = vpop.f32.mrf.mxu0
        %v10403 = vadd.f32 %v10314, %v10402
        %v10404 = vpop.f32.mrf.mxu0
        %v10405 = vadd.f32 %v10316, %v10404
        %10406 = vmatmul.bf16.gmra.mxu0 %v1962
        %v10407 = vpop.f32.mrf.mxu0
        %v10408 = vadd.f32 %v10319, %v10407
        %v10409 = vpop.f32.mrf.mxu0
        %v10410 = vadd.f32 %v10321, %v10409
        %10411 = vmatmul.bf16.gmra.mxu0 %v1970
        %v10412 = vpop.f32.mrf.mxu0
        %v10413 = vadd.f32 %v10324, %v10412
        %v10414 = vpop.f32.mrf.mxu0
        %v10415 = vadd.f32 %v10326, %v10414
        %10416 = vmatmul.bf16.gmra.mxu0 %v1978
        %v10417 = vpop.f32.mrf.mxu0
        %v10418 = vadd.f32 %v10329, %v10417
        %v10419 = vpop.f32.mrf.mxu0
        %v10420 = vadd.f32 %v10331, %v10419
        %10421 = vmatmul.bf16.gmra.mxu0 %v1986
        %v10422 = vpop.f32.mrf.mxu0
        %v10423 = vadd.f32 %v10334, %v10422
        %v10424 = vpop.f32.mrf.mxu0
        %v10425 = vadd.f32 %v10336, %v10424
        %10426 = vmatmul.bf16.gmra.mxu0 %v1994
        %v10427 = vpop.f32.mrf.mxu0
        %v10428 = vadd.f32 %v10339, %v10427
        %v10429 = vpop.f32.mrf.mxu0
        %v10430 = vadd.f32 %v10341, %v10429
        %10431 = vmatmul.bf16.gmra.mxu0 %v2002
        %v10432 = vpop.f32.mrf.mxu0
        %v10433 = vadd.f32 %v10344, %v10432
        %v10434 = vpop.f32.mrf.mxu0
        %v10435 = vadd.f32 %v10346, %v10434
        %10436 = vdwg.mxu0
        %10437 = vmatpush.bf16.msra.mxu0 %v4392
        %10438 = vmatpush.bf16.msra.mxu0 %v4384
        %10439 = vmatpush.bf16.msra.mxu0 %v4376
        %10440 = vmatpush.bf16.msra.mxu0 %v4368
        %10441 = vmatpush.bf16.msra.mxu0 %v4360
        %10442 = vmatpush.bf16.msra.mxu0 %v4352
        %10443 = vmatpush.bf16.msra.mxu0 %v4344
        %10444 = vmatpush.bf16.msra.mxu0 %v4336
        %10445 = vmatmul.bf16.gmra.mxu0 %v1883
        %v10446 = vpop.f32.mrf.mxu0
        %v10447 = vadd.f32 %v10358, %v10446
        %v10448 = vpop.f32.mrf.mxu0
        %v10449 = vadd.f32 %v10360, %v10448
        %10450 = vmatmul.bf16.gmra.mxu0 %v1891
        %v10451 = vpop.f32.mrf.mxu0
        %v10452 = vadd.f32 %v10363, %v10451
        %v10453 = vpop.f32.mrf.mxu0
        %v10454 = vadd.f32 %v10365, %v10453
        %10455 = vmatmul.bf16.gmra.mxu0 %v1899
        %v10456 = vpop.f32.mrf.mxu0
        %v10457 = vadd.f32 %v10368, %v10456
        %v10458 = vpop.f32.mrf.mxu0
        %v10459 = vadd.f32 %v10370, %v10458
        %10460 = vmatmul.bf16.gmra.mxu0 %v1907
        %v10461 = vpop.f32.mrf.mxu0
        %v10462 = vadd.f32 %v10373, %v10461
        %v10463 = vpop.f32.mrf.mxu0
        %v10464 = vadd.f32 %v10375, %v10463
        %10465 = vmatmul.bf16.gmra.mxu0 %v1915
        %v10466 = vpop.f32.mrf.mxu0
        %v10467 = vadd.f32 %v10378, %v10466
        %v10468 = vpop.f32.mrf.mxu0
        %v10469 = vadd.f32 %v10380, %v10468
        %10470 = vmatmul.bf16.gmra.mxu0 %v1923
        %v10471 = vpop.f32.mrf.mxu0
        %v10472 = vadd.f32 %v10383, %v10471
        %v10473 = vpop.f32.mrf.mxu0
        %v10474 = vadd.f32 %v10385, %v10473
        %10475 = vmatmul.bf16.gmra.mxu0 %v1931
        %v10476 = vpop.f32.mrf.mxu0
        %v10477 = vadd.f32 %v10388, %v10476
        %v10478 = vpop.f32.mrf.mxu0
        %v10479 = vadd.f32 %v10390, %v10478
        %10480 = vmatmul.bf16.gmra.mxu0 %v1939
        %v10481 = vpop.f32.mrf.mxu0
        %v10482 = vadd.f32 %v10393, %v10481
        %v10483 = vpop.f32.mrf.mxu0
        %v10484 = vadd.f32 %v10395, %v10483
        %10485 = vmatmul.bf16.gmra.mxu0 %v1947
        %v10486 = vpop.f32.mrf.mxu0
        %v10487 = vadd.f32 %v10398, %v10486
        %v10488 = vpop.f32.mrf.mxu0
        %v10489 = vadd.f32 %v10400, %v10488
        %10490 = vmatmul.bf16.gmra.mxu0 %v1955
        %v10491 = vpop.f32.mrf.mxu0
        %v10492 = vadd.f32 %v10403, %v10491
        %v10493 = vpop.f32.mrf.mxu0
        %v10494 = vadd.f32 %v10405, %v10493
        %10495 = vmatmul.bf16.gmra.mxu0 %v1963
        %v10496 = vpop.f32.mrf.mxu0
        %v10497 = vadd.f32 %v10408, %v10496
        %v10498 = vpop.f32.mrf.mxu0
        %v10499 = vadd.f32 %v10410, %v10498
        %10500 = vmatmul.bf16.gmra.mxu0 %v1971
        %v10501 = vpop.f32.mrf.mxu0
        %v10502 = vadd.f32 %v10413, %v10501
        %v10503 = vpop.f32.mrf.mxu0
        %v10504 = vadd.f32 %v10415, %v10503
        %10505 = vmatmul.bf16.gmra.mxu0 %v1979
        %v10506 = vpop.f32.mrf.mxu0
        %v10507 = vadd.f32 %v10418, %v10506
        %v10508 = vpop.f32.mrf.mxu0
        %v10509 = vadd.f32 %v10420, %v10508
        %10510 = vmatmul.bf16.gmra.mxu0 %v1987
        %v10511 = vpop.f32.mrf.mxu0
        %v10512 = vadd.f32 %v10423, %v10511
        %v10513 = vpop.f32.mrf.mxu0
        %v10514 = vadd.f32 %v10425, %v10513
        %10515 = vmatmul.bf16.gmra.mxu0 %v1995
        %v10516 = vpop.f32.mrf.mxu0
        %v10517 = vadd.f32 %v10428, %v10516
        %v10518 = vpop.f32.mrf.mxu0
        %v10519 = vadd.f32 %v10430, %v10518
        %10520 = vmatmul.bf16.gmra.mxu0 %v2003
        %v10521 = vpop.f32.mrf.mxu0
        %v10522 = vadd.f32 %v10433, %v10521
        %v10523 = vpop.f32.mrf.mxu0
        %v10524 = vadd.f32 %v10435, %v10523
        %10525 = vdwg.mxu0
        %10526 = vmatpush.bf16.msra.mxu0 %v4456
        %10527 = vmatpush.bf16.msra.mxu0 %v4448
        %10528 = vmatpush.bf16.msra.mxu0 %v4440
        %10529 = vmatpush.bf16.msra.mxu0 %v4432
        %10530 = vmatpush.bf16.msra.mxu0 %v4424
        %10531 = vmatpush.bf16.msra.mxu0 %v4416
        %10532 = vmatpush.bf16.msra.mxu0 %v4408
        %10533 = vmatpush.bf16.msra.mxu0 %v4400
        %10534 = vmatmul.bf16.gmra.mxu0 %v1884
        %v10535 = vpop.f32.mrf.mxu0
        %v10536 = vadd.f32 %v10447, %v10535
        %v10537 = vpop.f32.mrf.mxu0
        %v10538 = vadd.f32 %v10449, %v10537
        %10539 = vmatmul.bf16.gmra.mxu0 %v1892
        %v10540 = vpop.f32.mrf.mxu0
        %v10541 = vadd.f32 %v10452, %v10540
        %v10542 = vpop.f32.mrf.mxu0
        %v10543 = vadd.f32 %v10454, %v10542
        %10544 = vmatmul.bf16.gmra.mxu0 %v1900
        %v10545 = vpop.f32.mrf.mxu0
        %v10546 = vadd.f32 %v10457, %v10545
        %v10547 = vpop.f32.mrf.mxu0
        %v10548 = vadd.f32 %v10459, %v10547
        %10549 = vmatmul.bf16.gmra.mxu0 %v1908
        %v10550 = vpop.f32.mrf.mxu0
        %v10551 = vadd.f32 %v10462, %v10550
        %v10552 = vpop.f32.mrf.mxu0
        %v10553 = vadd.f32 %v10464, %v10552
        %10554 = vmatmul.bf16.gmra.mxu0 %v1916
        %v10555 = vpop.f32.mrf.mxu0
        %v10556 = vadd.f32 %v10467, %v10555
        %v10557 = vpop.f32.mrf.mxu0
        %v10558 = vadd.f32 %v10469, %v10557
        %10559 = vmatmul.bf16.gmra.mxu0 %v1924
        %v10560 = vpop.f32.mrf.mxu0
        %v10561 = vadd.f32 %v10472, %v10560
        %v10562 = vpop.f32.mrf.mxu0
        %v10563 = vadd.f32 %v10474, %v10562
        %10564 = vmatmul.bf16.gmra.mxu0 %v1932
        %v10565 = vpop.f32.mrf.mxu0
        %v10566 = vadd.f32 %v10477, %v10565
        %v10567 = vpop.f32.mrf.mxu0
        %v10568 = vadd.f32 %v10479, %v10567
        %10569 = vmatmul.bf16.gmra.mxu0 %v1940
        %v10570 = vpop.f32.mrf.mxu0
        %v10571 = vadd.f32 %v10482, %v10570
        %v10572 = vpop.f32.mrf.mxu0
        %v10573 = vadd.f32 %v10484, %v10572
        %10574 = vmatmul.bf16.gmra.mxu0 %v1948
        %v10575 = vpop.f32.mrf.mxu0
        %v10576 = vadd.f32 %v10487, %v10575
        %v10577 = vpop.f32.mrf.mxu0
        %v10578 = vadd.f32 %v10489, %v10577
        %10579 = vmatmul.bf16.gmra.mxu0 %v1956
        %v10580 = vpop.f32.mrf.mxu0
        %v10581 = vadd.f32 %v10492, %v10580
        %v10582 = vpop.f32.mrf.mxu0
        %v10583 = vadd.f32 %v10494, %v10582
        %10584 = vmatmul.bf16.gmra.mxu0 %v1964
        %v10585 = vpop.f32.mrf.mxu0
        %v10586 = vadd.f32 %v10497, %v10585
        %v10587 = vpop.f32.mrf.mxu0
        %v10588 = vadd.f32 %v10499, %v10587
        %10589 = vmatmul.bf16.gmra.mxu0 %v1972
        %v10590 = vpop.f32.mrf.mxu0
        %v10591 = vadd.f32 %v10502, %v10590
        %v10592 = vpop.f32.mrf.mxu0
        %v10593 = vadd.f32 %v10504, %v10592
        %10594 = vmatmul.bf16.gmra.mxu0 %v1980
        %v10595 = vpop.f32.mrf.mxu0
        %v10596 = vadd.f32 %v10507, %v10595
        %v10597 = vpop.f32.mrf.mxu0
        %v10598 = vadd.f32 %v10509, %v10597
        %10599 = vmatmul.bf16.gmra.mxu0 %v1988
        %v10600 = vpop.f32.mrf.mxu0
        %v10601 = vadd.f32 %v10512, %v10600
        %v10602 = vpop.f32.mrf.mxu0
        %v10603 = vadd.f32 %v10514, %v10602
        %10604 = vmatmul.bf16.gmra.mxu0 %v1996
        %v10605 = vpop.f32.mrf.mxu0
        %v10606 = vadd.f32 %v10517, %v10605
        %v10607 = vpop.f32.mrf.mxu0
        %v10608 = vadd.f32 %v10519, %v10607
        %10609 = vmatmul.bf16.gmra.mxu0 %v2004
        %v10610 = vpop.f32.mrf.mxu0
        %v10611 = vadd.f32 %v10522, %v10610
        %v10612 = vpop.f32.mrf.mxu0
        %v10613 = vadd.f32 %v10524, %v10612
        %10614 = vdwg.mxu0
        %10615 = vmatpush.bf16.msra.mxu0 %v4520
        %10616 = vmatpush.bf16.msra.mxu0 %v4512
        %10617 = vmatpush.bf16.msra.mxu0 %v4504
        %10618 = vmatpush.bf16.msra.mxu0 %v4496
        %10619 = vmatpush.bf16.msra.mxu0 %v4488
        %10620 = vmatpush.bf16.msra.mxu0 %v4480
        %10621 = vmatpush.bf16.msra.mxu0 %v4472
        %10622 = vmatpush.bf16.msra.mxu0 %v4464
        %10623 = vmatmul.bf16.gmra.mxu0 %v1885
        %v10624 = vpop.f32.mrf.mxu0
        %v10625 = vadd.f32 %v10536, %v10624
        %v10626 = vpop.f32.mrf.mxu0
        %v10627 = vadd.f32 %v10538, %v10626
        %10628 = vmatmul.bf16.gmra.mxu0 %v1893
        %v10629 = vpop.f32.mrf.mxu0
        %v10630 = vadd.f32 %v10541, %v10629
        %v10631 = vpop.f32.mrf.mxu0
        %v10632 = vadd.f32 %v10543, %v10631
        %10633 = vmatmul.bf16.gmra.mxu0 %v1901
        %v10634 = vpop.f32.mrf.mxu0
        %v10635 = vadd.f32 %v10546, %v10634
        %v10636 = vpop.f32.mrf.mxu0
        %v10637 = vadd.f32 %v10548, %v10636
        %10638 = vmatmul.bf16.gmra.mxu0 %v1909
        %v10639 = vpop.f32.mrf.mxu0
        %v10640 = vadd.f32 %v10551, %v10639
        %v10641 = vpop.f32.mrf.mxu0
        %v10642 = vadd.f32 %v10553, %v10641
        %10643 = vmatmul.bf16.gmra.mxu0 %v1917
        %v10644 = vpop.f32.mrf.mxu0
        %v10645 = vadd.f32 %v10556, %v10644
        %v10646 = vpop.f32.mrf.mxu0
        %v10647 = vadd.f32 %v10558, %v10646
        %10648 = vmatmul.bf16.gmra.mxu0 %v1925
        %v10649 = vpop.f32.mrf.mxu0
        %v10650 = vadd.f32 %v10561, %v10649
        %v10651 = vpop.f32.mrf.mxu0
        %v10652 = vadd.f32 %v10563, %v10651
        %10653 = vmatmul.bf16.gmra.mxu0 %v1933
        %v10654 = vpop.f32.mrf.mxu0
        %v10655 = vadd.f32 %v10566, %v10654
        %v10656 = vpop.f32.mrf.mxu0
        %v10657 = vadd.f32 %v10568, %v10656
        %10658 = vmatmul.bf16.gmra.mxu0 %v1941
        %v10659 = vpop.f32.mrf.mxu0
        %v10660 = vadd.f32 %v10571, %v10659
        %v10661 = vpop.f32.mrf.mxu0
        %v10662 = vadd.f32 %v10573, %v10661
        %10663 = vmatmul.bf16.gmra.mxu0 %v1949
        %v10664 = vpop.f32.mrf.mxu0
        %v10665 = vadd.f32 %v10576, %v10664
        %v10666 = vpop.f32.mrf.mxu0
        %v10667 = vadd.f32 %v10578, %v10666
        %10668 = vmatmul.bf16.gmra.mxu0 %v1957
        %v10669 = vpop.f32.mrf.mxu0
        %v10670 = vadd.f32 %v10581, %v10669
        %v10671 = vpop.f32.mrf.mxu0
        %v10672 = vadd.f32 %v10583, %v10671
        %10673 = vmatmul.bf16.gmra.mxu0 %v1965
        %v10674 = vpop.f32.mrf.mxu0
        %v10675 = vadd.f32 %v10586, %v10674
        %v10676 = vpop.f32.mrf.mxu0
        %v10677 = vadd.f32 %v10588, %v10676
        %10678 = vmatmul.bf16.gmra.mxu0 %v1973
        %v10679 = vpop.f32.mrf.mxu0
        %v10680 = vadd.f32 %v10591, %v10679
        %v10681 = vpop.f32.mrf.mxu0
        %v10682 = vadd.f32 %v10593, %v10681
        %10683 = vmatmul.bf16.gmra.mxu0 %v1981
        %v10684 = vpop.f32.mrf.mxu0
        %v10685 = vadd.f32 %v10596, %v10684
        %v10686 = vpop.f32.mrf.mxu0
        %v10687 = vadd.f32 %v10598, %v10686
        %10688 = vmatmul.bf16.gmra.mxu0 %v1989
        %v10689 = vpop.f32.mrf.mxu0
        %v10690 = vadd.f32 %v10601, %v10689
        %v10691 = vpop.f32.mrf.mxu0
        %v10692 = vadd.f32 %v10603, %v10691
        %10693 = vmatmul.bf16.gmra.mxu0 %v1997
        %v10694 = vpop.f32.mrf.mxu0
        %v10695 = vadd.f32 %v10606, %v10694
        %v10696 = vpop.f32.mrf.mxu0
        %v10697 = vadd.f32 %v10608, %v10696
        %10698 = vmatmul.bf16.gmra.mxu0 %v2005
        %v10699 = vpop.f32.mrf.mxu0
        %v10700 = vadd.f32 %v10611, %v10699
        %v10701 = vpop.f32.mrf.mxu0
        %v10702 = vadd.f32 %v10613, %v10701
        %10703 = vdwg.mxu0
        %10704 = vmatpush.bf16.msra.mxu0 %v4584
        %10705 = vmatpush.bf16.msra.mxu0 %v4576
        %10706 = vmatpush.bf16.msra.mxu0 %v4568
        %10707 = vmatpush.bf16.msra.mxu0 %v4560
        %10708 = vmatpush.bf16.msra.mxu0 %v4552
        %10709 = vmatpush.bf16.msra.mxu0 %v4544
        %10710 = vmatpush.bf16.msra.mxu0 %v4536
        %10711 = vmatpush.bf16.msra.mxu0 %v4528
        %10712 = vmatmul.bf16.gmra.mxu0 %v1886
        %v10713 = vpop.f32.mrf.mxu0
        %v10714 = vadd.f32 %v10625, %v10713
        %v10715 = vpop.f32.mrf.mxu0
        %v10716 = vadd.f32 %v10627, %v10715
        %10717 = vmatmul.bf16.gmra.mxu0 %v1894
        %v10718 = vpop.f32.mrf.mxu0
        %v10719 = vadd.f32 %v10630, %v10718
        %v10720 = vpop.f32.mrf.mxu0
        %v10721 = vadd.f32 %v10632, %v10720
        %10722 = vmatmul.bf16.gmra.mxu0 %v1902
        %v10723 = vpop.f32.mrf.mxu0
        %v10724 = vadd.f32 %v10635, %v10723
        %v10725 = vpop.f32.mrf.mxu0
        %v10726 = vadd.f32 %v10637, %v10725
        %10727 = vmatmul.bf16.gmra.mxu0 %v1910
        %v10728 = vpop.f32.mrf.mxu0
        %v10729 = vadd.f32 %v10640, %v10728
        %v10730 = vpop.f32.mrf.mxu0
        %v10731 = vadd.f32 %v10642, %v10730
        %10732 = vmatmul.bf16.gmra.mxu0 %v1918
        %v10733 = vpop.f32.mrf.mxu0
        %v10734 = vadd.f32 %v10645, %v10733
        %v10735 = vpop.f32.mrf.mxu0
        %v10736 = vadd.f32 %v10647, %v10735
        %10737 = vmatmul.bf16.gmra.mxu0 %v1926
        %v10738 = vpop.f32.mrf.mxu0
        %v10739 = vadd.f32 %v10650, %v10738
        %v10740 = vpop.f32.mrf.mxu0
        %v10741 = vadd.f32 %v10652, %v10740
        %10742 = vmatmul.bf16.gmra.mxu0 %v1934
        %v10743 = vpop.f32.mrf.mxu0
        %v10744 = vadd.f32 %v10655, %v10743
        %v10745 = vpop.f32.mrf.mxu0
        %v10746 = vadd.f32 %v10657, %v10745
        %10747 = vmatmul.bf16.gmra.mxu0 %v1942
        %v10748 = vpop.f32.mrf.mxu0
        %v10749 = vadd.f32 %v10660, %v10748
        %v10750 = vpop.f32.mrf.mxu0
        %v10751 = vadd.f32 %v10662, %v10750
        %10752 = vmatmul.bf16.gmra.mxu0 %v1950
        %v10753 = vpop.f32.mrf.mxu0
        %v10754 = vadd.f32 %v10665, %v10753
        %v10755 = vpop.f32.mrf.mxu0
        %v10756 = vadd.f32 %v10667, %v10755
        %10757 = vmatmul.bf16.gmra.mxu0 %v1958
        %v10758 = vpop.f32.mrf.mxu0
        %v10759 = vadd.f32 %v10670, %v10758
        %v10760 = vpop.f32.mrf.mxu0
        %v10761 = vadd.f32 %v10672, %v10760
        %10762 = vmatmul.bf16.gmra.mxu0 %v1966
        %v10763 = vpop.f32.mrf.mxu0
        %v10764 = vadd.f32 %v10675, %v10763
        %v10765 = vpop.f32.mrf.mxu0
        %v10766 = vadd.f32 %v10677, %v10765
        %10767 = vmatmul.bf16.gmra.mxu0 %v1974
        %v10768 = vpop.f32.mrf.mxu0
        %v10769 = vadd.f32 %v10680, %v10768
        %v10770 = vpop.f32.mrf.mxu0
        %v10771 = vadd.f32 %v10682, %v10770
        %10772 = vmatmul.bf16.gmra.mxu0 %v1982
        %v10773 = vpop.f32.mrf.mxu0
        %v10774 = vadd.f32 %v10685, %v10773
        %v10775 = vpop.f32.mrf.mxu0
        %v10776 = vadd.f32 %v10687, %v10775
        %10777 = vmatmul.bf16.gmra.mxu0 %v1990
        %v10778 = vpop.f32.mrf.mxu0
        %v10779 = vadd.f32 %v10690, %v10778
        %v10780 = vpop.f32.mrf.mxu0
        %v10781 = vadd.f32 %v10692, %v10780
        %10782 = vmatmul.bf16.gmra.mxu0 %v1998
        %v10783 = vpop.f32.mrf.mxu0
        %v10784 = vadd.f32 %v10695, %v10783
        %v10785 = vpop.f32.mrf.mxu0
        %v10786 = vadd.f32 %v10697, %v10785
        %10787 = vmatmul.bf16.gmra.mxu0 %v2006
        %v10788 = vpop.f32.mrf.mxu0
        %v10789 = vadd.f32 %v10700, %v10788
        %v10790 = vpop.f32.mrf.mxu0
        %v10791 = vadd.f32 %v10702, %v10790
        %10792 = vdwg.mxu0
        %v10793 = vmax.f32 %v5730, 0.0
        %v10794 = vmax.f32 %v6442, 0.0
        %v10795 = vmax.f32 %v7154, 0.0
        %v10796 = vmax.f32 %v7866, 0.0
        %v10797 = vmax.f32 %v8578, 0.0
        %v10798 = vmax.f32 %v9290, 0.0
        %v10799 = vmax.f32 %v10002, 0.0
        %v10800 = vmax.f32 %v10714, 0.0
        %v10801 = vmax.f32 %v5732, 0.0
        %v10802 = vmax.f32 %v6444, 0.0
        %v10803 = vmax.f32 %v7156, 0.0
        %v10804 = vmax.f32 %v7868, 0.0
        %v10805 = vmax.f32 %v8580, 0.0
        %v10806 = vmax.f32 %v9292, 0.0
        %v10807 = vmax.f32 %v10004, 0.0
        %v10808 = vmax.f32 %v10716, 0.0
        %v10809 = vmax.f32 %v5735, 0.0
        %v10810 = vmax.f32 %v6447, 0.0
        %v10811 = vmax.f32 %v7159, 0.0
        %v10812 = vmax.f32 %v7871, 0.0
        %v10813 = vmax.f32 %v8583, 0.0
        %v10814 = vmax.f32 %v9295, 0.0
        %v10815 = vmax.f32 %v10007, 0.0
        %v10816 = vmax.f32 %v10719, 0.0
        %v10817 = vmax.f32 %v5737, 0.0
        %v10818 = vmax.f32 %v6449, 0.0
        %v10819 = vmax.f32 %v7161, 0.0
        %v10820 = vmax.f32 %v7873, 0.0
        %v10821 = vmax.f32 %v8585, 0.0
        %v10822 = vmax.f32 %v9297, 0.0
        %v10823 = vmax.f32 %v10009, 0.0
        %v10824 = vmax.f32 %v10721, 0.0
        %v10825 = vmax.f32 %v5740, 0.0
        %v10826 = vmax.f32 %v6452, 0.0
        %v10827 = vmax.f32 %v7164, 0.0
        %v10828 = vmax.f32 %v7876, 0.0
        %v10829 = vmax.f32 %v8588, 0.0
        %v10830 = vmax.f32 %v9300, 0.0
        %v10831 = vmax.f32 %v10012, 0.0
        %v10832 = vmax.f32 %v10724, 0.0
        %v10833 = vmax.f32 %v5742, 0.0
        %v10834 = vmax.f32 %v6454, 0.0
        %v10835 = vmax.f32 %v7166, 0.0
        %v10836 = vmax.f32 %v7878, 0.0
        %v10837 = vmax.f32 %v8590, 0.0
        %v10838 = vmax.f32 %v9302, 0.0
        %v10839 = vmax.f32 %v10014, 0.0
        %v10840 = vmax.f32 %v10726, 0.0
        %v10841 = vmax.f32 %v5745, 0.0
        %v10842 = vmax.f32 %v6457, 0.0
        %v10843 = vmax.f32 %v7169, 0.0
        %v10844 = vmax.f32 %v7881, 0.0
        %v10845 = vmax.f32 %v8593, 0.0
        %v10846 = vmax.f32 %v9305, 0.0
        %v10847 = vmax.f32 %v10017, 0.0
        %v10848 = vmax.f32 %v10729, 0.0
        %v10849 = vmax.f32 %v5747, 0.0
        %v10850 = vmax.f32 %v6459, 0.0
        %v10851 = vmax.f32 %v7171, 0.0
        %v10852 = vmax.f32 %v7883, 0.0
        %v10853 = vmax.f32 %v8595, 0.0
        %v10854 = vmax.f32 %v9307, 0.0
        %v10855 = vmax.f32 %v10019, 0.0
        %v10856 = vmax.f32 %v10731, 0.0
        %v10857 = vmax.f32 %v5750, 0.0
        %v10858 = vmax.f32 %v6462, 0.0
        %v10859 = vmax.f32 %v7174, 0.0
        %v10860 = vmax.f32 %v7886, 0.0
        %v10861 = vmax.f32 %v8598, 0.0
        %v10862 = vmax.f32 %v9310, 0.0
        %v10863 = vmax.f32 %v10022, 0.0
        %v10864 = vmax.f32 %v10734, 0.0
        %v10865 = vmax.f32 %v5752, 0.0
        %v10866 = vmax.f32 %v6464, 0.0
        %v10867 = vmax.f32 %v7176, 0.0
        %v10868 = vmax.f32 %v7888, 0.0
        %v10869 = vmax.f32 %v8600, 0.0
        %v10870 = vmax.f32 %v9312, 0.0
        %v10871 = vmax.f32 %v10024, 0.0
        %v10872 = vmax.f32 %v10736, 0.0
        %v10873 = vmax.f32 %v5755, 0.0
        %v10874 = vmax.f32 %v6467, 0.0
        %v10875 = vmax.f32 %v7179, 0.0
        %v10876 = vmax.f32 %v7891, 0.0
        %v10877 = vmax.f32 %v8603, 0.0
        %v10878 = vmax.f32 %v9315, 0.0
        %v10879 = vmax.f32 %v10027, 0.0
        %v10880 = vmax.f32 %v10739, 0.0
        %v10881 = vmax.f32 %v5757, 0.0
        %v10882 = vmax.f32 %v6469, 0.0
        %v10883 = vmax.f32 %v7181, 0.0
        %v10884 = vmax.f32 %v7893, 0.0
        %v10885 = vmax.f32 %v8605, 0.0
        %v10886 = vmax.f32 %v9317, 0.0
        %v10887 = vmax.f32 %v10029, 0.0
        %v10888 = vmax.f32 %v10741, 0.0
        %v10889 = vmax.f32 %v5760, 0.0
        %v10890 = vmax.f32 %v6472, 0.0
        %v10891 = vmax.f32 %v7184, 0.0
        %v10892 = vmax.f32 %v7896, 0.0
        %v10893 = vmax.f32 %v8608, 0.0
        %v10894 = vmax.f32 %v9320, 0.0
        %v10895 = vmax.f32 %v10032, 0.0
        %v10896 = vmax.f32 %v10744, 0.0
        %v10897 = vmax.f32 %v5762, 0.0
        %v10898 = vmax.f32 %v6474, 0.0
        %v10899 = vmax.f32 %v7186, 0.0
        %v10900 = vmax.f32 %v7898, 0.0
        %v10901 = vmax.f32 %v8610, 0.0
        %v10902 = vmax.f32 %v9322, 0.0
        %v10903 = vmax.f32 %v10034, 0.0
        %v10904 = vmax.f32 %v10746, 0.0
        %v10905 = vmax.f32 %v5765, 0.0
        %v10906 = vmax.f32 %v6477, 0.0
        %v10907 = vmax.f32 %v7189, 0.0
        %v10908 = vmax.f32 %v7901, 0.0
        %v10909 = vmax.f32 %v8613, 0.0
        %v10910 = vmax.f32 %v9325, 0.0
        %v10911 = vmax.f32 %v10037, 0.0
        %v10912 = vmax.f32 %v10749, 0.0
        %v10913 = vmax.f32 %v5767, 0.0
        %v10914 = vmax.f32 %v6479, 0.0
        %v10915 = vmax.f32 %v7191, 0.0
        %v10916 = vmax.f32 %v7903, 0.0
        %v10917 = vmax.f32 %v8615, 0.0
        %v10918 = vmax.f32 %v9327, 0.0
        %v10919 = vmax.f32 %v10039, 0.0
        %v10920 = vmax.f32 %v10751, 0.0
        %v10921 = vmax.f32 %v5770, 0.0
        %v10922 = vmax.f32 %v6482, 0.0
        %v10923 = vmax.f32 %v7194, 0.0
        %v10924 = vmax.f32 %v7906, 0.0
        %v10925 = vmax.f32 %v8618, 0.0
        %v10926 = vmax.f32 %v9330, 0.0
        %v10927 = vmax.f32 %v10042, 0.0
        %v10928 = vmax.f32 %v10754, 0.0
        %v10929 = vmax.f32 %v5772, 0.0
        %v10930 = vmax.f32 %v6484, 0.0
        %v10931 = vmax.f32 %v7196, 0.0
        %v10932 = vmax.f32 %v7908, 0.0
        %v10933 = vmax.f32 %v8620, 0.0
        %v10934 = vmax.f32 %v9332, 0.0
        %v10935 = vmax.f32 %v10044, 0.0
        %v10936 = vmax.f32 %v10756, 0.0
        %v10937 = vmax.f32 %v5775, 0.0
        %v10938 = vmax.f32 %v6487, 0.0
        %v10939 = vmax.f32 %v7199, 0.0
        %v10940 = vmax.f32 %v7911, 0.0
        %v10941 = vmax.f32 %v8623, 0.0
        %v10942 = vmax.f32 %v9335, 0.0
        %v10943 = vmax.f32 %v10047, 0.0
        %v10944 = vmax.f32 %v10759, 0.0
        %v10945 = vmax.f32 %v5777, 0.0
        %v10946 = vmax.f32 %v6489, 0.0
        %v10947 = vmax.f32 %v7201, 0.0
        %v10948 = vmax.f32 %v7913, 0.0
        %v10949 = vmax.f32 %v8625, 0.0
        %v10950 = vmax.f32 %v9337, 0.0
        %v10951 = vmax.f32 %v10049, 0.0
        %v10952 = vmax.f32 %v10761, 0.0
        %v10953 = vmax.f32 %v5780, 0.0
        %v10954 = vmax.f32 %v6492, 0.0
        %v10955 = vmax.f32 %v7204, 0.0
        %v10956 = vmax.f32 %v7916, 0.0
        %v10957 = vmax.f32 %v8628, 0.0
        %v10958 = vmax.f32 %v9340, 0.0
        %v10959 = vmax.f32 %v10052, 0.0
        %v10960 = vmax.f32 %v10764, 0.0
        %v10961 = vmax.f32 %v5782, 0.0
        %v10962 = vmax.f32 %v6494, 0.0
        %v10963 = vmax.f32 %v7206, 0.0
        %v10964 = vmax.f32 %v7918, 0.0
        %v10965 = vmax.f32 %v8630, 0.0
        %v10966 = vmax.f32 %v9342, 0.0
        %v10967 = vmax.f32 %v10054, 0.0
        %v10968 = vmax.f32 %v10766, 0.0
        %v10969 = vmax.f32 %v5785, 0.0
        %v10970 = vmax.f32 %v6497, 0.0
        %v10971 = vmax.f32 %v7209, 0.0
        %v10972 = vmax.f32 %v7921, 0.0
        %v10973 = vmax.f32 %v8633, 0.0
        %v10974 = vmax.f32 %v9345, 0.0
        %v10975 = vmax.f32 %v10057, 0.0
        %v10976 = vmax.f32 %v10769, 0.0
        %v10977 = vmax.f32 %v5787, 0.0
        %v10978 = vmax.f32 %v6499, 0.0
        %v10979 = vmax.f32 %v7211, 0.0
        %v10980 = vmax.f32 %v7923, 0.0
        %v10981 = vmax.f32 %v8635, 0.0
        %v10982 = vmax.f32 %v9347, 0.0
        %v10983 = vmax.f32 %v10059, 0.0
        %v10984 = vmax.f32 %v10771, 0.0
        %v10985 = vmax.f32 %v5790, 0.0
        %v10986 = vmax.f32 %v6502, 0.0
        %v10987 = vmax.f32 %v7214, 0.0
        %v10988 = vmax.f32 %v7926, 0.0
        %v10989 = vmax.f32 %v8638, 0.0
        %v10990 = vmax.f32 %v9350, 0.0
        %v10991 = vmax.f32 %v10062, 0.0
        %v10992 = vmax.f32 %v10774, 0.0
        %v10993 = vmax.f32 %v5792, 0.0
        %v10994 = vmax.f32 %v6504, 0.0
        %v10995 = vmax.f32 %v7216, 0.0
        %v10996 = vmax.f32 %v7928, 0.0
        %v10997 = vmax.f32 %v8640, 0.0
        %v10998 = vmax.f32 %v9352, 0.0
        %v10999 = vmax.f32 %v10064, 0.0
        %v11000 = vmax.f32 %v10776, 0.0
        %v11001 = vmax.f32 %v5795, 0.0
        %v11002 = vmax.f32 %v6507, 0.0
        %v11003 = vmax.f32 %v7219, 0.0
        %v11004 = vmax.f32 %v7931, 0.0
        %v11005 = vmax.f32 %v8643, 0.0
        %v11006 = vmax.f32 %v9355, 0.0
        %v11007 = vmax.f32 %v10067, 0.0
        %v11008 = vmax.f32 %v10779, 0.0
        %v11009 = vmax.f32 %v5797, 0.0
        %v11010 = vmax.f32 %v6509, 0.0
        %v11011 = vmax.f32 %v7221, 0.0
        %v11012 = vmax.f32 %v7933, 0.0
        %v11013 = vmax.f32 %v8645, 0.0
        %v11014 = vmax.f32 %v9357, 0.0
        %v11015 = vmax.f32 %v10069, 0.0
        %v11016 = vmax.f32 %v10781, 0.0
        %v11017 = vmax.f32 %v5800, 0.0
        %v11018 = vmax.f32 %v6512, 0.0
        %v11019 = vmax.f32 %v7224, 0.0
        %v11020 = vmax.f32 %v7936, 0.0
        %v11021 = vmax.f32 %v8648, 0.0
        %v11022 = vmax.f32 %v9360, 0.0
        %v11023 = vmax.f32 %v10072, 0.0
        %v11024 = vmax.f32 %v10784, 0.0
        %v11025 = vmax.f32 %v5802, 0.0
        %v11026 = vmax.f32 %v6514, 0.0
        %v11027 = vmax.f32 %v7226, 0.0
        %v11028 = vmax.f32 %v7938, 0.0
        %v11029 = vmax.f32 %v8650, 0.0
        %v11030 = vmax.f32 %v9362, 0.0
        %v11031 = vmax.f32 %v10074, 0.0
        %v11032 = vmax.f32 %v10786, 0.0
        %v11033 = vmax.f32 %v5805, 0.0
        %v11034 = vmax.f32 %v6517, 0.0
        %v11035 = vmax.f32 %v7229, 0.0
        %v11036 = vmax.f32 %v7941, 0.0
        %v11037 = vmax.f32 %v8653, 0.0
        %v11038 = vmax.f32 %v9365, 0.0
        %v11039 = vmax.f32 %v10077, 0.0
        %v11040 = vmax.f32 %v10789, 0.0
        %v11041 = vmax.f32 %v5807, 0.0
        %v11042 = vmax.f32 %v6519, 0.0
        %v11043 = vmax.f32 %v7231, 0.0
        %v11044 = vmax.f32 %v7943, 0.0
        %v11045 = vmax.f32 %v8655, 0.0
        %v11046 = vmax.f32 %v9367, 0.0
        %v11047 = vmax.f32 %v10079, 0.0
        %v11048 = vmax.f32 %v10791, 0.0
        %v11049 = vpack.c.bf16 %v10801, %v10793
        %v11050 = vpack.c.bf16 %v10802, %v10794
        %v11051 = vpack.c.bf16 %v10803, %v10795
        %v11052 = vpack.c.bf16 %v10804, %v10796
        %v11053 = vpack.c.bf16 %v10805, %v10797
        %v11054 = vpack.c.bf16 %v10806, %v10798
        %v11055 = vpack.c.bf16 %v10807, %v10799
        %v11056 = vpack.c.bf16 %v10808, %v10800
        %v11057 = vpack.c.bf16 %v10817, %v10809
        %v11058 = vpack.c.bf16 %v10818, %v10810
        %v11059 = vpack.c.bf16 %v10819, %v10811
        %v11060 = vpack.c.bf16 %v10820, %v10812
        %v11061 = vpack.c.bf16 %v10821, %v10813
        %v11062 = vpack.c.bf16 %v10822, %v10814
        %v11063 = vpack.c.bf16 %v10823, %v10815
        %v11064 = vpack.c.bf16 %v10824, %v10816
        %v11065 = vpack.c.bf16 %v10833, %v10825
        %v11066 = vpack.c.bf16 %v10834, %v10826
        %v11067 = vpack.c.bf16 %v10835, %v10827
        %v11068 = vpack.c.bf16 %v10836, %v10828
        %v11069 = vpack.c.bf16 %v10837, %v10829
        %v11070 = vpack.c.bf16 %v10838, %v10830
        %v11071 = vpack.c.bf16 %v10839, %v10831
        %v11072 = vpack.c.bf16 %v10840, %v10832
        %v11073 = vpack.c.bf16 %v10849, %v10841
        %v11074 = vpack.c.bf16 %v10850, %v10842
        %v11075 = vpack.c.bf16 %v10851, %v10843
        %v11076 = vpack.c.bf16 %v10852, %v10844
        %v11077 = vpack.c.bf16 %v10853, %v10845
        %v11078 = vpack.c.bf16 %v10854, %v10846
        %v11079 = vpack.c.bf16 %v10855, %v10847
        %v11080 = vpack.c.bf16 %v10856, %v10848
        %v11081 = vpack.c.bf16 %v10865, %v10857
        %v11082 = vpack.c.bf16 %v10866, %v10858
        %v11083 = vpack.c.bf16 %v10867, %v10859
        %v11084 = vpack.c.bf16 %v10868, %v10860
        %v11085 = vpack.c.bf16 %v10869, %v10861
        %v11086 = vpack.c.bf16 %v10870, %v10862
        %v11087 = vpack.c.bf16 %v10871, %v10863
        %v11088 = vpack.c.bf16 %v10872, %v10864
        %v11089 = vpack.c.bf16 %v10881, %v10873
        %v11090 = vpack.c.bf16 %v10882, %v10874
        %v11091 = vpack.c.bf16 %v10883, %v10875
        %v11092 = vpack.c.bf16 %v10884, %v10876
        %v11093 = vpack.c.bf16 %v10885, %v10877
        %v11094 = vpack.c.bf16 %v10886, %v10878
        %v11095 = vpack.c.bf16 %v10887, %v10879
        %v11096 = vpack.c.bf16 %v10888, %v10880
        %v11097 = vpack.c.bf16 %v10897, %v10889
        %v11098 = vpack.c.bf16 %v10898, %v10890
        %v11099 = vpack.c.bf16 %v10899, %v10891
        %v11100 = vpack.c.bf16 %v10900, %v10892
        %v11101 = vpack.c.bf16 %v10901, %v10893
        %v11102 = vpack.c.bf16 %v10902, %v10894
        %v11103 = vpack.c.bf16 %v10903, %v10895
        %v11104 = vpack.c.bf16 %v10904, %v10896
        %v11105 = vpack.c.bf16 %v10913, %v10905
        %v11106 = vpack.c.bf16 %v10914, %v10906
        %v11107 = vpack.c.bf16 %v10915, %v10907
        %v11108 = vpack.c.bf16 %v10916, %v10908
        %v11109 = vpack.c.bf16 %v10917, %v10909
        %v11110 = vpack.c.bf16 %v10918, %v10910
        %v11111 = vpack.c.bf16 %v10919, %v10911
        %v11112 = vpack.c.bf16 %v10920, %v10912
        %v11113 = vpack.c.bf16 %v10929, %v10921
        %v11114 = vpack.c.bf16 %v10930, %v10922
        %v11115 = vpack.c.bf16 %v10931, %v10923
        %v11116 = vpack.c.bf16 %v10932, %v10924
        %v11117 = vpack.c.bf16 %v10933, %v10925
        %v11118 = vpack.c.bf16 %v10934, %v10926
        %v11119 = vpack.c.bf16 %v10935, %v10927
        %v11120 = vpack.c.bf16 %v10936, %v10928
        %v11121 = vpack.c.bf16 %v10945, %v10937
        %v11122 = vpack.c.bf16 %v10946, %v10938
        %v11123 = vpack.c.bf16 %v10947, %v10939
        %v11124 = vpack.c.bf16 %v10948, %v10940
        %v11125 = vpack.c.bf16 %v10949, %v10941
        %v11126 = vpack.c.bf16 %v10950, %v10942
        %v11127 = vpack.c.bf16 %v10951, %v10943
        %v11128 = vpack.c.bf16 %v10952, %v10944
        %v11129 = vpack.c.bf16 %v10961, %v10953
        %v11130 = vpack.c.bf16 %v10962, %v10954
        %v11131 = vpack.c.bf16 %v10963, %v10955
        %v11132 = vpack.c.bf16 %v10964, %v10956
        %v11133 = vpack.c.bf16 %v10965, %v10957
        %v11134 = vpack.c.bf16 %v10966, %v10958
        %v11135 = vpack.c.bf16 %v10967, %v10959
        %v11136 = vpack.c.bf16 %v10968, %v10960
        %v11137 = vpack.c.bf16 %v10977, %v10969
        %v11138 = vpack.c.bf16 %v10978, %v10970
        %v11139 = vpack.c.bf16 %v10979, %v10971
        %v11140 = vpack.c.bf16 %v10980, %v10972
        %v11141 = vpack.c.bf16 %v10981, %v10973
        %v11142 = vpack.c.bf16 %v10982, %v10974
        %v11143 = vpack.c.bf16 %v10983, %v10975
        %v11144 = vpack.c.bf16 %v10984, %v10976
        %v11145 = vpack.c.bf16 %v10993, %v10985
        %v11146 = vpack.c.bf16 %v10994, %v10986
        %v11147 = vpack.c.bf16 %v10995, %v10987
        %v11148 = vpack.c.bf16 %v10996, %v10988
        %v11149 = vpack.c.bf16 %v10997, %v10989
        %v11150 = vpack.c.bf16 %v10998, %v10990
        %v11151 = vpack.c.bf16 %v10999, %v10991
        %v11152 = vpack.c.bf16 %v11000, %v10992
        %v11153 = vpack.c.bf16 %v11009, %v11001
        %v11154 = vpack.c.bf16 %v11010, %v11002
        %v11155 = vpack.c.bf16 %v11011, %v11003
        %v11156 = vpack.c.bf16 %v11012, %v11004
        %v11157 = vpack.c.bf16 %v11013, %v11005
        %v11158 = vpack.c.bf16 %v11014, %v11006
        %v11159 = vpack.c.bf16 %v11015, %v11007
        %v11160 = vpack.c.bf16 %v11016, %v11008
        %v11161 = vpack.c.bf16 %v11025, %v11017
        %v11162 = vpack.c.bf16 %v11026, %v11018
        %v11163 = vpack.c.bf16 %v11027, %v11019
        %v11164 = vpack.c.bf16 %v11028, %v11020
        %v11165 = vpack.c.bf16 %v11029, %v11021
        %v11166 = vpack.c.bf16 %v11030, %v11022
        %v11167 = vpack.c.bf16 %v11031, %v11023
        %v11168 = vpack.c.bf16 %v11032, %v11024
        %v11169 = vpack.c.bf16 %v11041, %v11033
        %v11170 = vpack.c.bf16 %v11042, %v11034
        %v11171 = vpack.c.bf16 %v11043, %v11035
        %v11172 = vpack.c.bf16 %v11044, %v11036
        %v11173 = vpack.c.bf16 %v11045, %v11037
        %v11174 = vpack.c.bf16 %v11046, %v11038
        %v11175 = vpack.c.bf16 %v11047, %v11039
        %v11176 = vpack.c.bf16 %v11048, %v11040
        %v11177 = vld [vmem:[#allocation12] sm:$0xf]
        %v11178 = vld [vmem:[#allocation12 + $0x4] sm:$0xf]
        %v11179 = vld [vmem:[#allocation12 + $0x8] sm:$0xf]
        %v11180 = vld [vmem:[#allocation12 + $0xc] sm:$0xf]
        %v11181 = vld [vmem:[#allocation12 + $0x10] sm:$0xf]
        %v11182 = vld [vmem:[#allocation12 + $0x14] sm:$0xf]
        %v11183 = vld [vmem:[#allocation12 + $0x18] sm:$0xf]
        %v11184 = vld [vmem:[#allocation12 + $0x1c] sm:$0xf]
        %v11185 = vld [vmem:[#allocation12 + $0x20] sm:$0xf]
        %v11186 = vld [vmem:[#allocation12 + $0x24] sm:$0xf]
        %v11187 = vld [vmem:[#allocation12 + $0x28] sm:$0xf]
        %v11188 = vld [vmem:[#allocation12 + $0x2c] sm:$0xf]
        %v11189 = vld [vmem:[#allocation12 + $0x30] sm:$0xf]
        %v11190 = vld [vmem:[#allocation12 + $0x34] sm:$0xf]
        %v11191 = vld [vmem:[#allocation12 + $0x38] sm:$0xf]
        %v11192 = vld [vmem:[#allocation12 + $0x3c] sm:$0xf]
        %v11193 = vld [vmem:[#allocation12 + $0x40] sm:$0xf]
        %v11194 = vld [vmem:[#allocation12 + $0x44] sm:$0xf]
        %v11195 = vld [vmem:[#allocation12 + $0x48] sm:$0xf]
        %v11196 = vld [vmem:[#allocation12 + $0x4c] sm:$0xf]
        %v11197 = vld [vmem:[#allocation12 + $0x50] sm:$0xf]
        %v11198 = vld [vmem:[#allocation12 + $0x54] sm:$0xf]
        %v11199 = vld [vmem:[#allocation12 + $0x58] sm:$0xf]
        %v11200 = vld [vmem:[#allocation12 + $0x5c] sm:$0xf]
        %v11201 = vld [vmem:[#allocation12 + $0x60] sm:$0xf]
        %v11202 = vld [vmem:[#allocation12 + $0x64] sm:$0xf]
        %v11203 = vld [vmem:[#allocation12 + $0x68] sm:$0xf]
        %v11204 = vld [vmem:[#allocation12 + $0x6c] sm:$0xf]
        %v11205 = vld [vmem:[#allocation12 + $0x70] sm:$0xf]
        %v11206 = vld [vmem:[#allocation12 + $0x74] sm:$0xf]
        %v11207 = vld [vmem:[#allocation12 + $0x78] sm:$0xf]
        %v11208 = vld [vmem:[#allocation12 + $0x7c] sm:$0xf]
        %v11209 = vld [vmem:[#allocation12 + $0x80] sm:$0xf]
        %v11210 = vld [vmem:[#allocation12 + $0x84] sm:$0xf]
        %v11211 = vld [vmem:[#allocation12 + $0x88] sm:$0xf]
        %v11212 = vld [vmem:[#allocation12 + $0x8c] sm:$0xf]
        %v11213 = vld [vmem:[#allocation12 + $0x90] sm:$0xf]
        %v11214 = vld [vmem:[#allocation12 + $0x94] sm:$0xf]
        %v11215 = vld [vmem:[#allocation12 + $0x98] sm:$0xf]
        %v11216 = vld [vmem:[#allocation12 + $0x9c] sm:$0xf]
        %v11217 = vld [vmem:[#allocation12 + $0xa0] sm:$0xf]
        %v11218 = vld [vmem:[#allocation12 + $0xa4] sm:$0xf]
        %v11219 = vld [vmem:[#allocation12 + $0xa8] sm:$0xf]
        %v11220 = vld [vmem:[#allocation12 + $0xac] sm:$0xf]
        %v11221 = vld [vmem:[#allocation12 + $0xb0] sm:$0xf]
        %v11222 = vld [vmem:[#allocation12 + $0xb4] sm:$0xf]
        %v11223 = vld [vmem:[#allocation12 + $0xb8] sm:$0xf]
        %v11224 = vld [vmem:[#allocation12 + $0xbc] sm:$0xf]
        %v11225 = vld [vmem:[#allocation12 + $0xc0] sm:$0xf]
        %v11226 = vld [vmem:[#allocation12 + $0xc4] sm:$0xf]
        %v11227 = vld [vmem:[#allocation12 + $0xc8] sm:$0xf]
        %v11228 = vld [vmem:[#allocation12 + $0xcc] sm:$0xf]
        %v11229 = vld [vmem:[#allocation12 + $0xd0] sm:$0xf]
        %v11230 = vld [vmem:[#allocation12 + $0xd4] sm:$0xf]
        %v11231 = vld [vmem:[#allocation12 + $0xd8] sm:$0xf]
        %v11232 = vld [vmem:[#allocation12 + $0xdc] sm:$0xf]
        %v11233 = vld [vmem:[#allocation12 + $0xe0] sm:$0xf]
        %v11234 = vld [vmem:[#allocation12 + $0xe4] sm:$0xf]
        %v11235 = vld [vmem:[#allocation12 + $0xe8] sm:$0xf]
        %v11236 = vld [vmem:[#allocation12 + $0xec] sm:$0xf]
        %v11237 = vld [vmem:[#allocation12 + $0xf0] sm:$0xf]
        %v11238 = vld [vmem:[#allocation12 + $0xf4] sm:$0xf]
        %v11239 = vld [vmem:[#allocation12 + $0xf8] sm:$0xf]
        %v11240 = vld [vmem:[#allocation12 + $0xfc] sm:$0xf]
        %v11241 = vld [vmem:[#allocation12 + $0x100] sm:$0xf]
        %v11242 = vld [vmem:[#allocation12 + $0x104] sm:$0xf]
        %v11243 = vld [vmem:[#allocation12 + $0x108] sm:$0xf]
        %v11244 = vld [vmem:[#allocation12 + $0x10c] sm:$0xf]
        %v11245 = vld [vmem:[#allocation12 + $0x110] sm:$0xf]
        %v11246 = vld [vmem:[#allocation12 + $0x114] sm:$0xf]
        %v11247 = vld [vmem:[#allocation12 + $0x118] sm:$0xf]
        %v11248 = vld [vmem:[#allocation12 + $0x11c] sm:$0xf]
        %v11249 = vld [vmem:[#allocation12 + $0x120] sm:$0xf]
        %v11250 = vld [vmem:[#allocation12 + $0x124] sm:$0xf]
        %v11251 = vld [vmem:[#allocation12 + $0x128] sm:$0xf]
        %v11252 = vld [vmem:[#allocation12 + $0x12c] sm:$0xf]
        %v11253 = vld [vmem:[#allocation12 + $0x130] sm:$0xf]
        %v11254 = vld [vmem:[#allocation12 + $0x134] sm:$0xf]
        %v11255 = vld [vmem:[#allocation12 + $0x138] sm:$0xf]
        %v11256 = vld [vmem:[#allocation12 + $0x13c] sm:$0xf]
        %v11257 = vld [vmem:[#allocation12 + $0x140] sm:$0xf]
        %v11258 = vld [vmem:[#allocation12 + $0x144] sm:$0xf]
        %v11259 = vld [vmem:[#allocation12 + $0x148] sm:$0xf]
        %v11260 = vld [vmem:[#allocation12 + $0x14c] sm:$0xf]
        %v11261 = vld [vmem:[#allocation12 + $0x150] sm:$0xf]
        %v11262 = vld [vmem:[#allocation12 + $0x154] sm:$0xf]
        %v11263 = vld [vmem:[#allocation12 + $0x158] sm:$0xf]
        %v11264 = vld [vmem:[#allocation12 + $0x15c] sm:$0xf]
        %v11265 = vld [vmem:[#allocation12 + $0x160] sm:$0xf]
        %v11266 = vld [vmem:[#allocation12 + $0x164] sm:$0xf]
        %v11267 = vld [vmem:[#allocation12 + $0x168] sm:$0xf]
        %v11268 = vld [vmem:[#allocation12 + $0x16c] sm:$0xf]
        %v11269 = vld [vmem:[#allocation12 + $0x170] sm:$0xf]
        %v11270 = vld [vmem:[#allocation12 + $0x174] sm:$0xf]
        %v11271 = vld [vmem:[#allocation12 + $0x178] sm:$0xf]
        %v11272 = vld [vmem:[#allocation12 + $0x17c] sm:$0xf]
        %v11273 = vld [vmem:[#allocation12 + $0x180] sm:$0xf]
        %v11274 = vld [vmem:[#allocation12 + $0x184] sm:$0xf]
        %v11275 = vld [vmem:[#allocation12 + $0x188] sm:$0xf]
        %v11276 = vld [vmem:[#allocation12 + $0x18c] sm:$0xf]
        %v11277 = vld [vmem:[#allocation12 + $0x190] sm:$0xf]
        %v11278 = vld [vmem:[#allocation12 + $0x194] sm:$0xf]
        %v11279 = vld [vmem:[#allocation12 + $0x198] sm:$0xf]
        %v11280 = vld [vmem:[#allocation12 + $0x19c] sm:$0xf]
        %v11281 = vld [vmem:[#allocation12 + $0x1a0] sm:$0xf]
        %v11282 = vld [vmem:[#allocation12 + $0x1a4] sm:$0xf]
        %v11283 = vld [vmem:[#allocation12 + $0x1a8] sm:$0xf]
        %v11284 = vld [vmem:[#allocation12 + $0x1ac] sm:$0xf]
        %v11285 = vld [vmem:[#allocation12 + $0x1b0] sm:$0xf]
        %v11286 = vld [vmem:[#allocation12 + $0x1b4] sm:$0xf]
        %v11287 = vld [vmem:[#allocation12 + $0x1b8] sm:$0xf]
        %v11288 = vld [vmem:[#allocation12 + $0x1bc] sm:$0xf]
        %v11289 = vld [vmem:[#allocation12 + $0x1c0] sm:$0xf]
        %v11290 = vld [vmem:[#allocation12 + $0x1c4] sm:$0xf]
        %v11291 = vld [vmem:[#allocation12 + $0x1c8] sm:$0xf]
        %v11292 = vld [vmem:[#allocation12 + $0x1cc] sm:$0xf]
        %v11293 = vld [vmem:[#allocation12 + $0x1d0] sm:$0xf]
        %v11294 = vld [vmem:[#allocation12 + $0x1d4] sm:$0xf]
        %v11295 = vld [vmem:[#allocation12 + $0x1d8] sm:$0xf]
        %v11296 = vld [vmem:[#allocation12 + $0x1dc] sm:$0xf]
        %v11297 = vld [vmem:[#allocation12 + $0x1e0] sm:$0xf]
        %v11298 = vld [vmem:[#allocation12 + $0x1e4] sm:$0xf]
        %v11299 = vld [vmem:[#allocation12 + $0x1e8] sm:$0xf]
        %v11300 = vld [vmem:[#allocation12 + $0x1ec] sm:$0xf]
        %v11301 = vld [vmem:[#allocation12 + $0x1f0] sm:$0xf]
        %v11302 = vld [vmem:[#allocation12 + $0x1f4] sm:$0xf]
        %v11303 = vld [vmem:[#allocation12 + $0x1f8] sm:$0xf]
        %v11304 = vld [vmem:[#allocation12 + $0x1fc] sm:$0xf]
        %s11305 = sld [smem:[#allocation2]]
        %v11306 = vstv %s11305
        %v11435 = vunpack.c.l.b16 %v11177
        %v11436 = vunpack.c.l.b16 %v11178
        %v11437 = vunpack.c.l.b16 %v11179
        %v11438 = vunpack.c.l.b16 %v11180
        %v11439 = vunpack.c.l.b16 %v11181
        %v11440 = vunpack.c.l.b16 %v11182
        %v11441 = vunpack.c.l.b16 %v11183
        %v11442 = vunpack.c.l.b16 %v11184
        %v11443 = vunpack.c.l.b16 %v11185
        %v11444 = vunpack.c.l.b16 %v11186
        %v11445 = vunpack.c.l.b16 %v11187
        %v11446 = vunpack.c.l.b16 %v11188
        %v11447 = vunpack.c.l.b16 %v11189
        %v11448 = vunpack.c.l.b16 %v11190
        %v11449 = vunpack.c.l.b16 %v11191
        %v11450 = vunpack.c.l.b16 %v11192
        %v11451 = vunpack.c.l.b16 %v11193
        %v11452 = vunpack.c.l.b16 %v11194
        %v11453 = vunpack.c.l.b16 %v11195
        %v11454 = vunpack.c.l.b16 %v11196
        %v11455 = vunpack.c.l.b16 %v11197
        %v11456 = vunpack.c.l.b16 %v11198
        %v11457 = vunpack.c.l.b16 %v11199
        %v11458 = vunpack.c.l.b16 %v11200
        %v11459 = vunpack.c.l.b16 %v11201
        %v11460 = vunpack.c.l.b16 %v11202
        %v11461 = vunpack.c.l.b16 %v11203
        %v11462 = vunpack.c.l.b16 %v11204
        %v11463 = vunpack.c.l.b16 %v11205
        %v11464 = vunpack.c.l.b16 %v11206
        %v11465 = vunpack.c.l.b16 %v11207
        %v11466 = vunpack.c.l.b16 %v11208
        %v11467 = vunpack.c.l.b16 %v11209
        %v11468 = vunpack.c.l.b16 %v11210
        %v11469 = vunpack.c.l.b16 %v11211
        %v11470 = vunpack.c.l.b16 %v11212
        %v11471 = vunpack.c.l.b16 %v11213
        %v11472 = vunpack.c.l.b16 %v11214
        %v11473 = vunpack.c.l.b16 %v11215
        %v11474 = vunpack.c.l.b16 %v11216
        %v11475 = vunpack.c.l.b16 %v11217
        %v11476 = vunpack.c.l.b16 %v11218
        %v11477 = vunpack.c.l.b16 %v11219
        %v11478 = vunpack.c.l.b16 %v11220
        %v11479 = vunpack.c.l.b16 %v11221
        %v11480 = vunpack.c.l.b16 %v11222
        %v11481 = vunpack.c.l.b16 %v11223
        %v11482 = vunpack.c.l.b16 %v11224
        %v11483 = vunpack.c.l.b16 %v11225
        %v11484 = vunpack.c.l.b16 %v11226
        %v11485 = vunpack.c.l.b16 %v11227
        %v11486 = vunpack.c.l.b16 %v11228
        %v11487 = vunpack.c.l.b16 %v11229
        %v11488 = vunpack.c.l.b16 %v11230
        %v11489 = vunpack.c.l.b16 %v11231
        %v11490 = vunpack.c.l.b16 %v11232
        %v11491 = vunpack.c.l.b16 %v11233
        %v11492 = vunpack.c.l.b16 %v11234
        %v11493 = vunpack.c.l.b16 %v11235
        %v11494 = vunpack.c.l.b16 %v11236
        %v11495 = vunpack.c.l.b16 %v11237
        %v11496 = vunpack.c.l.b16 %v11238
        %v11497 = vunpack.c.l.b16 %v11239
        %v11498 = vunpack.c.l.b16 %v11240
        %v11499 = vunpack.c.l.b16 %v11241
        %v11500 = vunpack.c.l.b16 %v11242
        %v11501 = vunpack.c.l.b16 %v11243
        %v11502 = vunpack.c.l.b16 %v11244
        %v11503 = vunpack.c.l.b16 %v11245
        %v11504 = vunpack.c.l.b16 %v11246
        %v11505 = vunpack.c.l.b16 %v11247
        %v11506 = vunpack.c.l.b16 %v11248
        %v11507 = vunpack.c.l.b16 %v11249
        %v11508 = vunpack.c.l.b16 %v11250
        %v11509 = vunpack.c.l.b16 %v11251
        %v11510 = vunpack.c.l.b16 %v11252
        %v11511 = vunpack.c.l.b16 %v11253
        %v11512 = vunpack.c.l.b16 %v11254
        %v11513 = vunpack.c.l.b16 %v11255
        %v11514 = vunpack.c.l.b16 %v11256
        %v11515 = vunpack.c.l.b16 %v11257
        %v11516 = vunpack.c.l.b16 %v11258
        %v11517 = vunpack.c.l.b16 %v11259
        %v11518 = vunpack.c.l.b16 %v11260
        %v11519 = vunpack.c.l.b16 %v11261
        %v11520 = vunpack.c.l.b16 %v11262
        %v11521 = vunpack.c.l.b16 %v11263
        %v11522 = vunpack.c.l.b16 %v11264
        %v11523 = vunpack.c.l.b16 %v11265
        %v11524 = vunpack.c.l.b16 %v11266
        %v11525 = vunpack.c.l.b16 %v11267
        %v11526 = vunpack.c.l.b16 %v11268
        %v11527 = vunpack.c.l.b16 %v11269
        %v11528 = vunpack.c.l.b16 %v11270
        %v11529 = vunpack.c.l.b16 %v11271
        %v11530 = vunpack.c.l.b16 %v11272
        %v11531 = vunpack.c.l.b16 %v11273
        %v11532 = vunpack.c.l.b16 %v11274
        %v11533 = vunpack.c.l.b16 %v11275
        %v11534 = vunpack.c.l.b16 %v11276
        %v11535 = vunpack.c.l.b16 %v11277
        %v11536 = vunpack.c.l.b16 %v11278
        %v11537 = vunpack.c.l.b16 %v11279
        %v11538 = vunpack.c.l.b16 %v11280
        %v11539 = vunpack.c.l.b16 %v11281
        %v11540 = vunpack.c.l.b16 %v11282
        %v11541 = vunpack.c.l.b16 %v11283
        %v11542 = vunpack.c.l.b16 %v11284
        %v11543 = vunpack.c.l.b16 %v11285
        %v11544 = vunpack.c.l.b16 %v11286
        %v11545 = vunpack.c.l.b16 %v11287
        %v11546 = vunpack.c.l.b16 %v11288
        %v11547 = vunpack.c.l.b16 %v11289
        %v11548 = vunpack.c.l.b16 %v11290
        %v11549 = vunpack.c.l.b16 %v11291
        %v11550 = vunpack.c.l.b16 %v11292
        %v11551 = vunpack.c.l.b16 %v11293
        %v11552 = vunpack.c.l.b16 %v11294
        %v11553 = vunpack.c.l.b16 %v11295
        %v11554 = vunpack.c.l.b16 %v11296
        %v11555 = vunpack.c.l.b16 %v11297
        %v11556 = vunpack.c.l.b16 %v11298
        %v11557 = vunpack.c.l.b16 %v11299
        %v11558 = vunpack.c.l.b16 %v11300
        %v11559 = vunpack.c.l.b16 %v11301
        %v11560 = vunpack.c.l.b16 %v11302
        %v11561 = vunpack.c.l.b16 %v11303
        %v11562 = vunpack.c.l.b16 %v11304
        %v11563 = vpack.c.b16 %v11436, %v11435
        %v11564 = vpack.c.b16 %v11438, %v11437
        %v11565 = vpack.c.b16 %v11440, %v11439
        %v11566 = vpack.c.b16 %v11442, %v11441
        %v11567 = vpack.c.b16 %v11444, %v11443
        %v11568 = vpack.c.b16 %v11446, %v11445
        %v11569 = vpack.c.b16 %v11448, %v11447
        %v11570 = vpack.c.b16 %v11450, %v11449
        %v11571 = vpack.c.b16 %v11452, %v11451
        %v11572 = vpack.c.b16 %v11454, %v11453
        %v11573 = vpack.c.b16 %v11456, %v11455
        %v11574 = vpack.c.b16 %v11458, %v11457
        %v11575 = vpack.c.b16 %v11460, %v11459
        %v11576 = vpack.c.b16 %v11462, %v11461
        %v11577 = vpack.c.b16 %v11464, %v11463
        %v11578 = vpack.c.b16 %v11466, %v11465
        %v11579 = vpack.c.b16 %v11468, %v11467
        %v11580 = vpack.c.b16 %v11470, %v11469
        %v11581 = vpack.c.b16 %v11472, %v11471
        %v11582 = vpack.c.b16 %v11474, %v11473
        %v11583 = vpack.c.b16 %v11476, %v11475
        %v11584 = vpack.c.b16 %v11478, %v11477
        %v11585 = vpack.c.b16 %v11480, %v11479
        %v11586 = vpack.c.b16 %v11482, %v11481
        %v11587 = vpack.c.b16 %v11484, %v11483
        %v11588 = vpack.c.b16 %v11486, %v11485
        %v11589 = vpack.c.b16 %v11488, %v11487
        %v11590 = vpack.c.b16 %v11490, %v11489
        %v11591 = vpack.c.b16 %v11492, %v11491
        %v11592 = vpack.c.b16 %v11494, %v11493
        %v11593 = vpack.c.b16 %v11496, %v11495
        %v11594 = vpack.c.b16 %v11498, %v11497
        %v11595 = vpack.c.b16 %v11500, %v11499
        %v11596 = vpack.c.b16 %v11502, %v11501
        %v11597 = vpack.c.b16 %v11504, %v11503
        %v11598 = vpack.c.b16 %v11506, %v11505
        %v11599 = vpack.c.b16 %v11508, %v11507
        %v11600 = vpack.c.b16 %v11510, %v11509
        %v11601 = vpack.c.b16 %v11512, %v11511
        %v11602 = vpack.c.b16 %v11514, %v11513
        %v11603 = vpack.c.b16 %v11516, %v11515
        %v11604 = vpack.c.b16 %v11518, %v11517
        %v11605 = vpack.c.b16 %v11520, %v11519
        %v11606 = vpack.c.b16 %v11522, %v11521
        %v11607 = vpack.c.b16 %v11524, %v11523
        %v11608 = vpack.c.b16 %v11526, %v11525
        %v11609 = vpack.c.b16 %v11528, %v11527
        %v11610 = vpack.c.b16 %v11530, %v11529
        %v11611 = vpack.c.b16 %v11532, %v11531
        %v11612 = vpack.c.b16 %v11534, %v11533
        %v11613 = vpack.c.b16 %v11536, %v11535
        %v11614 = vpack.c.b16 %v11538, %v11537
        %v11615 = vpack.c.b16 %v11540, %v11539
        %v11616 = vpack.c.b16 %v11542, %v11541
        %v11617 = vpack.c.b16 %v11544, %v11543
        %v11618 = vpack.c.b16 %v11546, %v11545
        %v11619 = vpack.c.b16 %v11548, %v11547
        %v11620 = vpack.c.b16 %v11550, %v11549
        %v11621 = vpack.c.b16 %v11552, %v11551
        %v11622 = vpack.c.b16 %v11554, %v11553
        %v11623 = vpack.c.b16 %v11556, %v11555
        %v11624 = vpack.c.b16 %v11558, %v11557
        %v11625 = vpack.c.b16 %v11560, %v11559
        %v11626 = vpack.c.b16 %v11562, %v11561
        %11691 = vmatpush.bf16.msra.mxu0 %v11570
        %11692 = vmatpush.bf16.msra.mxu0 %v11569
        %11693 = vmatpush.bf16.msra.mxu0 %v11568
        %11694 = vmatpush.bf16.msra.mxu0 %v11567
        %11695 = vmatpush.bf16.msra.mxu0 %v11566
        %11696 = vmatpush.bf16.msra.mxu0 %v11565
        %11697 = vmatpush.bf16.msra.mxu0 %v11564
        %11698 = vmatpush.bf16.msra.mxu0 %v11563
        %11699 = vmatmul.bf16.gmra.mxu0 %v11049
        %v11700 = vpop.f32.mrf.mxu0
        %v11701 = vadd.f32 %v11306, %v11700
        %v11702 = vpop.f32.mrf.mxu0
        %v11703 = vadd.f32 %v11306, %v11702
        %11704 = vmatmul.bf16.gmra.mxu0 %v11057
        %v11705 = vpop.f32.mrf.mxu0
        %v11706 = vadd.f32 %v11306, %v11705
        %v11707 = vpop.f32.mrf.mxu0
        %v11708 = vadd.f32 %v11306, %v11707
        %11709 = vmatmul.bf16.gmra.mxu0 %v11065
        %v11710 = vpop.f32.mrf.mxu0
        %v11711 = vadd.f32 %v11306, %v11710
        %v11712 = vpop.f32.mrf.mxu0
        %v11713 = vadd.f32 %v11306, %v11712
        %11714 = vmatmul.bf16.gmra.mxu0 %v11073
        %v11715 = vpop.f32.mrf.mxu0
        %v11716 = vadd.f32 %v11306, %v11715
        %v11717 = vpop.f32.mrf.mxu0
        %v11718 = vadd.f32 %v11306, %v11717
        %11719 = vmatmul.bf16.gmra.mxu0 %v11081
        %v11720 = vpop.f32.mrf.mxu0
        %v11721 = vadd.f32 %v11306, %v11720
        %v11722 = vpop.f32.mrf.mxu0
        %v11723 = vadd.f32 %v11306, %v11722
        %11724 = vmatmul.bf16.gmra.mxu0 %v11089
        %v11725 = vpop.f32.mrf.mxu0
        %v11726 = vadd.f32 %v11306, %v11725
        %v11727 = vpop.f32.mrf.mxu0
        %v11728 = vadd.f32 %v11306, %v11727
        %11729 = vmatmul.bf16.gmra.mxu0 %v11097
        %v11730 = vpop.f32.mrf.mxu0
        %v11731 = vadd.f32 %v11306, %v11730
        %v11732 = vpop.f32.mrf.mxu0
        %v11733 = vadd.f32 %v11306, %v11732
        %11734 = vmatmul.bf16.gmra.mxu0 %v11105
        %v11735 = vpop.f32.mrf.mxu0
        %v11736 = vadd.f32 %v11306, %v11735
        %v11737 = vpop.f32.mrf.mxu0
        %v11738 = vadd.f32 %v11306, %v11737
        %11739 = vmatmul.bf16.gmra.mxu0 %v11113
        %v11740 = vpop.f32.mrf.mxu0
        %v11741 = vadd.f32 %v11306, %v11740
        %v11742 = vpop.f32.mrf.mxu0
        %v11743 = vadd.f32 %v11306, %v11742
        %11744 = vmatmul.bf16.gmra.mxu0 %v11121
        %v11745 = vpop.f32.mrf.mxu0
        %v11746 = vadd.f32 %v11306, %v11745
        %v11747 = vpop.f32.mrf.mxu0
        %v11748 = vadd.f32 %v11306, %v11747
        %11749 = vmatmul.bf16.gmra.mxu0 %v11129
        %v11750 = vpop.f32.mrf.mxu0
        %v11751 = vadd.f32 %v11306, %v11750
        %v11752 = vpop.f32.mrf.mxu0
        %v11753 = vadd.f32 %v11306, %v11752
        %11754 = vmatmul.bf16.gmra.mxu0 %v11137
        %v11755 = vpop.f32.mrf.mxu0
        %v11756 = vadd.f32 %v11306, %v11755
        %v11757 = vpop.f32.mrf.mxu0
        %v11758 = vadd.f32 %v11306, %v11757
        %11759 = vmatmul.bf16.gmra.mxu0 %v11145
        %v11760 = vpop.f32.mrf.mxu0
        %v11761 = vadd.f32 %v11306, %v11760
        %v11762 = vpop.f32.mrf.mxu0
        %v11763 = vadd.f32 %v11306, %v11762
        %11764 = vmatmul.bf16.gmra.mxu0 %v11153
        %v11765 = vpop.f32.mrf.mxu0
        %v11766 = vadd.f32 %v11306, %v11765
        %v11767 = vpop.f32.mrf.mxu0
        %v11768 = vadd.f32 %v11306, %v11767
        %11769 = vmatmul.bf16.gmra.mxu0 %v11161
        %v11770 = vpop.f32.mrf.mxu0
        %v11771 = vadd.f32 %v11306, %v11770
        %v11772 = vpop.f32.mrf.mxu0
        %v11773 = vadd.f32 %v11306, %v11772
        %11774 = vmatmul.bf16.gmra.mxu0 %v11169
        %v11775 = vpop.f32.mrf.mxu0
        %v11776 = vadd.f32 %v11306, %v11775
        %v11777 = vpop.f32.mrf.mxu0
        %v11778 = vadd.f32 %v11306, %v11777
        %11779 = vdwg.mxu0
        %11780 = vmatpush.bf16.msra.mxu0 %v11578
        %11781 = vmatpush.bf16.msra.mxu0 %v11577
        %11782 = vmatpush.bf16.msra.mxu0 %v11576
        %11783 = vmatpush.bf16.msra.mxu0 %v11575
        %11784 = vmatpush.bf16.msra.mxu0 %v11574
        %11785 = vmatpush.bf16.msra.mxu0 %v11573
        %11786 = vmatpush.bf16.msra.mxu0 %v11572
        %11787 = vmatpush.bf16.msra.mxu0 %v11571
        %11788 = vmatmul.bf16.gmra.mxu0 %v11050
        %v11789 = vpop.f32.mrf.mxu0
        %v11790 = vadd.f32 %v11701, %v11789
        %v11791 = vpop.f32.mrf.mxu0
        %v11792 = vadd.f32 %v11703, %v11791
        %11793 = vmatmul.bf16.gmra.mxu0 %v11058
        %v11794 = vpop.f32.mrf.mxu0
        %v11795 = vadd.f32 %v11706, %v11794
        %v11796 = vpop.f32.mrf.mxu0
        %v11797 = vadd.f32 %v11708, %v11796
        %11798 = vmatmul.bf16.gmra.mxu0 %v11066
        %v11799 = vpop.f32.mrf.mxu0
        %v11800 = vadd.f32 %v11711, %v11799
        %v11801 = vpop.f32.mrf.mxu0
        %v11802 = vadd.f32 %v11713, %v11801
        %11803 = vmatmul.bf16.gmra.mxu0 %v11074
        %v11804 = vpop.f32.mrf.mxu0
        %v11805 = vadd.f32 %v11716, %v11804
        %v11806 = vpop.f32.mrf.mxu0
        %v11807 = vadd.f32 %v11718, %v11806
        %11808 = vmatmul.bf16.gmra.mxu0 %v11082
        %v11809 = vpop.f32.mrf.mxu0
        %v11810 = vadd.f32 %v11721, %v11809
        %v11811 = vpop.f32.mrf.mxu0
        %v11812 = vadd.f32 %v11723, %v11811
        %11813 = vmatmul.bf16.gmra.mxu0 %v11090
        %v11814 = vpop.f32.mrf.mxu0
        %v11815 = vadd.f32 %v11726, %v11814
        %v11816 = vpop.f32.mrf.mxu0
        %v11817 = vadd.f32 %v11728, %v11816
        %11818 = vmatmul.bf16.gmra.mxu0 %v11098
        %v11819 = vpop.f32.mrf.mxu0
        %v11820 = vadd.f32 %v11731, %v11819
        %v11821 = vpop.f32.mrf.mxu0
        %v11822 = vadd.f32 %v11733, %v11821
        %11823 = vmatmul.bf16.gmra.mxu0 %v11106
        %v11824 = vpop.f32.mrf.mxu0
        %v11825 = vadd.f32 %v11736, %v11824
        %v11826 = vpop.f32.mrf.mxu0
        %v11827 = vadd.f32 %v11738, %v11826
        %11828 = vmatmul.bf16.gmra.mxu0 %v11114
        %v11829 = vpop.f32.mrf.mxu0
        %v11830 = vadd.f32 %v11741, %v11829
        %v11831 = vpop.f32.mrf.mxu0
        %v11832 = vadd.f32 %v11743, %v11831
        %11833 = vmatmul.bf16.gmra.mxu0 %v11122
        %v11834 = vpop.f32.mrf.mxu0
        %v11835 = vadd.f32 %v11746, %v11834
        %v11836 = vpop.f32.mrf.mxu0
        %v11837 = vadd.f32 %v11748, %v11836
        %11838 = vmatmul.bf16.gmra.mxu0 %v11130
        %v11839 = vpop.f32.mrf.mxu0
        %v11840 = vadd.f32 %v11751, %v11839
        %v11841 = vpop.f32.mrf.mxu0
        %v11842 = vadd.f32 %v11753, %v11841
        %11843 = vmatmul.bf16.gmra.mxu0 %v11138
        %v11844 = vpop.f32.mrf.mxu0
        %v11845 = vadd.f32 %v11756, %v11844
        %v11846 = vpop.f32.mrf.mxu0
        %v11847 = vadd.f32 %v11758, %v11846
        %11848 = vmatmul.bf16.gmra.mxu0 %v11146
        %v11849 = vpop.f32.mrf.mxu0
        %v11850 = vadd.f32 %v11761, %v11849
        %v11851 = vpop.f32.mrf.mxu0
        %v11852 = vadd.f32 %v11763, %v11851
        %11853 = vmatmul.bf16.gmra.mxu0 %v11154
        %v11854 = vpop.f32.mrf.mxu0
        %v11855 = vadd.f32 %v11766, %v11854
        %v11856 = vpop.f32.mrf.mxu0
        %v11857 = vadd.f32 %v11768, %v11856
        %11858 = vmatmul.bf16.gmra.mxu0 %v11162
        %v11859 = vpop.f32.mrf.mxu0
        %v11860 = vadd.f32 %v11771, %v11859
        %v11861 = vpop.f32.mrf.mxu0
        %v11862 = vadd.f32 %v11773, %v11861
        %11863 = vmatmul.bf16.gmra.mxu0 %v11170
        %v11864 = vpop.f32.mrf.mxu0
        %v11865 = vadd.f32 %v11776, %v11864
        %v11866 = vpop.f32.mrf.mxu0
        %v11867 = vadd.f32 %v11778, %v11866
        %11868 = vdwg.mxu0
        %11869 = vmatpush.bf16.msra.mxu0 %v11586
        %11870 = vmatpush.bf16.msra.mxu0 %v11585
        %11871 = vmatpush.bf16.msra.mxu0 %v11584
        %11872 = vmatpush.bf16.msra.mxu0 %v11583
        %11873 = vmatpush.bf16.msra.mxu0 %v11582
        %11874 = vmatpush.bf16.msra.mxu0 %v11581
        %11875 = vmatpush.bf16.msra.mxu0 %v11580
        %11876 = vmatpush.bf16.msra.mxu0 %v11579
        %11877 = vmatmul.bf16.gmra.mxu0 %v11051
        %v11878 = vpop.f32.mrf.mxu0
        %v11879 = vadd.f32 %v11790, %v11878
        %v11880 = vpop.f32.mrf.mxu0
        %v11881 = vadd.f32 %v11792, %v11880
        %11882 = vmatmul.bf16.gmra.mxu0 %v11059
        %v11883 = vpop.f32.mrf.mxu0
        %v11884 = vadd.f32 %v11795, %v11883
        %v11885 = vpop.f32.mrf.mxu0
        %v11886 = vadd.f32 %v11797, %v11885
        %11887 = vmatmul.bf16.gmra.mxu0 %v11067
        %v11888 = vpop.f32.mrf.mxu0
        %v11889 = vadd.f32 %v11800, %v11888
        %v11890 = vpop.f32.mrf.mxu0
        %v11891 = vadd.f32 %v11802, %v11890
        %11892 = vmatmul.bf16.gmra.mxu0 %v11075
        %v11893 = vpop.f32.mrf.mxu0
        %v11894 = vadd.f32 %v11805, %v11893
        %v11895 = vpop.f32.mrf.mxu0
        %v11896 = vadd.f32 %v11807, %v11895
        %11897 = vmatmul.bf16.gmra.mxu0 %v11083
        %v11898 = vpop.f32.mrf.mxu0
        %v11899 = vadd.f32 %v11810, %v11898
        %v11900 = vpop.f32.mrf.mxu0
        %v11901 = vadd.f32 %v11812, %v11900
        %11902 = vmatmul.bf16.gmra.mxu0 %v11091
        %v11903 = vpop.f32.mrf.mxu0
        %v11904 = vadd.f32 %v11815, %v11903
        %v11905 = vpop.f32.mrf.mxu0
        %v11906 = vadd.f32 %v11817, %v11905
        %11907 = vmatmul.bf16.gmra.mxu0 %v11099
        %v11908 = vpop.f32.mrf.mxu0
        %v11909 = vadd.f32 %v11820, %v11908
        %v11910 = vpop.f32.mrf.mxu0
        %v11911 = vadd.f32 %v11822, %v11910
        %11912 = vmatmul.bf16.gmra.mxu0 %v11107
        %v11913 = vpop.f32.mrf.mxu0
        %v11914 = vadd.f32 %v11825, %v11913
        %v11915 = vpop.f32.mrf.mxu0
        %v11916 = vadd.f32 %v11827, %v11915
        %11917 = vmatmul.bf16.gmra.mxu0 %v11115
        %v11918 = vpop.f32.mrf.mxu0
        %v11919 = vadd.f32 %v11830, %v11918
        %v11920 = vpop.f32.mrf.mxu0
        %v11921 = vadd.f32 %v11832, %v11920
        %11922 = vmatmul.bf16.gmra.mxu0 %v11123
        %v11923 = vpop.f32.mrf.mxu0
        %v11924 = vadd.f32 %v11835, %v11923
        %v11925 = vpop.f32.mrf.mxu0
        %v11926 = vadd.f32 %v11837, %v11925
        %11927 = vmatmul.bf16.gmra.mxu0 %v11131
        %v11928 = vpop.f32.mrf.mxu0
        %v11929 = vadd.f32 %v11840, %v11928
        %v11930 = vpop.f32.mrf.mxu0
        %v11931 = vadd.f32 %v11842, %v11930
        %11932 = vmatmul.bf16.gmra.mxu0 %v11139
        %v11933 = vpop.f32.mrf.mxu0
        %v11934 = vadd.f32 %v11845, %v11933
        %v11935 = vpop.f32.mrf.mxu0
        %v11936 = vadd.f32 %v11847, %v11935
        %11937 = vmatmul.bf16.gmra.mxu0 %v11147
        %v11938 = vpop.f32.mrf.mxu0
        %v11939 = vadd.f32 %v11850, %v11938
        %v11940 = vpop.f32.mrf.mxu0
        %v11941 = vadd.f32 %v11852, %v11940
        %11942 = vmatmul.bf16.gmra.mxu0 %v11155
        %v11943 = vpop.f32.mrf.mxu0
        %v11944 = vadd.f32 %v11855, %v11943
        %v11945 = vpop.f32.mrf.mxu0
        %v11946 = vadd.f32 %v11857, %v11945
        %11947 = vmatmul.bf16.gmra.mxu0 %v11163
        %v11948 = vpop.f32.mrf.mxu0
        %v11949 = vadd.f32 %v11860, %v11948
        %v11950 = vpop.f32.mrf.mxu0
        %v11951 = vadd.f32 %v11862, %v11950
        %11952 = vmatmul.bf16.gmra.mxu0 %v11171
        %v11953 = vpop.f32.mrf.mxu0
        %v11954 = vadd.f32 %v11865, %v11953
        %v11955 = vpop.f32.mrf.mxu0
        %v11956 = vadd.f32 %v11867, %v11955
        %11957 = vdwg.mxu0
        %11958 = vmatpush.bf16.msra.mxu0 %v11594
        %11959 = vmatpush.bf16.msra.mxu0 %v11593
        %11960 = vmatpush.bf16.msra.mxu0 %v11592
        %11961 = vmatpush.bf16.msra.mxu0 %v11591
        %11962 = vmatpush.bf16.msra.mxu0 %v11590
        %11963 = vmatpush.bf16.msra.mxu0 %v11589
        %11964 = vmatpush.bf16.msra.mxu0 %v11588
        %11965 = vmatpush.bf16.msra.mxu0 %v11587
        %11966 = vmatmul.bf16.gmra.mxu0 %v11052
        %v11967 = vpop.f32.mrf.mxu0
        %v11968 = vadd.f32 %v11879, %v11967
        %v11969 = vpop.f32.mrf.mxu0
        %v11970 = vadd.f32 %v11881, %v11969
        %11971 = vmatmul.bf16.gmra.mxu0 %v11060
        %v11972 = vpop.f32.mrf.mxu0
        %v11973 = vadd.f32 %v11884, %v11972
        %v11974 = vpop.f32.mrf.mxu0
        %v11975 = vadd.f32 %v11886, %v11974
        %11976 = vmatmul.bf16.gmra.mxu0 %v11068
        %v11977 = vpop.f32.mrf.mxu0
        %v11978 = vadd.f32 %v11889, %v11977
        %v11979 = vpop.f32.mrf.mxu0
        %v11980 = vadd.f32 %v11891, %v11979
        %11981 = vmatmul.bf16.gmra.mxu0 %v11076
        %v11982 = vpop.f32.mrf.mxu0
        %v11983 = vadd.f32 %v11894, %v11982
        %v11984 = vpop.f32.mrf.mxu0
        %v11985 = vadd.f32 %v11896, %v11984
        %11986 = vmatmul.bf16.gmra.mxu0 %v11084
        %v11987 = vpop.f32.mrf.mxu0
        %v11988 = vadd.f32 %v11899, %v11987
        %v11989 = vpop.f32.mrf.mxu0
        %v11990 = vadd.f32 %v11901, %v11989
        %11991 = vmatmul.bf16.gmra.mxu0 %v11092
        %v11992 = vpop.f32.mrf.mxu0
        %v11993 = vadd.f32 %v11904, %v11992
        %v11994 = vpop.f32.mrf.mxu0
        %v11995 = vadd.f32 %v11906, %v11994
        %11996 = vmatmul.bf16.gmra.mxu0 %v11100
        %v11997 = vpop.f32.mrf.mxu0
        %v11998 = vadd.f32 %v11909, %v11997
        %v11999 = vpop.f32.mrf.mxu0
        %v12000 = vadd.f32 %v11911, %v11999
        %12001 = vmatmul.bf16.gmra.mxu0 %v11108
        %v12002 = vpop.f32.mrf.mxu0
        %v12003 = vadd.f32 %v11914, %v12002
        %v12004 = vpop.f32.mrf.mxu0
        %v12005 = vadd.f32 %v11916, %v12004
        %12006 = vmatmul.bf16.gmra.mxu0 %v11116
        %v12007 = vpop.f32.mrf.mxu0
        %v12008 = vadd.f32 %v11919, %v12007
        %v12009 = vpop.f32.mrf.mxu0
        %v12010 = vadd.f32 %v11921, %v12009
        %12011 = vmatmul.bf16.gmra.mxu0 %v11124
        %v12012 = vpop.f32.mrf.mxu0
        %v12013 = vadd.f32 %v11924, %v12012
        %v12014 = vpop.f32.mrf.mxu0
        %v12015 = vadd.f32 %v11926, %v12014
        %12016 = vmatmul.bf16.gmra.mxu0 %v11132
        %v12017 = vpop.f32.mrf.mxu0
        %v12018 = vadd.f32 %v11929, %v12017
        %v12019 = vpop.f32.mrf.mxu0
        %v12020 = vadd.f32 %v11931, %v12019
        %12021 = vmatmul.bf16.gmra.mxu0 %v11140
        %v12022 = vpop.f32.mrf.mxu0
        %v12023 = vadd.f32 %v11934, %v12022
        %v12024 = vpop.f32.mrf.mxu0
        %v12025 = vadd.f32 %v11936, %v12024
        %12026 = vmatmul.bf16.gmra.mxu0 %v11148
        %v12027 = vpop.f32.mrf.mxu0
        %v12028 = vadd.f32 %v11939, %v12027
        %v12029 = vpop.f32.mrf.mxu0
        %v12030 = vadd.f32 %v11941, %v12029
        %12031 = vmatmul.bf16.gmra.mxu0 %v11156
        %v12032 = vpop.f32.mrf.mxu0
        %v12033 = vadd.f32 %v11944, %v12032
        %v12034 = vpop.f32.mrf.mxu0
        %v12035 = vadd.f32 %v11946, %v12034
        %12036 = vmatmul.bf16.gmra.mxu0 %v11164
        %v12037 = vpop.f32.mrf.mxu0
        %v12038 = vadd.f32 %v11949, %v12037
        %v12039 = vpop.f32.mrf.mxu0
        %v12040 = vadd.f32 %v11951, %v12039
        %12041 = vmatmul.bf16.gmra.mxu0 %v11172
        %v12042 = vpop.f32.mrf.mxu0
        %v12043 = vadd.f32 %v11954, %v12042
        %v12044 = vpop.f32.mrf.mxu0
        %v12045 = vadd.f32 %v11956, %v12044
        %12046 = vdwg.mxu0
        %12047 = vmatpush.bf16.msra.mxu0 %v11602
        %12048 = vmatpush.bf16.msra.mxu0 %v11601
        %12049 = vmatpush.bf16.msra.mxu0 %v11600
        %12050 = vmatpush.bf16.msra.mxu0 %v11599
        %12051 = vmatpush.bf16.msra.mxu0 %v11598
        %12052 = vmatpush.bf16.msra.mxu0 %v11597
        %12053 = vmatpush.bf16.msra.mxu0 %v11596
        %12054 = vmatpush.bf16.msra.mxu0 %v11595
        %12055 = vmatmul.bf16.gmra.mxu0 %v11053
        %v12056 = vpop.f32.mrf.mxu0
        %v12057 = vadd.f32 %v11968, %v12056
        %v12058 = vpop.f32.mrf.mxu0
        %v12059 = vadd.f32 %v11970, %v12058
        %12060 = vmatmul.bf16.gmra.mxu0 %v11061
        %v12061 = vpop.f32.mrf.mxu0
        %v12062 = vadd.f32 %v11973, %v12061
        %v12063 = vpop.f32.mrf.mxu0
        %v12064 = vadd.f32 %v11975, %v12063
        %12065 = vmatmul.bf16.gmra.mxu0 %v11069
        %v12066 = vpop.f32.mrf.mxu0
        %v12067 = vadd.f32 %v11978, %v12066
        %v12068 = vpop.f32.mrf.mxu0
        %v12069 = vadd.f32 %v11980, %v12068
        %12070 = vmatmul.bf16.gmra.mxu0 %v11077
        %v12071 = vpop.f32.mrf.mxu0
        %v12072 = vadd.f32 %v11983, %v12071
        %v12073 = vpop.f32.mrf.mxu0
        %v12074 = vadd.f32 %v11985, %v12073
        %12075 = vmatmul.bf16.gmra.mxu0 %v11085
        %v12076 = vpop.f32.mrf.mxu0
        %v12077 = vadd.f32 %v11988, %v12076
        %v12078 = vpop.f32.mrf.mxu0
        %v12079 = vadd.f32 %v11990, %v12078
        %12080 = vmatmul.bf16.gmra.mxu0 %v11093
        %v12081 = vpop.f32.mrf.mxu0
        %v12082 = vadd.f32 %v11993, %v12081
        %v12083 = vpop.f32.mrf.mxu0
        %v12084 = vadd.f32 %v11995, %v12083
        %12085 = vmatmul.bf16.gmra.mxu0 %v11101
        %v12086 = vpop.f32.mrf.mxu0
        %v12087 = vadd.f32 %v11998, %v12086
        %v12088 = vpop.f32.mrf.mxu0
        %v12089 = vadd.f32 %v12000, %v12088
        %12090 = vmatmul.bf16.gmra.mxu0 %v11109
        %v12091 = vpop.f32.mrf.mxu0
        %v12092 = vadd.f32 %v12003, %v12091
        %v12093 = vpop.f32.mrf.mxu0
        %v12094 = vadd.f32 %v12005, %v12093
        %12095 = vmatmul.bf16.gmra.mxu0 %v11117
        %v12096 = vpop.f32.mrf.mxu0
        %v12097 = vadd.f32 %v12008, %v12096
        %v12098 = vpop.f32.mrf.mxu0
        %v12099 = vadd.f32 %v12010, %v12098
        %12100 = vmatmul.bf16.gmra.mxu0 %v11125
        %v12101 = vpop.f32.mrf.mxu0
        %v12102 = vadd.f32 %v12013, %v12101
        %v12103 = vpop.f32.mrf.mxu0
        %v12104 = vadd.f32 %v12015, %v12103
        %12105 = vmatmul.bf16.gmra.mxu0 %v11133
        %v12106 = vpop.f32.mrf.mxu0
        %v12107 = vadd.f32 %v12018, %v12106
        %v12108 = vpop.f32.mrf.mxu0
        %v12109 = vadd.f32 %v12020, %v12108
        %12110 = vmatmul.bf16.gmra.mxu0 %v11141
        %v12111 = vpop.f32.mrf.mxu0
        %v12112 = vadd.f32 %v12023, %v12111
        %v12113 = vpop.f32.mrf.mxu0
        %v12114 = vadd.f32 %v12025, %v12113
        %12115 = vmatmul.bf16.gmra.mxu0 %v11149
        %v12116 = vpop.f32.mrf.mxu0
        %v12117 = vadd.f32 %v12028, %v12116
        %v12118 = vpop.f32.mrf.mxu0
        %v12119 = vadd.f32 %v12030, %v12118
        %12120 = vmatmul.bf16.gmra.mxu0 %v11157
        %v12121 = vpop.f32.mrf.mxu0
        %v12122 = vadd.f32 %v12033, %v12121
        %v12123 = vpop.f32.mrf.mxu0
        %v12124 = vadd.f32 %v12035, %v12123
        %12125 = vmatmul.bf16.gmra.mxu0 %v11165
        %v12126 = vpop.f32.mrf.mxu0
        %v12127 = vadd.f32 %v12038, %v12126
        %v12128 = vpop.f32.mrf.mxu0
        %v12129 = vadd.f32 %v12040, %v12128
        %12130 = vmatmul.bf16.gmra.mxu0 %v11173
        %v12131 = vpop.f32.mrf.mxu0
        %v12132 = vadd.f32 %v12043, %v12131
        %v12133 = vpop.f32.mrf.mxu0
        %v12134 = vadd.f32 %v12045, %v12133
        %12135 = vdwg.mxu0
        %12136 = vmatpush.bf16.msra.mxu0 %v11610
        %12137 = vmatpush.bf16.msra.mxu0 %v11609
        %12138 = vmatpush.bf16.msra.mxu0 %v11608
        %12139 = vmatpush.bf16.msra.mxu0 %v11607
        %12140 = vmatpush.bf16.msra.mxu0 %v11606
        %12141 = vmatpush.bf16.msra.mxu0 %v11605
        %12142 = vmatpush.bf16.msra.mxu0 %v11604
        %12143 = vmatpush.bf16.msra.mxu0 %v11603
        %12144 = vmatmul.bf16.gmra.mxu0 %v11054
        %v12145 = vpop.f32.mrf.mxu0
        %v12146 = vadd.f32 %v12057, %v12145
        %v12147 = vpop.f32.mrf.mxu0
        %v12148 = vadd.f32 %v12059, %v12147
        %12149 = vmatmul.bf16.gmra.mxu0 %v11062
        %v12150 = vpop.f32.mrf.mxu0
        %v12151 = vadd.f32 %v12062, %v12150
        %v12152 = vpop.f32.mrf.mxu0
        %v12153 = vadd.f32 %v12064, %v12152
        %12154 = vmatmul.bf16.gmra.mxu0 %v11070
        %v12155 = vpop.f32.mrf.mxu0
        %v12156 = vadd.f32 %v12067, %v12155
        %v12157 = vpop.f32.mrf.mxu0
        %v12158 = vadd.f32 %v12069, %v12157
        %12159 = vmatmul.bf16.gmra.mxu0 %v11078
        %v12160 = vpop.f32.mrf.mxu0
        %v12161 = vadd.f32 %v12072, %v12160
        %v12162 = vpop.f32.mrf.mxu0
        %v12163 = vadd.f32 %v12074, %v12162
        %12164 = vmatmul.bf16.gmra.mxu0 %v11086
        %v12165 = vpop.f32.mrf.mxu0
        %v12166 = vadd.f32 %v12077, %v12165
        %v12167 = vpop.f32.mrf.mxu0
        %v12168 = vadd.f32 %v12079, %v12167
        %12169 = vmatmul.bf16.gmra.mxu0 %v11094
        %v12170 = vpop.f32.mrf.mxu0
        %v12171 = vadd.f32 %v12082, %v12170
        %v12172 = vpop.f32.mrf.mxu0
        %v12173 = vadd.f32 %v12084, %v12172
        %12174 = vmatmul.bf16.gmra.mxu0 %v11102
        %v12175 = vpop.f32.mrf.mxu0
        %v12176 = vadd.f32 %v12087, %v12175
        %v12177 = vpop.f32.mrf.mxu0
        %v12178 = vadd.f32 %v12089, %v12177
        %12179 = vmatmul.bf16.gmra.mxu0 %v11110
        %v12180 = vpop.f32.mrf.mxu0
        %v12181 = vadd.f32 %v12092, %v12180
        %v12182 = vpop.f32.mrf.mxu0
        %v12183 = vadd.f32 %v12094, %v12182
        %12184 = vmatmul.bf16.gmra.mxu0 %v11118
        %v12185 = vpop.f32.mrf.mxu0
        %v12186 = vadd.f32 %v12097, %v12185
        %v12187 = vpop.f32.mrf.mxu0
        %v12188 = vadd.f32 %v12099, %v12187
        %12189 = vmatmul.bf16.gmra.mxu0 %v11126
        %v12190 = vpop.f32.mrf.mxu0
        %v12191 = vadd.f32 %v12102, %v12190
        %v12192 = vpop.f32.mrf.mxu0
        %v12193 = vadd.f32 %v12104, %v12192
        %12194 = vmatmul.bf16.gmra.mxu0 %v11134
        %v12195 = vpop.f32.mrf.mxu0
        %v12196 = vadd.f32 %v12107, %v12195
        %v12197 = vpop.f32.mrf.mxu0
        %v12198 = vadd.f32 %v12109, %v12197
        %12199 = vmatmul.bf16.gmra.mxu0 %v11142
        %v12200 = vpop.f32.mrf.mxu0
        %v12201 = vadd.f32 %v12112, %v12200
        %v12202 = vpop.f32.mrf.mxu0
        %v12203 = vadd.f32 %v12114, %v12202
        %12204 = vmatmul.bf16.gmra.mxu0 %v11150
        %v12205 = vpop.f32.mrf.mxu0
        %v12206 = vadd.f32 %v12117, %v12205
        %v12207 = vpop.f32.mrf.mxu0
        %v12208 = vadd.f32 %v12119, %v12207
        %12209 = vmatmul.bf16.gmra.mxu0 %v11158
        %v12210 = vpop.f32.mrf.mxu0
        %v12211 = vadd.f32 %v12122, %v12210
        %v12212 = vpop.f32.mrf.mxu0
        %v12213 = vadd.f32 %v12124, %v12212
        %12214 = vmatmul.bf16.gmra.mxu0 %v11166
        %v12215 = vpop.f32.mrf.mxu0
        %v12216 = vadd.f32 %v12127, %v12215
        %v12217 = vpop.f32.mrf.mxu0
        %v12218 = vadd.f32 %v12129, %v12217
        %12219 = vmatmul.bf16.gmra.mxu0 %v11174
        %v12220 = vpop.f32.mrf.mxu0
        %v12221 = vadd.f32 %v12132, %v12220
        %v12222 = vpop.f32.mrf.mxu0
        %v12223 = vadd.f32 %v12134, %v12222
        %12224 = vdwg.mxu0
        %12225 = vmatpush.bf16.msra.mxu0 %v11618
        %12226 = vmatpush.bf16.msra.mxu0 %v11617
        %12227 = vmatpush.bf16.msra.mxu0 %v11616
        %12228 = vmatpush.bf16.msra.mxu0 %v11615
        %12229 = vmatpush.bf16.msra.mxu0 %v11614
        %12230 = vmatpush.bf16.msra.mxu0 %v11613
        %12231 = vmatpush.bf16.msra.mxu0 %v11612
        %12232 = vmatpush.bf16.msra.mxu0 %v11611
        %12233 = vmatmul.bf16.gmra.mxu0 %v11055
        %v12234 = vpop.f32.mrf.mxu0
        %v12235 = vadd.f32 %v12146, %v12234
        %v12236 = vpop.f32.mrf.mxu0
        %v12237 = vadd.f32 %v12148, %v12236
        %12238 = vmatmul.bf16.gmra.mxu0 %v11063
        %v12239 = vpop.f32.mrf.mxu0
        %v12240 = vadd.f32 %v12151, %v12239
        %v12241 = vpop.f32.mrf.mxu0
        %v12242 = vadd.f32 %v12153, %v12241
        %12243 = vmatmul.bf16.gmra.mxu0 %v11071
        %v12244 = vpop.f32.mrf.mxu0
        %v12245 = vadd.f32 %v12156, %v12244
        %v12246 = vpop.f32.mrf.mxu0
        %v12247 = vadd.f32 %v12158, %v12246
        %12248 = vmatmul.bf16.gmra.mxu0 %v11079
        %v12249 = vpop.f32.mrf.mxu0
        %v12250 = vadd.f32 %v12161, %v12249
        %v12251 = vpop.f32.mrf.mxu0
        %v12252 = vadd.f32 %v12163, %v12251
        %12253 = vmatmul.bf16.gmra.mxu0 %v11087
        %v12254 = vpop.f32.mrf.mxu0
        %v12255 = vadd.f32 %v12166, %v12254
        %v12256 = vpop.f32.mrf.mxu0
        %v12257 = vadd.f32 %v12168, %v12256
        %12258 = vmatmul.bf16.gmra.mxu0 %v11095
        %v12259 = vpop.f32.mrf.mxu0
        %v12260 = vadd.f32 %v12171, %v12259
        %v12261 = vpop.f32.mrf.mxu0
        %v12262 = vadd.f32 %v12173, %v12261
        %12263 = vmatmul.bf16.gmra.mxu0 %v11103
        %v12264 = vpop.f32.mrf.mxu0
        %v12265 = vadd.f32 %v12176, %v12264
        %v12266 = vpop.f32.mrf.mxu0
        %v12267 = vadd.f32 %v12178, %v12266
        %12268 = vmatmul.bf16.gmra.mxu0 %v11111
        %v12269 = vpop.f32.mrf.mxu0
        %v12270 = vadd.f32 %v12181, %v12269
        %v12271 = vpop.f32.mrf.mxu0
        %v12272 = vadd.f32 %v12183, %v12271
        %12273 = vmatmul.bf16.gmra.mxu0 %v11119
        %v12274 = vpop.f32.mrf.mxu0
        %v12275 = vadd.f32 %v12186, %v12274
        %v12276 = vpop.f32.mrf.mxu0
        %v12277 = vadd.f32 %v12188, %v12276
        %12278 = vmatmul.bf16.gmra.mxu0 %v11127
        %v12279 = vpop.f32.mrf.mxu0
        %v12280 = vadd.f32 %v12191, %v12279
        %v12281 = vpop.f32.mrf.mxu0
        %v12282 = vadd.f32 %v12193, %v12281
        %12283 = vmatmul.bf16.gmra.mxu0 %v11135
        %v12284 = vpop.f32.mrf.mxu0
        %v12285 = vadd.f32 %v12196, %v12284
        %v12286 = vpop.f32.mrf.mxu0
        %v12287 = vadd.f32 %v12198, %v12286
        %12288 = vmatmul.bf16.gmra.mxu0 %v11143
        %v12289 = vpop.f32.mrf.mxu0
        %v12290 = vadd.f32 %v12201, %v12289
        %v12291 = vpop.f32.mrf.mxu0
        %v12292 = vadd.f32 %v12203, %v12291
        %12293 = vmatmul.bf16.gmra.mxu0 %v11151
        %v12294 = vpop.f32.mrf.mxu0
        %v12295 = vadd.f32 %v12206, %v12294
        %v12296 = vpop.f32.mrf.mxu0
        %v12297 = vadd.f32 %v12208, %v12296
        %12298 = vmatmul.bf16.gmra.mxu0 %v11159
        %v12299 = vpop.f32.mrf.mxu0
        %v12300 = vadd.f32 %v12211, %v12299
        %v12301 = vpop.f32.mrf.mxu0
        %v12302 = vadd.f32 %v12213, %v12301
        %12303 = vmatmul.bf16.gmra.mxu0 %v11167
        %v12304 = vpop.f32.mrf.mxu0
        %v12305 = vadd.f32 %v12216, %v12304
        %v12306 = vpop.f32.mrf.mxu0
        %v12307 = vadd.f32 %v12218, %v12306
        %12308 = vmatmul.bf16.gmra.mxu0 %v11175
        %v12309 = vpop.f32.mrf.mxu0
        %v12310 = vadd.f32 %v12221, %v12309
        %v12311 = vpop.f32.mrf.mxu0
        %v12312 = vadd.f32 %v12223, %v12311
        %12313 = vdwg.mxu0
        %12314 = vmatpush.bf16.msra.mxu0 %v11626
        %12315 = vmatpush.bf16.msra.mxu0 %v11625
        %12316 = vmatpush.bf16.msra.mxu0 %v11624
        %12317 = vmatpush.bf16.msra.mxu0 %v11623
        %12318 = vmatpush.bf16.msra.mxu0 %v11622
        %12319 = vmatpush.bf16.msra.mxu0 %v11621
        %12320 = vmatpush.bf16.msra.mxu0 %v11620
        %12321 = vmatpush.bf16.msra.mxu0 %v11619
        %12322 = vmatmul.bf16.gmra.mxu0 %v11056
        %v12323 = vpop.f32.mrf.mxu0
        %v12324 = vadd.f32 %v12235, %v12323
        %v12325 = vpop.f32.mrf.mxu0
        %v12326 = vadd.f32 %v12237, %v12325
        %12327 = vmatmul.bf16.gmra.mxu0 %v11064
        %v12328 = vpop.f32.mrf.mxu0
        %v12329 = vadd.f32 %v12240, %v12328
        %v12330 = vpop.f32.mrf.mxu0
        %v12331 = vadd.f32 %v12242, %v12330
        %12332 = vmatmul.bf16.gmra.mxu0 %v11072
        %v12333 = vpop.f32.mrf.mxu0
        %v12334 = vadd.f32 %v12245, %v12333
        %v12335 = vpop.f32.mrf.mxu0
        %v12336 = vadd.f32 %v12247, %v12335
        %12337 = vmatmul.bf16.gmra.mxu0 %v11080
        %v12338 = vpop.f32.mrf.mxu0
        %v12339 = vadd.f32 %v12250, %v12338
        %v12340 = vpop.f32.mrf.mxu0
        %v12341 = vadd.f32 %v12252, %v12340
        %12342 = vmatmul.bf16.gmra.mxu0 %v11088
        %v12343 = vpop.f32.mrf.mxu0
        %v12344 = vadd.f32 %v12255, %v12343
        %v12345 = vpop.f32.mrf.mxu0
        %v12346 = vadd.f32 %v12257, %v12345
        %12347 = vmatmul.bf16.gmra.mxu0 %v11096
        %v12348 = vpop.f32.mrf.mxu0
        %v12349 = vadd.f32 %v12260, %v12348
        %v12350 = vpop.f32.mrf.mxu0
        %v12351 = vadd.f32 %v12262, %v12350
        %12352 = vmatmul.bf16.gmra.mxu0 %v11104
        %v12353 = vpop.f32.mrf.mxu0
        %v12354 = vadd.f32 %v12265, %v12353
        %v12355 = vpop.f32.mrf.mxu0
        %v12356 = vadd.f32 %v12267, %v12355
        %12357 = vmatmul.bf16.gmra.mxu0 %v11112
        %v12358 = vpop.f32.mrf.mxu0
        %v12359 = vadd.f32 %v12270, %v12358
        %v12360 = vpop.f32.mrf.mxu0
        %v12361 = vadd.f32 %v12272, %v12360
        %12362 = vmatmul.bf16.gmra.mxu0 %v11120
        %v12363 = vpop.f32.mrf.mxu0
        %v12364 = vadd.f32 %v12275, %v12363
        %v12365 = vpop.f32.mrf.mxu0
        %v12366 = vadd.f32 %v12277, %v12365
        %12367 = vmatmul.bf16.gmra.mxu0 %v11128
        %v12368 = vpop.f32.mrf.mxu0
        %v12369 = vadd.f32 %v12280, %v12368
        %v12370 = vpop.f32.mrf.mxu0
        %v12371 = vadd.f32 %v12282, %v12370
        %12372 = vmatmul.bf16.gmra.mxu0 %v11136
        %v12373 = vpop.f32.mrf.mxu0
        %v12374 = vadd.f32 %v12285, %v12373
        %v12375 = vpop.f32.mrf.mxu0
        %v12376 = vadd.f32 %v12287, %v12375
        %12377 = vmatmul.bf16.gmra.mxu0 %v11144
        %v12378 = vpop.f32.mrf.mxu0
        %v12379 = vadd.f32 %v12290, %v12378
        %v12380 = vpop.f32.mrf.mxu0
        %v12381 = vadd.f32 %v12292, %v12380
        %12382 = vmatmul.bf16.gmra.mxu0 %v11152
        %v12383 = vpop.f32.mrf.mxu0
        %v12384 = vadd.f32 %v12295, %v12383
        %v12385 = vpop.f32.mrf.mxu0
        %v12386 = vadd.f32 %v12297, %v12385
        %12387 = vmatmul.bf16.gmra.mxu0 %v11160
        %v12388 = vpop.f32.mrf.mxu0
        %v12389 = vadd.f32 %v12300, %v12388
        %v12390 = vpop.f32.mrf.mxu0
        %v12391 = vadd.f32 %v12302, %v12390
        %12392 = vmatmul.bf16.gmra.mxu0 %v11168
        %v12393 = vpop.f32.mrf.mxu0
        %v12394 = vadd.f32 %v12305, %v12393
        %v12395 = vpop.f32.mrf.mxu0
        %v12396 = vadd.f32 %v12307, %v12395
        %12397 = vmatmul.bf16.gmra.mxu0 %v11176
        %v12398 = vpop.f32.mrf.mxu0
        %v12399 = vadd.f32 %v12310, %v12398
        %v12400 = vpop.f32.mrf.mxu0
        %v12401 = vadd.f32 %v12312, %v12400
        %12402 = vdwg.mxu0
        %12403 = vst [vmem:[%s378] sm:$0xff] %v12324
        %12404 = vst [vmem:[%s378 + $0x8] sm:$0xff] %v12326
        %12405 = vst [vmem:[%s378 + $0x10] sm:$0xff] %v12329
        %12406 = vst [vmem:[%s378 + $0x18] sm:$0xff] %v12331
        %12407 = vst [vmem:[%s378 + $0x20] sm:$0xff] %v12334
        %12408 = vst [vmem:[%s378 + $0x28] sm:$0xff] %v12336
        %12409 = vst [vmem:[%s378 + $0x30] sm:$0xff] %v12339
        %12410 = vst [vmem:[%s378 + $0x38] sm:$0xff] %v12341
        %12411 = vst [vmem:[%s378 + $0x40] sm:$0xff] %v12344
        %12412 = vst [vmem:[%s378 + $0x48] sm:$0xff] %v12346
        %12413 = vst [vmem:[%s378 + $0x50] sm:$0xff] %v12349
        %12414 = vst [vmem:[%s378 + $0x58] sm:$0xff] %v12351
        %12415 = vst [vmem:[%s378 + $0x60] sm:$0xff] %v12354
        %12416 = vst [vmem:[%s378 + $0x68] sm:$0xff] %v12356
        %12417 = vst [vmem:[%s378 + $0x70] sm:$0xff] %v12359
        %12418 = vst [vmem:[%s378 + $0x78] sm:$0xff] %v12361
        %12419 = vst [vmem:[%s378 + $0x80] sm:$0xff] %v12364
        %12420 = vst [vmem:[%s378 + $0x88] sm:$0xff] %v12366
        %12421 = vst [vmem:[%s378 + $0x90] sm:$0xff] %v12369
        %12422 = vst [vmem:[%s378 + $0x98] sm:$0xff] %v12371
        %12423 = vst [vmem:[%s378 + $0xa0] sm:$0xff] %v12374
        %12424 = vst [vmem:[%s378 + $0xa8] sm:$0xff] %v12376
        %12425 = vst [vmem:[%s378 + $0xb0] sm:$0xff] %v12379
        %12426 = vst [vmem:[%s378 + $0xb8] sm:$0xff] %v12381
        %12427 = vst [vmem:[%s378 + $0xc0] sm:$0xff] %v12384
        %12428 = vst [vmem:[%s378 + $0xc8] sm:$0xff] %v12386
        %12429 = vst [vmem:[%s378 + $0xd0] sm:$0xff] %v12389
        %12430 = vst [vmem:[%s378 + $0xd8] sm:$0xff] %v12391
        %12431 = vst [vmem:[%s378 + $0xe0] sm:$0xff] %v12394
        %12432 = vst [vmem:[%s378 + $0xe8] sm:$0xff] %v12396
        %12433 = vst [vmem:[%s378 + $0xf0] sm:$0xff] %v12399
        %12434 = vst [vmem:[%s378 + $0xf8] sm:$0xff] %v12401
        %s12435 = sand.u32 %s188, 1
        %s12436 = scalar_lea.sflag [#allocation5], %s12435
        %s12437 = sand.u32 %s188, 1
        %s12438 = smul.addr %s12437, 256
        %s12439 = scalar_lea.vmem [#allocation14], %s12438
        // Predicated region
        $region73: #{tpu_custom_call.1} parent=47 // pred_check
          %p12440 = pneg %p198
        $region74: #{tpu_custom_call.1} parent=47 // pred_check_branch
          %12442 = sbr.rel (%p12440) target = $region76
        $region75: #{tpu_custom_call.1} parent=47 // pred_region
          %s12443 = smul.u32 32, %s28
          %12445 = vsyncadd %s12436, 0
          %s12446 = smul.addr %s12443, 8
          %s12447 = scalar_lea.hbm %s7, %s12446
          %s12448 = sshll.u32 %s12439, 4
          %s12449 = int_to_ptr.vmem [resolvable:$true] %s12448
          %s12450 = sshll.u32 %s12447, 4
          %s12451 = int_to_ptr.hbm [resolvable:$true] %s12450
          %12456 = dma.vmem_to_hbm [thread:$0]  %s12449, 4096, %s12451, %s12436, 128, 128, 8
        $region76: #{tpu_custom_call.1} parent=47 // pred_fallthru
          _
      $region48: #{tpu_custom_call.1} parent=5 // pred_fallthru
        _
      %p12457 = scmp.le.s32.totalorder 2, %s23
      // Predicated region
      $region77: #{tpu_custom_call.1} parent=5 // pred_check
        %p12458 = pneg %p12457
      $region78: #{tpu_custom_call.1} parent=5 // pred_check_branch
        %12460 = sbr.rel (%p12458) target = $region80
      $region79: #{tpu_custom_call.1} parent=5 // pred_region
        %s12461 = ssub.s32 %s23, 2
        // Predicated region
        $region81: #{tpu_custom_call.1} parent=79 // pred_check
          %p12462 = pneg %p204
        $region82: #{tpu_custom_call.1} parent=79 // pred_check_branch
          %12464 = sbr.rel (%p12462) target = $region84
        $region83: #{tpu_custom_call.1} parent=79 // pred_region
          %s12465 = sand.u32 %s189, 1
          %s12466 = scalar_lea.sflag [#allocation5], %s12465
          %s12467 = sand.u32 %s189, 1
          %s12468 = smul.addr %s12467, 256
          %s12469 = scalar_lea.vmem [#allocation14], %s12468
          %12471 = dma.done %s12466, 4096
        $region84: #{tpu_custom_call.1} parent=79 // pred_fallthru
          _
      $region80: #{tpu_custom_call.1} parent=5 // pred_fallthru
        _
    $region6: #{tpu_custom_call.1} parent=1 // loop_footer
      %s27 = sadd.s32 1, %s23
    $region7: #{tpu_custom_call.1} parent=1 // loop_footer_branch
      %22 = sbr.rel target = $region3
    $region8: #{tpu_custom_call.1} parent=1 // loop_exit
      _
    %12472 = vsyncpa [#allocation4], 1
    %s12473 = scalar_lea.sflag [#allocation4], 1
    %12474 = vsyncpa %s12473, 1
    %12475 = vsyncpa [#allocation7], 1
    %12476 = vsyncpa [#allocation10], 1
    %12477 = vsyncpa [#allocation13], 1
    %12478 = vsyncpa [#allocation5], 1
    %s12479 = scalar_lea.sflag [#allocation5], 1
    %12480 = vsyncpa %s12479, 1

</llo_original>
